<compile_context>
chip_gen: v5e
topology: v5e:2x2
jax: 0.10.0
libtpu: 0.0.40
codegen_flags: <defaults>
</compile_context>

<pallas_src>
import functools
import math

import jax
import jax.numpy as jnp
from jax import lax
from jax.experimental import pallas as pl
from jax.experimental.pallas import tpu as pltpu


def _sigmoid(v):
    return 1.0 / (1.0 + jnp.exp(-v))


# ----------------------------------------------------------------------------- kernels

def _mhsa_kernel(xs_ref, bias_ref, wq_ref, wk_ref, wv_ref, bq_ref, bk_ref, bv_ref,
                 wo_ref, bo_ref, o_ref, *, num_heads, head_dim):
    """Self-attention over C for all (b, t) items in one step.

    xs_ref : (N, M) with N = B*T*C, rows grouped per (b, t) item.
    bias_ref: (N, N) additive block-diagonal mask (0 within an item, -1e30 across
              items), precomputed on the host so the kernel needs no iota / int-div.
    wq/wk/wv: (H, M, dh) per-head projection weights; wo: (H, dh, M).
    """
    x = xs_ref[...]
    n = x.shape[0]
    m = bo_ref.shape[-1]
    scale = 1.0 / math.sqrt(head_dim)
    bias = bias_ref[...]

    acc = jnp.zeros((n, m), jnp.float32)
    for h in range(num_heads):                                   # static; H is tiny
        q = (jnp.dot(x, wq_ref[h], preferred_element_type=jnp.float32)
             + bq_ref[h]) * scale                                # (N, dh)
        k = jnp.dot(x, wk_ref[h], preferred_element_type=jnp.float32) + bk_ref[h]
        v = jnp.dot(x, wv_ref[h], preferred_element_type=jnp.float32) + bv_ref[h]

        s = jnp.einsum("nd,kd->nk", q, k,
                       preferred_element_type=jnp.float32) + bias  # (N, N)
        s = s - jnp.max(s, axis=-1, keepdims=True)
        e = jnp.exp(s)                                            # masked entries -> 0
        p = e / jnp.sum(e, axis=-1, keepdims=True)
        o = jnp.dot(p, v, preferred_element_type=jnp.float32)     # (N, dh)
        # accumulate per-head output projection (avoids concat over heads)
        acc = acc + jnp.dot(o, wo_ref[h], preferred_element_type=jnp.float32)

    o_ref[...] = (acc + bo_ref[...]).astype(o_ref.dtype)


def _fused_path_kernel(x_ref, y_ref, gm_ref, bm_ref,
                       wih0m_ref, wih0s_ref, bih0_ref, whh0_ref, bhh0_ref,
                       wih1_ref, bih1_ref, whh1_ref, bhh1_ref,
                       lw_ref, lb_ref, gr_ref, br_ref,
                       o_ref, rnn_ref,
                       *, n_ch, n_bt, n_batch, n_time, hidden, eps):
    """Fused post-attention path.  Rows of x/y/out are ordered (c, t, b) with features
    (M) on lanes; the aggregated / recurrent path uses rows ordered (t, b)."""
    # ---- LayerNorm(M) of attention output + residual add (all C*T*B rows at once)
    # TODO(synk): LayerNorm assumed to normalize the feature (M) axis with affine.
    y = y_ref[...]
    mu = jnp.mean(y, axis=-1, keepdims=True)
    var = jnp.mean((y - mu) ** 2, axis=-1, keepdims=True)
    ln = (y - mu) * lax.rsqrt(var + eps) * gm_ref[...] + bm_ref[...]
    x1 = x_ref[...] + ln                                          # (C*TB, M)

    # ---- channelwise softmax aggregation over C (weighted mean + weighted std) ----
    # TODO(synk): confirm channelwise_softmax_aggregation(std=True) definition.
    xc = [x1[c * n_bt:(c + 1) * n_bt, :] for c in range(n_ch)]    # C x (TB, M)
    mx = xc[0]
    for c in range(1, n_ch):
        mx = jnp.maximum(mx, xc[c])
    ec = [jnp.exp(v - mx) for v in xc]
    inv_den = 1.0 / sum(ec)
    mean_a = sum(e * v for e, v in zip(ec, xc)) * inv_den         # (TB, M)
    var_a = sum(e * (v - mean_a) ** 2 for e, v in zip(ec, xc)) * inv_den
    std_a = jnp.sqrt(var_a + eps)

    # ---- GRU layer-0 input transform: all timesteps at once, one matmul per gate ---
    gi0 = [jnp.dot(mean_a, wih0m_ref[g], preferred_element_type=jnp.float32)
           + jnp.dot(std_a, wih0s_ref[g], preferred_element_type=jnp.float32)
           + bih0_ref[g]
           for g in range(3)]                                     # 3 x (TB, H)

    # ---- 2-layer GRU recurrence (PyTorch gate order r, z, n); time loop unrolled ---
    h0 = jnp.zeros((n_batch, hidden), jnp.float32)
    h1 = jnp.zeros((n_batch, hidden), jnp.float32)
    for t in range(n_time):                                       # static unroll
        lo = t * n_batch
        gh0 = [jnp.dot(h0, whh0_ref[g], preferred_element_type=jnp.float32)
               + bhh0_ref[g] for g in range(3)]
        r = _sigmoid(gi0[0][lo:lo + n_batch, :] + gh0[0])
        z = _sigmoid(gi0[1][lo:lo + n_batch, :] + gh0[1])
        ng = jnp.tanh(gi0[2][lo:lo + n_batch, :] + r * gh0[2])
        h0 = (1.0 - z) * ng + z * h0

        gi1 = [jnp.dot(h0, wih1_ref[g], preferred_element_type=jnp.float32)
               + bih1_ref[g] for g in range(3)]
        gh1 = [jnp.dot(h1, whh1_ref[g], preferred_element_type=jnp.float32)
               + bhh1_ref[g] for g in range(3)]
        r1 = _sigmoid(gi1[0] + gh1[0])
        z1 = _sigmoid(gi1[1] + gh1[1])
        n1 = jnp.tanh(gi1[2] + r1 * gh1[2])
        h1 = (1.0 - z1) * n1 + z1 * h1
        rnn_ref[lo:lo + n_batch, :] = h1                          # (t, b) rows

    # ---- ELU -> Linear -> LayerNorm(M) -> broadcast residual add over C -----------
    h = rnn_ref[...]                                              # (TB, H)
    h = jnp.where(h > 0, h, jnp.exp(jnp.minimum(h, 0.0)) - 1.0)   # ELU(alpha=1)
    zl = jnp.dot(h, lw_ref[...], preferred_element_type=jnp.float32) + lb_ref[...]
    mu2 = jnp.mean(zl, axis=-1, keepdims=True)
    var2 = jnp.mean((zl - mu2) ** 2, axis=-1, keepdims=True)
    zl = (zl - mu2) * lax.rsqrt(var2 + eps) * gr_ref[...] + br_ref[...]

    for c in range(n_ch):
        o_ref[c * n_bt:(c + 1) * n_bt, :] = (xc[c] + zl).astype(o_ref.dtype)


# ----------------------------------------------------------------------------- wrappers

def mhsa_attention(xs2d, attn_bias, wq, wk, wv, bq, bk, bv, wo, bo, *, num_heads):
    n, m = xs2d.shape
    kern = functools.partial(_mhsa_kernel, num_heads=num_heads, head_dim=m // num_heads)
    # grid=() -> single step; every array lives fully in VMEM (tiny shapes).
    return pl.pallas_call(
        kern,
        out_shape=jax.ShapeDtypeStruct((n, m), jnp.float32),
    )(xs2d, attn_bias, wq, wk, wv, bq, bk, bv, wo, bo)


def fused_dual_path(x2d, y2d, gm, bm, wih0m, wih0s, bih0, whh0, bhh0,
                    wih1, bih1, whh1, bhh1, lw, lb, grw, brw,
                    *, n_ch, n_batch, n_time, hidden, eps=1e-5):
    n_bt = n_batch * n_time
    kern = functools.partial(_fused_path_kernel, n_ch=n_ch, n_bt=n_bt,
                             n_batch=n_batch, n_time=n_time, hidden=hidden, eps=eps)
    return pl.pallas_call(
        kern,
        out_shape=jax.ShapeDtypeStruct((n_ch * n_bt, hidden), jnp.float32),
        scratch_shapes=[pltpu.VMEM((n_bt, hidden), jnp.float32)],
    )(x2d, y2d, gm, bm, wih0m, wih0s, bih0, whh0, bhh0,
      wih1, bih1, whh1, bhh1, lw, lb, grw, brw)


# ----------------------------------------------------------------------------- forward

def dualpath_block_forward(x, mpe, params, num_heads):
    B, C, M, T = x.shape
    H = num_heads
    dh = M // H
    mh, gr = params["mhsa"], params["gru"]

    # ---- trace-time weight prep: per-head slices, gate splits, transposes ----------
    def per_head_in(wmat, bvec):
        wt = wmat.T.reshape(M, H, dh).transpose(1, 0, 2)          # (H, M, dh)
        return wt, bvec.reshape(H, 1, dh)

    wq, bq = per_head_in(mh["wq"], mh["bq"])
    wk, bk = per_head_in(mh["wk"], mh["bk"])
    wv, bv = per_head_in(mh["wv"], mh["bv"])
    wo = mh["wo"].T.reshape(H, dh, M)                             # (H, dh, M)
    bo = mh["bo"].reshape(1, M)

    def split_gates(wmat):                                        # (3M, K) -> (3, K, M)
        return jnp.stack([wmat[g * M:(g + 1) * M, :].T for g in range(3)], axis=0)

    wih0m = split_gates(gr["wih0"][:, :M])                        # mean-feature half
    wih0s = split_gates(gr["wih0"][:, M:])                        # std-feature half
    whh0 = split_gates(gr["whh0"])
    wih1 = split_gates(gr["wih1"])
    whh1 = split_gates(gr["whh1"])
    bih0 = gr["bih0"].reshape(3, 1, M)
    bhh0 = gr["bhh0"].reshape(3, 1, M)
    bih1 = gr["bih1"].reshape(3, 1, M)
    bhh1 = gr["bhh1"].reshape(3, 1, M)

    # Block-diagonal additive attention mask (items = consecutive groups of C rows).
    item = jnp.arange(B * T * C, dtype=jnp.int32) // C
    attn_bias = jnp.where(item[:, None] == item[None, :],
                          jnp.float32(0.0), jnp.float32(-1e30))

    # ------------------ mhsa_forward ------------------
    # (B,C,M,T) + MPE -> permute(0,3,1,2) -> (B,T,C,M) -> flatten to (B*T*C, M) rows.
    xs2d = jnp.transpose(x + mpe, (0, 3, 1, 2)).reshape(B * T * C, M)
    attn = mhsa_attention(xs2d, attn_bias, wq, wk, wv, bq, bk, bv, wo, bo,
                          num_heads=H)                            # (B*T*C, M)

    # Reproduce torch's axis-mixing  permute(1,2,0).contiguous().view(B,T,C,M)
    # (host-side: a ~4 KiB relayout, kept out of the kernels).
    y = jnp.transpose(attn.reshape(B, T, C, M), (0, 1, 3, 2)).reshape(B, T, C, M)
    # Bring both operands to the kernel's (c, t, b) row layout, features on lanes.
    y2d = jnp.transpose(y, (2, 1, 0, 3)).reshape(C * T * B, M)
    x2d = jnp.transpose(x, (1, 3, 0, 2)).reshape(C * T * B, M)

    # ------------------ fused LN/residual/agg + GRU + output path ------------------
    out2d = fused_dual_path(
        x2d, y2d,
        params["norm_mhsa_g"].reshape(1, M), params["norm_mhsa_b"].reshape(1, M),
        wih0m, wih0s, bih0, whh0, bhh0, wih1, bih1, whh1, bhh1,
        params["lin_w"].T, params["lin_b"].reshape(1, M),
        params["norm_rnn_g"].reshape(1, M), params["norm_rnn_b"].reshape(1, M),
        n_ch=C, n_batch=B, n_time=T, hidden=M)                    # (C*T*B, M)

    # Back to the module's (B, C, M, T) layout.
    return jnp.transpose(out2d.reshape(C, T, B, M), (2, 0, 3, 1))


# ----------------------------------------------------------------------------- params

def init_params(key, feature_size):
    M = feature_size
    ks = jax.random.split(key, 18)

    def w(k, shape, scale=0.1):
        return (scale * jax.random.normal(k, shape)).astype(jnp.float32)

    mhsa = dict(wq=w(ks[0], (M, M)), wk=w(ks[1], (M, M)), wv=w(ks[2], (M, M)),
                bq=w(ks[3], (M,)), bk=w(ks[4], (M,)), bv=w(ks[5], (M,)),
                wo=w(ks[6], (M, M)), bo=w(ks[7], (M,)))
    gru = dict(wih0=w(ks[8], (3 * M, 2 * M)), whh0=w(ks[9], (3 * M, M)),
               bih0=w(ks[10], (3 * M,)), bhh0=w(ks[11], (3 * M,)),
               wih1=w(ks[12], (3 * M, M)), whh1=w(ks[13], (3 * M, M)),
               bih1=w(ks[14], (3 * M,)), bhh1=w(ks[15], (3 * M,)))
    return dict(mhsa=mhsa, gru=gru,
                lin_w=w(ks[16], (M, M)), lin_b=w(ks[17], (M,)),
                norm_mhsa_g=jnp.ones((M,), jnp.float32),
                norm_mhsa_b=jnp.zeros((M,), jnp.float32),
                norm_rnn_g=jnp.ones((M,), jnp.float32),
                norm_rnn_b=jnp.zeros((M,), jnp.float32))


# ----------------------------------------------------------------------------- main

if __name__ == "__main__":
    B, C, M, T = 2, 4, 16, 8     # feature_size = M = 16, frames T = 8
    num_heads = 4                # head_dim = 4

    key = jax.random.PRNGKey(0)
    kx, kmpe, kp = jax.random.split(key, 3)
    x = jax.random.normal(kx, (B, C, M, T), jnp.float32)
    mpe = 0.1 * jax.random.normal(kmpe, (B, C, M, T), jnp.float32)
    params = init_params(kp, M)

    fwd = jax.jit(functools.partial(dualpath_block_forward, num_heads=num_heads))
    out = jax.block_until_ready(fwd(x, mpe, params))

    assert out.shape == (B, C, M, T), out.shape
    assert bool(jnp.all(jnp.isfinite(out)))
    print("KERNEL_OK")
</pallas_src>

<mosaic_0001>
module attributes {stable_mosaic.version = 11 : i64} {
  func.func @_mhsa_kernel(%arg0: memref<64x16xf32, #tpu.memory_space<vmem>>, %arg1: memref<64x64xf32, #tpu.memory_space<vmem>>, %arg2: memref<4x16x4xf32, #tpu.memory_space<vmem>>, %arg3: memref<4x16x4xf32, #tpu.memory_space<vmem>>, %arg4: memref<4x16x4xf32, #tpu.memory_space<vmem>>, %arg5: memref<4x1x4xf32, #tpu.memory_space<vmem>>, %arg6: memref<4x1x4xf32, #tpu.memory_space<vmem>>, %arg7: memref<4x1x4xf32, #tpu.memory_space<vmem>>, %arg8: memref<4x4x16xf32, #tpu.memory_space<vmem>>, %arg9: memref<1x16xf32, #tpu.memory_space<vmem>>, %arg10: memref<64x16xf32, #tpu.memory_space<vmem>>) attributes {dimension_semantics = [], scalar_prefetch = 0 : i64, scratch_operands = 0 : i64, tpu.core_type = #tpu.core_type<tc>} {
    %c0 = arith.constant 0 : index
    %c0_0 = arith.constant 0 : index
    %0 = vector.load %arg0[%c0, %c0_0] : memref<64x16xf32, #tpu.memory_space<vmem>>, vector<64x16xf32>
    %c0_1 = arith.constant 0 : index
    %c0_2 = arith.constant 0 : index
    %1 = vector.load %arg1[%c0_1, %c0_2] : memref<64x64xf32, #tpu.memory_space<vmem>>, vector<64x64xf32>
    %cst = arith.constant 0.000000e+00 : f32
    %2 = vector.broadcast %cst : f32 to vector<64x16xf32>
    %c0_3 = arith.constant 0 : index
    %c0_4 = arith.constant 0 : index
    %c0_5 = arith.constant 0 : index
    %3 = vector.load %arg2[%c0_3, %c0_4, %c0_5] : memref<4x16x4xf32, #tpu.memory_space<vmem>>, vector<1x16x4xf32>
    %4 = vector.shape_cast %3 : vector<1x16x4xf32> to vector<16x4xf32>
    %cst_6 = arith.constant dense<0.000000e+00> : vector<64x4xf32>
    %5 = tpu.matmul %0, %4, %cst_6 {dimension_numbers = #tpu.dot_dimension_numbers<[1], [0], [0], [1], [0, 0, 1, 1], [], []>} : vector<64x16xf32>, vector<16x4xf32>, vector<64x4xf32> -> vector<64x4xf32>
    %c0_7 = arith.constant 0 : index
    %c0_8 = arith.constant 0 : index
    %c0_9 = arith.constant 0 : index
    %6 = vector.load %arg5[%c0_7, %c0_8, %c0_9] : memref<4x1x4xf32, #tpu.memory_space<vmem>>, vector<1x1x4xf32>
    %7 = vector.shape_cast %6 : vector<1x1x4xf32> to vector<1x4xf32>
    %8 = vector.broadcast %7 : vector<1x4xf32> to vector<64x4xf32>
    %9 = arith.addf %5, %8 : vector<64x4xf32>
    %cst_10 = arith.constant 5.000000e-01 : f32
    %10 = vector.broadcast %cst_10 : f32 to vector<64x4xf32>
    %11 = arith.mulf %9, %10 : vector<64x4xf32>
    %c0_11 = arith.constant 0 : index
    %c0_12 = arith.constant 0 : index
    %c0_13 = arith.constant 0 : index
    %12 = vector.load %arg3[%c0_11, %c0_12, %c0_13] : memref<4x16x4xf32, #tpu.memory_space<vmem>>, vector<1x16x4xf32>
    %13 = vector.shape_cast %12 : vector<1x16x4xf32> to vector<16x4xf32>
    %cst_14 = arith.constant dense<0.000000e+00> : vector<64x4xf32>
    %14 = tpu.matmul %0, %13, %cst_14 {dimension_numbers = #tpu.dot_dimension_numbers<[1], [0], [0], [1], [0, 0, 1, 1], [], []>} : vector<64x16xf32>, vector<16x4xf32>, vector<64x4xf32> -> vector<64x4xf32>
    %c0_15 = arith.constant 0 : index
    %c0_16 = arith.constant 0 : index
    %c0_17 = arith.constant 0 : index
    %15 = vector.load %arg6[%c0_15, %c0_16, %c0_17] : memref<4x1x4xf32, #tpu.memory_space<vmem>>, vector<1x1x4xf32>
    %16 = vector.shape_cast %15 : vector<1x1x4xf32> to vector<1x4xf32>
    %17 = vector.broadcast %16 : vector<1x4xf32> to vector<64x4xf32>
    %18 = arith.addf %14, %17 : vector<64x4xf32>
    %c0_18 = arith.constant 0 : index
    %c0_19 = arith.constant 0 : index
    %c0_20 = arith.constant 0 : index
    %19 = vector.load %arg4[%c0_18, %c0_19, %c0_20] : memref<4x16x4xf32, #tpu.memory_space<vmem>>, vector<1x16x4xf32>
    %20 = vector.shape_cast %19 : vector<1x16x4xf32> to vector<16x4xf32>
    %cst_21 = arith.constant dense<0.000000e+00> : vector<64x4xf32>
    %21 = tpu.matmul %0, %20, %cst_21 {dimension_numbers = #tpu.dot_dimension_numbers<[1], [0], [0], [1], [0, 0, 1, 1], [], []>} : vector<64x16xf32>, vector<16x4xf32>, vector<64x4xf32> -> vector<64x4xf32>
    %c0_22 = arith.constant 0 : index
    %c0_23 = arith.constant 0 : index
    %c0_24 = arith.constant 0 : index
    %22 = vector.load %arg7[%c0_22, %c0_23, %c0_24] : memref<4x1x4xf32, #tpu.memory_space<vmem>>, vector<1x1x4xf32>
    %23 = vector.shape_cast %22 : vector<1x1x4xf32> to vector<1x4xf32>
    %24 = vector.broadcast %23 : vector<1x4xf32> to vector<64x4xf32>
    %25 = arith.addf %21, %24 : vector<64x4xf32>
    "tpu.trace_start"() <{level = 10 : i32, message = "nd,kd->nk"}> : () -> ()
    %cst_25 = arith.constant dense<0.000000e+00> : vector<64x64xf32>
    %26 = tpu.matmul %11, %18, %cst_25 {dimension_numbers = #tpu.dot_dimension_numbers<[1], [1], [0], [0], [0, 0, 1, 0], [], []>} : vector<64x4xf32>, vector<64x4xf32>, vector<64x64xf32> -> vector<64x64xf32>
    "tpu.trace_stop"() : () -> ()
    %27 = arith.addf %26, %1 : vector<64x64xf32>
    %cst_26 = arith.constant dense<0xFF800000> : vector<64xf32>
    %28 = vector.multi_reduction <maximumf>, %27, %cst_26 [1] : vector<64x64xf32> to vector<64xf32>
    %29 = vector.shape_cast %28 : vector<64xf32> to vector<64x1xf32>
    %30 = vector.broadcast %29 : vector<64x1xf32> to vector<64x64xf32>
    %31 = arith.subf %27, %30 : vector<64x64xf32>
    %32 = math.exp %31 : vector<64x64xf32>
    %cst_27 = arith.constant dense<0.000000e+00> : vector<64xf32>
    %33 = vector.multi_reduction <add>, %32, %cst_27 [1] : vector<64x64xf32> to vector<64xf32>
    %34 = vector.shape_cast %33 : vector<64xf32> to vector<64x1xf32>
    %35 = vector.broadcast %34 : vector<64x1xf32> to vector<64x64xf32>
    %36 = arith.divf %32, %35 : vector<64x64xf32>
    %cst_28 = arith.constant dense<0.000000e+00> : vector<64x4xf32>
    %37 = tpu.matmul %36, %25, %cst_28 {dimension_numbers = #tpu.dot_dimension_numbers<[1], [0], [0], [1], [0, 0, 1, 1], [], []>} : vector<64x64xf32>, vector<64x4xf32>, vector<64x4xf32> -> vector<64x4xf32>
    %c0_29 = arith.constant 0 : index
    %c0_30 = arith.constant 0 : index
    %c0_31 = arith.constant 0 : index
    %38 = vector.load %arg8[%c0_29, %c0_30, %c0_31] : memref<4x4x16xf32, #tpu.memory_space<vmem>>, vector<1x4x16xf32>
    %39 = vector.shape_cast %38 : vector<1x4x16xf32> to vector<4x16xf32>
    %cst_32 = arith.constant dense<0.000000e+00> : vector<64x16xf32>
    %40 = tpu.matmul %37, %39, %cst_32 {dimension_numbers = #tpu.dot_dimension_numbers<[1], [0], [0], [1], [0, 0, 1, 1], [], []>} : vector<64x4xf32>, vector<4x16xf32>, vector<64x16xf32> -> vector<64x16xf32>
    %41 = arith.addf %2, %40 : vector<64x16xf32>
    %c1 = arith.constant 1 : index
    %c0_33 = arith.constant 0 : index
    %c0_34 = arith.constant 0 : index
    %42 = vector.load %arg2[%c1, %c0_33, %c0_34] : memref<4x16x4xf32, #tpu.memory_space<vmem>>, vector<1x16x4xf32>
    %43 = vector.shape_cast %42 : vector<1x16x4xf32> to vector<16x4xf32>
    %cst_35 = arith.constant dense<0.000000e+00> : vector<64x4xf32>
    %44 = tpu.matmul %0, %43, %cst_35 {dimension_numbers = #tpu.dot_dimension_numbers<[1], [0], [0], [1], [0, 0, 1, 1], [], []>} : vector<64x16xf32>, vector<16x4xf32>, vector<64x4xf32> -> vector<64x4xf32>
    %c1_36 = arith.constant 1 : index
    %c0_37 = arith.constant 0 : index
    %c0_38 = arith.constant 0 : index
    %45 = vector.load %arg5[%c1_36, %c0_37, %c0_38] : memref<4x1x4xf32, #tpu.memory_space<vmem>>, vector<1x1x4xf32>
    %46 = vector.shape_cast %45 : vector<1x1x4xf32> to vector<1x4xf32>
    %47 = vector.broadcast %46 : vector<1x4xf32> to vector<64x4xf32>
    %48 = arith.addf %44, %47 : vector<64x4xf32>
    %cst_39 = arith.constant 5.000000e-01 : f32
    %49 = vector.broadcast %cst_39 : f32 to vector<64x4xf32>
    %50 = arith.mulf %48, %49 : vector<64x4xf32>
    %c1_40 = arith.constant 1 : index
    %c0_41 = arith.constant 0 : index
    %c0_42 = arith.constant 0 : index
    %51 = vector.load %arg3[%c1_40, %c0_41, %c0_42] : memref<4x16x4xf32, #tpu.memory_space<vmem>>, vector<1x16x4xf32>
    %52 = vector.shape_cast %51 : vector<1x16x4xf32> to vector<16x4xf32>
    %cst_43 = arith.constant dense<0.000000e+00> : vector<64x4xf32>
    %53 = tpu.matmul %0, %52, %cst_43 {dimension_numbers = #tpu.dot_dimension_numbers<[1], [0], [0], [1], [0, 0, 1, 1], [], []>} : vector<64x16xf32>, vector<16x4xf32>, vector<64x4xf32> -> vector<64x4xf32>
    %c1_44 = arith.constant 1 : index
    %c0_45 = arith.constant 0 : index
    %c0_46 = arith.constant 0 : index
    %54 = vector.load %arg6[%c1_44, %c0_45, %c0_46] : memref<4x1x4xf32, #tpu.memory_space<vmem>>, vector<1x1x4xf32>
    %55 = vector.shape_cast %54 : vector<1x1x4xf32> to vector<1x4xf32>
    %56 = vector.broadcast %55 : vector<1x4xf32> to vector<64x4xf32>
    %57 = arith.addf %53, %56 : vector<64x4xf32>
    %c1_47 = arith.constant 1 : index
    %c0_48 = arith.constant 0 : index
    %c0_49 = arith.constant 0 : index
    %58 = vector.load %arg4[%c1_47, %c0_48, %c0_49] : memref<4x16x4xf32, #tpu.memory_space<vmem>>, vector<1x16x4xf32>
    %59 = vector.shape_cast %58 : vector<1x16x4xf32> to vector<16x4xf32>
    %cst_50 = arith.constant dense<0.000000e+00> : vector<64x4xf32>
    %60 = tpu.matmul %0, %59, %cst_50 {dimension_numbers = #tpu.dot_dimension_numbers<[1], [0], [0], [1], [0, 0, 1, 1], [], []>} : vector<64x16xf32>, vector<16x4xf32>, vector<64x4xf32> -> vector<64x4xf32>
    %c1_51 = arith.constant 1 : index
    %c0_52 = arith.constant 0 : index
    %c0_53 = arith.constant 0 : index
    %61 = vector.load %arg7[%c1_51, %c0_52, %c0_53] : memref<4x1x4xf32, #tpu.memory_space<vmem>>, vector<1x1x4xf32>
    %62 = vector.shape_cast %61 : vector<1x1x4xf32> to vector<1x4xf32>
    %63 = vector.broadcast %62 : vector<1x4xf32> to vector<64x4xf32>
    %64 = arith.addf %60, %63 : vector<64x4xf32>
    "tpu.trace_start"() <{level = 10 : i32, message = "nd,kd->nk"}> : () -> ()
    %cst_54 = arith.constant dense<0.000000e+00> : vector<64x64xf32>
    %65 = tpu.matmul %50, %57, %cst_54 {dimension_numbers = #tpu.dot_dimension_numbers<[1], [1], [0], [0], [0, 0, 1, 0], [], []>} : vector<64x4xf32>, vector<64x4xf32>, vector<64x64xf32> -> vector<64x64xf32>
    "tpu.trace_stop"() : () -> ()
    %66 = arith.addf %65, %1 : vector<64x64xf32>
    %cst_55 = arith.constant dense<0xFF800000> : vector<64xf32>
    %67 = vector.multi_reduction <maximumf>, %66, %cst_55 [1] : vector<64x64xf32> to vector<64xf32>
    %68 = vector.shape_cast %67 : vector<64xf32> to vector<64x1xf32>
    %69 = vector.broadcast %68 : vector<64x1xf32> to vector<64x64xf32>
    %70 = arith.subf %66, %69 : vector<64x64xf32>
    %71 = math.exp %70 : vector<64x64xf32>
    %cst_56 = arith.constant dense<0.000000e+00> : vector<64xf32>
    %72 = vector.multi_reduction <add>, %71, %cst_56 [1] : vector<64x64xf32> to vector<64xf32>
    %73 = vector.shape_cast %72 : vector<64xf32> to vector<64x1xf32>
    %74 = vector.broadcast %73 : vector<64x1xf32> to vector<64x64xf32>
    %75 = arith.divf %71, %74 : vector<64x64xf32>
    %cst_57 = arith.constant dense<0.000000e+00> : vector<64x4xf32>
    %76 = tpu.matmul %75, %64, %cst_57 {dimension_numbers = #tpu.dot_dimension_numbers<[1], [0], [0], [1], [0, 0, 1, 1], [], []>} : vector<64x64xf32>, vector<64x4xf32>, vector<64x4xf32> -> vector<64x4xf32>
    %c1_58 = arith.constant 1 : index
    %c0_59 = arith.constant 0 : index
    %c0_60 = arith.constant 0 : index
    %77 = vector.load %arg8[%c1_58, %c0_59, %c0_60] : memref<4x4x16xf32, #tpu.memory_space<vmem>>, vector<1x4x16xf32>
    %78 = vector.shape_cast %77 : vector<1x4x16xf32> to vector<4x16xf32>
    %cst_61 = arith.constant dense<0.000000e+00> : vector<64x16xf32>
    %79 = tpu.matmul %76, %78, %cst_61 {dimension_numbers = #tpu.dot_dimension_numbers<[1], [0], [0], [1], [0, 0, 1, 1], [], []>} : vector<64x4xf32>, vector<4x16xf32>, vector<64x16xf32> -> vector<64x16xf32>
    %80 = arith.addf %41, %79 : vector<64x16xf32>
    %c2 = arith.constant 2 : index
    %c0_62 = arith.constant 0 : index
    %c0_63 = arith.constant 0 : index
    %81 = vector.load %arg2[%c2, %c0_62, %c0_63] : memref<4x16x4xf32, #tpu.memory_space<vmem>>, vector<1x16x4xf32>
    %82 = vector.shape_cast %81 : vector<1x16x4xf32> to vector<16x4xf32>
    %cst_64 = arith.constant dense<0.000000e+00> : vector<64x4xf32>
    %83 = tpu.matmul %0, %82, %cst_64 {dimension_numbers = #tpu.dot_dimension_numbers<[1], [0], [0], [1], [0, 0, 1, 1], [], []>} : vector<64x16xf32>, vector<16x4xf32>, vector<64x4xf32> -> vector<64x4xf32>
    %c2_65 = arith.constant 2 : index
    %c0_66 = arith.constant 0 : index
    %c0_67 = arith.constant 0 : index
    %84 = vector.load %arg5[%c2_65, %c0_66, %c0_67] : memref<4x1x4xf32, #tpu.memory_space<vmem>>, vector<1x1x4xf32>
    %85 = vector.shape_cast %84 : vector<1x1x4xf32> to vector<1x4xf32>
    %86 = vector.broadcast %85 : vector<1x4xf32> to vector<64x4xf32>
    %87 = arith.addf %83, %86 : vector<64x4xf32>
    %cst_68 = arith.constant 5.000000e-01 : f32
    %88 = vector.broadcast %cst_68 : f32 to vector<64x4xf32>
    %89 = arith.mulf %87, %88 : vector<64x4xf32>
    %c2_69 = arith.constant 2 : index
    %c0_70 = arith.constant 0 : index
    %c0_71 = arith.constant 0 : index
    %90 = vector.load %arg3[%c2_69, %c0_70, %c0_71] : memref<4x16x4xf32, #tpu.memory_space<vmem>>, vector<1x16x4xf32>
    %91 = vector.shape_cast %90 : vector<1x16x4xf32> to vector<16x4xf32>
    %cst_72 = arith.constant dense<0.000000e+00> : vector<64x4xf32>
    %92 = tpu.matmul %0, %91, %cst_72 {dimension_numbers = #tpu.dot_dimension_numbers<[1], [0], [0], [1], [0, 0, 1, 1], [], []>} : vector<64x16xf32>, vector<16x4xf32>, vector<64x4xf32> -> vector<64x4xf32>
    %c2_73 = arith.constant 2 : index
    %c0_74 = arith.constant 0 : index
    %c0_75 = arith.constant 0 : index
    %93 = vector.load %arg6[%c2_73, %c0_74, %c0_75] : memref<4x1x4xf32, #tpu.memory_space<vmem>>, vector<1x1x4xf32>
    %94 = vector.shape_cast %93 : vector<1x1x4xf32> to vector<1x4xf32>
    %95 = vector.broadcast %94 : vector<1x4xf32> to vector<64x4xf32>
    %96 = arith.addf %92, %95 : vector<64x4xf32>
    %c2_76 = arith.constant 2 : index
    %c0_77 = arith.constant 0 : index
    %c0_78 = arith.constant 0 : index
    %97 = vector.load %arg4[%c2_76, %c0_77, %c0_78] : memref<4x16x4xf32, #tpu.memory_space<vmem>>, vector<1x16x4xf32>
    %98 = vector.shape_cast %97 : vector<1x16x4xf32> to vector<16x4xf32>
    %cst_79 = arith.constant dense<0.000000e+00> : vector<64x4xf32>
    %99 = tpu.matmul %0, %98, %cst_79 {dimension_numbers = #tpu.dot_dimension_numbers<[1], [0], [0], [1], [0, 0, 1, 1], [], []>} : vector<64x16xf32>, vector<16x4xf32>, vector<64x4xf32> -> vector<64x4xf32>
    %c2_80 = arith.constant 2 : index
    %c0_81 = arith.constant 0 : index
    %c0_82 = arith.constant 0 : index
    %100 = vector.load %arg7[%c2_80, %c0_81, %c0_82] : memref<4x1x4xf32, #tpu.memory_space<vmem>>, vector<1x1x4xf32>
    %101 = vector.shape_cast %100 : vector<1x1x4xf32> to vector<1x4xf32>
    %102 = vector.broadcast %101 : vector<1x4xf32> to vector<64x4xf32>
    %103 = arith.addf %99, %102 : vector<64x4xf32>
    "tpu.trace_start"() <{level = 10 : i32, message = "nd,kd->nk"}> : () -> ()
    %cst_83 = arith.constant dense<0.000000e+00> : vector<64x64xf32>
    %104 = tpu.matmul %89, %96, %cst_83 {dimension_numbers = #tpu.dot_dimension_numbers<[1], [1], [0], [0], [0, 0, 1, 0], [], []>} : vector<64x4xf32>, vector<64x4xf32>, vector<64x64xf32> -> vector<64x64xf32>
    "tpu.trace_stop"() : () -> ()
    %105 = arith.addf %104, %1 : vector<64x64xf32>
    %cst_84 = arith.constant dense<0xFF800000> : vector<64xf32>
    %106 = vector.multi_reduction <maximumf>, %105, %cst_84 [1] : vector<64x64xf32> to vector<64xf32>
    %107 = vector.shape_cast %106 : vector<64xf32> to vector<64x1xf32>
    %108 = vector.broadcast %107 : vector<64x1xf32> to vector<64x64xf32>
    %109 = arith.subf %105, %108 : vector<64x64xf32>
    %110 = math.exp %109 : vector<64x64xf32>
    %cst_85 = arith.constant dense<0.000000e+00> : vector<64xf32>
    %111 = vector.multi_reduction <add>, %110, %cst_85 [1] : vector<64x64xf32> to vector<64xf32>
    %112 = vector.shape_cast %111 : vector<64xf32> to vector<64x1xf32>
    %113 = vector.broadcast %112 : vector<64x1xf32> to vector<64x64xf32>
    %114 = arith.divf %110, %113 : vector<64x64xf32>
    %cst_86 = arith.constant dense<0.000000e+00> : vector<64x4xf32>
    %115 = tpu.matmul %114, %103, %cst_86 {dimension_numbers = #tpu.dot_dimension_numbers<[1], [0], [0], [1], [0, 0, 1, 1], [], []>} : vector<64x64xf32>, vector<64x4xf32>, vector<64x4xf32> -> vector<64x4xf32>
    %c2_87 = arith.constant 2 : index
    %c0_88 = arith.constant 0 : index
    %c0_89 = arith.constant 0 : index
    %116 = vector.load %arg8[%c2_87, %c0_88, %c0_89] : memref<4x4x16xf32, #tpu.memory_space<vmem>>, vector<1x4x16xf32>
    %117 = vector.shape_cast %116 : vector<1x4x16xf32> to vector<4x16xf32>
    %cst_90 = arith.constant dense<0.000000e+00> : vector<64x16xf32>
    %118 = tpu.matmul %115, %117, %cst_90 {dimension_numbers = #tpu.dot_dimension_numbers<[1], [0], [0], [1], [0, 0, 1, 1], [], []>} : vector<64x4xf32>, vector<4x16xf32>, vector<64x16xf32> -> vector<64x16xf32>
    %119 = arith.addf %80, %118 : vector<64x16xf32>
    %c3 = arith.constant 3 : index
    %c0_91 = arith.constant 0 : index
    %c0_92 = arith.constant 0 : index
    %120 = vector.load %arg2[%c3, %c0_91, %c0_92] : memref<4x16x4xf32, #tpu.memory_space<vmem>>, vector<1x16x4xf32>
    %121 = vector.shape_cast %120 : vector<1x16x4xf32> to vector<16x4xf32>
    %cst_93 = arith.constant dense<0.000000e+00> : vector<64x4xf32>
    %122 = tpu.matmul %0, %121, %cst_93 {dimension_numbers = #tpu.dot_dimension_numbers<[1], [0], [0], [1], [0, 0, 1, 1], [], []>} : vector<64x16xf32>, vector<16x4xf32>, vector<64x4xf32> -> vector<64x4xf32>
    %c3_94 = arith.constant 3 : index
    %c0_95 = arith.constant 0 : index
    %c0_96 = arith.constant 0 : index
    %123 = vector.load %arg5[%c3_94, %c0_95, %c0_96] : memref<4x1x4xf32, #tpu.memory_space<vmem>>, vector<1x1x4xf32>
    %124 = vector.shape_cast %123 : vector<1x1x4xf32> to vector<1x4xf32>
    %125 = vector.broadcast %124 : vector<1x4xf32> to vector<64x4xf32>
    %126 = arith.addf %122, %125 : vector<64x4xf32>
    %cst_97 = arith.constant 5.000000e-01 : f32
    %127 = vector.broadcast %cst_97 : f32 to vector<64x4xf32>
    %128 = arith.mulf %126, %127 : vector<64x4xf32>
    %c3_98 = arith.constant 3 : index
    %c0_99 = arith.constant 0 : index
    %c0_100 = arith.constant 0 : index
    %129 = vector.load %arg3[%c3_98, %c0_99, %c0_100] : memref<4x16x4xf32, #tpu.memory_space<vmem>>, vector<1x16x4xf32>
    %130 = vector.shape_cast %129 : vector<1x16x4xf32> to vector<16x4xf32>
    %cst_101 = arith.constant dense<0.000000e+00> : vector<64x4xf32>
    %131 = tpu.matmul %0, %130, %cst_101 {dimension_numbers = #tpu.dot_dimension_numbers<[1], [0], [0], [1], [0, 0, 1, 1], [], []>} : vector<64x16xf32>, vector<16x4xf32>, vector<64x4xf32> -> vector<64x4xf32>
    %c3_102 = arith.constant 3 : index
    %c0_103 = arith.constant 0 : index
    %c0_104 = arith.constant 0 : index
    %132 = vector.load %arg6[%c3_102, %c0_103, %c0_104] : memref<4x1x4xf32, #tpu.memory_space<vmem>>, vector<1x1x4xf32>
    %133 = vector.shape_cast %132 : vector<1x1x4xf32> to vector<1x4xf32>
    %134 = vector.broadcast %133 : vector<1x4xf32> to vector<64x4xf32>
    %135 = arith.addf %131, %134 : vector<64x4xf32>
    %c3_105 = arith.constant 3 : index
    %c0_106 = arith.constant 0 : index
    %c0_107 = arith.constant 0 : index
    %136 = vector.load %arg4[%c3_105, %c0_106, %c0_107] : memref<4x16x4xf32, #tpu.memory_space<vmem>>, vector<1x16x4xf32>
    %137 = vector.shape_cast %136 : vector<1x16x4xf32> to vector<16x4xf32>
    %cst_108 = arith.constant dense<0.000000e+00> : vector<64x4xf32>
    %138 = tpu.matmul %0, %137, %cst_108 {dimension_numbers = #tpu.dot_dimension_numbers<[1], [0], [0], [1], [0, 0, 1, 1], [], []>} : vector<64x16xf32>, vector<16x4xf32>, vector<64x4xf32> -> vector<64x4xf32>
    %c3_109 = arith.constant 3 : index
    %c0_110 = arith.constant 0 : index
    %c0_111 = arith.constant 0 : index
    %139 = vector.load %arg7[%c3_109, %c0_110, %c0_111] : memref<4x1x4xf32, #tpu.memory_space<vmem>>, vector<1x1x4xf32>
    %140 = vector.shape_cast %139 : vector<1x1x4xf32> to vector<1x4xf32>
    %141 = vector.broadcast %140 : vector<1x4xf32> to vector<64x4xf32>
    %142 = arith.addf %138, %141 : vector<64x4xf32>
    "tpu.trace_start"() <{level = 10 : i32, message = "nd,kd->nk"}> : () -> ()
    %cst_112 = arith.constant dense<0.000000e+00> : vector<64x64xf32>
    %143 = tpu.matmul %128, %135, %cst_112 {dimension_numbers = #tpu.dot_dimension_numbers<[1], [1], [0], [0], [0, 0, 1, 0], [], []>} : vector<64x4xf32>, vector<64x4xf32>, vector<64x64xf32> -> vector<64x64xf32>
    "tpu.trace_stop"() : () -> ()
    %144 = arith.addf %143, %1 : vector<64x64xf32>
    %cst_113 = arith.constant dense<0xFF800000> : vector<64xf32>
    %145 = vector.multi_reduction <maximumf>, %144, %cst_113 [1] : vector<64x64xf32> to vector<64xf32>
    %146 = vector.shape_cast %145 : vector<64xf32> to vector<64x1xf32>
    %147 = vector.broadcast %146 : vector<64x1xf32> to vector<64x64xf32>
    %148 = arith.subf %144, %147 : vector<64x64xf32>
    %149 = math.exp %148 : vector<64x64xf32>
    %cst_114 = arith.constant dense<0.000000e+00> : vector<64xf32>
    %150 = vector.multi_reduction <add>, %149, %cst_114 [1] : vector<64x64xf32> to vector<64xf32>
    %151 = vector.shape_cast %150 : vector<64xf32> to vector<64x1xf32>
    %152 = vector.broadcast %151 : vector<64x1xf32> to vector<64x64xf32>
    %153 = arith.divf %149, %152 : vector<64x64xf32>
    %cst_115 = arith.constant dense<0.000000e+00> : vector<64x4xf32>
    %154 = tpu.matmul %153, %142, %cst_115 {dimension_numbers = #tpu.dot_dimension_numbers<[1], [0], [0], [1], [0, 0, 1, 1], [], []>} : vector<64x64xf32>, vector<64x4xf32>, vector<64x4xf32> -> vector<64x4xf32>
    %c3_116 = arith.constant 3 : index
    %c0_117 = arith.constant 0 : index
    %c0_118 = arith.constant 0 : index
    %155 = vector.load %arg8[%c3_116, %c0_117, %c0_118] : memref<4x4x16xf32, #tpu.memory_space<vmem>>, vector<1x4x16xf32>
    %156 = vector.shape_cast %155 : vector<1x4x16xf32> to vector<4x16xf32>
    %cst_119 = arith.constant dense<0.000000e+00> : vector<64x16xf32>
    %157 = tpu.matmul %154, %156, %cst_119 {dimension_numbers = #tpu.dot_dimension_numbers<[1], [0], [0], [1], [0, 0, 1, 1], [], []>} : vector<64x4xf32>, vector<4x16xf32>, vector<64x16xf32> -> vector<64x16xf32>
    %158 = arith.addf %119, %157 : vector<64x16xf32>
    %c0_120 = arith.constant 0 : index
    %c0_121 = arith.constant 0 : index
    %159 = vector.load %arg9[%c0_120, %c0_121] : memref<1x16xf32, #tpu.memory_space<vmem>>, vector<1x16xf32>
    %160 = vector.broadcast %159 : vector<1x16xf32> to vector<64x16xf32>
    %161 = arith.addf %158, %160 : vector<64x16xf32>
    %c0_122 = arith.constant 0 : index
    %c0_123 = arith.constant 0 : index
    %162 = vector.load %arg10[%c0_122, %c0_123] : memref<64x16xf32, #tpu.memory_space<vmem>>, vector<64x16xf32>
    tpu.vector_store %arg10[%c0_122, %c0_123], %161 {strides = array<i32>} : memref<64x16xf32, #tpu.memory_space<vmem>>, vector<64x16xf32>,
    return
  }
}

module attributes {stable_mosaic.version = 11 : i64} {
  func.func @_fused_path_kernel(%arg0: memref<64x16xf32, #tpu.memory_space<vmem>>, %arg1: memref<64x16xf32, #tpu.memory_space<vmem>>, %arg2: memref<1x16xf32, #tpu.memory_space<vmem>>, %arg3: memref<1x16xf32, #tpu.memory_space<vmem>>, %arg4: memref<3x16x16xf32, #tpu.memory_space<vmem>>, %arg5: memref<3x16x16xf32, #tpu.memory_space<vmem>>, %arg6: memref<3x1x16xf32, #tpu.memory_space<vmem>>, %arg7: memref<3x16x16xf32, #tpu.memory_space<vmem>>, %arg8: memref<3x1x16xf32, #tpu.memory_space<vmem>>, %arg9: memref<3x16x16xf32, #tpu.memory_space<vmem>>, %arg10: memref<3x1x16xf32, #tpu.memory_space<vmem>>, %arg11: memref<3x16x16xf32, #tpu.memory_space<vmem>>, %arg12: memref<3x1x16xf32, #tpu.memory_space<vmem>>, %arg13: memref<16x16xf32, #tpu.memory_space<vmem>>, %arg14: memref<1x16xf32, #tpu.memory_space<vmem>>, %arg15: memref<1x16xf32, #tpu.memory_space<vmem>>, %arg16: memref<1x16xf32, #tpu.memory_space<vmem>>, %arg17: memref<64x16xf32, #tpu.memory_space<vmem>>, %arg18: memref<16x16xf32, #tpu.memory_space<vmem>>) attributes {dimension_semantics = [], scalar_prefetch = 0 : i64, scratch_operands = 1 : i64, tpu.core_type = #tpu.core_type<tc>} {
    %c0 = arith.constant 0 : index
    %c0_0 = arith.constant 0 : index
    %0 = vector.load %arg1[%c0, %c0_0] : memref<64x16xf32, #tpu.memory_space<vmem>>, vector<64x16xf32>
    %cst = arith.constant dense<0.000000e+00> : vector<64xf32>
    %1 = vector.multi_reduction <add>, %0, %cst [1] : vector<64x16xf32> to vector<64xf32>
    %2 = vector.shape_cast %1 : vector<64xf32> to vector<64x1xf32>
    %cst_1 = arith.constant 1.600000e+01 : f32
    %3 = vector.broadcast %cst_1 : f32 to vector<64x1xf32>
    %4 = arith.divf %2, %3 : vector<64x1xf32>
    %5 = vector.broadcast %4 : vector<64x1xf32> to vector<64x16xf32>
    %6 = arith.subf %0, %5 : vector<64x16xf32>
    %7 = arith.mulf %6, %6 : vector<64x16xf32>
    %cst_2 = arith.constant dense<0.000000e+00> : vector<64xf32>
    %8 = vector.multi_reduction <add>, %7, %cst_2 [1] : vector<64x16xf32> to vector<64xf32>
    %9 = vector.shape_cast %8 : vector<64xf32> to vector<64x1xf32>
    %cst_3 = arith.constant 1.600000e+01 : f32
    %10 = vector.broadcast %cst_3 : f32 to vector<64x1xf32>
    %11 = arith.divf %9, %10 : vector<64x1xf32>
    %12 = vector.broadcast %4 : vector<64x1xf32> to vector<64x16xf32>
    %13 = arith.subf %0, %12 : vector<64x16xf32>
    %cst_4 = arith.constant 9.99999974E-6 : f32
    %14 = vector.broadcast %cst_4 : f32 to vector<64x1xf32>
    %15 = arith.addf %11, %14 : vector<64x1xf32>
    %16 = math.rsqrt %15 : vector<64x1xf32>
    %17 = vector.broadcast %16 : vector<64x1xf32> to vector<64x16xf32>
    %18 = arith.mulf %13, %17 : vector<64x16xf32>
    %c0_5 = arith.constant 0 : index
    %c0_6 = arith.constant 0 : index
    %19 = vector.load %arg2[%c0_5, %c0_6] : memref<1x16xf32, #tpu.memory_space<vmem>>, vector<1x16xf32>
    %20 = vector.broadcast %19 : vector<1x16xf32> to vector<64x16xf32>
    %21 = arith.mulf %18, %20 : vector<64x16xf32>
    %c0_7 = arith.constant 0 : index
    %c0_8 = arith.constant 0 : index
    %22 = vector.load %arg3[%c0_7, %c0_8] : memref<1x16xf32, #tpu.memory_space<vmem>>, vector<1x16xf32>
    %23 = vector.broadcast %22 : vector<1x16xf32> to vector<64x16xf32>
    %24 = arith.addf %21, %23 : vector<64x16xf32>
    %c0_9 = arith.constant 0 : index
    %c0_10 = arith.constant 0 : index
    %25 = vector.load %arg0[%c0_9, %c0_10] : memref<64x16xf32, #tpu.memory_space<vmem>>, vector<64x16xf32>
    %26 = arith.addf %25, %24 : vector<64x16xf32>
    %27 = vector.extract_strided_slice %26 {offsets = [0, 0], sizes = [16, 16], strides = [1, 1]} : vector<64x16xf32> to vector<16x16xf32>
    %28 = vector.extract_strided_slice %26 {offsets = [16, 0], sizes = [16, 16], strides = [1, 1]} : vector<64x16xf32> to vector<16x16xf32>
    %29 = vector.extract_strided_slice %26 {offsets = [32, 0], sizes = [16, 16], strides = [1, 1]} : vector<64x16xf32> to vector<16x16xf32>
    %30 = vector.extract_strided_slice %26 {offsets = [48, 0], sizes = [16, 16], strides = [1, 1]} : vector<64x16xf32> to vector<16x16xf32>
    %31 = arith.maximumf %27, %28 : vector<16x16xf32>
    %32 = arith.maximumf %31, %29 : vector<16x16xf32>
    %33 = arith.maximumf %32, %30 : vector<16x16xf32>
    %34 = arith.subf %27, %33 : vector<16x16xf32>
    %35 = math.exp %34 : vector<16x16xf32>
    %36 = arith.subf %28, %33 : vector<16x16xf32>
    %37 = math.exp %36 : vector<16x16xf32>
    %38 = arith.subf %29, %33 : vector<16x16xf32>
    %39 = math.exp %38 : vector<16x16xf32>
    %40 = arith.subf %30, %33 : vector<16x16xf32>
    %41 = math.exp %40 : vector<16x16xf32>
    %cst_11 = arith.constant 0.000000e+00 : f32
    %42 = vector.broadcast %cst_11 : f32 to vector<16x16xf32>
    %43 = arith.addf %42, %35 : vector<16x16xf32>
    %44 = arith.addf %43, %37 : vector<16x16xf32>
    %45 = arith.addf %44, %39 : vector<16x16xf32>
    %46 = arith.addf %45, %41 : vector<16x16xf32>
    %cst_12 = arith.constant 1.000000e+00 : f32
    %47 = vector.broadcast %cst_12 : f32 to vector<16x16xf32>
    %48 = arith.divf %47, %46 : vector<16x16xf32>
    %49 = arith.mulf %35, %27 : vector<16x16xf32>
    %cst_13 = arith.constant 0.000000e+00 : f32
    %50 = vector.broadcast %cst_13 : f32 to vector<16x16xf32>
    %51 = arith.addf %50, %49 : vector<16x16xf32>
    %52 = arith.mulf %37, %28 : vector<16x16xf32>
    %53 = arith.addf %51, %52 : vector<16x16xf32>
    %54 = arith.mulf %39, %29 : vector<16x16xf32>
    %55 = arith.addf %53, %54 : vector<16x16xf32>
    %56 = arith.mulf %41, %30 : vector<16x16xf32>
    %57 = arith.addf %55, %56 : vector<16x16xf32>
    %58 = arith.mulf %57, %48 : vector<16x16xf32>
    %59 = arith.subf %27, %58 : vector<16x16xf32>
    %60 = arith.mulf %59, %59 : vector<16x16xf32>
    %61 = arith.mulf %35, %60 : vector<16x16xf32>
    %cst_14 = arith.constant 0.000000e+00 : f32
    %62 = vector.broadcast %cst_14 : f32 to vector<16x16xf32>
    %63 = arith.addf %62, %61 : vector<16x16xf32>
    %64 = arith.subf %28, %58 : vector<16x16xf32>
    %65 = arith.mulf %64, %64 : vector<16x16xf32>
    %66 = arith.mulf %37, %65 : vector<16x16xf32>
    %67 = arith.addf %63, %66 : vector<16x16xf32>
    %68 = arith.subf %29, %58 : vector<16x16xf32>
    %69 = arith.mulf %68, %68 : vector<16x16xf32>
    %70 = arith.mulf %39, %69 : vector<16x16xf32>
    %71 = arith.addf %67, %70 : vector<16x16xf32>
    %72 = arith.subf %30, %58 : vector<16x16xf32>
    %73 = arith.mulf %72, %72 : vector<16x16xf32>
    %74 = arith.mulf %41, %73 : vector<16x16xf32>
    %75 = arith.addf %71, %74 : vector<16x16xf32>
    %76 = arith.mulf %75, %48 : vector<16x16xf32>
    %cst_15 = arith.constant 9.99999974E-6 : f32
    %77 = vector.broadcast %cst_15 : f32 to vector<16x16xf32>
    %78 = arith.addf %76, %77 : vector<16x16xf32>
    %79 = math.sqrt %78 : vector<16x16xf32>
    %c0_16 = arith.constant 0 : index
    %c0_17 = arith.constant 0 : index
    %c0_18 = arith.constant 0 : index
    %80 = vector.load %arg4[%c0_16, %c0_17, %c0_18] : memref<3x16x16xf32, #tpu.memory_space<vmem>>, vector<1x16x16xf32>
    %81 = vector.shape_cast %80 : vector<1x16x16xf32> to vector<16x16xf32>
    %cst_19 = arith.constant dense<0.000000e+00> : vector<16x16xf32>
    %82 = tpu.matmul %58, %81, %cst_19 {dimension_numbers = #tpu.dot_dimension_numbers<[1], [0], [0], [1], [0, 0, 1, 1], [], []>} : vector<16x16xf32>, vector<16x16xf32>, vector<16x16xf32> -> vector<16x16xf32>
    %c0_20 = arith.constant 0 : index
    %c0_21 = arith.constant 0 : index
    %c0_22 = arith.constant 0 : index
    %83 = vector.load %arg5[%c0_20, %c0_21, %c0_22] : memref<3x16x16xf32, #tpu.memory_space<vmem>>, vector<1x16x16xf32>
    %84 = vector.shape_cast %83 : vector<1x16x16xf32> to vector<16x16xf32>
    %cst_23 = arith.constant dense<0.000000e+00> : vector<16x16xf32>
    %85 = tpu.matmul %79, %84, %cst_23 {dimension_numbers = #tpu.dot_dimension_numbers<[1], [0], [0], [1], [0, 0, 1, 1], [], []>} : vector<16x16xf32>, vector<16x16xf32>, vector<16x16xf32> -> vector<16x16xf32>
    %86 = arith.addf %82, %85 : vector<16x16xf32>
    %c0_24 = arith.constant 0 : index
    %c0_25 = arith.constant 0 : index
    %c0_26 = arith.constant 0 : index
    %87 = vector.load %arg6[%c0_24, %c0_25, %c0_26] : memref<3x1x16xf32, #tpu.memory_space<vmem>>, vector<1x1x16xf32>
    %88 = vector.shape_cast %87 : vector<1x1x16xf32> to vector<1x16xf32>
    %89 = vector.broadcast %88 : vector<1x16xf32> to vector<16x16xf32>
    %90 = arith.addf %86, %89 : vector<16x16xf32>
    %c1 = arith.constant 1 : index
    %c0_27 = arith.constant 0 : index
    %c0_28 = arith.constant 0 : index
    %91 = vector.load %arg4[%c1, %c0_27, %c0_28] : memref<3x16x16xf32, #tpu.memory_space<vmem>>, vector<1x16x16xf32>
    %92 = vector.shape_cast %91 : vector<1x16x16xf32> to vector<16x16xf32>
    %cst_29 = arith.constant dense<0.000000e+00> : vector<16x16xf32>
    %93 = tpu.matmul %58, %92, %cst_29 {dimension_numbers = #tpu.dot_dimension_numbers<[1], [0], [0], [1], [0, 0, 1, 1], [], []>} : vector<16x16xf32>, vector<16x16xf32>, vector<16x16xf32> -> vector<16x16xf32>
    %c1_30 = arith.constant 1 : index
    %c0_31 = arith.constant 0 : index
    %c0_32 = arith.constant 0 : index
    %94 = vector.load %arg5[%c1_30, %c0_31, %c0_32] : memref<3x16x16xf32, #tpu.memory_space<vmem>>, vector<1x16x16xf32>
    %95 = vector.shape_cast %94 : vector<1x16x16xf32> to vector<16x16xf32>
    %cst_33 = arith.constant dense<0.000000e+00> : vector<16x16xf32>
    %96 = tpu.matmul %79, %95, %cst_33 {dimension_numbers = #tpu.dot_dimension_numbers<[1], [0], [0], [1], [0, 0, 1, 1], [], []>} : vector<16x16xf32>, vector<16x16xf32>, vector<16x16xf32> -> vector<16x16xf32>
    %97 = arith.addf %93, %96 : vector<16x16xf32>
    %c1_34 = arith.constant 1 : index
    %c0_35 = arith.constant 0 : index
    %c0_36 = arith.constant 0 : index
    %98 = vector.load %arg6[%c1_34, %c0_35, %c0_36] : memref<3x1x16xf32, #tpu.memory_space<vmem>>, vector<1x1x16xf32>
    %99 = vector.shape_cast %98 : vector<1x1x16xf32> to vector<1x16xf32>
    %100 = vector.broadcast %99 : vector<1x16xf32> to vector<16x16xf32>
    %101 = arith.addf %97, %100 : vector<16x16xf32>
    %c2 = arith.constant 2 : index
    %c0_37 = arith.constant 0 : index
    %c0_38 = arith.constant 0 : index
    %102 = vector.load %arg4[%c2, %c0_37, %c0_38] : memref<3x16x16xf32, #tpu.memory_space<vmem>>, vector<1x16x16xf32>
    %103 = vector.shape_cast %102 : vector<1x16x16xf32> to vector<16x16xf32>
    %cst_39 = arith.constant dense<0.000000e+00> : vector<16x16xf32>
    %104 = tpu.matmul %58, %103, %cst_39 {dimension_numbers = #tpu.dot_dimension_numbers<[1], [0], [0], [1], [0, 0, 1, 1], [], []>} : vector<16x16xf32>, vector<16x16xf32>, vector<16x16xf32> -> vector<16x16xf32>
    %c2_40 = arith.constant 2 : index
    %c0_41 = arith.constant 0 : index
    %c0_42 = arith.constant 0 : index
    %105 = vector.load %arg5[%c2_40, %c0_41, %c0_42] : memref<3x16x16xf32, #tpu.memory_space<vmem>>, vector<1x16x16xf32>
    %106 = vector.shape_cast %105 : vector<1x16x16xf32> to vector<16x16xf32>
    %cst_43 = arith.constant dense<0.000000e+00> : vector<16x16xf32>
    %107 = tpu.matmul %79, %106, %cst_43 {dimension_numbers = #tpu.dot_dimension_numbers<[1], [0], [0], [1], [0, 0, 1, 1], [], []>} : vector<16x16xf32>, vector<16x16xf32>, vector<16x16xf32> -> vector<16x16xf32>
    %108 = arith.addf %104, %107 : vector<16x16xf32>
    %c2_44 = arith.constant 2 : index
    %c0_45 = arith.constant 0 : index
    %c0_46 = arith.constant 0 : index
    %109 = vector.load %arg6[%c2_44, %c0_45, %c0_46] : memref<3x1x16xf32, #tpu.memory_space<vmem>>, vector<1x1x16xf32>
    %110 = vector.shape_cast %109 : vector<1x1x16xf32> to vector<1x16xf32>
    %111 = vector.broadcast %110 : vector<1x16xf32> to vector<16x16xf32>
    %112 = arith.addf %108, %111 : vector<16x16xf32>
    %cst_47 = arith.constant 0.000000e+00 : f32
    %113 = vector.broadcast %cst_47 : f32 to vector<2x16xf32>
    %cst_48 = arith.constant 0.000000e+00 : f32
    %114 = vector.broadcast %cst_48 : f32 to vector<2x16xf32>
    %c0_49 = arith.constant 0 : index
    %c0_50 = arith.constant 0 : index
    %c0_51 = arith.constant 0 : index
    %115 = vector.load %arg7[%c0_49, %c0_50, %c0_51] : memref<3x16x16xf32, #tpu.memory_space<vmem>>, vector<1x16x16xf32>
    %116 = vector.shape_cast %115 : vector<1x16x16xf32> to vector<16x16xf32>
    %cst_52 = arith.constant dense<0.000000e+00> : vector<2x16xf32>
    %117 = tpu.matmul %113, %116, %cst_52 {dimension_numbers = #tpu.dot_dimension_numbers<[1], [0], [0], [1], [0, 0, 1, 1], [], []>} : vector<2x16xf32>, vector<16x16xf32>, vector<2x16xf32> -> vector<2x16xf32>
    %c0_53 = arith.constant 0 : index
    %c0_54 = arith.constant 0 : index
    %c0_55 = arith.constant 0 : index
    %118 = vector.load %arg8[%c0_53, %c0_54, %c0_55] : memref<3x1x16xf32, #tpu.memory_space<vmem>>, vector<1x1x16xf32>
    %119 = vector.shape_cast %118 : vector<1x1x16xf32> to vector<1x16xf32>
    %120 = vector.broadcast %119 : vector<1x16xf32> to vector<2x16xf32>
    %121 = arith.addf %117, %120 : vector<2x16xf32>
    %c1_56 = arith.constant 1 : index
    %c0_57 = arith.constant 0 : index
    %c0_58 = arith.constant 0 : index
    %122 = vector.load %arg7[%c1_56, %c0_57, %c0_58] : memref<3x16x16xf32, #tpu.memory_space<vmem>>, vector<1x16x16xf32>
    %123 = vector.shape_cast %122 : vector<1x16x16xf32> to vector<16x16xf32>
    %cst_59 = arith.constant dense<0.000000e+00> : vector<2x16xf32>
    %124 = tpu.matmul %113, %123, %cst_59 {dimension_numbers = #tpu.dot_dimension_numbers<[1], [0], [0], [1], [0, 0, 1, 1], [], []>} : vector<2x16xf32>, vector<16x16xf32>, vector<2x16xf32> -> vector<2x16xf32>
    %c1_60 = arith.constant 1 : index
    %c0_61 = arith.constant 0 : index
    %c0_62 = arith.constant 0 : index
    %125 = vector.load %arg8[%c1_60, %c0_61, %c0_62] : memref<3x1x16xf32, #tpu.memory_space<vmem>>, vector<1x1x16xf32>
    %126 = vector.shape_cast %125 : vector<1x1x16xf32> to vector<1x16xf32>
    %127 = vector.broadcast %126 : vector<1x16xf32> to vector<2x16xf32>
    %128 = arith.addf %124, %127 : vector<2x16xf32>
    %c2_63 = arith.constant 2 : index
    %c0_64 = arith.constant 0 : index
    %c0_65 = arith.constant 0 : index
    %129 = vector.load %arg7[%c2_63, %c0_64, %c0_65] : memref<3x16x16xf32, #tpu.memory_space<vmem>>, vector<1x16x16xf32>
    %130 = vector.shape_cast %129 : vector<1x16x16xf32> to vector<16x16xf32>
    %cst_66 = arith.constant dense<0.000000e+00> : vector<2x16xf32>
    %131 = tpu.matmul %113, %130, %cst_66 {dimension_numbers = #tpu.dot_dimension_numbers<[1], [0], [0], [1], [0, 0, 1, 1], [], []>} : vector<2x16xf32>, vector<16x16xf32>, vector<2x16xf32> -> vector<2x16xf32>
    %c2_67 = arith.constant 2 : index
    %c0_68 = arith.constant 0 : index
    %c0_69 = arith.constant 0 : index
    %132 = vector.load %arg8[%c2_67, %c0_68, %c0_69] : memref<3x1x16xf32, #tpu.memory_space<vmem>>, vector<1x1x16xf32>
    %133 = vector.shape_cast %132 : vector<1x1x16xf32> to vector<1x16xf32>
    %134 = vector.broadcast %133 : vector<1x16xf32> to vector<2x16xf32>
    %135 = arith.addf %131, %134 : vector<2x16xf32>
    %136 = vector.extract_strided_slice %90 {offsets = [0, 0], sizes = [2, 16], strides = [1, 1]} : vector<16x16xf32> to vector<2x16xf32>
    %137 = arith.addf %136, %121 : vector<2x16xf32>
    %cst_70 = arith.constant 0.000000e+00 : f32
    %138 = vector.broadcast %cst_70 : f32 to vector<2x16xf32>
    %139 = arith.subf %138, %137 : vector<2x16xf32>
    %140 = math.exp %139 : vector<2x16xf32>
    %cst_71 = arith.constant 1.000000e+00 : f32
    %141 = vector.broadcast %cst_71 : f32 to vector<2x16xf32>
    %142 = arith.addf %141, %140 : vector<2x16xf32>
    %cst_72 = arith.constant 1.000000e+00 : f32
    %143 = vector.broadcast %cst_72 : f32 to vector<2x16xf32>
    %144 = arith.divf %143, %142 : vector<2x16xf32>
    %145 = vector.extract_strided_slice %101 {offsets = [0, 0], sizes = [2, 16], strides = [1, 1]} : vector<16x16xf32> to vector<2x16xf32>
    %146 = arith.addf %145, %128 : vector<2x16xf32>
    %cst_73 = arith.constant 0.000000e+00 : f32
    %147 = vector.broadcast %cst_73 : f32 to vector<2x16xf32>
    %148 = arith.subf %147, %146 : vector<2x16xf32>
    %149 = math.exp %148 : vector<2x16xf32>
    %cst_74 = arith.constant 1.000000e+00 : f32
    %150 = vector.broadcast %cst_74 : f32 to vector<2x16xf32>
    %151 = arith.addf %150, %149 : vector<2x16xf32>
    %cst_75 = arith.constant 1.000000e+00 : f32
    %152 = vector.broadcast %cst_75 : f32 to vector<2x16xf32>
    %153 = arith.divf %152, %151 : vector<2x16xf32>
    %154 = vector.extract_strided_slice %112 {offsets = [0, 0], sizes = [2, 16], strides = [1, 1]} : vector<16x16xf32> to vector<2x16xf32>
    %155 = arith.mulf %144, %135 : vector<2x16xf32>
    %156 = arith.addf %154, %155 : vector<2x16xf32>
    %157 = math.tanh %156 : vector<2x16xf32>
    %cst_76 = arith.constant 1.000000e+00 : f32
    %158 = vector.broadcast %cst_76 : f32 to vector<2x16xf32>
    %159 = arith.subf %158, %153 : vector<2x16xf32>
    %160 = arith.mulf %159, %157 : vector<2x16xf32>
    %161 = arith.mulf %153, %113 : vector<2x16xf32>
    %162 = arith.addf %160, %161 : vector<2x16xf32>
    %c0_77 = arith.constant 0 : index
    %c0_78 = arith.constant 0 : index
    %c0_79 = arith.constant 0 : index
    %163 = vector.load %arg9[%c0_77, %c0_78, %c0_79] : memref<3x16x16xf32, #tpu.memory_space<vmem>>, vector<1x16x16xf32>
    %164 = vector.shape_cast %163 : vector<1x16x16xf32> to vector<16x16xf32>
    %cst_80 = arith.constant dense<0.000000e+00> : vector<2x16xf32>
    %165 = tpu.matmul %162, %164, %cst_80 {dimension_numbers = #tpu.dot_dimension_numbers<[1], [0], [0], [1], [0, 0, 1, 1], [], []>} : vector<2x16xf32>, vector<16x16xf32>, vector<2x16xf32> -> vector<2x16xf32>
    %c0_81 = arith.constant 0 : index
    %c0_82 = arith.constant 0 : index
    %c0_83 = arith.constant 0 : index
    %166 = vector.load %arg10[%c0_81, %c0_82, %c0_83] : memref<3x1x16xf32, #tpu.memory_space<vmem>>, vector<1x1x16xf32>
    %167 = vector.shape_cast %166 : vector<1x1x16xf32> to vector<1x16xf32>
    %168 = vector.broadcast %167 : vector<1x16xf32> to vector<2x16xf32>
    %169 = arith.addf %165, %168 : vector<2x16xf32>
    %c1_84 = arith.constant 1 : index
    %c0_85 = arith.constant 0 : index
    %c0_86 = arith.constant 0 : index
    %170 = vector.load %arg9[%c1_84, %c0_85, %c0_86] : memref<3x16x16xf32, #tpu.memory_space<vmem>>, vector<1x16x16xf32>
    %171 = vector.shape_cast %170 : vector<1x16x16xf32> to vector<16x16xf32>
    %cst_87 = arith.constant dense<0.000000e+00> : vector<2x16xf32>
    %172 = tpu.matmul %162, %171, %cst_87 {dimension_numbers = #tpu.dot_dimension_numbers<[1], [0], [0], [1], [0, 0, 1, 1], [], []>} : vector<2x16xf32>, vector<16x16xf32>, vector<2x16xf32> -> vector<2x16xf32>
    %c1_88 = arith.constant 1 : index
    %c0_89 = arith.constant 0 : index
    %c0_90 = arith.constant 0 : index
    %173 = vector.load %arg10[%c1_88, %c0_89, %c0_90] : memref<3x1x16xf32, #tpu.memory_space<vmem>>, vector<1x1x16xf32>
    %174 = vector.shape_cast %173 : vector<1x1x16xf32> to vector<1x16xf32>
    %175 = vector.broadcast %174 : vector<1x16xf32> to vector<2x16xf32>
    %176 = arith.addf %172, %175 : vector<2x16xf32>
    %c2_91 = arith.constant 2 : index
    %c0_92 = arith.constant 0 : index
    %c0_93 = arith.constant 0 : index
    %177 = vector.load %arg9[%c2_91, %c0_92, %c0_93] : memref<3x16x16xf32, #tpu.memory_space<vmem>>, vector<1x16x16xf32>
    %178 = vector.shape_cast %177 : vector<1x16x16xf32> to vector<16x16xf32>
    %cst_94 = arith.constant dense<0.000000e+00> : vector<2x16xf32>
    %179 = tpu.matmul %162, %178, %cst_94 {dimension_numbers = #tpu.dot_dimension_numbers<[1], [0], [0], [1], [0, 0, 1, 1], [], []>} : vector<2x16xf32>, vector<16x16xf32>, vector<2x16xf32> -> vector<2x16xf32>
    %c2_95 = arith.constant 2 : index
    %c0_96 = arith.constant 0 : index
    %c0_97 = arith.constant 0 : index
    %180 = vector.load %arg10[%c2_95, %c0_96, %c0_97] : memref<3x1x16xf32, #tpu.memory_space<vmem>>, vector<1x1x16xf32>
    %181 = vector.shape_cast %180 : vector<1x1x16xf32> to vector<1x16xf32>
    %182 = vector.broadcast %181 : vector<1x16xf32> to vector<2x16xf32>
    %183 = arith.addf %179, %182 : vector<2x16xf32>
    %c0_98 = arith.constant 0 : index
    %c0_99 = arith.constant 0 : index
    %c0_100 = arith.constant 0 : index
    %184 = vector.load %arg11[%c0_98, %c0_99, %c0_100] : memref<3x16x16xf32, #tpu.memory_space<vmem>>, vector<1x16x16xf32>
    %185 = vector.shape_cast %184 : vector<1x16x16xf32> to vector<16x16xf32>
    %cst_101 = arith.constant dense<0.000000e+00> : vector<2x16xf32>
    %186 = tpu.matmul %114, %185, %cst_101 {dimension_numbers = #tpu.dot_dimension_numbers<[1], [0], [0], [1], [0, 0, 1, 1], [], []>} : vector<2x16xf32>, vector<16x16xf32>, vector<2x16xf32> -> vector<2x16xf32>
    %c0_102 = arith.constant 0 : index
    %c0_103 = arith.constant 0 : index
    %c0_104 = arith.constant 0 : index
    %187 = vector.load %arg12[%c0_102, %c0_103, %c0_104] : memref<3x1x16xf32, #tpu.memory_space<vmem>>, vector<1x1x16xf32>
    %188 = vector.shape_cast %187 : vector<1x1x16xf32> to vector<1x16xf32>
    %189 = vector.broadcast %188 : vector<1x16xf32> to vector<2x16xf32>
    %190 = arith.addf %186, %189 : vector<2x16xf32>
    %c1_105 = arith.constant 1 : index
    %c0_106 = arith.constant 0 : index
    %c0_107 = arith.constant 0 : index
    %191 = vector.load %arg11[%c1_105, %c0_106, %c0_107] : memref<3x16x16xf32, #tpu.memory_space<vmem>>, vector<1x16x16xf32>
    %192 = vector.shape_cast %191 : vector<1x16x16xf32> to vector<16x16xf32>
    %cst_108 = arith.constant dense<0.000000e+00> : vector<2x16xf32>
    %193 = tpu.matmul %114, %192, %cst_108 {dimension_numbers = #tpu.dot_dimension_numbers<[1], [0], [0], [1], [0, 0, 1, 1], [], []>} : vector<2x16xf32>, vector<16x16xf32>, vector<2x16xf32> -> vector<2x16xf32>
    %c1_109 = arith.constant 1 : index
    %c0_110 = arith.constant 0 : index
    %c0_111 = arith.constant 0 : index
    %194 = vector.load %arg12[%c1_109, %c0_110, %c0_111] : memref<3x1x16xf32, #tpu.memory_space<vmem>>, vector<1x1x16xf32>
    %195 = vector.shape_cast %194 : vector<1x1x16xf32> to vector<1x16xf32>
    %196 = vector.broadcast %195 : vector<1x16xf32> to vector<2x16xf32>
    %197 = arith.addf %193, %196 : vector<2x16xf32>
    %c2_112 = arith.constant 2 : index
    %c0_113 = arith.constant 0 : index
    %c0_114 = arith.constant 0 : index
    %198 = vector.load %arg11[%c2_112, %c0_113, %c0_114] : memref<3x16x16xf32, #tpu.memory_space<vmem>>, vector<1x16x16xf32>
    %199 = vector.shape_cast %198 : vector<1x16x16xf32> to vector<16x16xf32>
    %cst_115 = arith.constant dense<0.000000e+00> : vector<2x16xf32>
    %200 = tpu.matmul %114, %199, %cst_115 {dimension_numbers = #tpu.dot_dimension_numbers<[1], [0], [0], [1], [0, 0, 1, 1], [], []>} : vector<2x16xf32>, vector<16x16xf32>, vector<2x16xf32> -> vector<2x16xf32>
    %c2_116 = arith.constant 2 : index
    %c0_117 = arith.constant 0 : index
    %c0_118 = arith.constant 0 : index
    %201 = vector.load %arg12[%c2_116, %c0_117, %c0_118] : memref<3x1x16xf32, #tpu.memory_space<vmem>>, vector<1x1x16xf32>
    %202 = vector.shape_cast %201 : vector<1x1x16xf32> to vector<1x16xf32>
    %203 = vector.broadcast %202 : vector<1x16xf32> to vector<2x16xf32>
    %204 = arith.addf %200, %203 : vector<2x16xf32>
    %205 = arith.addf %169, %190 : vector<2x16xf32>
    %cst_119 = arith.constant 0.000000e+00 : f32
    %206 = vector.broadcast %cst_119 : f32 to vector<2x16xf32>
    %207 = arith.subf %206, %205 : vector<2x16xf32>
    %208 = math.exp %207 : vector<2x16xf32>
    %cst_120 = arith.constant 1.000000e+00 : f32
    %209 = vector.broadcast %cst_120 : f32 to vector<2x16xf32>
    %210 = arith.addf %209, %208 : vector<2x16xf32>
    %cst_121 = arith.constant 1.000000e+00 : f32
    %211 = vector.broadcast %cst_121 : f32 to vector<2x16xf32>
    %212 = arith.divf %211, %210 : vector<2x16xf32>
    %213 = arith.addf %176, %197 : vector<2x16xf32>
    %cst_122 = arith.constant 0.000000e+00 : f32
    %214 = vector.broadcast %cst_122 : f32 to vector<2x16xf32>
    %215 = arith.subf %214, %213 : vector<2x16xf32>
    %216 = math.exp %215 : vector<2x16xf32>
    %cst_123 = arith.constant 1.000000e+00 : f32
    %217 = vector.broadcast %cst_123 : f32 to vector<2x16xf32>
    %218 = arith.addf %217, %216 : vector<2x16xf32>
    %cst_124 = arith.constant 1.000000e+00 : f32
    %219 = vector.broadcast %cst_124 : f32 to vector<2x16xf32>
    %220 = arith.divf %219, %218 : vector<2x16xf32>
    %221 = arith.mulf %212, %204 : vector<2x16xf32>
    %222 = arith.addf %183, %221 : vector<2x16xf32>
    %223 = math.tanh %222 : vector<2x16xf32>
    %cst_125 = arith.constant 1.000000e+00 : f32
    %224 = vector.broadcast %cst_125 : f32 to vector<2x16xf32>
    %225 = arith.subf %224, %220 : vector<2x16xf32>
    %226 = arith.mulf %225, %223 : vector<2x16xf32>
    %227 = arith.mulf %220, %114 : vector<2x16xf32>
    %228 = arith.addf %226, %227 : vector<2x16xf32>
    %c0_126 = arith.constant 0 : index
    %c0_127 = arith.constant 0 : index
    %229 = vector.load %arg18[%c0_126, %c0_127] : memref<16x16xf32, #tpu.memory_space<vmem>>, vector<2x16xf32>
    tpu.vector_store %arg18[%c0_126, %c0_127], %228 {strides = array<i32>} : memref<16x16xf32, #tpu.memory_space<vmem>>, vector<2x16xf32>,
    %c0_128 = arith.constant 0 : index
    %c0_129 = arith.constant 0 : index
    %c0_130 = arith.constant 0 : index
    %230 = vector.load %arg7[%c0_128, %c0_129, %c0_130] : memref<3x16x16xf32, #tpu.memory_space<vmem>>, vector<1x16x16xf32>
    %231 = vector.shape_cast %230 : vector<1x16x16xf32> to vector<16x16xf32>
    %cst_131 = arith.constant dense<0.000000e+00> : vector<2x16xf32>
    %232 = tpu.matmul %162, %231, %cst_131 {dimension_numbers = #tpu.dot_dimension_numbers<[1], [0], [0], [1], [0, 0, 1, 1], [], []>} : vector<2x16xf32>, vector<16x16xf32>, vector<2x16xf32> -> vector<2x16xf32>
    %c0_132 = arith.constant 0 : index
    %c0_133 = arith.constant 0 : index
    %c0_134 = arith.constant 0 : index
    %233 = vector.load %arg8[%c0_132, %c0_133, %c0_134] : memref<3x1x16xf32, #tpu.memory_space<vmem>>, vector<1x1x16xf32>
    %234 = vector.shape_cast %233 : vector<1x1x16xf32> to vector<1x16xf32>
    %235 = vector.broadcast %234 : vector<1x16xf32> to vector<2x16xf32>
    %236 = arith.addf %232, %235 : vector<2x16xf32>
    %c1_135 = arith.constant 1 : index
    %c0_136 = arith.constant 0 : index
    %c0_137 = arith.constant 0 : index
    %237 = vector.load %arg7[%c1_135, %c0_136, %c0_137] : memref<3x16x16xf32, #tpu.memory_space<vmem>>, vector<1x16x16xf32>
    %238 = vector.shape_cast %237 : vector<1x16x16xf32> to vector<16x16xf32>
    %cst_138 = arith.constant dense<0.000000e+00> : vector<2x16xf32>
    %239 = tpu.matmul %162, %238, %cst_138 {dimension_numbers = #tpu.dot_dimension_numbers<[1], [0], [0], [1], [0, 0, 1, 1], [], []>} : vector<2x16xf32>, vector<16x16xf32>, vector<2x16xf32> -> vector<2x16xf32>
    %c1_139 = arith.constant 1 : index
    %c0_140 = arith.constant 0 : index
    %c0_141 = arith.constant 0 : index
    %240 = vector.load %arg8[%c1_139, %c0_140, %c0_141] : memref<3x1x16xf32, #tpu.memory_space<vmem>>, vector<1x1x16xf32>
    %241 = vector.shape_cast %240 : vector<1x1x16xf32> to vector<1x16xf32>
    %242 = vector.broadcast %241 : vector<1x16xf32> to vector<2x16xf32>
    %243 = arith.addf %239, %242 : vector<2x16xf32>
    %c2_142 = arith.constant 2 : index
    %c0_143 = arith.constant 0 : index
    %c0_144 = arith.constant 0 : index
    %244 = vector.load %arg7[%c2_142, %c0_143, %c0_144] : memref<3x16x16xf32, #tpu.memory_space<vmem>>, vector<1x16x16xf32>
    %245 = vector.shape_cast %244 : vector<1x16x16xf32> to vector<16x16xf32>
    %cst_145 = arith.constant dense<0.000000e+00> : vector<2x16xf32>
    %246 = tpu.matmul %162, %245, %cst_145 {dimension_numbers = #tpu.dot_dimension_numbers<[1], [0], [0], [1], [0, 0, 1, 1], [], []>} : vector<2x16xf32>, vector<16x16xf32>, vector<2x16xf32> -> vector<2x16xf32>
    %c2_146 = arith.constant 2 : index
    %c0_147 = arith.constant 0 : index
    %c0_148 = arith.constant 0 : index
    %247 = vector.load %arg8[%c2_146, %c0_147, %c0_148] : memref<3x1x16xf32, #tpu.memory_space<vmem>>, vector<1x1x16xf32>
    %248 = vector.shape_cast %247 : vector<1x1x16xf32> to vector<1x16xf32>
    %249 = vector.broadcast %248 : vector<1x16xf32> to vector<2x16xf32>
    %250 = arith.addf %246, %249 : vector<2x16xf32>
    %251 = vector.extract_strided_slice %90 {offsets = [2, 0], sizes = [2, 16], strides = [1, 1]} : vector<16x16xf32> to vector<2x16xf32>
    %252 = arith.addf %251, %236 : vector<2x16xf32>
    %cst_149 = arith.constant 0.000000e+00 : f32
    %253 = vector.broadcast %cst_149 : f32 to vector<2x16xf32>
    %254 = arith.subf %253, %252 : vector<2x16xf32>
    %255 = math.exp %254 : vector<2x16xf32>
    %cst_150 = arith.constant 1.000000e+00 : f32
    %256 = vector.broadcast %cst_150 : f32 to vector<2x16xf32>
    %257 = arith.addf %256, %255 : vector<2x16xf32>
    %cst_151 = arith.constant 1.000000e+00 : f32
    %258 = vector.broadcast %cst_151 : f32 to vector<2x16xf32>
    %259 = arith.divf %258, %257 : vector<2x16xf32>
    %260 = vector.extract_strided_slice %101 {offsets = [2, 0], sizes = [2, 16], strides = [1, 1]} : vector<16x16xf32> to vector<2x16xf32>
    %261 = arith.addf %260, %243 : vector<2x16xf32>
    %cst_152 = arith.constant 0.000000e+00 : f32
    %262 = vector.broadcast %cst_152 : f32 to vector<2x16xf32>
    %263 = arith.subf %262, %261 : vector<2x16xf32>
    %264 = math.exp %263 : vector<2x16xf32>
    %cst_153 = arith.constant 1.000000e+00 : f32
    %265 = vector.broadcast %cst_153 : f32 to vector<2x16xf32>
    %266 = arith.addf %265, %264 : vector<2x16xf32>
    %cst_154 = arith.constant 1.000000e+00 : f32
    %267 = vector.broadcast %cst_154 : f32 to vector<2x16xf32>
    %268 = arith.divf %267, %266 : vector<2x16xf32>
    %269 = vector.extract_strided_slice %112 {offsets = [2, 0], sizes = [2, 16], strides = [1, 1]} : vector<16x16xf32> to vector<2x16xf32>
    %270 = arith.mulf %259, %250 : vector<2x16xf32>
    %271 = arith.addf %269, %270 : vector<2x16xf32>
    %272 = math.tanh %271 : vector<2x16xf32>
    %cst_155 = arith.constant 1.000000e+00 : f32
    %273 = vector.broadcast %cst_155 : f32 to vector<2x16xf32>
    %274 = arith.subf %273, %268 : vector<2x16xf32>
    %275 = arith.mulf %274, %272 : vector<2x16xf32>
    %276 = arith.mulf %268, %162 : vector<2x16xf32>
    %277 = arith.addf %275, %276 : vector<2x16xf32>
    %c0_156 = arith.constant 0 : index
    %c0_157 = arith.constant 0 : index
    %c0_158 = arith.constant 0 : index
    %278 = vector.load %arg9[%c0_156, %c0_157, %c0_158] : memref<3x16x16xf32, #tpu.memory_space<vmem>>, vector<1x16x16xf32>
    %279 = vector.shape_cast %278 : vector<1x16x16xf32> to vector<16x16xf32>
    %cst_159 = arith.constant dense<0.000000e+00> : vector<2x16xf32>
    %280 = tpu.matmul %277, %279, %cst_159 {dimension_numbers = #tpu.dot_dimension_numbers<[1], [0], [0], [1], [0, 0, 1, 1], [], []>} : vector<2x16xf32>, vector<16x16xf32>, vector<2x16xf32> -> vector<2x16xf32>
    %c0_160 = arith.constant 0 : index
    %c0_161 = arith.constant 0 : index
    %c0_162 = arith.constant 0 : index
    %281 = vector.load %arg10[%c0_160, %c0_161, %c0_162] : memref<3x1x16xf32, #tpu.memory_space<vmem>>, vector<1x1x16xf32>
    %282 = vector.shape_cast %281 : vector<1x1x16xf32> to vector<1x16xf32>
    %283 = vector.broadcast %282 : vector<1x16xf32> to vector<2x16xf32>
    %284 = arith.addf %280, %283 : vector<2x16xf32>
    %c1_163 = arith.constant 1 : index
    %c0_164 = arith.constant 0 : index
    %c0_165 = arith.constant 0 : index
    %285 = vector.load %arg9[%c1_163, %c0_164, %c0_165] : memref<3x16x16xf32, #tpu.memory_space<vmem>>, vector<1x16x16xf32>
    %286 = vector.shape_cast %285 : vector<1x16x16xf32> to vector<16x16xf32>
    %cst_166 = arith.constant dense<0.000000e+00> : vector<2x16xf32>
    %287 = tpu.matmul %277, %286, %cst_166 {dimension_numbers = #tpu.dot_dimension_numbers<[1], [0], [0], [1], [0, 0, 1, 1], [], []>} : vector<2x16xf32>, vector<16x16xf32>, vector<2x16xf32> -> vector<2x16xf32>
    %c1_167 = arith.constant 1 : index
    %c0_168 = arith.constant 0 : index
    %c0_169 = arith.constant 0 : index
    %288 = vector.load %arg10[%c1_167, %c0_168, %c0_169] : memref<3x1x16xf32, #tpu.memory_space<vmem>>, vector<1x1x16xf32>
    %289 = vector.shape_cast %288 : vector<1x1x16xf32> to vector<1x16xf32>
    %290 = vector.broadcast %289 : vector<1x16xf32> to vector<2x16xf32>
    %291 = arith.addf %287, %290 : vector<2x16xf32>
    %c2_170 = arith.constant 2 : index
    %c0_171 = arith.constant 0 : index
    %c0_172 = arith.constant 0 : index
    %292 = vector.load %arg9[%c2_170, %c0_171, %c0_172] : memref<3x16x16xf32, #tpu.memory_space<vmem>>, vector<1x16x16xf32>
    %293 = vector.shape_cast %292 : vector<1x16x16xf32> to vector<16x16xf32>
    %cst_173 = arith.constant dense<0.000000e+00> : vector<2x16xf32>
    %294 = tpu.matmul %277, %293, %cst_173 {dimension_numbers = #tpu.dot_dimension_numbers<[1], [0], [0], [1], [0, 0, 1, 1], [], []>} : vector<2x16xf32>, vector<16x16xf32>, vector<2x16xf32> -> vector<2x16xf32>
    %c2_174 = arith.constant 2 : index
    %c0_175 = arith.constant 0 : index
    %c0_176 = arith.constant 0 : index
    %295 = vector.load %arg10[%c2_174, %c0_175, %c0_176] : memref<3x1x16xf32, #tpu.memory_space<vmem>>, vector<1x1x16xf32>
    %296 = vector.shape_cast %295 : vector<1x1x16xf32> to vector<1x16xf32>
    %297 = vector.broadcast %296 : vector<1x16xf32> to vector<2x16xf32>
    %298 = arith.addf %294, %297 : vector<2x16xf32>
    %c0_177 = arith.constant 0 : index
    %c0_178 = arith.constant 0 : index
    %c0_179 = arith.constant 0 : index
    %299 = vector.load %arg11[%c0_177, %c0_178, %c0_179] : memref<3x16x16xf32, #tpu.memory_space<vmem>>, vector<1x16x16xf32>
    %300 = vector.shape_cast %299 : vector<1x16x16xf32> to vector<16x16xf32>
    %cst_180 = arith.constant dense<0.000000e+00> : vector<2x16xf32>
    %301 = tpu.matmul %228, %300, %cst_180 {dimension_numbers = #tpu.dot_dimension_numbers<[1], [0], [0], [1], [0, 0, 1, 1], [], []>} : vector<2x16xf32>, vector<16x16xf32>, vector<2x16xf32> -> vector<2x16xf32>
    %c0_181 = arith.constant 0 : index
    %c0_182 = arith.constant 0 : index
    %c0_183 = arith.constant 0 : index
    %302 = vector.load %arg12[%c0_181, %c0_182, %c0_183] : memref<3x1x16xf32, #tpu.memory_space<vmem>>, vector<1x1x16xf32>
    %303 = vector.shape_cast %302 : vector<1x1x16xf32> to vector<1x16xf32>
    %304 = vector.broadcast %303 : vector<1x16xf32> to vector<2x16xf32>
    %305 = arith.addf %301, %304 : vector<2x16xf32>
    %c1_184 = arith.constant 1 : index
    %c0_185 = arith.constant 0 : index
    %c0_186 = arith.constant 0 : index
    %306 = vector.load %arg11[%c1_184, %c0_185, %c0_186] : memref<3x16x16xf32, #tpu.memory_space<vmem>>, vector<1x16x16xf32>
    %307 = vector.shape_cast %306 : vector<1x16x16xf32> to vector<16x16xf32>
    %cst_187 = arith.constant dense<0.000000e+00> : vector<2x16xf32>
    %308 = tpu.matmul %228, %307, %cst_187 {dimension_numbers = #tpu.dot_dimension_numbers<[1], [0], [0], [1], [0, 0, 1, 1], [], []>} : vector<2x16xf32>, vector<16x16xf32>, vector<2x16xf32> -> vector<2x16xf32>
    %c1_188 = arith.constant 1 : index
    %c0_189 = arith.constant 0 : index
    %c0_190 = arith.constant 0 : index
    %309 = vector.load %arg12[%c1_188, %c0_189, %c0_190] : memref<3x1x16xf32, #tpu.memory_space<vmem>>, vector<1x1x16xf32>
    %310 = vector.shape_cast %309 : vector<1x1x16xf32> to vector<1x16xf32>
    %311 = vector.broadcast %310 : vector<1x16xf32> to vector<2x16xf32>
    %312 = arith.addf %308, %311 : vector<2x16xf32>
    %c2_191 = arith.constant 2 : index
    %c0_192 = arith.constant 0 : index
    %c0_193 = arith.constant 0 : index
    %313 = vector.load %arg11[%c2_191, %c0_192, %c0_193] : memref<3x16x16xf32, #tpu.memory_space<vmem>>, vector<1x16x16xf32>
    %314 = vector.shape_cast %313 : vector<1x16x16xf32> to vector<16x16xf32>
    %cst_194 = arith.constant dense<0.000000e+00> : vector<2x16xf32>
    %315 = tpu.matmul %228, %314, %cst_194 {dimension_numbers = #tpu.dot_dimension_numbers<[1], [0], [0], [1], [0, 0, 1, 1], [], []>} : vector<2x16xf32>, vector<16x16xf32>, vector<2x16xf32> -> vector<2x16xf32>
    %c2_195 = arith.constant 2 : index
    %c0_196 = arith.constant 0 : index
    %c0_197 = arith.constant 0 : index
    %316 = vector.load %arg12[%c2_195, %c0_196, %c0_197] : memref<3x1x16xf32, #tpu.memory_space<vmem>>, vector<1x1x16xf32>
    %317 = vector.shape_cast %316 : vector<1x1x16xf32> to vector<1x16xf32>
    %318 = vector.broadcast %317 : vector<1x16xf32> to vector<2x16xf32>
    %319 = arith.addf %315, %318 : vector<2x16xf32>
    %320 = arith.addf %284, %305 : vector<2x16xf32>
    %cst_198 = arith.constant 0.000000e+00 : f32
    %321 = vector.broadcast %cst_198 : f32 to vector<2x16xf32>
    %322 = arith.subf %321, %320 : vector<2x16xf32>
    %323 = math.exp %322 : vector<2x16xf32>
    %cst_199 = arith.constant 1.000000e+00 : f32
    %324 = vector.broadcast %cst_199 : f32 to vector<2x16xf32>
    %325 = arith.addf %324, %323 : vector<2x16xf32>
    %cst_200 = arith.constant 1.000000e+00 : f32
    %326 = vector.broadcast %cst_200 : f32 to vector<2x16xf32>
    %327 = arith.divf %326, %325 : vector<2x16xf32>
    %328 = arith.addf %291, %312 : vector<2x16xf32>
    %cst_201 = arith.constant 0.000000e+00 : f32
    %329 = vector.broadcast %cst_201 : f32 to vector<2x16xf32>
    %330 = arith.subf %329, %328 : vector<2x16xf32>
    %331 = math.exp %330 : vector<2x16xf32>
    %cst_202 = arith.constant 1.000000e+00 : f32
    %332 = vector.broadcast %cst_202 : f32 to vector<2x16xf32>
    %333 = arith.addf %332, %331 : vector<2x16xf32>
    %cst_203 = arith.constant 1.000000e+00 : f32
    %334 = vector.broadcast %cst_203 : f32 to vector<2x16xf32>
    %335 = arith.divf %334, %333 : vector<2x16xf32>
    %336 = arith.mulf %327, %319 : vector<2x16xf32>
    %337 = arith.addf %298, %336 : vector<2x16xf32>
    %338 = math.tanh %337 : vector<2x16xf32>
    %cst_204 = arith.constant 1.000000e+00 : f32
    %339 = vector.broadcast %cst_204 : f32 to vector<2x16xf32>
    %340 = arith.subf %339, %335 : vector<2x16xf32>
    %341 = arith.mulf %340, %338 : vector<2x16xf32>
    %342 = arith.mulf %335, %228 : vector<2x16xf32>
    %343 = arith.addf %341, %342 : vector<2x16xf32>
    %c2_205 = arith.constant 2 : index
    %c0_206 = arith.constant 0 : index
    %344 = vector.load %arg18[%c2_205, %c0_206] : memref<16x16xf32, #tpu.memory_space<vmem>>, vector<2x16xf32>
    tpu.vector_store %arg18[%c2_205, %c0_206], %343 {strides = array<i32>} : memref<16x16xf32, #tpu.memory_space<vmem>>, vector<2x16xf32>,
    %c0_207 = arith.constant 0 : index
    %c0_208 = arith.constant 0 : index
    %c0_209 = arith.constant 0 : index
    %345 = vector.load %arg7[%c0_207, %c0_208, %c0_209] : memref<3x16x16xf32, #tpu.memory_space<vmem>>, vector<1x16x16xf32>
    %346 = vector.shape_cast %345 : vector<1x16x16xf32> to vector<16x16xf32>
    %cst_210 = arith.constant dense<0.000000e+00> : vector<2x16xf32>
    %347 = tpu.matmul %277, %346, %cst_210 {dimension_numbers = #tpu.dot_dimension_numbers<[1], [0], [0], [1], [0, 0, 1, 1], [], []>} : vector<2x16xf32>, vector<16x16xf32>, vector<2x16xf32> -> vector<2x16xf32>
    %c0_211 = arith.constant 0 : index
    %c0_212 = arith.constant 0 : index
    %c0_213 = arith.constant 0 : index
    %348 = vector.load %arg8[%c0_211, %c0_212, %c0_213] : memref<3x1x16xf32, #tpu.memory_space<vmem>>, vector<1x1x16xf32>
    %349 = vector.shape_cast %348 : vector<1x1x16xf32> to vector<1x16xf32>
    %350 = vector.broadcast %349 : vector<1x16xf32> to vector<2x16xf32>
    %351 = arith.addf %347, %350 : vector<2x16xf32>
    %c1_214 = arith.constant 1 : index
    %c0_215 = arith.constant 0 : index
    %c0_216 = arith.constant 0 : index
    %352 = vector.load %arg7[%c1_214, %c0_215, %c0_216] : memref<3x16x16xf32, #tpu.memory_space<vmem>>, vector<1x16x16xf32>
    %353 = vector.shape_cast %352 : vector<1x16x16xf32> to vector<16x16xf32>
    %cst_217 = arith.constant dense<0.000000e+00> : vector<2x16xf32>
    %354 = tpu.matmul %277, %353, %cst_217 {dimension_numbers = #tpu.dot_dimension_numbers<[1], [0], [0], [1], [0, 0, 1, 1], [], []>} : vector<2x16xf32>, vector<16x16xf32>, vector<2x16xf32> -> vector<2x16xf32>
    %c1_218 = arith.constant 1 : index
    %c0_219 = arith.constant 0 : index
    %c0_220 = arith.constant 0 : index
    %355 = vector.load %arg8[%c1_218, %c0_219, %c0_220] : memref<3x1x16xf32, #tpu.memory_space<vmem>>, vector<1x1x16xf32>
    %356 = vector.shape_cast %355 : vector<1x1x16xf32> to vector<1x16xf32>
    %357 = vector.broadcast %356 : vector<1x16xf32> to vector<2x16xf32>
    %358 = arith.addf %354, %357 : vector<2x16xf32>
    %c2_221 = arith.constant 2 : index
    %c0_222 = arith.constant 0 : index
    %c0_223 = arith.constant 0 : index
    %359 = vector.load %arg7[%c2_221, %c0_222, %c0_223] : memref<3x16x16xf32, #tpu.memory_space<vmem>>, vector<1x16x16xf32>
    %360 = vector.shape_cast %359 : vector<1x16x16xf32> to vector<16x16xf32>
    %cst_224 = arith.constant dense<0.000000e+00> : vector<2x16xf32>
    %361 = tpu.matmul %277, %360, %cst_224 {dimension_numbers = #tpu.dot_dimension_numbers<[1], [0], [0], [1], [0, 0, 1, 1], [], []>} : vector<2x16xf32>, vector<16x16xf32>, vector<2x16xf32> -> vector<2x16xf32>
    %c2_225 = arith.constant 2 : index
    %c0_226 = arith.constant 0 : index
    %c0_227 = arith.constant 0 : index
    %362 = vector.load %arg8[%c2_225, %c0_226, %c0_227] : memref<3x1x16xf32, #tpu.memory_space<vmem>>, vector<1x1x16xf32>
    %363 = vector.shape_cast %362 : vector<1x1x16xf32> to vector<1x16xf32>
    %364 = vector.broadcast %363 : vector<1x16xf32> to vector<2x16xf32>
    %365 = arith.addf %361, %364 : vector<2x16xf32>
    %366 = vector.extract_strided_slice %90 {offsets = [4, 0], sizes = [2, 16], strides = [1, 1]} : vector<16x16xf32> to vector<2x16xf32>
    %367 = arith.addf %366, %351 : vector<2x16xf32>
    %cst_228 = arith.constant 0.000000e+00 : f32
    %368 = vector.broadcast %cst_228 : f32 to vector<2x16xf32>
    %369 = arith.subf %368, %367 : vector<2x16xf32>
    %370 = math.exp %369 : vector<2x16xf32>
    %cst_229 = arith.constant 1.000000e+00 : f32
    %371 = vector.broadcast %cst_229 : f32 to vector<2x16xf32>
    %372 = arith.addf %371, %370 : vector<2x16xf32>
    %cst_230 = arith.constant 1.000000e+00 : f32
    %373 = vector.broadcast %cst_230 : f32 to vector<2x16xf32>
    %374 = arith.divf %373, %372 : vector<2x16xf32>
    %375 = vector.extract_strided_slice %101 {offsets = [4, 0], sizes = [2, 16], strides = [1, 1]} : vector<16x16xf32> to vector<2x16xf32>
    %376 = arith.addf %375, %358 : vector<2x16xf32>
    %cst_231 = arith.constant 0.000000e+00 : f32
    %377 = vector.broadcast %cst_231 : f32 to vector<2x16xf32>
    %378 = arith.subf %377, %376 : vector<2x16xf32>
    %379 = math.exp %378 : vector<2x16xf32>
    %cst_232 = arith.constant 1.000000e+00 : f32
    %380 = vector.broadcast %cst_232 : f32 to vector<2x16xf32>
    %381 = arith.addf %380, %379 : vector<2x16xf32>
    %cst_233 = arith.constant 1.000000e+00 : f32
    %382 = vector.broadcast %cst_233 : f32 to vector<2x16xf32>
    %383 = arith.divf %382, %381 : vector<2x16xf32>
    %384 = vector.extract_strided_slice %112 {offsets = [4, 0], sizes = [2, 16], strides = [1, 1]} : vector<16x16xf32> to vector<2x16xf32>
    %385 = arith.mulf %374, %365 : vector<2x16xf32>
    %386 = arith.addf %384, %385 : vector<2x16xf32>
    %387 = math.tanh %386 : vector<2x16xf32>
    %cst_234 = arith.constant 1.000000e+00 : f32
    %388 = vector.broadcast %cst_234 : f32 to vector<2x16xf32>
    %389 = arith.subf %388, %383 : vector<2x16xf32>
    %390 = arith.mulf %389, %387 : vector<2x16xf32>
    %391 = arith.mulf %383, %277 : vector<2x16xf32>
    %392 = arith.addf %390, %391 : vector<2x16xf32>
    %c0_235 = arith.constant 0 : index
    %c0_236 = arith.constant 0 : index
    %c0_237 = arith.constant 0 : index
    %393 = vector.load %arg9[%c0_235, %c0_236, %c0_237] : memref<3x16x16xf32, #tpu.memory_space<vmem>>, vector<1x16x16xf32>
    %394 = vector.shape_cast %393 : vector<1x16x16xf32> to vector<16x16xf32>
    %cst_238 = arith.constant dense<0.000000e+00> : vector<2x16xf32>
    %395 = tpu.matmul %392, %394, %cst_238 {dimension_numbers = #tpu.dot_dimension_numbers<[1], [0], [0], [1], [0, 0, 1, 1], [], []>} : vector<2x16xf32>, vector<16x16xf32>, vector<2x16xf32> -> vector<2x16xf32>
    %c0_239 = arith.constant 0 : index
    %c0_240 = arith.constant 0 : index
    %c0_241 = arith.constant 0 : index
    %396 = vector.load %arg10[%c0_239, %c0_240, %c0_241] : memref<3x1x16xf32, #tpu.memory_space<vmem>>, vector<1x1x16xf32>
    %397 = vector.shape_cast %396 : vector<1x1x16xf32> to vector<1x16xf32>
    %398 = vector.broadcast %397 : vector<1x16xf32> to vector<2x16xf32>
    %399 = arith.addf %395, %398 : vector<2x16xf32>
    %c1_242 = arith.constant 1 : index
    %c0_243 = arith.constant 0 : index
    %c0_244 = arith.constant 0 : index
    %400 = vector.load %arg9[%c1_242, %c0_243, %c0_244] : memref<3x16x16xf32, #tpu.memory_space<vmem>>, vector<1x16x16xf32>
    %401 = vector.shape_cast %400 : vector<1x16x16xf32> to vector<16x16xf32>
    %cst_245 = arith.constant dense<0.000000e+00> : vector<2x16xf32>
    %402 = tpu.matmul %392, %401, %cst_245 {dimension_numbers = #tpu.dot_dimension_numbers<[1], [0], [0], [1], [0, 0, 1, 1], [], []>} : vector<2x16xf32>, vector<16x16xf32>, vector<2x16xf32> -> vector<2x16xf32>
    %c1_246 = arith.constant 1 : index
    %c0_247 = arith.constant 0 : index
    %c0_248 = arith.constant 0 : index
    %403 = vector.load %arg10[%c1_246, %c0_247, %c0_248] : memref<3x1x16xf32, #tpu.memory_space<vmem>>, vector<1x1x16xf32>
    %404 = vector.shape_cast %403 : vector<1x1x16xf32> to vector<1x16xf32>
    %405 = vector.broadcast %404 : vector<1x16xf32> to vector<2x16xf32>
    %406 = arith.addf %402, %405 : vector<2x16xf32>
    %c2_249 = arith.constant 2 : index
    %c0_250 = arith.constant 0 : index
    %c0_251 = arith.constant 0 : index
    %407 = vector.load %arg9[%c2_249, %c0_250, %c0_251] : memref<3x16x16xf32, #tpu.memory_space<vmem>>, vector<1x16x16xf32>
    %408 = vector.shape_cast %407 : vector<1x16x16xf32> to vector<16x16xf32>
    %cst_252 = arith.constant dense<0.000000e+00> : vector<2x16xf32>
    %409 = tpu.matmul %392, %408, %cst_252 {dimension_numbers = #tpu.dot_dimension_numbers<[1], [0], [0], [1], [0, 0, 1, 1], [], []>} : vector<2x16xf32>, vector<16x16xf32>, vector<2x16xf32> -> vector<2x16xf32>
    %c2_253 = arith.constant 2 : index
    %c0_254 = arith.constant 0 : index
    %c0_255 = arith.constant 0 : index
    %410 = vector.load %arg10[%c2_253, %c0_254, %c0_255] : memref<3x1x16xf32, #tpu.memory_space<vmem>>, vector<1x1x16xf32>
    %411 = vector.shape_cast %410 : vector<1x1x16xf32> to vector<1x16xf32>
    %412 = vector.broadcast %411 : vector<1x16xf32> to vector<2x16xf32>
    %413 = arith.addf %409, %412 : vector<2x16xf32>
    %c0_256 = arith.constant 0 : index
    %c0_257 = arith.constant 0 : index
    %c0_258 = arith.constant 0 : index
    %414 = vector.load %arg11[%c0_256, %c0_257, %c0_258] : memref<3x16x16xf32, #tpu.memory_space<vmem>>, vector<1x16x16xf32>
    %415 = vector.shape_cast %414 : vector<1x16x16xf32> to vector<16x16xf32>
    %cst_259 = arith.constant dense<0.000000e+00> : vector<2x16xf32>
    %416 = tpu.matmul %343, %415, %cst_259 {dimension_numbers = #tpu.dot_dimension_numbers<[1], [0], [0], [1], [0, 0, 1, 1], [], []>} : vector<2x16xf32>, vector<16x16xf32>, vector<2x16xf32> -> vector<2x16xf32>
    %c0_260 = arith.constant 0 : index
    %c0_261 = arith.constant 0 : index
    %c0_262 = arith.constant 0 : index
    %417 = vector.load %arg12[%c0_260, %c0_261, %c0_262] : memref<3x1x16xf32, #tpu.memory_space<vmem>>, vector<1x1x16xf32>
    %418 = vector.shape_cast %417 : vector<1x1x16xf32> to vector<1x16xf32>
    %419 = vector.broadcast %418 : vector<1x16xf32> to vector<2x16xf32>
    %420 = arith.addf %416, %419 : vector<2x16xf32>
    %c1_263 = arith.constant 1 : index
    %c0_264 = arith.constant 0 : index
    %c0_265 = arith.constant 0 : index
    %421 = vector.load %arg11[%c1_263, %c0_264, %c0_265] : memref<3x16x16xf32, #tpu.memory_space<vmem>>, vector<1x16x16xf32>
    %422 = vector.shape_cast %421 : vector<1x16x16xf32> to vector<16x16xf32>
    %cst_266 = arith.constant dense<0.000000e+00> : vector<2x16xf32>
    %423 = tpu.matmul %343, %422, %cst_266 {dimension_numbers = #tpu.dot_dimension_numbers<[1], [0], [0], [1], [0, 0, 1, 1], [], []>} : vector<2x16xf32>, vector<16x16xf32>, vector<2x16xf32> -> vector<2x16xf32>
    %c1_267 = arith.constant 1 : index
    %c0_268 = arith.constant 0 : index
    %c0_269 = arith.constant 0 : index
    %424 = vector.load %arg12[%c1_267, %c0_268, %c0_269] : memref<3x1x16xf32, #tpu.memory_space<vmem>>, vector<1x1x16xf32>
    %425 = vector.shape_cast %424 : vector<1x1x16xf32> to vector<1x16xf32>
    %426 = vector.broadcast %425 : vector<1x16xf32> to vector<2x16xf32>
    %427 = arith.addf %423, %426 : vector<2x16xf32>
    %c2_270 = arith.constant 2 : index
    %c0_271 = arith.constant 0 : index
    %c0_272 = arith.constant 0 : index
    %428 = vector.load %arg11[%c2_270, %c0_271, %c0_272] : memref<3x16x16xf32, #tpu.memory_space<vmem>>, vector<1x16x16xf32>
    %429 = vector.shape_cast %428 : vector<1x16x16xf32> to vector<16x16xf32>
    %cst_273 = arith.constant dense<0.000000e+00> : vector<2x16xf32>
    %430 = tpu.matmul %343, %429, %cst_273 {dimension_numbers = #tpu.dot_dimension_numbers<[1], [0], [0], [1], [0, 0, 1, 1], [], []>} : vector<2x16xf32>, vector<16x16xf32>, vector<2x16xf32> -> vector<2x16xf32>
    %c2_274 = arith.constant 2 : index
    %c0_275 = arith.constant 0 : index
    %c0_276 = arith.constant 0 : index
    %431 = vector.load %arg12[%c2_274, %c0_275, %c0_276] : memref<3x1x16xf32, #tpu.memory_space<vmem>>, vector<1x1x16xf32>
    %432 = vector.shape_cast %431 : vector<1x1x16xf32> to vector<1x16xf32>
    %433 = vector.broadcast %432 : vector<1x16xf32> to vector<2x16xf32>
    %434 = arith.addf %430, %433 : vector<2x16xf32>
    %435 = arith.addf %399, %420 : vector<2x16xf32>
    %cst_277 = arith.constant 0.000000e+00 : f32
    %436 = vector.broadcast %cst_277 : f32 to vector<2x16xf32>
    %437 = arith.subf %436, %435 : vector<2x16xf32>
    %438 = math.exp %437 : vector<2x16xf32>
    %cst_278 = arith.constant 1.000000e+00 : f32
    %439 = vector.broadcast %cst_278 : f32 to vector<2x16xf32>
    %440 = arith.addf %439, %438 : vector<2x16xf32>
    %cst_279 = arith.constant 1.000000e+00 : f32
    %441 = vector.broadcast %cst_279 : f32 to vector<2x16xf32>
    %442 = arith.divf %441, %440 : vector<2x16xf32>
    %443 = arith.addf %406, %427 : vector<2x16xf32>
    %cst_280 = arith.constant 0.000000e+00 : f32
    %444 = vector.broadcast %cst_280 : f32 to vector<2x16xf32>
    %445 = arith.subf %444, %443 : vector<2x16xf32>
    %446 = math.exp %445 : vector<2x16xf32>
    %cst_281 = arith.constant 1.000000e+00 : f32
    %447 = vector.broadcast %cst_281 : f32 to vector<2x16xf32>
    %448 = arith.addf %447, %446 : vector<2x16xf32>
    %cst_282 = arith.constant 1.000000e+00 : f32
    %449 = vector.broadcast %cst_282 : f32 to vector<2x16xf32>
    %450 = arith.divf %449, %448 : vector<2x16xf32>
    %451 = arith.mulf %442, %434 : vector<2x16xf32>
    %452 = arith.addf %413, %451 : vector<2x16xf32>
    %453 = math.tanh %452 : vector<2x16xf32>
    %cst_283 = arith.constant 1.000000e+00 : f32
    %454 = vector.broadcast %cst_283 : f32 to vector<2x16xf32>
    %455 = arith.subf %454, %450 : vector<2x16xf32>
    %456 = arith.mulf %455, %453 : vector<2x16xf32>
    %457 = arith.mulf %450, %343 : vector<2x16xf32>
    %458 = arith.addf %456, %457 : vector<2x16xf32>
    %c4 = arith.constant 4 : index
    %c0_284 = arith.constant 0 : index
    %459 = vector.load %arg18[%c4, %c0_284] : memref<16x16xf32, #tpu.memory_space<vmem>>, vector<2x16xf32>
    tpu.vector_store %arg18[%c4, %c0_284], %458 {strides = array<i32>} : memref<16x16xf32, #tpu.memory_space<vmem>>, vector<2x16xf32>,
    %c0_285 = arith.constant 0 : index
    %c0_286 = arith.constant 0 : index
    %c0_287 = arith.constant 0 : index
    %460 = vector.load %arg7[%c0_285, %c0_286, %c0_287] : memref<3x16x16xf32, #tpu.memory_space<vmem>>, vector<1x16x16xf32>
    %461 = vector.shape_cast %460 : vector<1x16x16xf32> to vector<16x16xf32>
    %cst_288 = arith.constant dense<0.000000e+00> : vector<2x16xf32>
    %462 = tpu.matmul %392, %461, %cst_288 {dimension_numbers = #tpu.dot_dimension_numbers<[1], [0], [0], [1], [0, 0, 1, 1], [], []>} : vector<2x16xf32>, vector<16x16xf32>, vector<2x16xf32> -> vector<2x16xf32>
    %c0_289 = arith.constant 0 : index
    %c0_290 = arith.constant 0 : index
    %c0_291 = arith.constant 0 : index
    %463 = vector.load %arg8[%c0_289, %c0_290, %c0_291] : memref<3x1x16xf32, #tpu.memory_space<vmem>>, vector<1x1x16xf32>
    %464 = vector.shape_cast %463 : vector<1x1x16xf32> to vector<1x16xf32>
    %465 = vector.broadcast %464 : vector<1x16xf32> to vector<2x16xf32>
    %466 = arith.addf %462, %465 : vector<2x16xf32>
    %c1_292 = arith.constant 1 : index
    %c0_293 = arith.constant 0 : index
    %c0_294 = arith.constant 0 : index
    %467 = vector.load %arg7[%c1_292, %c0_293, %c0_294] : memref<3x16x16xf32, #tpu.memory_space<vmem>>, vector<1x16x16xf32>
    %468 = vector.shape_cast %467 : vector<1x16x16xf32> to vector<16x16xf32>
    %cst_295 = arith.constant dense<0.000000e+00> : vector<2x16xf32>
    %469 = tpu.matmul %392, %468, %cst_295 {dimension_numbers = #tpu.dot_dimension_numbers<[1], [0], [0], [1], [0, 0, 1, 1], [], []>} : vector<2x16xf32>, vector<16x16xf32>, vector<2x16xf32> -> vector<2x16xf32>
    %c1_296 = arith.constant 1 : index
    %c0_297 = arith.constant 0 : index
    %c0_298 = arith.constant 0 : index
    %470 = vector.load %arg8[%c1_296, %c0_297, %c0_298] : memref<3x1x16xf32, #tpu.memory_space<vmem>>, vector<1x1x16xf32>
    %471 = vector.shape_cast %470 : vector<1x1x16xf32> to vector<1x16xf32>
    %472 = vector.broadcast %471 : vector<1x16xf32> to vector<2x16xf32>
    %473 = arith.addf %469, %472 : vector<2x16xf32>
    %c2_299 = arith.constant 2 : index
    %c0_300 = arith.constant 0 : index
    %c0_301 = arith.constant 0 : index
    %474 = vector.load %arg7[%c2_299, %c0_300, %c0_301] : memref<3x16x16xf32, #tpu.memory_space<vmem>>, vector<1x16x16xf32>
    %475 = vector.shape_cast %474 : vector<1x16x16xf32> to vector<16x16xf32>
    %cst_302 = arith.constant dense<0.000000e+00> : vector<2x16xf32>
    %476 = tpu.matmul %392, %475, %cst_302 {dimension_numbers = #tpu.dot_dimension_numbers<[1], [0], [0], [1], [0, 0, 1, 1], [], []>} : vector<2x16xf32>, vector<16x16xf32>, vector<2x16xf32> -> vector<2x16xf32>
    %c2_303 = arith.constant 2 : index
    %c0_304 = arith.constant 0 : index
    %c0_305 = arith.constant 0 : index
    %477 = vector.load %arg8[%c2_303, %c0_304, %c0_305] : memref<3x1x16xf32, #tpu.memory_space<vmem>>, vector<1x1x16xf32>
    %478 = vector.shape_cast %477 : vector<1x1x16xf32> to vector<1x16xf32>
    %479 = vector.broadcast %478 : vector<1x16xf32> to vector<2x16xf32>
    %480 = arith.addf %476, %479 : vector<2x16xf32>
    %481 = vector.extract_strided_slice %90 {offsets = [6, 0], sizes = [2, 16], strides = [1, 1]} : vector<16x16xf32> to vector<2x16xf32>
    %482 = arith.addf %481, %466 : vector<2x16xf32>
    %cst_306 = arith.constant 0.000000e+00 : f32
    %483 = vector.broadcast %cst_306 : f32 to vector<2x16xf32>
    %484 = arith.subf %483, %482 : vector<2x16xf32>
    %485 = math.exp %484 : vector<2x16xf32>
    %cst_307 = arith.constant 1.000000e+00 : f32
    %486 = vector.broadcast %cst_307 : f32 to vector<2x16xf32>
    %487 = arith.addf %486, %485 : vector<2x16xf32>
    %cst_308 = arith.constant 1.000000e+00 : f32
    %488 = vector.broadcast %cst_308 : f32 to vector<2x16xf32>
    %489 = arith.divf %488, %487 : vector<2x16xf32>
    %490 = vector.extract_strided_slice %101 {offsets = [6, 0], sizes = [2, 16], strides = [1, 1]} : vector<16x16xf32> to vector<2x16xf32>
    %491 = arith.addf %490, %473 : vector<2x16xf32>
    %cst_309 = arith.constant 0.000000e+00 : f32
    %492 = vector.broadcast %cst_309 : f32 to vector<2x16xf32>
    %493 = arith.subf %492, %491 : vector<2x16xf32>
    %494 = math.exp %493 : vector<2x16xf32>
    %cst_310 = arith.constant 1.000000e+00 : f32
    %495 = vector.broadcast %cst_310 : f32 to vector<2x16xf32>
    %496 = arith.addf %495, %494 : vector<2x16xf32>
    %cst_311 = arith.constant 1.000000e+00 : f32
    %497 = vector.broadcast %cst_311 : f32 to vector<2x16xf32>
    %498 = arith.divf %497, %496 : vector<2x16xf32>
    %499 = vector.extract_strided_slice %112 {offsets = [6, 0], sizes = [2, 16], strides = [1, 1]} : vector<16x16xf32> to vector<2x16xf32>
    %500 = arith.mulf %489, %480 : vector<2x16xf32>
    %501 = arith.addf %499, %500 : vector<2x16xf32>
    %502 = math.tanh %501 : vector<2x16xf32>
    %cst_312 = arith.constant 1.000000e+00 : f32
    %503 = vector.broadcast %cst_312 : f32 to vector<2x16xf32>
    %504 = arith.subf %503, %498 : vector<2x16xf32>
    %505 = arith.mulf %504, %502 : vector<2x16xf32>
    %506 = arith.mulf %498, %392 : vector<2x16xf32>
    %507 = arith.addf %505, %506 : vector<2x16xf32>
    %c0_313 = arith.constant 0 : index
    %c0_314 = arith.constant 0 : index
    %c0_315 = arith.constant 0 : index
    %508 = vector.load %arg9[%c0_313, %c0_314, %c0_315] : memref<3x16x16xf32, #tpu.memory_space<vmem>>, vector<1x16x16xf32>
    %509 = vector.shape_cast %508 : vector<1x16x16xf32> to vector<16x16xf32>
    %cst_316 = arith.constant dense<0.000000e+00> : vector<2x16xf32>
    %510 = tpu.matmul %507, %509, %cst_316 {dimension_numbers = #tpu.dot_dimension_numbers<[1], [0], [0], [1], [0, 0, 1, 1], [], []>} : vector<2x16xf32>, vector<16x16xf32>, vector<2x16xf32> -> vector<2x16xf32>
    %c0_317 = arith.constant 0 : index
    %c0_318 = arith.constant 0 : index
    %c0_319 = arith.constant 0 : index
    %511 = vector.load %arg10[%c0_317, %c0_318, %c0_319] : memref<3x1x16xf32, #tpu.memory_space<vmem>>, vector<1x1x16xf32>
    %512 = vector.shape_cast %511 : vector<1x1x16xf32> to vector<1x16xf32>
    %513 = vector.broadcast %512 : vector<1x16xf32> to vector<2x16xf32>
    %514 = arith.addf %510, %513 : vector<2x16xf32>
    %c1_320 = arith.constant 1 : index
    %c0_321 = arith.constant 0 : index
    %c0_322 = arith.constant 0 : index
    %515 = vector.load %arg9[%c1_320, %c0_321, %c0_322] : memref<3x16x16xf32, #tpu.memory_space<vmem>>, vector<1x16x16xf32>
    %516 = vector.shape_cast %515 : vector<1x16x16xf32> to vector<16x16xf32>
    %cst_323 = arith.constant dense<0.000000e+00> : vector<2x16xf32>
    %517 = tpu.matmul %507, %516, %cst_323 {dimension_numbers = #tpu.dot_dimension_numbers<[1], [0], [0], [1], [0, 0, 1, 1], [], []>} : vector<2x16xf32>, vector<16x16xf32>, vector<2x16xf32> -> vector<2x16xf32>
    %c1_324 = arith.constant 1 : index
    %c0_325 = arith.constant 0 : index
    %c0_326 = arith.constant 0 : index
    %518 = vector.load %arg10[%c1_324, %c0_325, %c0_326] : memref<3x1x16xf32, #tpu.memory_space<vmem>>, vector<1x1x16xf32>
    %519 = vector.shape_cast %518 : vector<1x1x16xf32> to vector<1x16xf32>
    %520 = vector.broadcast %519 : vector<1x16xf32> to vector<2x16xf32>
    %521 = arith.addf %517, %520 : vector<2x16xf32>
    %c2_327 = arith.constant 2 : index
    %c0_328 = arith.constant 0 : index
    %c0_329 = arith.constant 0 : index
    %522 = vector.load %arg9[%c2_327, %c0_328, %c0_329] : memref<3x16x16xf32, #tpu.memory_space<vmem>>, vector<1x16x16xf32>
    %523 = vector.shape_cast %522 : vector<1x16x16xf32> to vector<16x16xf32>
    %cst_330 = arith.constant dense<0.000000e+00> : vector<2x16xf32>
    %524 = tpu.matmul %507, %523, %cst_330 {dimension_numbers = #tpu.dot_dimension_numbers<[1], [0], [0], [1], [0, 0, 1, 1], [], []>} : vector<2x16xf32>, vector<16x16xf32>, vector<2x16xf32> -> vector<2x16xf32>
    %c2_331 = arith.constant 2 : index
    %c0_332 = arith.constant 0 : index
    %c0_333 = arith.constant 0 : index
    %525 = vector.load %arg10[%c2_331, %c0_332, %c0_333] : memref<3x1x16xf32, #tpu.memory_space<vmem>>, vector<1x1x16xf32>
    %526 = vector.shape_cast %525 : vector<1x1x16xf32> to vector<1x16xf32>
    %527 = vector.broadcast %526 : vector<1x16xf32> to vector<2x16xf32>
    %528 = arith.addf %524, %527 : vector<2x16xf32>
    %c0_334 = arith.constant 0 : index
    %c0_335 = arith.constant 0 : index
    %c0_336 = arith.constant 0 : index
    %529 = vector.load %arg11[%c0_334, %c0_335, %c0_336] : memref<3x16x16xf32, #tpu.memory_space<vmem>>, vector<1x16x16xf32>
    %530 = vector.shape_cast %529 : vector<1x16x16xf32> to vector<16x16xf32>
    %cst_337 = arith.constant dense<0.000000e+00> : vector<2x16xf32>
    %531 = tpu.matmul %458, %530, %cst_337 {dimension_numbers = #tpu.dot_dimension_numbers<[1], [0], [0], [1], [0, 0, 1, 1], [], []>} : vector<2x16xf32>, vector<16x16xf32>, vector<2x16xf32> -> vector<2x16xf32>
    %c0_338 = arith.constant 0 : index
    %c0_339 = arith.constant 0 : index
    %c0_340 = arith.constant 0 : index
    %532 = vector.load %arg12[%c0_338, %c0_339, %c0_340] : memref<3x1x16xf32, #tpu.memory_space<vmem>>, vector<1x1x16xf32>
    %533 = vector.shape_cast %532 : vector<1x1x16xf32> to vector<1x16xf32>
    %534 = vector.broadcast %533 : vector<1x16xf32> to vector<2x16xf32>
    %535 = arith.addf %531, %534 : vector<2x16xf32>
    %c1_341 = arith.constant 1 : index
    %c0_342 = arith.constant 0 : index
    %c0_343 = arith.constant 0 : index
    %536 = vector.load %arg11[%c1_341, %c0_342, %c0_343] : memref<3x16x16xf32, #tpu.memory_space<vmem>>, vector<1x16x16xf32>
    %537 = vector.shape_cast %536 : vector<1x16x16xf32> to vector<16x16xf32>
    %cst_344 = arith.constant dense<0.000000e+00> : vector<2x16xf32>
    %538 = tpu.matmul %458, %537, %cst_344 {dimension_numbers = #tpu.dot_dimension_numbers<[1], [0], [0], [1], [0, 0, 1, 1], [], []>} : vector<2x16xf32>, vector<16x16xf32>, vector<2x16xf32> -> vector<2x16xf32>
    %c1_345 = arith.constant 1 : index
    %c0_346 = arith.constant 0 : index
    %c0_347 = arith.constant 0 : index
    %539 = vector.load %arg12[%c1_345, %c0_346, %c0_347] : memref<3x1x16xf32, #tpu.memory_space<vmem>>, vector<1x1x16xf32>
    %540 = vector.shape_cast %539 : vector<1x1x16xf32> to vector<1x16xf32>
    %541 = vector.broadcast %540 : vector<1x16xf32> to vector<2x16xf32>
    %542 = arith.addf %538, %541 : vector<2x16xf32>
    %c2_348 = arith.constant 2 : index
    %c0_349 = arith.constant 0 : index
    %c0_350 = arith.constant 0 : index
    %543 = vector.load %arg11[%c2_348, %c0_349, %c0_350] : memref<3x16x16xf32, #tpu.memory_space<vmem>>, vector<1x16x16xf32>
    %544 = vector.shape_cast %543 : vector<1x16x16xf32> to vector<16x16xf32>
    %cst_351 = arith.constant dense<0.000000e+00> : vector<2x16xf32>
    %545 = tpu.matmul %458, %544, %cst_351 {dimension_numbers = #tpu.dot_dimension_numbers<[1], [0], [0], [1], [0, 0, 1, 1], [], []>} : vector<2x16xf32>, vector<16x16xf32>, vector<2x16xf32> -> vector<2x16xf32>
    %c2_352 = arith.constant 2 : index
    %c0_353 = arith.constant 0 : index
    %c0_354 = arith.constant 0 : index
    %546 = vector.load %arg12[%c2_352, %c0_353, %c0_354] : memref<3x1x16xf32, #tpu.memory_space<vmem>>, vector<1x1x16xf32>
    %547 = vector.shape_cast %546 : vector<1x1x16xf32> to vector<1x16xf32>
    %548 = vector.broadcast %547 : vector<1x16xf32> to vector<2x16xf32>
    %549 = arith.addf %545, %548 : vector<2x16xf32>
    %550 = arith.addf %514, %535 : vector<2x16xf32>
    %cst_355 = arith.constant 0.000000e+00 : f32
    %551 = vector.broadcast %cst_355 : f32 to vector<2x16xf32>
    %552 = arith.subf %551, %550 : vector<2x16xf32>
    %553 = math.exp %552 : vector<2x16xf32>
    %cst_356 = arith.constant 1.000000e+00 : f32
    %554 = vector.broadcast %cst_356 : f32 to vector<2x16xf32>
    %555 = arith.addf %554, %553 : vector<2x16xf32>
    %cst_357 = arith.constant 1.000000e+00 : f32
    %556 = vector.broadcast %cst_357 : f32 to vector<2x16xf32>
    %557 = arith.divf %556, %555 : vector<2x16xf32>
    %558 = arith.addf %521, %542 : vector<2x16xf32>
    %cst_358 = arith.constant 0.000000e+00 : f32
    %559 = vector.broadcast %cst_358 : f32 to vector<2x16xf32>
    %560 = arith.subf %559, %558 : vector<2x16xf32>
    %561 = math.exp %560 : vector<2x16xf32>
    %cst_359 = arith.constant 1.000000e+00 : f32
    %562 = vector.broadcast %cst_359 : f32 to vector<2x16xf32>
    %563 = arith.addf %562, %561 : vector<2x16xf32>
    %cst_360 = arith.constant 1.000000e+00 : f32
    %564 = vector.broadcast %cst_360 : f32 to vector<2x16xf32>
    %565 = arith.divf %564, %563 : vector<2x16xf32>
    %566 = arith.mulf %557, %549 : vector<2x16xf32>
    %567 = arith.addf %528, %566 : vector<2x16xf32>
    %568 = math.tanh %567 : vector<2x16xf32>
    %cst_361 = arith.constant 1.000000e+00 : f32
    %569 = vector.broadcast %cst_361 : f32 to vector<2x16xf32>
    %570 = arith.subf %569, %565 : vector<2x16xf32>
    %571 = arith.mulf %570, %568 : vector<2x16xf32>
    %572 = arith.mulf %565, %458 : vector<2x16xf32>
    %573 = arith.addf %571, %572 : vector<2x16xf32>
    %c6 = arith.constant 6 : index
    %c0_362 = arith.constant 0 : index
    %574 = vector.load %arg18[%c6, %c0_362] : memref<16x16xf32, #tpu.memory_space<vmem>>, vector<2x16xf32>
    tpu.vector_store %arg18[%c6, %c0_362], %573 {strides = array<i32>} : memref<16x16xf32, #tpu.memory_space<vmem>>, vector<2x16xf32>,
    %c0_363 = arith.constant 0 : index
    %c0_364 = arith.constant 0 : index
    %c0_365 = arith.constant 0 : index
    %575 = vector.load %arg7[%c0_363, %c0_364, %c0_365] : memref<3x16x16xf32, #tpu.memory_space<vmem>>, vector<1x16x16xf32>
    %576 = vector.shape_cast %575 : vector<1x16x16xf32> to vector<16x16xf32>
    %cst_366 = arith.constant dense<0.000000e+00> : vector<2x16xf32>
    %577 = tpu.matmul %507, %576, %cst_366 {dimension_numbers = #tpu.dot_dimension_numbers<[1], [0], [0], [1], [0, 0, 1, 1], [], []>} : vector<2x16xf32>, vector<16x16xf32>, vector<2x16xf32> -> vector<2x16xf32>
    %c0_367 = arith.constant 0 : index
    %c0_368 = arith.constant 0 : index
    %c0_369 = arith.constant 0 : index
    %578 = vector.load %arg8[%c0_367, %c0_368, %c0_369] : memref<3x1x16xf32, #tpu.memory_space<vmem>>, vector<1x1x16xf32>
    %579 = vector.shape_cast %578 : vector<1x1x16xf32> to vector<1x16xf32>
    %580 = vector.broadcast %579 : vector<1x16xf32> to vector<2x16xf32>
    %581 = arith.addf %577, %580 : vector<2x16xf32>
    %c1_370 = arith.constant 1 : index
    %c0_371 = arith.constant 0 : index
    %c0_372 = arith.constant 0 : index
    %582 = vector.load %arg7[%c1_370, %c0_371, %c0_372] : memref<3x16x16xf32, #tpu.memory_space<vmem>>, vector<1x16x16xf32>
    %583 = vector.shape_cast %582 : vector<1x16x16xf32> to vector<16x16xf32>
    %cst_373 = arith.constant dense<0.000000e+00> : vector<2x16xf32>
    %584 = tpu.matmul %507, %583, %cst_373 {dimension_numbers = #tpu.dot_dimension_numbers<[1], [0], [0], [1], [0, 0, 1, 1], [], []>} : vector<2x16xf32>, vector<16x16xf32>, vector<2x16xf32> -> vector<2x16xf32>
    %c1_374 = arith.constant 1 : index
    %c0_375 = arith.constant 0 : index
    %c0_376 = arith.constant 0 : index
    %585 = vector.load %arg8[%c1_374, %c0_375, %c0_376] : memref<3x1x16xf32, #tpu.memory_space<vmem>>, vector<1x1x16xf32>
    %586 = vector.shape_cast %585 : vector<1x1x16xf32> to vector<1x16xf32>
    %587 = vector.broadcast %586 : vector<1x16xf32> to vector<2x16xf32>
    %588 = arith.addf %584, %587 : vector<2x16xf32>
    %c2_377 = arith.constant 2 : index
    %c0_378 = arith.constant 0 : index
    %c0_379 = arith.constant 0 : index
    %589 = vector.load %arg7[%c2_377, %c0_378, %c0_379] : memref<3x16x16xf32, #tpu.memory_space<vmem>>, vector<1x16x16xf32>
    %590 = vector.shape_cast %589 : vector<1x16x16xf32> to vector<16x16xf32>
    %cst_380 = arith.constant dense<0.000000e+00> : vector<2x16xf32>
    %591 = tpu.matmul %507, %590, %cst_380 {dimension_numbers = #tpu.dot_dimension_numbers<[1], [0], [0], [1], [0, 0, 1, 1], [], []>} : vector<2x16xf32>, vector<16x16xf32>, vector<2x16xf32> -> vector<2x16xf32>
    %c2_381 = arith.constant 2 : index
    %c0_382 = arith.constant 0 : index
    %c0_383 = arith.constant 0 : index
    %592 = vector.load %arg8[%c2_381, %c0_382, %c0_383] : memref<3x1x16xf32, #tpu.memory_space<vmem>>, vector<1x1x16xf32>
    %593 = vector.shape_cast %592 : vector<1x1x16xf32> to vector<1x16xf32>
    %594 = vector.broadcast %593 : vector<1x16xf32> to vector<2x16xf32>
    %595 = arith.addf %591, %594 : vector<2x16xf32>
    %596 = vector.extract_strided_slice %90 {offsets = [8, 0], sizes = [2, 16], strides = [1, 1]} : vector<16x16xf32> to vector<2x16xf32>
    %597 = arith.addf %596, %581 : vector<2x16xf32>
    %cst_384 = arith.constant 0.000000e+00 : f32
    %598 = vector.broadcast %cst_384 : f32 to vector<2x16xf32>
    %599 = arith.subf %598, %597 : vector<2x16xf32>
    %600 = math.exp %599 : vector<2x16xf32>
    %cst_385 = arith.constant 1.000000e+00 : f32
    %601 = vector.broadcast %cst_385 : f32 to vector<2x16xf32>
    %602 = arith.addf %601, %600 : vector<2x16xf32>
    %cst_386 = arith.constant 1.000000e+00 : f32
    %603 = vector.broadcast %cst_386 : f32 to vector<2x16xf32>
    %604 = arith.divf %603, %602 : vector<2x16xf32>
    %605 = vector.extract_strided_slice %101 {offsets = [8, 0], sizes = [2, 16], strides = [1, 1]} : vector<16x16xf32> to vector<2x16xf32>
    %606 = arith.addf %605, %588 : vector<2x16xf32>
    %cst_387 = arith.constant 0.000000e+00 : f32
    %607 = vector.broadcast %cst_387 : f32 to vector<2x16xf32>
    %608 = arith.subf %607, %606 : vector<2x16xf32>
    %609 = math.exp %608 : vector<2x16xf32>
    %cst_388 = arith.constant 1.000000e+00 : f32
    %610 = vector.broadcast %cst_388 : f32 to vector<2x16xf32>
    %611 = arith.addf %610, %609 : vector<2x16xf32>
    %cst_389 = arith.constant 1.000000e+00 : f32
    %612 = vector.broadcast %cst_389 : f32 to vector<2x16xf32>
    %613 = arith.divf %612, %611 : vector<2x16xf32>
    %614 = vector.extract_strided_slice %112 {offsets = [8, 0], sizes = [2, 16], strides = [1, 1]} : vector<16x16xf32> to vector<2x16xf32>
    %615 = arith.mulf %604, %595 : vector<2x16xf32>
    %616 = arith.addf %614, %615 : vector<2x16xf32>
    %617 = math.tanh %616 : vector<2x16xf32>
    %cst_390 = arith.constant 1.000000e+00 : f32
    %618 = vector.broadcast %cst_390 : f32 to vector<2x16xf32>
    %619 = arith.subf %618, %613 : vector<2x16xf32>
    %620 = arith.mulf %619, %617 : vector<2x16xf32>
    %621 = arith.mulf %613, %507 : vector<2x16xf32>
    %622 = arith.addf %620, %621 : vector<2x16xf32>
    %c0_391 = arith.constant 0 : index
    %c0_392 = arith.constant 0 : index
    %c0_393 = arith.constant 0 : index
    %623 = vector.load %arg9[%c0_391, %c0_392, %c0_393] : memref<3x16x16xf32, #tpu.memory_space<vmem>>, vector<1x16x16xf32>
    %624 = vector.shape_cast %623 : vector<1x16x16xf32> to vector<16x16xf32>
    %cst_394 = arith.constant dense<0.000000e+00> : vector<2x16xf32>
    %625 = tpu.matmul %622, %624, %cst_394 {dimension_numbers = #tpu.dot_dimension_numbers<[1], [0], [0], [1], [0, 0, 1, 1], [], []>} : vector<2x16xf32>, vector<16x16xf32>, vector<2x16xf32> -> vector<2x16xf32>
    %c0_395 = arith.constant 0 : index
    %c0_396 = arith.constant 0 : index
    %c0_397 = arith.constant 0 : index
    %626 = vector.load %arg10[%c0_395, %c0_396, %c0_397] : memref<3x1x16xf32, #tpu.memory_space<vmem>>, vector<1x1x16xf32>
    %627 = vector.shape_cast %626 : vector<1x1x16xf32> to vector<1x16xf32>
    %628 = vector.broadcast %627 : vector<1x16xf32> to vector<2x16xf32>
    %629 = arith.addf %625, %628 : vector<2x16xf32>
    %c1_398 = arith.constant 1 : index
    %c0_399 = arith.constant 0 : index
    %c0_400 = arith.constant 0 : index
    %630 = vector.load %arg9[%c1_398, %c0_399, %c0_400] : memref<3x16x16xf32, #tpu.memory_space<vmem>>, vector<1x16x16xf32>
    %631 = vector.shape_cast %630 : vector<1x16x16xf32> to vector<16x16xf32>
    %cst_401 = arith.constant dense<0.000000e+00> : vector<2x16xf32>
    %632 = tpu.matmul %622, %631, %cst_401 {dimension_numbers = #tpu.dot_dimension_numbers<[1], [0], [0], [1], [0, 0, 1, 1], [], []>} : vector<2x16xf32>, vector<16x16xf32>, vector<2x16xf32> -> vector<2x16xf32>
    %c1_402 = arith.constant 1 : index
    %c0_403 = arith.constant 0 : index
    %c0_404 = arith.constant 0 : index
    %633 = vector.load %arg10[%c1_402, %c0_403, %c0_404] : memref<3x1x16xf32, #tpu.memory_space<vmem>>, vector<1x1x16xf32>
    %634 = vector.shape_cast %633 : vector<1x1x16xf32> to vector<1x16xf32>
    %635 = vector.broadcast %634 : vector<1x16xf32> to vector<2x16xf32>
    %636 = arith.addf %632, %635 : vector<2x16xf32>
    %c2_405 = arith.constant 2 : index
    %c0_406 = arith.constant 0 : index
    %c0_407 = arith.constant 0 : index
    %637 = vector.load %arg9[%c2_405, %c0_406, %c0_407] : memref<3x16x16xf32, #tpu.memory_space<vmem>>, vector<1x16x16xf32>
    %638 = vector.shape_cast %637 : vector<1x16x16xf32> to vector<16x16xf32>
    %cst_408 = arith.constant dense<0.000000e+00> : vector<2x16xf32>
    %639 = tpu.matmul %622, %638, %cst_408 {dimension_numbers = #tpu.dot_dimension_numbers<[1], [0], [0], [1], [0, 0, 1, 1], [], []>} : vector<2x16xf32>, vector<16x16xf32>, vector<2x16xf32> -> vector<2x16xf32>
    %c2_409 = arith.constant 2 : index
    %c0_410 = arith.constant 0 : index
    %c0_411 = arith.constant 0 : index
    %640 = vector.load %arg10[%c2_409, %c0_410, %c0_411] : memref<3x1x16xf32, #tpu.memory_space<vmem>>, vector<1x1x16xf32>
    %641 = vector.shape_cast %640 : vector<1x1x16xf32> to vector<1x16xf32>
    %642 = vector.broadcast %641 : vector<1x16xf32> to vector<2x16xf32>
    %643 = arith.addf %639, %642 : vector<2x16xf32>
    %c0_412 = arith.constant 0 : index
    %c0_413 = arith.constant 0 : index
    %c0_414 = arith.constant 0 : index
    %644 = vector.load %arg11[%c0_412, %c0_413, %c0_414] : memref<3x16x16xf32, #tpu.memory_space<vmem>>, vector<1x16x16xf32>
    %645 = vector.shape_cast %644 : vector<1x16x16xf32> to vector<16x16xf32>
    %cst_415 = arith.constant dense<0.000000e+00> : vector<2x16xf32>
    %646 = tpu.matmul %573, %645, %cst_415 {dimension_numbers = #tpu.dot_dimension_numbers<[1], [0], [0], [1], [0, 0, 1, 1], [], []>} : vector<2x16xf32>, vector<16x16xf32>, vector<2x16xf32> -> vector<2x16xf32>
    %c0_416 = arith.constant 0 : index
    %c0_417 = arith.constant 0 : index
    %c0_418 = arith.constant 0 : index
    %647 = vector.load %arg12[%c0_416, %c0_417, %c0_418] : memref<3x1x16xf32, #tpu.memory_space<vmem>>, vector<1x1x16xf32>
    %648 = vector.shape_cast %647 : vector<1x1x16xf32> to vector<1x16xf32>
    %649 = vector.broadcast %648 : vector<1x16xf32> to vector<2x16xf32>
    %650 = arith.addf %646, %649 : vector<2x16xf32>
    %c1_419 = arith.constant 1 : index
    %c0_420 = arith.constant 0 : index
    %c0_421 = arith.constant 0 : index
    %651 = vector.load %arg11[%c1_419, %c0_420, %c0_421] : memref<3x16x16xf32, #tpu.memory_space<vmem>>, vector<1x16x16xf32>
    %652 = vector.shape_cast %651 : vector<1x16x16xf32> to vector<16x16xf32>
    %cst_422 = arith.constant dense<0.000000e+00> : vector<2x16xf32>
    %653 = tpu.matmul %573, %652, %cst_422 {dimension_numbers = #tpu.dot_dimension_numbers<[1], [0], [0], [1], [0, 0, 1, 1], [], []>} : vector<2x16xf32>, vector<16x16xf32>, vector<2x16xf32> -> vector<2x16xf32>
    %c1_423 = arith.constant 1 : index
    %c0_424 = arith.constant 0 : index
    %c0_425 = arith.constant 0 : index
    %654 = vector.load %arg12[%c1_423, %c0_424, %c0_425] : memref<3x1x16xf32, #tpu.memory_space<vmem>>, vector<1x1x16xf32>
    %655 = vector.shape_cast %654 : vector<1x1x16xf32> to vector<1x16xf32>
    %656 = vector.broadcast %655 : vector<1x16xf32> to vector<2x16xf32>
    %657 = arith.addf %653, %656 : vector<2x16xf32>
    %c2_426 = arith.constant 2 : index
    %c0_427 = arith.constant 0 : index
    %c0_428 = arith.constant 0 : index
    %658 = vector.load %arg11[%c2_426, %c0_427, %c0_428] : memref<3x16x16xf32, #tpu.memory_space<vmem>>, vector<1x16x16xf32>
    %659 = vector.shape_cast %658 : vector<1x16x16xf32> to vector<16x16xf32>
    %cst_429 = arith.constant dense<0.000000e+00> : vector<2x16xf32>
    %660 = tpu.matmul %573, %659, %cst_429 {dimension_numbers = #tpu.dot_dimension_numbers<[1], [0], [0], [1], [0, 0, 1, 1], [], []>} : vector<2x16xf32>, vector<16x16xf32>, vector<2x16xf32> -> vector<2x16xf32>
    %c2_430 = arith.constant 2 : index
    %c0_431 = arith.constant 0 : index
    %c0_432 = arith.constant 0 : index
    %661 = vector.load %arg12[%c2_430, %c0_431, %c0_432] : memref<3x1x16xf32, #tpu.memory_space<vmem>>, vector<1x1x16xf32>
    %662 = vector.shape_cast %661 : vector<1x1x16xf32> to vector<1x16xf32>
    %663 = vector.broadcast %662 : vector<1x16xf32> to vector<2x16xf32>
    %664 = arith.addf %660, %663 : vector<2x16xf32>
    %665 = arith.addf %629, %650 : vector<2x16xf32>
    %cst_433 = arith.constant 0.000000e+00 : f32
    %666 = vector.broadcast %cst_433 : f32 to vector<2x16xf32>
    %667 = arith.subf %666, %665 : vector<2x16xf32>
    %668 = math.exp %667 : vector<2x16xf32>
    %cst_434 = arith.constant 1.000000e+00 : f32
    %669 = vector.broadcast %cst_434 : f32 to vector<2x16xf32>
    %670 = arith.addf %669, %668 : vector<2x16xf32>
    %cst_435 = arith.constant 1.000000e+00 : f32
    %671 = vector.broadcast %cst_435 : f32 to vector<2x16xf32>
    %672 = arith.divf %671, %670 : vector<2x16xf32>
    %673 = arith.addf %636, %657 : vector<2x16xf32>
    %cst_436 = arith.constant 0.000000e+00 : f32
    %674 = vector.broadcast %cst_436 : f32 to vector<2x16xf32>
    %675 = arith.subf %674, %673 : vector<2x16xf32>
    %676 = math.exp %675 : vector<2x16xf32>
    %cst_437 = arith.constant 1.000000e+00 : f32
    %677 = vector.broadcast %cst_437 : f32 to vector<2x16xf32>
    %678 = arith.addf %677, %676 : vector<2x16xf32>
    %cst_438 = arith.constant 1.000000e+00 : f32
    %679 = vector.broadcast %cst_438 : f32 to vector<2x16xf32>
    %680 = arith.divf %679, %678 : vector<2x16xf32>
    %681 = arith.mulf %672, %664 : vector<2x16xf32>
    %682 = arith.addf %643, %681 : vector<2x16xf32>
    %683 = math.tanh %682 : vector<2x16xf32>
    %cst_439 = arith.constant 1.000000e+00 : f32
    %684 = vector.broadcast %cst_439 : f32 to vector<2x16xf32>
    %685 = arith.subf %684, %680 : vector<2x16xf32>
    %686 = arith.mulf %685, %683 : vector<2x16xf32>
    %687 = arith.mulf %680, %573 : vector<2x16xf32>
    %688 = arith.addf %686, %687 : vector<2x16xf32>
    %c8 = arith.constant 8 : index
    %c0_440 = arith.constant 0 : index
    %689 = vector.load %arg18[%c8, %c0_440] : memref<16x16xf32, #tpu.memory_space<vmem>>, vector<2x16xf32>
    tpu.vector_store %arg18[%c8, %c0_440], %688 {strides = array<i32>} : memref<16x16xf32, #tpu.memory_space<vmem>>, vector<2x16xf32>,
    %c0_441 = arith.constant 0 : index
    %c0_442 = arith.constant 0 : index
    %c0_443 = arith.constant 0 : index
    %690 = vector.load %arg7[%c0_441, %c0_442, %c0_443] : memref<3x16x16xf32, #tpu.memory_space<vmem>>, vector<1x16x16xf32>
    %691 = vector.shape_cast %690 : vector<1x16x16xf32> to vector<16x16xf32>
    %cst_444 = arith.constant dense<0.000000e+00> : vector<2x16xf32>
    %692 = tpu.matmul %622, %691, %cst_444 {dimension_numbers = #tpu.dot_dimension_numbers<[1], [0], [0], [1], [0, 0, 1, 1], [], []>} : vector<2x16xf32>, vector<16x16xf32>, vector<2x16xf32> -> vector<2x16xf32>
    %c0_445 = arith.constant 0 : index
    %c0_446 = arith.constant 0 : index
    %c0_447 = arith.constant 0 : index
    %693 = vector.load %arg8[%c0_445, %c0_446, %c0_447] : memref<3x1x16xf32, #tpu.memory_space<vmem>>, vector<1x1x16xf32>
    %694 = vector.shape_cast %693 : vector<1x1x16xf32> to vector<1x16xf32>
    %695 = vector.broadcast %694 : vector<1x16xf32> to vector<2x16xf32>
    %696 = arith.addf %692, %695 : vector<2x16xf32>
    %c1_448 = arith.constant 1 : index
    %c0_449 = arith.constant 0 : index
    %c0_450 = arith.constant 0 : index
    %697 = vector.load %arg7[%c1_448, %c0_449, %c0_450] : memref<3x16x16xf32, #tpu.memory_space<vmem>>, vector<1x16x16xf32>
    %698 = vector.shape_cast %697 : vector<1x16x16xf32> to vector<16x16xf32>
    %cst_451 = arith.constant dense<0.000000e+00> : vector<2x16xf32>
    %699 = tpu.matmul %622, %698, %cst_451 {dimension_numbers = #tpu.dot_dimension_numbers<[1], [0], [0], [1], [0, 0, 1, 1], [], []>} : vector<2x16xf32>, vector<16x16xf32>, vector<2x16xf32> -> vector<2x16xf32>
    %c1_452 = arith.constant 1 : index
    %c0_453 = arith.constant 0 : index
    %c0_454 = arith.constant 0 : index
    %700 = vector.load %arg8[%c1_452, %c0_453, %c0_454] : memref<3x1x16xf32, #tpu.memory_space<vmem>>, vector<1x1x16xf32>
    %701 = vector.shape_cast %700 : vector<1x1x16xf32> to vector<1x16xf32>
    %702 = vector.broadcast %701 : vector<1x16xf32> to vector<2x16xf32>
    %703 = arith.addf %699, %702 : vector<2x16xf32>
    %c2_455 = arith.constant 2 : index
    %c0_456 = arith.constant 0 : index
    %c0_457 = arith.constant 0 : index
    %704 = vector.load %arg7[%c2_455, %c0_456, %c0_457] : memref<3x16x16xf32, #tpu.memory_space<vmem>>, vector<1x16x16xf32>
    %705 = vector.shape_cast %704 : vector<1x16x16xf32> to vector<16x16xf32>
    %cst_458 = arith.constant dense<0.000000e+00> : vector<2x16xf32>
    %706 = tpu.matmul %622, %705, %cst_458 {dimension_numbers = #tpu.dot_dimension_numbers<[1], [0], [0], [1], [0, 0, 1, 1], [], []>} : vector<2x16xf32>, vector<16x16xf32>, vector<2x16xf32> -> vector<2x16xf32>
    %c2_459 = arith.constant 2 : index
    %c0_460 = arith.constant 0 : index
    %c0_461 = arith.constant 0 : index
    %707 = vector.load %arg8[%c2_459, %c0_460, %c0_461] : memref<3x1x16xf32, #tpu.memory_space<vmem>>, vector<1x1x16xf32>
    %708 = vector.shape_cast %707 : vector<1x1x16xf32> to vector<1x16xf32>
    %709 = vector.broadcast %708 : vector<1x16xf32> to vector<2x16xf32>
    %710 = arith.addf %706, %709 : vector<2x16xf32>
    %711 = vector.extract_strided_slice %90 {offsets = [10, 0], sizes = [2, 16], strides = [1, 1]} : vector<16x16xf32> to vector<2x16xf32>
    %712 = arith.addf %711, %696 : vector<2x16xf32>
    %cst_462 = arith.constant 0.000000e+00 : f32
    %713 = vector.broadcast %cst_462 : f32 to vector<2x16xf32>
    %714 = arith.subf %713, %712 : vector<2x16xf32>
    %715 = math.exp %714 : vector<2x16xf32>
    %cst_463 = arith.constant 1.000000e+00 : f32
    %716 = vector.broadcast %cst_463 : f32 to vector<2x16xf32>
    %717 = arith.addf %716, %715 : vector<2x16xf32>
    %cst_464 = arith.constant 1.000000e+00 : f32
    %718 = vector.broadcast %cst_464 : f32 to vector<2x16xf32>
    %719 = arith.divf %718, %717 : vector<2x16xf32>
    %720 = vector.extract_strided_slice %101 {offsets = [10, 0], sizes = [2, 16], strides = [1, 1]} : vector<16x16xf32> to vector<2x16xf32>
    %721 = arith.addf %720, %703 : vector<2x16xf32>
    %cst_465 = arith.constant 0.000000e+00 : f32
    %722 = vector.broadcast %cst_465 : f32 to vector<2x16xf32>
    %723 = arith.subf %722, %721 : vector<2x16xf32>
    %724 = math.exp %723 : vector<2x16xf32>
    %cst_466 = arith.constant 1.000000e+00 : f32
    %725 = vector.broadcast %cst_466 : f32 to vector<2x16xf32>
    %726 = arith.addf %725, %724 : vector<2x16xf32>
    %cst_467 = arith.constant 1.000000e+00 : f32
    %727 = vector.broadcast %cst_467 : f32 to vector<2x16xf32>
    %728 = arith.divf %727, %726 : vector<2x16xf32>
    %729 = vector.extract_strided_slice %112 {offsets = [10, 0], sizes = [2, 16], strides = [1, 1]} : vector<16x16xf32> to vector<2x16xf32>
    %730 = arith.mulf %719, %710 : vector<2x16xf32>
    %731 = arith.addf %729, %730 : vector<2x16xf32>
    %732 = math.tanh %731 : vector<2x16xf32>
    %cst_468 = arith.constant 1.000000e+00 : f32
    %733 = vector.broadcast %cst_468 : f32 to vector<2x16xf32>
    %734 = arith.subf %733, %728 : vector<2x16xf32>
    %735 = arith.mulf %734, %732 : vector<2x16xf32>
    %736 = arith.mulf %728, %622 : vector<2x16xf32>
    %737 = arith.addf %735, %736 : vector<2x16xf32>
    %c0_469 = arith.constant 0 : index
    %c0_470 = arith.constant 0 : index
    %c0_471 = arith.constant 0 : index
    %738 = vector.load %arg9[%c0_469, %c0_470, %c0_471] : memref<3x16x16xf32, #tpu.memory_space<vmem>>, vector<1x16x16xf32>
    %739 = vector.shape_cast %738 : vector<1x16x16xf32> to vector<16x16xf32>
    %cst_472 = arith.constant dense<0.000000e+00> : vector<2x16xf32>
    %740 = tpu.matmul %737, %739, %cst_472 {dimension_numbers = #tpu.dot_dimension_numbers<[1], [0], [0], [1], [0, 0, 1, 1], [], []>} : vector<2x16xf32>, vector<16x16xf32>, vector<2x16xf32> -> vector<2x16xf32>
    %c0_473 = arith.constant 0 : index
    %c0_474 = arith.constant 0 : index
    %c0_475 = arith.constant 0 : index
    %741 = vector.load %arg10[%c0_473, %c0_474, %c0_475] : memref<3x1x16xf32, #tpu.memory_space<vmem>>, vector<1x1x16xf32>
    %742 = vector.shape_cast %741 : vector<1x1x16xf32> to vector<1x16xf32>
    %743 = vector.broadcast %742 : vector<1x16xf32> to vector<2x16xf32>
    %744 = arith.addf %740, %743 : vector<2x16xf32>
    %c1_476 = arith.constant 1 : index
    %c0_477 = arith.constant 0 : index
    %c0_478 = arith.constant 0 : index
    %745 = vector.load %arg9[%c1_476, %c0_477, %c0_478] : memref<3x16x16xf32, #tpu.memory_space<vmem>>, vector<1x16x16xf32>
    %746 = vector.shape_cast %745 : vector<1x16x16xf32> to vector<16x16xf32>
    %cst_479 = arith.constant dense<0.000000e+00> : vector<2x16xf32>
    %747 = tpu.matmul %737, %746, %cst_479 {dimension_numbers = #tpu.dot_dimension_numbers<[1], [0], [0], [1], [0, 0, 1, 1], [], []>} : vector<2x16xf32>, vector<16x16xf32>, vector<2x16xf32> -> vector<2x16xf32>
    %c1_480 = arith.constant 1 : index
    %c0_481 = arith.constant 0 : index
    %c0_482 = arith.constant 0 : index
    %748 = vector.load %arg10[%c1_480, %c0_481, %c0_482] : memref<3x1x16xf32, #tpu.memory_space<vmem>>, vector<1x1x16xf32>
    %749 = vector.shape_cast %748 : vector<1x1x16xf32> to vector<1x16xf32>
    %750 = vector.broadcast %749 : vector<1x16xf32> to vector<2x16xf32>
    %751 = arith.addf %747, %750 : vector<2x16xf32>
    %c2_483 = arith.constant 2 : index
    %c0_484 = arith.constant 0 : index
    %c0_485 = arith.constant 0 : index
    %752 = vector.load %arg9[%c2_483, %c0_484, %c0_485] : memref<3x16x16xf32, #tpu.memory_space<vmem>>, vector<1x16x16xf32>
    %753 = vector.shape_cast %752 : vector<1x16x16xf32> to vector<16x16xf32>
    %cst_486 = arith.constant dense<0.000000e+00> : vector<2x16xf32>
    %754 = tpu.matmul %737, %753, %cst_486 {dimension_numbers = #tpu.dot_dimension_numbers<[1], [0], [0], [1], [0, 0, 1, 1], [], []>} : vector<2x16xf32>, vector<16x16xf32>, vector<2x16xf32> -> vector<2x16xf32>
    %c2_487 = arith.constant 2 : index
    %c0_488 = arith.constant 0 : index
    %c0_489 = arith.constant 0 : index
    %755 = vector.load %arg10[%c2_487, %c0_488, %c0_489] : memref<3x1x16xf32, #tpu.memory_space<vmem>>, vector<1x1x16xf32>
    %756 = vector.shape_cast %755 : vector<1x1x16xf32> to vector<1x16xf32>
    %757 = vector.broadcast %756 : vector<1x16xf32> to vector<2x16xf32>
    %758 = arith.addf %754, %757 : vector<2x16xf32>
    %c0_490 = arith.constant 0 : index
    %c0_491 = arith.constant 0 : index
    %c0_492 = arith.constant 0 : index
    %759 = vector.load %arg11[%c0_490, %c0_491, %c0_492] : memref<3x16x16xf32, #tpu.memory_space<vmem>>, vector<1x16x16xf32>
    %760 = vector.shape_cast %759 : vector<1x16x16xf32> to vector<16x16xf32>
    %cst_493 = arith.constant dense<0.000000e+00> : vector<2x16xf32>
    %761 = tpu.matmul %688, %760, %cst_493 {dimension_numbers = #tpu.dot_dimension_numbers<[1], [0], [0], [1], [0, 0, 1, 1], [], []>} : vector<2x16xf32>, vector<16x16xf32>, vector<2x16xf32> -> vector<2x16xf32>
    %c0_494 = arith.constant 0 : index
    %c0_495 = arith.constant 0 : index
    %c0_496 = arith.constant 0 : index
    %762 = vector.load %arg12[%c0_494, %c0_495, %c0_496] : memref<3x1x16xf32, #tpu.memory_space<vmem>>, vector<1x1x16xf32>
    %763 = vector.shape_cast %762 : vector<1x1x16xf32> to vector<1x16xf32>
    %764 = vector.broadcast %763 : vector<1x16xf32> to vector<2x16xf32>
    %765 = arith.addf %761, %764 : vector<2x16xf32>
    %c1_497 = arith.constant 1 : index
    %c0_498 = arith.constant 0 : index
    %c0_499 = arith.constant 0 : index
    %766 = vector.load %arg11[%c1_497, %c0_498, %c0_499] : memref<3x16x16xf32, #tpu.memory_space<vmem>>, vector<1x16x16xf32>
    %767 = vector.shape_cast %766 : vector<1x16x16xf32> to vector<16x16xf32>
    %cst_500 = arith.constant dense<0.000000e+00> : vector<2x16xf32>
    %768 = tpu.matmul %688, %767, %cst_500 {dimension_numbers = #tpu.dot_dimension_numbers<[1], [0], [0], [1], [0, 0, 1, 1], [], []>} : vector<2x16xf32>, vector<16x16xf32>, vector<2x16xf32> -> vector<2x16xf32>
    %c1_501 = arith.constant 1 : index
    %c0_502 = arith.constant 0 : index
    %c0_503 = arith.constant 0 : index
    %769 = vector.load %arg12[%c1_501, %c0_502, %c0_503] : memref<3x1x16xf32, #tpu.memory_space<vmem>>, vector<1x1x16xf32>
    %770 = vector.shape_cast %769 : vector<1x1x16xf32> to vector<1x16xf32>
    %771 = vector.broadcast %770 : vector<1x16xf32> to vector<2x16xf32>
    %772 = arith.addf %768, %771 : vector<2x16xf32>
    %c2_504 = arith.constant 2 : index
    %c0_505 = arith.constant 0 : index
    %c0_506 = arith.constant 0 : index
    %773 = vector.load %arg11[%c2_504, %c0_505, %c0_506] : memref<3x16x16xf32, #tpu.memory_space<vmem>>, vector<1x16x16xf32>
    %774 = vector.shape_cast %773 : vector<1x16x16xf32> to vector<16x16xf32>
    %cst_507 = arith.constant dense<0.000000e+00> : vector<2x16xf32>
    %775 = tpu.matmul %688, %774, %cst_507 {dimension_numbers = #tpu.dot_dimension_numbers<[1], [0], [0], [1], [0, 0, 1, 1], [], []>} : vector<2x16xf32>, vector<16x16xf32>, vector<2x16xf32> -> vector<2x16xf32>
    %c2_508 = arith.constant 2 : index
    %c0_509 = arith.constant 0 : index
    %c0_510 = arith.constant 0 : index
    %776 = vector.load %arg12[%c2_508, %c0_509, %c0_510] : memref<3x1x16xf32, #tpu.memory_space<vmem>>, vector<1x1x16xf32>
    %777 = vector.shape_cast %776 : vector<1x1x16xf32> to vector<1x16xf32>
    %778 = vector.broadcast %777 : vector<1x16xf32> to vector<2x16xf32>
    %779 = arith.addf %775, %778 : vector<2x16xf32>
    %780 = arith.addf %744, %765 : vector<2x16xf32>
    %cst_511 = arith.constant 0.000000e+00 : f32
    %781 = vector.broadcast %cst_511 : f32 to vector<2x16xf32>
    %782 = arith.subf %781, %780 : vector<2x16xf32>
    %783 = math.exp %782 : vector<2x16xf32>
    %cst_512 = arith.constant 1.000000e+00 : f32
    %784 = vector.broadcast %cst_512 : f32 to vector<2x16xf32>
    %785 = arith.addf %784, %783 : vector<2x16xf32>
    %cst_513 = arith.constant 1.000000e+00 : f32
    %786 = vector.broadcast %cst_513 : f32 to vector<2x16xf32>
    %787 = arith.divf %786, %785 : vector<2x16xf32>
    %788 = arith.addf %751, %772 : vector<2x16xf32>
    %cst_514 = arith.constant 0.000000e+00 : f32
    %789 = vector.broadcast %cst_514 : f32 to vector<2x16xf32>
    %790 = arith.subf %789, %788 : vector<2x16xf32>
    %791 = math.exp %790 : vector<2x16xf32>
    %cst_515 = arith.constant 1.000000e+00 : f32
    %792 = vector.broadcast %cst_515 : f32 to vector<2x16xf32>
    %793 = arith.addf %792, %791 : vector<2x16xf32>
    %cst_516 = arith.constant 1.000000e+00 : f32
    %794 = vector.broadcast %cst_516 : f32 to vector<2x16xf32>
    %795 = arith.divf %794, %793 : vector<2x16xf32>
    %796 = arith.mulf %787, %779 : vector<2x16xf32>
    %797 = arith.addf %758, %796 : vector<2x16xf32>
    %798 = math.tanh %797 : vector<2x16xf32>
    %cst_517 = arith.constant 1.000000e+00 : f32
    %799 = vector.broadcast %cst_517 : f32 to vector<2x16xf32>
    %800 = arith.subf %799, %795 : vector<2x16xf32>
    %801 = arith.mulf %800, %798 : vector<2x16xf32>
    %802 = arith.mulf %795, %688 : vector<2x16xf32>
    %803 = arith.addf %801, %802 : vector<2x16xf32>
    %c10 = arith.constant 10 : index
    %c0_518 = arith.constant 0 : index
    %804 = vector.load %arg18[%c10, %c0_518] : memref<16x16xf32, #tpu.memory_space<vmem>>, vector<2x16xf32>
    tpu.vector_store %arg18[%c10, %c0_518], %803 {strides = array<i32>} : memref<16x16xf32, #tpu.memory_space<vmem>>, vector<2x16xf32>,
    %c0_519 = arith.constant 0 : index
    %c0_520 = arith.constant 0 : index
    %c0_521 = arith.constant 0 : index
    %805 = vector.load %arg7[%c0_519, %c0_520, %c0_521] : memref<3x16x16xf32, #tpu.memory_space<vmem>>, vector<1x16x16xf32>
    %806 = vector.shape_cast %805 : vector<1x16x16xf32> to vector<16x16xf32>
    %cst_522 = arith.constant dense<0.000000e+00> : vector<2x16xf32>
    %807 = tpu.matmul %737, %806, %cst_522 {dimension_numbers = #tpu.dot_dimension_numbers<[1], [0], [0], [1], [0, 0, 1, 1], [], []>} : vector<2x16xf32>, vector<16x16xf32>, vector<2x16xf32> -> vector<2x16xf32>
    %c0_523 = arith.constant 0 : index
    %c0_524 = arith.constant 0 : index
    %c0_525 = arith.constant 0 : index
    %808 = vector.load %arg8[%c0_523, %c0_524, %c0_525] : memref<3x1x16xf32, #tpu.memory_space<vmem>>, vector<1x1x16xf32>
    %809 = vector.shape_cast %808 : vector<1x1x16xf32> to vector<1x16xf32>
    %810 = vector.broadcast %809 : vector<1x16xf32> to vector<2x16xf32>
    %811 = arith.addf %807, %810 : vector<2x16xf32>
    %c1_526 = arith.constant 1 : index
    %c0_527 = arith.constant 0 : index
    %c0_528 = arith.constant 0 : index
    %812 = vector.load %arg7[%c1_526, %c0_527, %c0_528] : memref<3x16x16xf32, #tpu.memory_space<vmem>>, vector<1x16x16xf32>
    %813 = vector.shape_cast %812 : vector<1x16x16xf32> to vector<16x16xf32>
    %cst_529 = arith.constant dense<0.000000e+00> : vector<2x16xf32>
    %814 = tpu.matmul %737, %813, %cst_529 {dimension_numbers = #tpu.dot_dimension_numbers<[1], [0], [0], [1], [0, 0, 1, 1], [], []>} : vector<2x16xf32>, vector<16x16xf32>, vector<2x16xf32> -> vector<2x16xf32>
    %c1_530 = arith.constant 1 : index
    %c0_531 = arith.constant 0 : index
    %c0_532 = arith.constant 0 : index
    %815 = vector.load %arg8[%c1_530, %c0_531, %c0_532] : memref<3x1x16xf32, #tpu.memory_space<vmem>>, vector<1x1x16xf32>
    %816 = vector.shape_cast %815 : vector<1x1x16xf32> to vector<1x16xf32>
    %817 = vector.broadcast %816 : vector<1x16xf32> to vector<2x16xf32>
    %818 = arith.addf %814, %817 : vector<2x16xf32>
    %c2_533 = arith.constant 2 : index
    %c0_534 = arith.constant 0 : index
    %c0_535 = arith.constant 0 : index
    %819 = vector.load %arg7[%c2_533, %c0_534, %c0_535] : memref<3x16x16xf32, #tpu.memory_space<vmem>>, vector<1x16x16xf32>
    %820 = vector.shape_cast %819 : vector<1x16x16xf32> to vector<16x16xf32>
    %cst_536 = arith.constant dense<0.000000e+00> : vector<2x16xf32>
    %821 = tpu.matmul %737, %820, %cst_536 {dimension_numbers = #tpu.dot_dimension_numbers<[1], [0], [0], [1], [0, 0, 1, 1], [], []>} : vector<2x16xf32>, vector<16x16xf32>, vector<2x16xf32> -> vector<2x16xf32>
    %c2_537 = arith.constant 2 : index
    %c0_538 = arith.constant 0 : index
    %c0_539 = arith.constant 0 : index
    %822 = vector.load %arg8[%c2_537, %c0_538, %c0_539] : memref<3x1x16xf32, #tpu.memory_space<vmem>>, vector<1x1x16xf32>
    %823 = vector.shape_cast %822 : vector<1x1x16xf32> to vector<1x16xf32>
    %824 = vector.broadcast %823 : vector<1x16xf32> to vector<2x16xf32>
    %825 = arith.addf %821, %824 : vector<2x16xf32>
    %826 = vector.extract_strided_slice %90 {offsets = [12, 0], sizes = [2, 16], strides = [1, 1]} : vector<16x16xf32> to vector<2x16xf32>
    %827 = arith.addf %826, %811 : vector<2x16xf32>
    %cst_540 = arith.constant 0.000000e+00 : f32
    %828 = vector.broadcast %cst_540 : f32 to vector<2x16xf32>
    %829 = arith.subf %828, %827 : vector<2x16xf32>
    %830 = math.exp %829 : vector<2x16xf32>
    %cst_541 = arith.constant 1.000000e+00 : f32
    %831 = vector.broadcast %cst_541 : f32 to vector<2x16xf32>
    %832 = arith.addf %831, %830 : vector<2x16xf32>
    %cst_542 = arith.constant 1.000000e+00 : f32
    %833 = vector.broadcast %cst_542 : f32 to vector<2x16xf32>
    %834 = arith.divf %833, %832 : vector<2x16xf32>
    %835 = vector.extract_strided_slice %101 {offsets = [12, 0], sizes = [2, 16], strides = [1, 1]} : vector<16x16xf32> to vector<2x16xf32>
    %836 = arith.addf %835, %818 : vector<2x16xf32>
    %cst_543 = arith.constant 0.000000e+00 : f32
    %837 = vector.broadcast %cst_543 : f32 to vector<2x16xf32>
    %838 = arith.subf %837, %836 : vector<2x16xf32>
    %839 = math.exp %838 : vector<2x16xf32>
    %cst_544 = arith.constant 1.000000e+00 : f32
    %840 = vector.broadcast %cst_544 : f32 to vector<2x16xf32>
    %841 = arith.addf %840, %839 : vector<2x16xf32>
    %cst_545 = arith.constant 1.000000e+00 : f32
    %842 = vector.broadcast %cst_545 : f32 to vector<2x16xf32>
    %843 = arith.divf %842, %841 : vector<2x16xf32>
    %844 = vector.extract_strided_slice %112 {offsets = [12, 0], sizes = [2, 16], strides = [1, 1]} : vector<16x16xf32> to vector<2x16xf32>
    %845 = arith.mulf %834, %825 : vector<2x16xf32>
    %846 = arith.addf %844, %845 : vector<2x16xf32>
    %847 = math.tanh %846 : vector<2x16xf32>
    %cst_546 = arith.constant 1.000000e+00 : f32
    %848 = vector.broadcast %cst_546 : f32 to vector<2x16xf32>
    %849 = arith.subf %848, %843 : vector<2x16xf32>
    %850 = arith.mulf %849, %847 : vector<2x16xf32>
    %851 = arith.mulf %843, %737 : vector<2x16xf32>
    %852 = arith.addf %850, %851 : vector<2x16xf32>
    %c0_547 = arith.constant 0 : index
    %c0_548 = arith.constant 0 : index
    %c0_549 = arith.constant 0 : index
    %853 = vector.load %arg9[%c0_547, %c0_548, %c0_549] : memref<3x16x16xf32, #tpu.memory_space<vmem>>, vector<1x16x16xf32>
    %854 = vector.shape_cast %853 : vector<1x16x16xf32> to vector<16x16xf32>
    %cst_550 = arith.constant dense<0.000000e+00> : vector<2x16xf32>
    %855 = tpu.matmul %852, %854, %cst_550 {dimension_numbers = #tpu.dot_dimension_numbers<[1], [0], [0], [1], [0, 0, 1, 1], [], []>} : vector<2x16xf32>, vector<16x16xf32>, vector<2x16xf32> -> vector<2x16xf32>
    %c0_551 = arith.constant 0 : index
    %c0_552 = arith.constant 0 : index
    %c0_553 = arith.constant 0 : index
    %856 = vector.load %arg10[%c0_551, %c0_552, %c0_553] : memref<3x1x16xf32, #tpu.memory_space<vmem>>, vector<1x1x16xf32>
    %857 = vector.shape_cast %856 : vector<1x1x16xf32> to vector<1x16xf32>
    %858 = vector.broadcast %857 : vector<1x16xf32> to vector<2x16xf32>
    %859 = arith.addf %855, %858 : vector<2x16xf32>
    %c1_554 = arith.constant 1 : index
    %c0_555 = arith.constant 0 : index
    %c0_556 = arith.constant 0 : index
    %860 = vector.load %arg9[%c1_554, %c0_555, %c0_556] : memref<3x16x16xf32, #tpu.memory_space<vmem>>, vector<1x16x16xf32>
    %861 = vector.shape_cast %860 : vector<1x16x16xf32> to vector<16x16xf32>
    %cst_557 = arith.constant dense<0.000000e+00> : vector<2x16xf32>
    %862 = tpu.matmul %852, %861, %cst_557 {dimension_numbers = #tpu.dot_dimension_numbers<[1], [0], [0], [1], [0, 0, 1, 1], [], []>} : vector<2x16xf32>, vector<16x16xf32>, vector<2x16xf32> -> vector<2x16xf32>
    %c1_558 = arith.constant 1 : index
    %c0_559 = arith.constant 0 : index
    %c0_560 = arith.constant 0 : index
    %863 = vector.load %arg10[%c1_558, %c0_559, %c0_560] : memref<3x1x16xf32, #tpu.memory_space<vmem>>, vector<1x1x16xf32>
    %864 = vector.shape_cast %863 : vector<1x1x16xf32> to vector<1x16xf32>
    %865 = vector.broadcast %864 : vector<1x16xf32> to vector<2x16xf32>
    %866 = arith.addf %862, %865 : vector<2x16xf32>
    %c2_561 = arith.constant 2 : index
    %c0_562 = arith.constant 0 : index
    %c0_563 = arith.constant 0 : index
    %867 = vector.load %arg9[%c2_561, %c0_562, %c0_563] : memref<3x16x16xf32, #tpu.memory_space<vmem>>, vector<1x16x16xf32>
    %868 = vector.shape_cast %867 : vector<1x16x16xf32> to vector<16x16xf32>
    %cst_564 = arith.constant dense<0.000000e+00> : vector<2x16xf32>
    %869 = tpu.matmul %852, %868, %cst_564 {dimension_numbers = #tpu.dot_dimension_numbers<[1], [0], [0], [1], [0, 0, 1, 1], [], []>} : vector<2x16xf32>, vector<16x16xf32>, vector<2x16xf32> -> vector<2x16xf32>
    %c2_565 = arith.constant 2 : index
    %c0_566 = arith.constant 0 : index
    %c0_567 = arith.constant 0 : index
    %870 = vector.load %arg10[%c2_565, %c0_566, %c0_567] : memref<3x1x16xf32, #tpu.memory_space<vmem>>, vector<1x1x16xf32>
    %871 = vector.shape_cast %870 : vector<1x1x16xf32> to vector<1x16xf32>
    %872 = vector.broadcast %871 : vector<1x16xf32> to vector<2x16xf32>
    %873 = arith.addf %869, %872 : vector<2x16xf32>
    %c0_568 = arith.constant 0 : index
    %c0_569 = arith.constant 0 : index
    %c0_570 = arith.constant 0 : index
    %874 = vector.load %arg11[%c0_568, %c0_569, %c0_570] : memref<3x16x16xf32, #tpu.memory_space<vmem>>, vector<1x16x16xf32>
    %875 = vector.shape_cast %874 : vector<1x16x16xf32> to vector<16x16xf32>
    %cst_571 = arith.constant dense<0.000000e+00> : vector<2x16xf32>
    %876 = tpu.matmul %803, %875, %cst_571 {dimension_numbers = #tpu.dot_dimension_numbers<[1], [0], [0], [1], [0, 0, 1, 1], [], []>} : vector<2x16xf32>, vector<16x16xf32>, vector<2x16xf32> -> vector<2x16xf32>
    %c0_572 = arith.constant 0 : index
    %c0_573 = arith.constant 0 : index
    %c0_574 = arith.constant 0 : index
    %877 = vector.load %arg12[%c0_572, %c0_573, %c0_574] : memref<3x1x16xf32, #tpu.memory_space<vmem>>, vector<1x1x16xf32>
    %878 = vector.shape_cast %877 : vector<1x1x16xf32> to vector<1x16xf32>
    %879 = vector.broadcast %878 : vector<1x16xf32> to vector<2x16xf32>
    %880 = arith.addf %876, %879 : vector<2x16xf32>
    %c1_575 = arith.constant 1 : index
    %c0_576 = arith.constant 0 : index
    %c0_577 = arith.constant 0 : index
    %881 = vector.load %arg11[%c1_575, %c0_576, %c0_577] : memref<3x16x16xf32, #tpu.memory_space<vmem>>, vector<1x16x16xf32>
    %882 = vector.shape_cast %881 : vector<1x16x16xf32> to vector<16x16xf32>
    %cst_578 = arith.constant dense<0.000000e+00> : vector<2x16xf32>
    %883 = tpu.matmul %803, %882, %cst_578 {dimension_numbers = #tpu.dot_dimension_numbers<[1], [0], [0], [1], [0, 0, 1, 1], [], []>} : vector<2x16xf32>, vector<16x16xf32>, vector<2x16xf32> -> vector<2x16xf32>
    %c1_579 = arith.constant 1 : index
    %c0_580 = arith.constant 0 : index
    %c0_581 = arith.constant 0 : index
    %884 = vector.load %arg12[%c1_579, %c0_580, %c0_581] : memref<3x1x16xf32, #tpu.memory_space<vmem>>, vector<1x1x16xf32>
    %885 = vector.shape_cast %884 : vector<1x1x16xf32> to vector<1x16xf32>
    %886 = vector.broadcast %885 : vector<1x16xf32> to vector<2x16xf32>
    %887 = arith.addf %883, %886 : vector<2x16xf32>
    %c2_582 = arith.constant 2 : index
    %c0_583 = arith.constant 0 : index
    %c0_584 = arith.constant 0 : index
    %888 = vector.load %arg11[%c2_582, %c0_583, %c0_584] : memref<3x16x16xf32, #tpu.memory_space<vmem>>, vector<1x16x16xf32>
    %889 = vector.shape_cast %888 : vector<1x16x16xf32> to vector<16x16xf32>
    %cst_585 = arith.constant dense<0.000000e+00> : vector<2x16xf32>
    %890 = tpu.matmul %803, %889, %cst_585 {dimension_numbers = #tpu.dot_dimension_numbers<[1], [0], [0], [1], [0, 0, 1, 1], [], []>} : vector<2x16xf32>, vector<16x16xf32>, vector<2x16xf32> -> vector<2x16xf32>
    %c2_586 = arith.constant 2 : index
    %c0_587 = arith.constant 0 : index
    %c0_588 = arith.constant 0 : index
    %891 = vector.load %arg12[%c2_586, %c0_587, %c0_588] : memref<3x1x16xf32, #tpu.memory_space<vmem>>, vector<1x1x16xf32>
    %892 = vector.shape_cast %891 : vector<1x1x16xf32> to vector<1x16xf32>
    %893 = vector.broadcast %892 : vector<1x16xf32> to vector<2x16xf32>
    %894 = arith.addf %890, %893 : vector<2x16xf32>
    %895 = arith.addf %859, %880 : vector<2x16xf32>
    %cst_589 = arith.constant 0.000000e+00 : f32
    %896 = vector.broadcast %cst_589 : f32 to vector<2x16xf32>
    %897 = arith.subf %896, %895 : vector<2x16xf32>
    %898 = math.exp %897 : vector<2x16xf32>
    %cst_590 = arith.constant 1.000000e+00 : f32
    %899 = vector.broadcast %cst_590 : f32 to vector<2x16xf32>
    %900 = arith.addf %899, %898 : vector<2x16xf32>
    %cst_591 = arith.constant 1.000000e+00 : f32
    %901 = vector.broadcast %cst_591 : f32 to vector<2x16xf32>
    %902 = arith.divf %901, %900 : vector<2x16xf32>
    %903 = arith.addf %866, %887 : vector<2x16xf32>
    %cst_592 = arith.constant 0.000000e+00 : f32
    %904 = vector.broadcast %cst_592 : f32 to vector<2x16xf32>
    %905 = arith.subf %904, %903 : vector<2x16xf32>
    %906 = math.exp %905 : vector<2x16xf32>
    %cst_593 = arith.constant 1.000000e+00 : f32
    %907 = vector.broadcast %cst_593 : f32 to vector<2x16xf32>
    %908 = arith.addf %907, %906 : vector<2x16xf32>
    %cst_594 = arith.constant 1.000000e+00 : f32
    %909 = vector.broadcast %cst_594 : f32 to vector<2x16xf32>
    %910 = arith.divf %909, %908 : vector<2x16xf32>
    %911 = arith.mulf %902, %894 : vector<2x16xf32>
    %912 = arith.addf %873, %911 : vector<2x16xf32>
    %913 = math.tanh %912 : vector<2x16xf32>
    %cst_595 = arith.constant 1.000000e+00 : f32
    %914 = vector.broadcast %cst_595 : f32 to vector<2x16xf32>
    %915 = arith.subf %914, %910 : vector<2x16xf32>
    %916 = arith.mulf %915, %913 : vector<2x16xf32>
    %917 = arith.mulf %910, %803 : vector<2x16xf32>
    %918 = arith.addf %916, %917 : vector<2x16xf32>
    %c12 = arith.constant 12 : index
    %c0_596 = arith.constant 0 : index
    %919 = vector.load %arg18[%c12, %c0_596] : memref<16x16xf32, #tpu.memory_space<vmem>>, vector<2x16xf32>
    tpu.vector_store %arg18[%c12, %c0_596], %918 {strides = array<i32>} : memref<16x16xf32, #tpu.memory_space<vmem>>, vector<2x16xf32>,
    %c0_597 = arith.constant 0 : index
    %c0_598 = arith.constant 0 : index
    %c0_599 = arith.constant 0 : index
    %920 = vector.load %arg7[%c0_597, %c0_598, %c0_599] : memref<3x16x16xf32, #tpu.memory_space<vmem>>, vector<1x16x16xf32>
    %921 = vector.shape_cast %920 : vector<1x16x16xf32> to vector<16x16xf32>
    %cst_600 = arith.constant dense<0.000000e+00> : vector<2x16xf32>
    %922 = tpu.matmul %852, %921, %cst_600 {dimension_numbers = #tpu.dot_dimension_numbers<[1], [0], [0], [1], [0, 0, 1, 1], [], []>} : vector<2x16xf32>, vector<16x16xf32>, vector<2x16xf32> -> vector<2x16xf32>
    %c0_601 = arith.constant 0 : index
    %c0_602 = arith.constant 0 : index
    %c0_603 = arith.constant 0 : index
    %923 = vector.load %arg8[%c0_601, %c0_602, %c0_603] : memref<3x1x16xf32, #tpu.memory_space<vmem>>, vector<1x1x16xf32>
    %924 = vector.shape_cast %923 : vector<1x1x16xf32> to vector<1x16xf32>
    %925 = vector.broadcast %924 : vector<1x16xf32> to vector<2x16xf32>
    %926 = arith.addf %922, %925 : vector<2x16xf32>
    %c1_604 = arith.constant 1 : index
    %c0_605 = arith.constant 0 : index
    %c0_606 = arith.constant 0 : index
    %927 = vector.load %arg7[%c1_604, %c0_605, %c0_606] : memref<3x16x16xf32, #tpu.memory_space<vmem>>, vector<1x16x16xf32>
    %928 = vector.shape_cast %927 : vector<1x16x16xf32> to vector<16x16xf32>
    %cst_607 = arith.constant dense<0.000000e+00> : vector<2x16xf32>
    %929 = tpu.matmul %852, %928, %cst_607 {dimension_numbers = #tpu.dot_dimension_numbers<[1], [0], [0], [1], [0, 0, 1, 1], [], []>} : vector<2x16xf32>, vector<16x16xf32>, vector<2x16xf32> -> vector<2x16xf32>
    %c1_608 = arith.constant 1 : index
    %c0_609 = arith.constant 0 : index
    %c0_610 = arith.constant 0 : index
    %930 = vector.load %arg8[%c1_608, %c0_609, %c0_610] : memref<3x1x16xf32, #tpu.memory_space<vmem>>, vector<1x1x16xf32>
    %931 = vector.shape_cast %930 : vector<1x1x16xf32> to vector<1x16xf32>
    %932 = vector.broadcast %931 : vector<1x16xf32> to vector<2x16xf32>
    %933 = arith.addf %929, %932 : vector<2x16xf32>
    %c2_611 = arith.constant 2 : index
    %c0_612 = arith.constant 0 : index
    %c0_613 = arith.constant 0 : index
    %934 = vector.load %arg7[%c2_611, %c0_612, %c0_613] : memref<3x16x16xf32, #tpu.memory_space<vmem>>, vector<1x16x16xf32>
    %935 = vector.shape_cast %934 : vector<1x16x16xf32> to vector<16x16xf32>
    %cst_614 = arith.constant dense<0.000000e+00> : vector<2x16xf32>
    %936 = tpu.matmul %852, %935, %cst_614 {dimension_numbers = #tpu.dot_dimension_numbers<[1], [0], [0], [1], [0, 0, 1, 1], [], []>} : vector<2x16xf32>, vector<16x16xf32>, vector<2x16xf32> -> vector<2x16xf32>
    %c2_615 = arith.constant 2 : index
    %c0_616 = arith.constant 0 : index
    %c0_617 = arith.constant 0 : index
    %937 = vector.load %arg8[%c2_615, %c0_616, %c0_617] : memref<3x1x16xf32, #tpu.memory_space<vmem>>, vector<1x1x16xf32>
    %938 = vector.shape_cast %937 : vector<1x1x16xf32> to vector<1x16xf32>
    %939 = vector.broadcast %938 : vector<1x16xf32> to vector<2x16xf32>
    %940 = arith.addf %936, %939 : vector<2x16xf32>
    %941 = vector.extract_strided_slice %90 {offsets = [14, 0], sizes = [2, 16], strides = [1, 1]} : vector<16x16xf32> to vector<2x16xf32>
    %942 = arith.addf %941, %926 : vector<2x16xf32>
    %cst_618 = arith.constant 0.000000e+00 : f32
    %943 = vector.broadcast %cst_618 : f32 to vector<2x16xf32>
    %944 = arith.subf %943, %942 : vector<2x16xf32>
    %945 = math.exp %944 : vector<2x16xf32>
    %cst_619 = arith.constant 1.000000e+00 : f32
    %946 = vector.broadcast %cst_619 : f32 to vector<2x16xf32>
    %947 = arith.addf %946, %945 : vector<2x16xf32>
    %cst_620 = arith.constant 1.000000e+00 : f32
    %948 = vector.broadcast %cst_620 : f32 to vector<2x16xf32>
    %949 = arith.divf %948, %947 : vector<2x16xf32>
    %950 = vector.extract_strided_slice %101 {offsets = [14, 0], sizes = [2, 16], strides = [1, 1]} : vector<16x16xf32> to vector<2x16xf32>
    %951 = arith.addf %950, %933 : vector<2x16xf32>
    %cst_621 = arith.constant 0.000000e+00 : f32
    %952 = vector.broadcast %cst_621 : f32 to vector<2x16xf32>
    %953 = arith.subf %952, %951 : vector<2x16xf32>
    %954 = math.exp %953 : vector<2x16xf32>
    %cst_622 = arith.constant 1.000000e+00 : f32
    %955 = vector.broadcast %cst_622 : f32 to vector<2x16xf32>
    %956 = arith.addf %955, %954 : vector<2x16xf32>
    %cst_623 = arith.constant 1.000000e+00 : f32
    %957 = vector.broadcast %cst_623 : f32 to vector<2x16xf32>
    %958 = arith.divf %957, %956 : vector<2x16xf32>
    %959 = vector.extract_strided_slice %112 {offsets = [14, 0], sizes = [2, 16], strides = [1, 1]} : vector<16x16xf32> to vector<2x16xf32>
    %960 = arith.mulf %949, %940 : vector<2x16xf32>
    %961 = arith.addf %959, %960 : vector<2x16xf32>
    %962 = math.tanh %961 : vector<2x16xf32>
    %cst_624 = arith.constant 1.000000e+00 : f32
    %963 = vector.broadcast %cst_624 : f32 to vector<2x16xf32>
    %964 = arith.subf %963, %958 : vector<2x16xf32>
    %965 = arith.mulf %964, %962 : vector<2x16xf32>
    %966 = arith.mulf %958, %852 : vector<2x16xf32>
    %967 = arith.addf %965, %966 : vector<2x16xf32>
    %c0_625 = arith.constant 0 : index
    %c0_626 = arith.constant 0 : index
    %c0_627 = arith.constant 0 : index
    %968 = vector.load %arg9[%c0_625, %c0_626, %c0_627] : memref<3x16x16xf32, #tpu.memory_space<vmem>>, vector<1x16x16xf32>
    %969 = vector.shape_cast %968 : vector<1x16x16xf32> to vector<16x16xf32>
    %cst_628 = arith.constant dense<0.000000e+00> : vector<2x16xf32>
    %970 = tpu.matmul %967, %969, %cst_628 {dimension_numbers = #tpu.dot_dimension_numbers<[1], [0], [0], [1], [0, 0, 1, 1], [], []>} : vector<2x16xf32>, vector<16x16xf32>, vector<2x16xf32> -> vector<2x16xf32>
    %c0_629 = arith.constant 0 : index
    %c0_630 = arith.constant 0 : index
    %c0_631 = arith.constant 0 : index
    %971 = vector.load %arg10[%c0_629, %c0_630, %c0_631] : memref<3x1x16xf32, #tpu.memory_space<vmem>>, vector<1x1x16xf32>
    %972 = vector.shape_cast %971 : vector<1x1x16xf32> to vector<1x16xf32>
    %973 = vector.broadcast %972 : vector<1x16xf32> to vector<2x16xf32>
    %974 = arith.addf %970, %973 : vector<2x16xf32>
    %c1_632 = arith.constant 1 : index
    %c0_633 = arith.constant 0 : index
    %c0_634 = arith.constant 0 : index
    %975 = vector.load %arg9[%c1_632, %c0_633, %c0_634] : memref<3x16x16xf32, #tpu.memory_space<vmem>>, vector<1x16x16xf32>
    %976 = vector.shape_cast %975 : vector<1x16x16xf32> to vector<16x16xf32>
    %cst_635 = arith.constant dense<0.000000e+00> : vector<2x16xf32>
    %977 = tpu.matmul %967, %976, %cst_635 {dimension_numbers = #tpu.dot_dimension_numbers<[1], [0], [0], [1], [0, 0, 1, 1], [], []>} : vector<2x16xf32>, vector<16x16xf32>, vector<2x16xf32> -> vector<2x16xf32>
    %c1_636 = arith.constant 1 : index
    %c0_637 = arith.constant 0 : index
    %c0_638 = arith.constant 0 : index
    %978 = vector.load %arg10[%c1_636, %c0_637, %c0_638] : memref<3x1x16xf32, #tpu.memory_space<vmem>>, vector<1x1x16xf32>
    %979 = vector.shape_cast %978 : vector<1x1x16xf32> to vector<1x16xf32>
    %980 = vector.broadcast %979 : vector<1x16xf32> to vector<2x16xf32>
    %981 = arith.addf %977, %980 : vector<2x16xf32>
    %c2_639 = arith.constant 2 : index
    %c0_640 = arith.constant 0 : index
    %c0_641 = arith.constant 0 : index
    %982 = vector.load %arg9[%c2_639, %c0_640, %c0_641] : memref<3x16x16xf32, #tpu.memory_space<vmem>>, vector<1x16x16xf32>
    %983 = vector.shape_cast %982 : vector<1x16x16xf32> to vector<16x16xf32>
    %cst_642 = arith.constant dense<0.000000e+00> : vector<2x16xf32>
    %984 = tpu.matmul %967, %983, %cst_642 {dimension_numbers = #tpu.dot_dimension_numbers<[1], [0], [0], [1], [0, 0, 1, 1], [], []>} : vector<2x16xf32>, vector<16x16xf32>, vector<2x16xf32> -> vector<2x16xf32>
    %c2_643 = arith.constant 2 : index
    %c0_644 = arith.constant 0 : index
    %c0_645 = arith.constant 0 : index
    %985 = vector.load %arg10[%c2_643, %c0_644, %c0_645] : memref<3x1x16xf32, #tpu.memory_space<vmem>>, vector<1x1x16xf32>
    %986 = vector.shape_cast %985 : vector<1x1x16xf32> to vector<1x16xf32>
    %987 = vector.broadcast %986 : vector<1x16xf32> to vector<2x16xf32>
    %988 = arith.addf %984, %987 : vector<2x16xf32>
    %c0_646 = arith.constant 0 : index
    %c0_647 = arith.constant 0 : index
    %c0_648 = arith.constant 0 : index
    %989 = vector.load %arg11[%c0_646, %c0_647, %c0_648] : memref<3x16x16xf32, #tpu.memory_space<vmem>>, vector<1x16x16xf32>
    %990 = vector.shape_cast %989 : vector<1x16x16xf32> to vector<16x16xf32>
    %cst_649 = arith.constant dense<0.000000e+00> : vector<2x16xf32>
    %991 = tpu.matmul %918, %990, %cst_649 {dimension_numbers = #tpu.dot_dimension_numbers<[1], [0], [0], [1], [0, 0, 1, 1], [], []>} : vector<2x16xf32>, vector<16x16xf32>, vector<2x16xf32> -> vector<2x16xf32>
    %c0_650 = arith.constant 0 : index
    %c0_651 = arith.constant 0 : index
    %c0_652 = arith.constant 0 : index
    %992 = vector.load %arg12[%c0_650, %c0_651, %c0_652] : memref<3x1x16xf32, #tpu.memory_space<vmem>>, vector<1x1x16xf32>
    %993 = vector.shape_cast %992 : vector<1x1x16xf32> to vector<1x16xf32>
    %994 = vector.broadcast %993 : vector<1x16xf32> to vector<2x16xf32>
    %995 = arith.addf %991, %994 : vector<2x16xf32>
    %c1_653 = arith.constant 1 : index
    %c0_654 = arith.constant 0 : index
    %c0_655 = arith.constant 0 : index
    %996 = vector.load %arg11[%c1_653, %c0_654, %c0_655] : memref<3x16x16xf32, #tpu.memory_space<vmem>>, vector<1x16x16xf32>
    %997 = vector.shape_cast %996 : vector<1x16x16xf32> to vector<16x16xf32>
    %cst_656 = arith.constant dense<0.000000e+00> : vector<2x16xf32>
    %998 = tpu.matmul %918, %997, %cst_656 {dimension_numbers = #tpu.dot_dimension_numbers<[1], [0], [0], [1], [0, 0, 1, 1], [], []>} : vector<2x16xf32>, vector<16x16xf32>, vector<2x16xf32> -> vector<2x16xf32>
    %c1_657 = arith.constant 1 : index
    %c0_658 = arith.constant 0 : index
    %c0_659 = arith.constant 0 : index
    %999 = vector.load %arg12[%c1_657, %c0_658, %c0_659] : memref<3x1x16xf32, #tpu.memory_space<vmem>>, vector<1x1x16xf32>
    %1000 = vector.shape_cast %999 : vector<1x1x16xf32> to vector<1x16xf32>
    %1001 = vector.broadcast %1000 : vector<1x16xf32> to vector<2x16xf32>
    %1002 = arith.addf %998, %1001 : vector<2x16xf32>
    %c2_660 = arith.constant 2 : index
    %c0_661 = arith.constant 0 : index
    %c0_662 = arith.constant 0 : index
    %1003 = vector.load %arg11[%c2_660, %c0_661, %c0_662] : memref<3x16x16xf32, #tpu.memory_space<vmem>>, vector<1x16x16xf32>
    %1004 = vector.shape_cast %1003 : vector<1x16x16xf32> to vector<16x16xf32>
    %cst_663 = arith.constant dense<0.000000e+00> : vector<2x16xf32>
    %1005 = tpu.matmul %918, %1004, %cst_663 {dimension_numbers = #tpu.dot_dimension_numbers<[1], [0], [0], [1], [0, 0, 1, 1], [], []>} : vector<2x16xf32>, vector<16x16xf32>, vector<2x16xf32> -> vector<2x16xf32>
    %c2_664 = arith.constant 2 : index
    %c0_665 = arith.constant 0 : index
    %c0_666 = arith.constant 0 : index
    %1006 = vector.load %arg12[%c2_664, %c0_665, %c0_666] : memref<3x1x16xf32, #tpu.memory_space<vmem>>, vector<1x1x16xf32>
    %1007 = vector.shape_cast %1006 : vector<1x1x16xf32> to vector<1x16xf32>
    %1008 = vector.broadcast %1007 : vector<1x16xf32> to vector<2x16xf32>
    %1009 = arith.addf %1005, %1008 : vector<2x16xf32>
    %1010 = arith.addf %974, %995 : vector<2x16xf32>
    %cst_667 = arith.constant 0.000000e+00 : f32
    %1011 = vector.broadcast %cst_667 : f32 to vector<2x16xf32>
    %1012 = arith.subf %1011, %1010 : vector<2x16xf32>
    %1013 = math.exp %1012 : vector<2x16xf32>
    %cst_668 = arith.constant 1.000000e+00 : f32
    %1014 = vector.broadcast %cst_668 : f32 to vector<2x16xf32>
    %1015 = arith.addf %1014, %1013 : vector<2x16xf32>
    %cst_669 = arith.constant 1.000000e+00 : f32
    %1016 = vector.broadcast %cst_669 : f32 to vector<2x16xf32>
    %1017 = arith.divf %1016, %1015 : vector<2x16xf32>
    %1018 = arith.addf %981, %1002 : vector<2x16xf32>
    %cst_670 = arith.constant 0.000000e+00 : f32
    %1019 = vector.broadcast %cst_670 : f32 to vector<2x16xf32>
    %1020 = arith.subf %1019, %1018 : vector<2x16xf32>
    %1021 = math.exp %1020 : vector<2x16xf32>
    %cst_671 = arith.constant 1.000000e+00 : f32
    %1022 = vector.broadcast %cst_671 : f32 to vector<2x16xf32>
    %1023 = arith.addf %1022, %1021 : vector<2x16xf32>
    %cst_672 = arith.constant 1.000000e+00 : f32
    %1024 = vector.broadcast %cst_672 : f32 to vector<2x16xf32>
    %1025 = arith.divf %1024, %1023 : vector<2x16xf32>
    %1026 = arith.mulf %1017, %1009 : vector<2x16xf32>
    %1027 = arith.addf %988, %1026 : vector<2x16xf32>
    %1028 = math.tanh %1027 : vector<2x16xf32>
    %cst_673 = arith.constant 1.000000e+00 : f32
    %1029 = vector.broadcast %cst_673 : f32 to vector<2x16xf32>
    %1030 = arith.subf %1029, %1025 : vector<2x16xf32>
    %1031 = arith.mulf %1030, %1028 : vector<2x16xf32>
    %1032 = arith.mulf %1025, %918 : vector<2x16xf32>
    %1033 = arith.addf %1031, %1032 : vector<2x16xf32>
    %c14 = arith.constant 14 : index
    %c0_674 = arith.constant 0 : index
    %1034 = vector.load %arg18[%c14, %c0_674] : memref<16x16xf32, #tpu.memory_space<vmem>>, vector<2x16xf32>
    tpu.vector_store %arg18[%c14, %c0_674], %1033 {strides = array<i32>} : memref<16x16xf32, #tpu.memory_space<vmem>>, vector<2x16xf32>,
    %c0_675 = arith.constant 0 : index
    %c0_676 = arith.constant 0 : index
    %1035 = vector.load %arg18[%c0_675, %c0_676] : memref<16x16xf32, #tpu.memory_space<vmem>>, vector<16x16xf32>
    %cst_677 = arith.constant 0.000000e+00 : f32
    %1036 = vector.broadcast %cst_677 : f32 to vector<16x16xf32>
    %1037 = arith.cmpf ogt, %1035, %1036 : vector<16x16xf32>
    %cst_678 = arith.constant 0.000000e+00 : f32
    %1038 = vector.broadcast %cst_678 : f32 to vector<16x16xf32>
    %1039 = arith.minimumf %1035, %1038 : vector<16x16xf32>
    %1040 = math.exp %1039 : vector<16x16xf32>
    %cst_679 = arith.constant 1.000000e+00 : f32
    %1041 = vector.broadcast %cst_679 : f32 to vector<16x16xf32>
    %1042 = arith.subf %1040, %1041 : vector<16x16xf32>
    %1043 = arith.select %1037, %1035, %1042 : vector<16x16xi1>, vector<16x16xf32>
    %c0_680 = arith.constant 0 : index
    %c0_681 = arith.constant 0 : index
    %1044 = vector.load %arg13[%c0_680, %c0_681] : memref<16x16xf32, #tpu.memory_space<vmem>>, vector<16x16xf32>
    %cst_682 = arith.constant dense<0.000000e+00> : vector<16x16xf32>
    %1045 = tpu.matmul %1043, %1044, %cst_682 {dimension_numbers = #tpu.dot_dimension_numbers<[1], [0], [0], [1], [0, 0, 1, 1], [], []>} : vector<16x16xf32>, vector<16x16xf32>, vector<16x16xf32> -> vector<16x16xf32>
    %c0_683 = arith.constant 0 : index
    %c0_684 = arith.constant 0 : index
    %1046 = vector.load %arg14[%c0_683, %c0_684] : memref<1x16xf32, #tpu.memory_space<vmem>>, vector<1x16xf32>
    %1047 = vector.broadcast %1046 : vector<1x16xf32> to vector<16x16xf32>
    %1048 = arith.addf %1045, %1047 : vector<16x16xf32>
    %cst_685 = arith.constant dense<0.000000e+00> : vector<16xf32>
    %1049 = vector.multi_reduction <add>, %1048, %cst_685 [1] : vector<16x16xf32> to vector<16xf32>
    %1050 = vector.shape_cast %1049 : vector<16xf32> to vector<16x1xf32>
    %cst_686 = arith.constant 1.600000e+01 : f32
    %1051 = vector.broadcast %cst_686 : f32 to vector<16x1xf32>
    %1052 = arith.divf %1050, %1051 : vector<16x1xf32>
    %1053 = vector.broadcast %1052 : vector<16x1xf32> to vector<16x16xf32>
    %1054 = arith.subf %1048, %1053 : vector<16x16xf32>
    %1055 = arith.mulf %1054, %1054 : vector<16x16xf32>
    %cst_687 = arith.constant dense<0.000000e+00> : vector<16xf32>
    %1056 = vector.multi_reduction <add>, %1055, %cst_687 [1] : vector<16x16xf32> to vector<16xf32>
    %1057 = vector.shape_cast %1056 : vector<16xf32> to vector<16x1xf32>
    %cst_688 = arith.constant 1.600000e+01 : f32
    %1058 = vector.broadcast %cst_688 : f32 to vector<16x1xf32>
    %1059 = arith.divf %1057, %1058 : vector<16x1xf32>
    %1060 = vector.broadcast %1052 : vector<16x1xf32> to vector<16x16xf32>
    %1061 = arith.subf %1048, %1060 : vector<16x16xf32>
    %cst_689 = arith.constant 9.99999974E-6 : f32
    %1062 = vector.broadcast %cst_689 : f32 to vector<16x1xf32>
    %1063 = arith.addf %1059, %1062 : vector<16x1xf32>
    %1064 = math.rsqrt %1063 : vector<16x1xf32>
    %1065 = vector.broadcast %1064 : vector<16x1xf32> to vector<16x16xf32>
    %1066 = arith.mulf %1061, %1065 : vector<16x16xf32>
    %c0_690 = arith.constant 0 : index
    %c0_691 = arith.constant 0 : index
    %1067 = vector.load %arg15[%c0_690, %c0_691] : memref<1x16xf32, #tpu.memory_space<vmem>>, vector<1x16xf32>
    %1068 = vector.broadcast %1067 : vector<1x16xf32> to vector<16x16xf32>
    %1069 = arith.mulf %1066, %1068 : vector<16x16xf32>
    %c0_692 = arith.constant 0 : index
    %c0_693 = arith.constant 0 : index
    %1070 = vector.load %arg16[%c0_692, %c0_693] : memref<1x16xf32, #tpu.memory_space<vmem>>, vector<1x16xf32>
    %1071 = vector.broadcast %1070 : vector<1x16xf32> to vector<16x16xf32>
    %1072 = arith.addf %1069, %1071 : vector<16x16xf32>
    %1073 = arith.addf %27, %1072 : vector<16x16xf32>
    %c0_694 = arith.constant 0 : index
    %c0_695 = arith.constant 0 : index
    %1074 = vector.load %arg17[%c0_694, %c0_695] : memref<64x16xf32, #tpu.memory_space<vmem>>, vector<16x16xf32>
    tpu.vector_store %arg17[%c0_694, %c0_695], %1073 {strides = array<i32>} : memref<64x16xf32, #tpu.memory_space<vmem>>, vector<16x16xf32>,
    %1075 = arith.addf %28, %1072 : vector<16x16xf32>
    %c16 = arith.constant 16 : index
    %c0_696 = arith.constant 0 : index
    %1076 = vector.load %arg17[%c16, %c0_696] : memref<64x16xf32, #tpu.memory_space<vmem>>, vector<16x16xf32>
    tpu.vector_store %arg17[%c16, %c0_696], %1075 {strides = array<i32>} : memref<64x16xf32, #tpu.memory_space<vmem>>, vector<16x16xf32>,
    %1077 = arith.addf %29, %1072 : vector<16x16xf32>
    %c32 = arith.constant 32 : index
    %c0_697 = arith.constant 0 : index
    %1078 = vector.load %arg17[%c32, %c0_697] : memref<64x16xf32, #tpu.memory_space<vmem>>, vector<16x16xf32>
    tpu.vector_store %arg17[%c32, %c0_697], %1077 {strides = array<i32>} : memref<64x16xf32, #tpu.memory_space<vmem>>, vector<16x16xf32>,
    %1079 = arith.addf %30, %1072 : vector<16x16xf32>
    %c48 = arith.constant 48 : index
    %c0_698 = arith.constant 0 : index
    %1080 = vector.load %arg17[%c48, %c0_698] : memref<64x16xf32, #tpu.memory_space<vmem>>, vector<16x16xf32>
    tpu.vector_store %arg17[%c48, %c0_698], %1079 {strides = array<i32>} : memref<64x16xf32, #tpu.memory_space<vmem>>, vector<16x16xf32>,
    return
  }
}

</mosaic_0001>

<llo_original>
// kernel: dualpath_block_forward.2
$region0: #{dualpath_block_forward.2}
  #allocation0 [shape = 'u32[]', space=smem, size = 0x4, offset = 0x4, fixed_abs, tag = 'smem constant byte address 0x4 - core index']
  #allocation1 [shape = 'u32[72,128]{1,0:T(1,128)}', space=vmem, size = 0x9000, scoped, tag = 'internal scratch']
  %s0 = inlined_call_operand.vmem [shape: f32[64,16], index: 0, kind: input, shape index: {}]
  %s1 = inlined_call_operand.vmem [shape: f32[64,64], index: 1, kind: input, shape index: {}]
  %s2 = inlined_call_operand.vmem [shape: f32[4,16,4], index: 2, kind: input, shape index: {}]
  %s3 = inlined_call_operand.vmem [shape: f32[4,16,4], index: 3, kind: input, shape index: {}]
  %s4 = inlined_call_operand.vmem [shape: f32[4,16,4], index: 4, kind: input, shape index: {}]
  %s5 = inlined_call_operand.vmem [shape: f32[4,1,4], index: 5, kind: input, shape index: {}]
  %s6 = inlined_call_operand.vmem [shape: f32[4,1,4], index: 6, kind: input, shape index: {}]
  %s7 = inlined_call_operand.vmem [shape: f32[4,1,4], index: 7, kind: input, shape index: {}]
  %s8 = inlined_call_operand.vmem [shape: f32[4,4,16], index: 8, kind: input, shape index: {}]
  %s9 = inlined_call_operand.vmem [shape: f32[1,16], index: 9, kind: input, shape index: {}]
  %s10 = inlined_call_operand.vmem [shape: f32[64,16], index: 10, kind: output, shape index: {}]
  %s11 = sld [smem:[#allocation0]]
  $region50: #{dualpath_block_forward.2} parent=0
    _
  %s13 = ssub.s32 1, %s11
  %s14 = scalar_select 0, %s13, %s11
  // Predicated region
  $region2: #{dualpath_block_forward.2} parent=0 // pred_check
    _
  $region3: #{dualpath_block_forward.2} parent=0 // pred_check_branch
    %16 = sbr.rel (0) target = $region5
  $region4: #{dualpath_block_forward.2} parent=0 // pred_region
    _
  $region5: #{dualpath_block_forward.2} parent=0 // pred_fallthru
    _
  // Predicated region
  $region6: #{dualpath_block_forward.2} parent=0 // pred_check
    _
  $region7: #{dualpath_block_forward.2} parent=0 // pred_check_branch
    %18 = sbr.rel (0) target = $region9
  $region8: #{dualpath_block_forward.2} parent=0 // pred_region
    _
  $region9: #{dualpath_block_forward.2} parent=0 // pred_fallthru
    _
  // Predicated region
  $region10: #{dualpath_block_forward.2} parent=0 // pred_check
    _
  $region11: #{dualpath_block_forward.2} parent=0 // pred_check_branch
    %20 = sbr.rel (0) target = $region13
  $region12: #{dualpath_block_forward.2} parent=0 // pred_region
    _
  $region13: #{dualpath_block_forward.2} parent=0 // pred_fallthru
    _
  // Predicated region
  $region14: #{dualpath_block_forward.2} parent=0 // pred_check
    _
  $region15: #{dualpath_block_forward.2} parent=0 // pred_check_branch
    %22 = sbr.rel (0) target = $region17
  $region16: #{dualpath_block_forward.2} parent=0 // pred_region
    _
  $region17: #{dualpath_block_forward.2} parent=0 // pred_fallthru
    _
  // Predicated region
  $region18: #{dualpath_block_forward.2} parent=0 // pred_check
    _
  $region19: #{dualpath_block_forward.2} parent=0 // pred_check_branch
    %24 = sbr.rel (0) target = $region21
  $region20: #{dualpath_block_forward.2} parent=0 // pred_region
    _
  $region21: #{dualpath_block_forward.2} parent=0 // pred_fallthru
    _
  // Predicated region
  $region22: #{dualpath_block_forward.2} parent=0 // pred_check
    _
  $region23: #{dualpath_block_forward.2} parent=0 // pred_check_branch
    %26 = sbr.rel (0) target = $region25
  $region24: #{dualpath_block_forward.2} parent=0 // pred_region
    _
  $region25: #{dualpath_block_forward.2} parent=0 // pred_fallthru
    _
  // Predicated region
  $region26: #{dualpath_block_forward.2} parent=0 // pred_check
    _
  $region27: #{dualpath_block_forward.2} parent=0 // pred_check_branch
    %28 = sbr.rel (0) target = $region29
  $region28: #{dualpath_block_forward.2} parent=0 // pred_region
    _
  $region29: #{dualpath_block_forward.2} parent=0 // pred_fallthru
    _
  // Predicated region
  $region30: #{dualpath_block_forward.2} parent=0 // pred_check
    _
  $region31: #{dualpath_block_forward.2} parent=0 // pred_check_branch
    %30 = sbr.rel (0) target = $region33
  $region32: #{dualpath_block_forward.2} parent=0 // pred_region
    _
  $region33: #{dualpath_block_forward.2} parent=0 // pred_fallthru
    _
  // Predicated region
  $region34: #{dualpath_block_forward.2} parent=0 // pred_check
    _
  $region35: #{dualpath_block_forward.2} parent=0 // pred_check_branch
    %32 = sbr.rel (0) target = $region37
  $region36: #{dualpath_block_forward.2} parent=0 // pred_region
    _
  $region37: #{dualpath_block_forward.2} parent=0 // pred_fallthru
    _
  // Predicated region
  $region38: #{dualpath_block_forward.2} parent=0 // pred_check
    _
  $region39: #{dualpath_block_forward.2} parent=0 // pred_check_branch
    %34 = sbr.rel (0) target = $region41
  $region40: #{dualpath_block_forward.2} parent=0 // pred_region
    _
  $region41: #{dualpath_block_forward.2} parent=0 // pred_fallthru
    _
  %v35 = vld [vmem:[%s0] sm:$0xff]
  %v36 = vld [vmem:[%s0 + $0x8] sm:$0xff]
  %v37 = vld [vmem:[%s0 + $0x10] sm:$0xff]
  %v38 = vld [vmem:[%s0 + $0x18] sm:$0xff]
  %v39 = vld [vmem:[%s0 + $0x20] sm:$0xff]
  %v40 = vld [vmem:[%s0 + $0x28] sm:$0xff]
  %v41 = vld [vmem:[%s0 + $0x30] sm:$0xff]
  %v42 = vld [vmem:[%s0 + $0x38] sm:$0xff]
  %v43 = vld [vmem:[%s1] sm:$0xff]
  %v44 = vld [vmem:[%s1 + $0x8] sm:$0xff]
  %v45 = vld [vmem:[%s1 + $0x10] sm:$0xff]
  %v46 = vld [vmem:[%s1 + $0x18] sm:$0xff]
  %v47 = vld [vmem:[%s1 + $0x20] sm:$0xff]
  %v48 = vld [vmem:[%s1 + $0x28] sm:$0xff]
  %v49 = vld [vmem:[%s1 + $0x30] sm:$0xff]
  %v50 = vld [vmem:[%s1 + $0x38] sm:$0xff]
  %v51 = vld [vmem:[%s2] sm:$0xff]
  %v52 = vld [vmem:[%s2 + $0x8] sm:$0xff]
  %v53 = vld [vmem:[%s5] sm:$0x1]
  %v55 = vperm.slane %v53, 0
  %vm57 = vcmask 130048
  %v59 = vsel %vm57, %v35, 0
  %v62 = vsel %vm57, %v36, 0
  %v65 = vsel %vm57, %v37, 0
  %v68 = vsel %vm57, %v38, 0
  %v71 = vsel %vm57, %v39, 0
  %v74 = vsel %vm57, %v40, 0
  %v77 = vsel %vm57, %v41, 0
  %v80 = vsel %vm57, %v42, 0
  %82 = vmatpush.msra.mxu0 0.0
  %83 = vmatpush.msra.mxu0 0.0
  %84 = vmatpush.msra.mxu0 0.0
  %85 = vmatpush.msra.mxu0 0.0
  %86 = vmatpush.msra.mxu0 0.0
  %87 = vmatpush.msra.mxu0 0.0
  %88 = vmatpush.msra.mxu0 0.0
  %89 = vmatpush.msra.mxu0 0.0
  %90 = vmatpush.msra.mxu0 0.0
  %91 = vmatpush.msra.mxu0 0.0
  %92 = vmatpush.msra.mxu0 0.0
  %93 = vmatpush.msra.mxu0 0.0
  %94 = vmatpush.msra.mxu0 0.0
  %95 = vmatpush.msra.mxu0 0.0
  %96 = vmatpush.msra.mxu0 %v52
  %97 = vmatpush.msra.mxu0 %v51
  %98 = vmatmul.f32.gmra.mxu0 %v59
  %v99 = vpop.f32.mrf.mxu0
  %v100 = vadd.f32 %v55, %v99
  %101 = vmatmul.f32.gmra.mxu0 %v62
  %v102 = vpop.f32.mrf.mxu0
  %v103 = vadd.f32 %v55, %v102
  %104 = vmatmul.f32.gmra.mxu0 %v65
  %v105 = vpop.f32.mrf.mxu0
  %v106 = vadd.f32 %v55, %v105
  %107 = vmatmul.f32.gmra.mxu0 %v68
  %v108 = vpop.f32.mrf.mxu0
  %v109 = vadd.f32 %v55, %v108
  %110 = vmatmul.f32.gmra.mxu0 %v71
  %v111 = vpop.f32.mrf.mxu0
  %v112 = vadd.f32 %v55, %v111
  %113 = vmatmul.f32.gmra.mxu0 %v74
  %v114 = vpop.f32.mrf.mxu0
  %v115 = vadd.f32 %v55, %v114
  %116 = vmatmul.f32.gmra.mxu0 %v77
  %v117 = vpop.f32.mrf.mxu0
  %v118 = vadd.f32 %v55, %v117
  %119 = vmatmul.f32.gmra.mxu0 %v80
  %v120 = vpop.f32.mrf.mxu0
  %v121 = vadd.f32 %v55, %v120
  %122 = vdwg.mxu0
  %v123 = vmul.f32 %v100, 0.5
  %v124 = vmul.f32 %v103, 0.5
  %v125 = vmul.f32 %v106, 0.5
  %v126 = vmul.f32 %v109, 0.5
  %v127 = vmul.f32 %v112, 0.5
  %v128 = vmul.f32 %v115, 0.5
  %v129 = vmul.f32 %v118, 0.5
  %v130 = vmul.f32 %v121, 0.5
  %v131 = vld [vmem:[%s3] sm:$0xff]
  %v132 = vld [vmem:[%s3 + $0x8] sm:$0xff]
  %v133 = vld [vmem:[%s6] sm:$0x1]
  %v135 = vperm.slane %v133, 0
  %137 = vmatpush.msra.mxu0 0.0
  %138 = vmatpush.msra.mxu0 0.0
  %139 = vmatpush.msra.mxu0 0.0
  %140 = vmatpush.msra.mxu0 0.0
  %141 = vmatpush.msra.mxu0 0.0
  %142 = vmatpush.msra.mxu0 0.0
  %143 = vmatpush.msra.mxu0 0.0
  %144 = vmatpush.msra.mxu0 0.0
  %145 = vmatpush.msra.mxu0 0.0
  %146 = vmatpush.msra.mxu0 0.0
  %147 = vmatpush.msra.mxu0 0.0
  %148 = vmatpush.msra.mxu0 0.0
  %149 = vmatpush.msra.mxu0 0.0
  %150 = vmatpush.msra.mxu0 0.0
  %151 = vmatpush.msra.mxu0 %v132
  %152 = vmatpush.msra.mxu0 %v131
  %153 = vmatmul.f32.gmra.mxu0 %v59
  %v154 = vpop.f32.mrf.mxu0
  %v155 = vadd.f32 %v135, %v154
  %156 = vmatmul.f32.gmra.mxu0 %v62
  %v157 = vpop.f32.mrf.mxu0
  %v158 = vadd.f32 %v135, %v157
  %159 = vmatmul.f32.gmra.mxu0 %v65
  %v160 = vpop.f32.mrf.mxu0
  %v161 = vadd.f32 %v135, %v160
  %162 = vmatmul.f32.gmra.mxu0 %v68
  %v163 = vpop.f32.mrf.mxu0
  %v164 = vadd.f32 %v135, %v163
  %165 = vmatmul.f32.gmra.mxu0 %v71
  %v166 = vpop.f32.mrf.mxu0
  %v167 = vadd.f32 %v135, %v166
  %168 = vmatmul.f32.gmra.mxu0 %v74
  %v169 = vpop.f32.mrf.mxu0
  %v170 = vadd.f32 %v135, %v169
  %171 = vmatmul.f32.gmra.mxu0 %v77
  %v172 = vpop.f32.mrf.mxu0
  %v173 = vadd.f32 %v135, %v172
  %174 = vmatmul.f32.gmra.mxu0 %v80
  %v175 = vpop.f32.mrf.mxu0
  %v176 = vadd.f32 %v135, %v175
  %177 = vdwg.mxu0
  %v178 = vld [vmem:[%s4] sm:$0xff]
  %v179 = vld [vmem:[%s4 + $0x8] sm:$0xff]
  %v180 = vld [vmem:[%s7] sm:$0x1]
  %v182 = vperm.slane %v180, 0
  %184 = vmatpush.msra.mxu0 0.0
  %185 = vmatpush.msra.mxu0 0.0
  %186 = vmatpush.msra.mxu0 0.0
  %187 = vmatpush.msra.mxu0 0.0
  %188 = vmatpush.msra.mxu0 0.0
  %189 = vmatpush.msra.mxu0 0.0
  %190 = vmatpush.msra.mxu0 0.0
  %191 = vmatpush.msra.mxu0 0.0
  %192 = vmatpush.msra.mxu0 0.0
  %193 = vmatpush.msra.mxu0 0.0
  %194 = vmatpush.msra.mxu0 0.0
  %195 = vmatpush.msra.mxu0 0.0
  %196 = vmatpush.msra.mxu0 0.0
  %197 = vmatpush.msra.mxu0 0.0
  %198 = vmatpush.msra.mxu0 %v179
  %199 = vmatpush.msra.mxu0 %v178
  %200 = vmatmul.f32.gmra.mxu0 %v59
  %v201 = vpop.f32.mrf.mxu0
  %v202 = vadd.f32 %v182, %v201
  %203 = vmatmul.f32.gmra.mxu0 %v62
  %v204 = vpop.f32.mrf.mxu0
  %v205 = vadd.f32 %v182, %v204
  %206 = vmatmul.f32.gmra.mxu0 %v65
  %v207 = vpop.f32.mrf.mxu0
  %v208 = vadd.f32 %v182, %v207
  %209 = vmatmul.f32.gmra.mxu0 %v68
  %v210 = vpop.f32.mrf.mxu0
  %v211 = vadd.f32 %v182, %v210
  %212 = vmatmul.f32.gmra.mxu0 %v71
  %v213 = vpop.f32.mrf.mxu0
  %v214 = vadd.f32 %v182, %v213
  %215 = vmatmul.f32.gmra.mxu0 %v74
  %v216 = vpop.f32.mrf.mxu0
  %v217 = vadd.f32 %v182, %v216
  %218 = vmatmul.f32.gmra.mxu0 %v77
  %v219 = vpop.f32.mrf.mxu0
  %v220 = vadd.f32 %v182, %v219
  %221 = vmatmul.f32.gmra.mxu0 %v80
  %v222 = vpop.f32.mrf.mxu0
  %v223 = vadd.f32 %v182, %v222
  %224 = vdwg.mxu0
  %vm225 = vcmask 31744
  %v227 = vsel %vm225, %v123, 0
  %v230 = vsel %vm225, %v124, 0
  %v233 = vsel %vm225, %v125, 0
  %v236 = vsel %vm225, %v126, 0
  %v239 = vsel %vm225, %v127, 0
  %v242 = vsel %vm225, %v128, 0
  %v245 = vsel %vm225, %v129, 0
  %v248 = vsel %vm225, %v130, 0
  %v251 = vsel %vm225, %v155, 0
  %v254 = vsel %vm225, %v158, 0
  %v257 = vsel %vm225, %v161, 0
  %v260 = vsel %vm225, %v164, 0
  %v263 = vsel %vm225, %v167, 0
  %v266 = vsel %vm225, %v170, 0
  %v269 = vsel %vm225, %v173, 0
  %v272 = vsel %vm225, %v176, 0
  %274 = vmatpush.xpose.msra.mxu0 0.0
  %275 = vmatpush.xpose.msra.mxu0 0.0
  %276 = vmatpush.xpose.msra.mxu0 0.0
  %277 = vmatpush.xpose.msra.mxu0 0.0
  %278 = vmatpush.xpose.msra.mxu0 0.0
  %279 = vmatpush.xpose.msra.mxu0 0.0
  %280 = vmatpush.xpose.msra.mxu0 0.0
  %281 = vmatpush.xpose.msra.mxu0 0.0
  %282 = vmatpush.xpose.msra.mxu0 %v272
  %283 = vmatpush.xpose.msra.mxu0 %v269
  %284 = vmatpush.xpose.msra.mxu0 %v266
  %285 = vmatpush.xpose.msra.mxu0 %v263
  %286 = vmatpush.xpose.msra.mxu0 %v260
  %287 = vmatpush.xpose.msra.mxu0 %v257
  %288 = vmatpush.xpose.msra.mxu0 %v254
  %289 = vmatpush.xpose.msra.mxu0 %v251
  %290 = vmatmul.f32.gmra.mxu0 %v227
  %v291 = vpop.f32.mrf.mxu0
  %v292 = vadd.f32 %v43, %v291
  %293 = vmatmul.f32.gmra.mxu0 %v230
  %v294 = vpop.f32.mrf.mxu0
  %v295 = vadd.f32 %v44, %v294
  %296 = vmatmul.f32.gmra.mxu0 %v233
  %v297 = vpop.f32.mrf.mxu0
  %v298 = vadd.f32 %v45, %v297
  %299 = vmatmul.f32.gmra.mxu0 %v236
  %v300 = vpop.f32.mrf.mxu0
  %v301 = vadd.f32 %v46, %v300
  %302 = vmatmul.f32.gmra.mxu0 %v239
  %v303 = vpop.f32.mrf.mxu0
  %v304 = vadd.f32 %v47, %v303
  %305 = vmatmul.f32.gmra.mxu0 %v242
  %v306 = vpop.f32.mrf.mxu0
  %v307 = vadd.f32 %v48, %v306
  %308 = vmatmul.f32.gmra.mxu0 %v245
  %v309 = vpop.f32.mrf.mxu0
  %v310 = vadd.f32 %v49, %v309
  %311 = vmatmul.f32.gmra.mxu0 %v248
  %v312 = vpop.f32.mrf.mxu0
  %v313 = vadd.f32 %v50, %v312
  %314 = vdwg.mxu0
  %vm315 = vcmask 523264
  %v316 = vsel %vm315, %v292, -inf
  %317 = vmax.xlane.f32.xlu0 %v316
  %v318 = vpop.xlane.xlu0 %317
  %v319 = vsel %vm315, %v295, -inf
  %320 = vmax.xlane.f32.xlu0 %v319
  %v321 = vpop.xlane.xlu0 %320
  %v322 = vsel %vm315, %v298, -inf
  %323 = vmax.xlane.f32.xlu0 %v322
  %v324 = vpop.xlane.xlu0 %323
  %v325 = vsel %vm315, %v301, -inf
  %326 = vmax.xlane.f32.xlu0 %v325
  %v327 = vpop.xlane.xlu0 %326
  %v328 = vsel %vm315, %v304, -inf
  %329 = vmax.xlane.f32.xlu0 %v328
  %v330 = vpop.xlane.xlu0 %329
  %v331 = vsel %vm315, %v307, -inf
  %332 = vmax.xlane.f32.xlu0 %v331
  %v333 = vpop.xlane.xlu0 %332
  %v334 = vsel %vm315, %v310, -inf
  %335 = vmax.xlane.f32.xlu0 %v334
  %v336 = vpop.xlane.xlu0 %335
  %v337 = vsel %vm315, %v313, -inf
  %338 = vmax.xlane.f32.xlu0 %v337
  %v339 = vpop.xlane.xlu0 %338
  %v340 = vsub.f32 %v292, %v318
  %v341 = vsub.f32 %v295, %v321
  %v342 = vsub.f32 %v298, %v324
  %v343 = vsub.f32 %v301, %v327
  %v344 = vsub.f32 %v304, %v330
  %v345 = vsub.f32 %v307, %v333
  %v346 = vsub.f32 %v310, %v336
  %v347 = vsub.f32 %v313, %v339
  %v348 = vmul.f32 %v340, 1.442695
  %v349 = vpow.pop %v348
  %v350 = vmul.f32 %v341, 1.442695
  %v351 = vpow.pop %v350
  %v352 = vmul.f32 %v342, 1.442695
  %v353 = vpow.pop %v352
  %v354 = vmul.f32 %v343, 1.442695
  %v355 = vpow.pop %v354
  %v356 = vmul.f32 %v344, 1.442695
  %v357 = vpow.pop %v356
  %v358 = vmul.f32 %v345, 1.442695
  %v359 = vpow.pop %v358
  %v360 = vmul.f32 %v346, 1.442695
  %v361 = vpow.pop %v360
  %v362 = vmul.f32 %v347, 1.442695
  %v363 = vpow.pop %v362
  %v364 = vsel %vm315, %v349, 0.0
  %365 = vadd.xlane.f32.xlu0 %v364
  %v366 = vpop.xlane.xlu0 %365
  %v367 = vsel %vm315, %v351, 0.0
  %368 = vadd.xlane.f32.xlu0 %v367
  %v369 = vpop.xlane.xlu0 %368
  %v370 = vsel %vm315, %v353, 0.0
  %371 = vadd.xlane.f32.xlu0 %v370
  %v372 = vpop.xlane.xlu0 %371
  %v373 = vsel %vm315, %v355, 0.0
  %374 = vadd.xlane.f32.xlu0 %v373
  %v375 = vpop.xlane.xlu0 %374
  %v376 = vsel %vm315, %v357, 0.0
  %377 = vadd.xlane.f32.xlu0 %v376
  %v378 = vpop.xlane.xlu0 %377
  %v379 = vsel %vm315, %v359, 0.0
  %380 = vadd.xlane.f32.xlu0 %v379
  %v381 = vpop.xlane.xlu0 %380
  %v382 = vsel %vm315, %v361, 0.0
  %383 = vadd.xlane.f32.xlu0 %v382
  %v384 = vpop.xlane.xlu0 %383
  %v385 = vsel %vm315, %v363, 0.0
  %386 = vadd.xlane.f32.xlu0 %v385
  %v387 = vpop.xlane.xlu0 %386
  %v388 = vrcp.pop %v366
  %v389 = vmul.f32 %v366, %v388
  %v390 = vsub.f32 1.0, %v389
  %v391 = vmul.f32 %v388, %v390
  %v392 = vadd.f32 %v388, %v391
  %vm393 = vweird.f32 %v366
  %vm394 = vweird.f32 %v388
  %vm395 = vmor %vm393, %vm394
  %v396 = vsel %vm395, %v388, %v392
  %v397 = vand.u32 2147483647, %v366
  %vm398 = vcmp.eq.f32.partialorder %v397, 8.507059e+37
  %v399 = vand.u32 %v366, 2147483648
  %v400 = vor.u32 1.1754944e-38, %v399
  %v401 = vsel %vm398, %v400, %v396
  %v402 = vmul.f32 %v349, %v401
  %v403 = vrcp.pop %v369
  %v404 = vmul.f32 %v369, %v403
  %v405 = vsub.f32 1.0, %v404
  %v406 = vmul.f32 %v403, %v405
  %v407 = vadd.f32 %v403, %v406
  %vm408 = vweird.f32 %v369
  %vm409 = vweird.f32 %v403
  %vm410 = vmor %vm408, %vm409
  %v411 = vsel %vm410, %v403, %v407
  %v412 = vand.u32 2147483647, %v369
  %vm413 = vcmp.eq.f32.partialorder %v412, 8.507059e+37
  %v414 = vand.u32 %v369, 2147483648
  %v415 = vor.u32 1.1754944e-38, %v414
  %v416 = vsel %vm413, %v415, %v411
  %v417 = vmul.f32 %v351, %v416
  %v418 = vrcp.pop %v372
  %v419 = vmul.f32 %v372, %v418
  %v420 = vsub.f32 1.0, %v419
  %v421 = vmul.f32 %v418, %v420
  %v422 = vadd.f32 %v418, %v421
  %vm423 = vweird.f32 %v372
  %vm424 = vweird.f32 %v418
  %vm425 = vmor %vm423, %vm424
  %v426 = vsel %vm425, %v418, %v422
  %v427 = vand.u32 2147483647, %v372
  %vm428 = vcmp.eq.f32.partialorder %v427, 8.507059e+37
  %v429 = vand.u32 %v372, 2147483648
  %v430 = vor.u32 1.1754944e-38, %v429
  %v431 = vsel %vm428, %v430, %v426
  %v432 = vmul.f32 %v353, %v431
  %v433 = vrcp.pop %v375
  %v434 = vmul.f32 %v375, %v433
  %v435 = vsub.f32 1.0, %v434
  %v436 = vmul.f32 %v433, %v435
  %v437 = vadd.f32 %v433, %v436
  %vm438 = vweird.f32 %v375
  %vm439 = vweird.f32 %v433
  %vm440 = vmor %vm438, %vm439
  %v441 = vsel %vm440, %v433, %v437
  %v442 = vand.u32 2147483647, %v375
  %vm443 = vcmp.eq.f32.partialorder %v442, 8.507059e+37
  %v444 = vand.u32 %v375, 2147483648
  %v445 = vor.u32 1.1754944e-38, %v444
  %v446 = vsel %vm443, %v445, %v441
  %v447 = vmul.f32 %v355, %v446
  %v448 = vrcp.pop %v378
  %v449 = vmul.f32 %v378, %v448
  %v450 = vsub.f32 1.0, %v449
  %v451 = vmul.f32 %v448, %v450
  %v452 = vadd.f32 %v448, %v451
  %vm453 = vweird.f32 %v378
  %vm454 = vweird.f32 %v448
  %vm455 = vmor %vm453, %vm454
  %v456 = vsel %vm455, %v448, %v452
  %v457 = vand.u32 2147483647, %v378
  %vm458 = vcmp.eq.f32.partialorder %v457, 8.507059e+37
  %v459 = vand.u32 %v378, 2147483648
  %v460 = vor.u32 1.1754944e-38, %v459
  %v461 = vsel %vm458, %v460, %v456
  %v462 = vmul.f32 %v357, %v461
  %v463 = vrcp.pop %v381
  %v464 = vmul.f32 %v381, %v463
  %v465 = vsub.f32 1.0, %v464
  %v466 = vmul.f32 %v463, %v465
  %v467 = vadd.f32 %v463, %v466
  %vm468 = vweird.f32 %v381
  %vm469 = vweird.f32 %v463
  %vm470 = vmor %vm468, %vm469
  %v471 = vsel %vm470, %v463, %v467
  %v472 = vand.u32 2147483647, %v381
  %vm473 = vcmp.eq.f32.partialorder %v472, 8.507059e+37
  %v474 = vand.u32 %v381, 2147483648
  %v475 = vor.u32 1.1754944e-38, %v474
  %v476 = vsel %vm473, %v475, %v471
  %v477 = vmul.f32 %v359, %v476
  %v478 = vrcp.pop %v384
  %v479 = vmul.f32 %v384, %v478
  %v480 = vsub.f32 1.0, %v479
  %v481 = vmul.f32 %v478, %v480
  %v482 = vadd.f32 %v478, %v481
  %vm483 = vweird.f32 %v384
  %vm484 = vweird.f32 %v478
  %vm485 = vmor %vm483, %vm484
  %v486 = vsel %vm485, %v478, %v482
  %v487 = vand.u32 2147483647, %v384
  %vm488 = vcmp.eq.f32.partialorder %v487, 8.507059e+37
  %v489 = vand.u32 %v384, 2147483648
  %v490 = vor.u32 1.1754944e-38, %v489
  %v491 = vsel %vm488, %v490, %v486
  %v492 = vmul.f32 %v361, %v491
  %v493 = vrcp.pop %v387
  %v494 = vmul.f32 %v387, %v493
  %v495 = vsub.f32 1.0, %v494
  %v496 = vmul.f32 %v493, %v495
  %v497 = vadd.f32 %v493, %v496
  %vm498 = vweird.f32 %v387
  %vm499 = vweird.f32 %v493
  %vm500 = vmor %vm498, %vm499
  %v501 = vsel %vm500, %v493, %v497
  %v502 = vand.u32 2147483647, %v387
  %vm503 = vcmp.eq.f32.partialorder %v502, 8.507059e+37
  %v504 = vand.u32 %v387, 2147483648
  %v505 = vor.u32 1.1754944e-38, %v504
  %v506 = vsel %vm503, %v505, %v501
  %v507 = vmul.f32 %v363, %v506
  %v509 = vsel %vm315, %v402, 0
  %v512 = vsel %vm315, %v417, 0
  %v515 = vsel %vm315, %v432, 0
  %v518 = vsel %vm315, %v447, 0
  %v521 = vsel %vm315, %v462, 0
  %v524 = vsel %vm315, %v477, 0
  %v527 = vsel %vm315, %v492, 0
  %v530 = vsel %vm315, %v507, 0
  %532 = vmatpush.msra.mxu0 0.0
  %533 = vmatpush.msra.mxu0 0.0
  %534 = vmatpush.msra.mxu0 0.0
  %535 = vmatpush.msra.mxu0 0.0
  %536 = vmatpush.msra.mxu0 0.0
  %537 = vmatpush.msra.mxu0 0.0
  %538 = vmatpush.msra.mxu0 0.0
  %539 = vmatpush.msra.mxu0 0.0
  %540 = vmatpush.msra.mxu0 %v223
  %541 = vmatpush.msra.mxu0 %v220
  %542 = vmatpush.msra.mxu0 %v217
  %543 = vmatpush.msra.mxu0 %v214
  %544 = vmatpush.msra.mxu0 %v211
  %545 = vmatpush.msra.mxu0 %v208
  %546 = vmatpush.msra.mxu0 %v205
  %547 = vmatpush.msra.mxu0 %v202
  %548 = vmatmul.f32.gmra.mxu0 %v509
  %v549 = vpop.f32.mrf.mxu0
  %v550 = vadd.f32 0.0, %v549
  %551 = vmatmul.f32.gmra.mxu0 %v512
  %v552 = vpop.f32.mrf.mxu0
  %v553 = vadd.f32 0.0, %v552
  %554 = vmatmul.f32.gmra.mxu0 %v515
  %v555 = vpop.f32.mrf.mxu0
  %v556 = vadd.f32 0.0, %v555
  %557 = vmatmul.f32.gmra.mxu0 %v518
  %v558 = vpop.f32.mrf.mxu0
  %v559 = vadd.f32 0.0, %v558
  %560 = vmatmul.f32.gmra.mxu0 %v521
  %v561 = vpop.f32.mrf.mxu0
  %v562 = vadd.f32 0.0, %v561
  %563 = vmatmul.f32.gmra.mxu0 %v524
  %v564 = vpop.f32.mrf.mxu0
  %v565 = vadd.f32 0.0, %v564
  %566 = vmatmul.f32.gmra.mxu0 %v527
  %v567 = vpop.f32.mrf.mxu0
  %v568 = vadd.f32 0.0, %v567
  %569 = vmatmul.f32.gmra.mxu0 %v530
  %v570 = vpop.f32.mrf.mxu0
  %v571 = vadd.f32 0.0, %v570
  %572 = vdwg.mxu0
  %v573 = vld [vmem:[%s8] sm:$0xf]
  %s574 = scalar_lea.vmem %s2, 16
  %v575 = vld [vmem:[%s574] sm:$0xff]
  %v576 = vld [vmem:[%s574 + $0x8] sm:$0xff]
  %s577 = scalar_lea.vmem %s5, 1
  %v578 = vld [vmem:[%s577] sm:$0x1]
  %v580 = vperm.slane %v578, 0
  %582 = vmatpush.msra.mxu0 0.0
  %583 = vmatpush.msra.mxu0 0.0
  %584 = vmatpush.msra.mxu0 0.0
  %585 = vmatpush.msra.mxu0 0.0
  %586 = vmatpush.msra.mxu0 0.0
  %587 = vmatpush.msra.mxu0 0.0
  %588 = vmatpush.msra.mxu0 0.0
  %589 = vmatpush.msra.mxu0 0.0
  %590 = vmatpush.msra.mxu0 0.0
  %591 = vmatpush.msra.mxu0 0.0
  %592 = vmatpush.msra.mxu0 0.0
  %593 = vmatpush.msra.mxu0 0.0
  %594 = vmatpush.msra.mxu0 0.0
  %595 = vmatpush.msra.mxu0 0.0
  %596 = vmatpush.msra.mxu0 %v576
  %597 = vmatpush.msra.mxu0 %v575
  %598 = vmatmul.f32.gmra.mxu0 %v59
  %v599 = vpop.f32.mrf.mxu0
  %v600 = vadd.f32 %v580, %v599
  %601 = vmatmul.f32.gmra.mxu0 %v62
  %v602 = vpop.f32.mrf.mxu0
  %v603 = vadd.f32 %v580, %v602
  %604 = vmatmul.f32.gmra.mxu0 %v65
  %v605 = vpop.f32.mrf.mxu0
  %v606 = vadd.f32 %v580, %v605
  %607 = vmatmul.f32.gmra.mxu0 %v68
  %v608 = vpop.f32.mrf.mxu0
  %v609 = vadd.f32 %v580, %v608
  %610 = vmatmul.f32.gmra.mxu0 %v71
  %v611 = vpop.f32.mrf.mxu0
  %v612 = vadd.f32 %v580, %v611
  %613 = vmatmul.f32.gmra.mxu0 %v74
  %v614 = vpop.f32.mrf.mxu0
  %v615 = vadd.f32 %v580, %v614
  %616 = vmatmul.f32.gmra.mxu0 %v77
  %v617 = vpop.f32.mrf.mxu0
  %v618 = vadd.f32 %v580, %v617
  %619 = vmatmul.f32.gmra.mxu0 %v80
  %v620 = vpop.f32.mrf.mxu0
  %v621 = vadd.f32 %v580, %v620
  %622 = vdwg.mxu0
  %v623 = vmul.f32 %v600, 0.5
  %v624 = vmul.f32 %v603, 0.5
  %v625 = vmul.f32 %v606, 0.5
  %v626 = vmul.f32 %v609, 0.5
  %v627 = vmul.f32 %v612, 0.5
  %v628 = vmul.f32 %v615, 0.5
  %v629 = vmul.f32 %v618, 0.5
  %v630 = vmul.f32 %v621, 0.5
  %s631 = scalar_lea.vmem %s3, 16
  %v632 = vld [vmem:[%s631] sm:$0xff]
  %v633 = vld [vmem:[%s631 + $0x8] sm:$0xff]
  %s634 = scalar_lea.vmem %s6, 1
  %v635 = vld [vmem:[%s634] sm:$0x1]
  %v637 = vperm.slane %v635, 0
  %639 = vmatpush.msra.mxu0 0.0
  %640 = vmatpush.msra.mxu0 0.0
  %641 = vmatpush.msra.mxu0 0.0
  %642 = vmatpush.msra.mxu0 0.0
  %643 = vmatpush.msra.mxu0 0.0
  %644 = vmatpush.msra.mxu0 0.0
  %645 = vmatpush.msra.mxu0 0.0
  %646 = vmatpush.msra.mxu0 0.0
  %647 = vmatpush.msra.mxu0 0.0
  %648 = vmatpush.msra.mxu0 0.0
  %649 = vmatpush.msra.mxu0 0.0
  %650 = vmatpush.msra.mxu0 0.0
  %651 = vmatpush.msra.mxu0 0.0
  %652 = vmatpush.msra.mxu0 0.0
  %653 = vmatpush.msra.mxu0 %v633
  %654 = vmatpush.msra.mxu0 %v632
  %655 = vmatmul.f32.gmra.mxu0 %v59
  %v656 = vpop.f32.mrf.mxu0
  %v657 = vadd.f32 %v637, %v656
  %658 = vmatmul.f32.gmra.mxu0 %v62
  %v659 = vpop.f32.mrf.mxu0
  %v660 = vadd.f32 %v637, %v659
  %661 = vmatmul.f32.gmra.mxu0 %v65
  %v662 = vpop.f32.mrf.mxu0
  %v663 = vadd.f32 %v637, %v662
  %664 = vmatmul.f32.gmra.mxu0 %v68
  %v665 = vpop.f32.mrf.mxu0
  %v666 = vadd.f32 %v637, %v665
  %667 = vmatmul.f32.gmra.mxu0 %v71
  %v668 = vpop.f32.mrf.mxu0
  %v669 = vadd.f32 %v637, %v668
  %670 = vmatmul.f32.gmra.mxu0 %v74
  %v671 = vpop.f32.mrf.mxu0
  %v672 = vadd.f32 %v637, %v671
  %673 = vmatmul.f32.gmra.mxu0 %v77
  %v674 = vpop.f32.mrf.mxu0
  %v675 = vadd.f32 %v637, %v674
  %676 = vmatmul.f32.gmra.mxu0 %v80
  %v677 = vpop.f32.mrf.mxu0
  %v678 = vadd.f32 %v637, %v677
  %679 = vdwg.mxu0
  %s680 = scalar_lea.vmem %s4, 16
  %v681 = vld [vmem:[%s680] sm:$0xff]
  %v682 = vld [vmem:[%s680 + $0x8] sm:$0xff]
  %s683 = scalar_lea.vmem %s7, 1
  %v684 = vld [vmem:[%s683] sm:$0x1]
  %v686 = vperm.slane %v684, 0
  %688 = vmatpush.msra.mxu0 0.0
  %689 = vmatpush.msra.mxu0 0.0
  %690 = vmatpush.msra.mxu0 0.0
  %691 = vmatpush.msra.mxu0 0.0
  %692 = vmatpush.msra.mxu0 0.0
  %693 = vmatpush.msra.mxu0 0.0
  %694 = vmatpush.msra.mxu0 0.0
  %695 = vmatpush.msra.mxu0 0.0
  %696 = vmatpush.msra.mxu0 0.0
  %697 = vmatpush.msra.mxu0 0.0
  %698 = vmatpush.msra.mxu0 0.0
  %699 = vmatpush.msra.mxu0 0.0
  %700 = vmatpush.msra.mxu0 0.0
  %701 = vmatpush.msra.mxu0 0.0
  %702 = vmatpush.msra.mxu0 %v682
  %703 = vmatpush.msra.mxu0 %v681
  %704 = vmatmul.f32.gmra.mxu0 %v59
  %v705 = vpop.f32.mrf.mxu0
  %v706 = vadd.f32 %v686, %v705
  %707 = vmatmul.f32.gmra.mxu0 %v62
  %v708 = vpop.f32.mrf.mxu0
  %v709 = vadd.f32 %v686, %v708
  %710 = vmatmul.f32.gmra.mxu0 %v65
  %v711 = vpop.f32.mrf.mxu0
  %v712 = vadd.f32 %v686, %v711
  %713 = vmatmul.f32.gmra.mxu0 %v68
  %v714 = vpop.f32.mrf.mxu0
  %v715 = vadd.f32 %v686, %v714
  %716 = vmatmul.f32.gmra.mxu0 %v71
  %v717 = vpop.f32.mrf.mxu0
  %v718 = vadd.f32 %v686, %v717
  %719 = vmatmul.f32.gmra.mxu0 %v74
  %v720 = vpop.f32.mrf.mxu0
  %v721 = vadd.f32 %v686, %v720
  %722 = vmatmul.f32.gmra.mxu0 %v77
  %v723 = vpop.f32.mrf.mxu0
  %v724 = vadd.f32 %v686, %v723
  %725 = vmatmul.f32.gmra.mxu0 %v80
  %v726 = vpop.f32.mrf.mxu0
  %v727 = vadd.f32 %v686, %v726
  %728 = vdwg.mxu0
  %v730 = vsel %vm225, %v623, 0
  %v733 = vsel %vm225, %v624, 0
  %v736 = vsel %vm225, %v625, 0
  %v739 = vsel %vm225, %v626, 0
  %v742 = vsel %vm225, %v627, 0
  %v745 = vsel %vm225, %v628, 0
  %v748 = vsel %vm225, %v629, 0
  %v751 = vsel %vm225, %v630, 0
  %v754 = vsel %vm225, %v657, 0
  %v757 = vsel %vm225, %v660, 0
  %v760 = vsel %vm225, %v663, 0
  %v763 = vsel %vm225, %v666, 0
  %v766 = vsel %vm225, %v669, 0
  %v769 = vsel %vm225, %v672, 0
  %v772 = vsel %vm225, %v675, 0
  %v775 = vsel %vm225, %v678, 0
  %777 = vmatpush.xpose.msra.mxu0 0.0
  %778 = vmatpush.xpose.msra.mxu0 0.0
  %779 = vmatpush.xpose.msra.mxu0 0.0
  %780 = vmatpush.xpose.msra.mxu0 0.0
  %781 = vmatpush.xpose.msra.mxu0 0.0
  %782 = vmatpush.xpose.msra.mxu0 0.0
  %783 = vmatpush.xpose.msra.mxu0 0.0
  %784 = vmatpush.xpose.msra.mxu0 0.0
  %785 = vmatpush.xpose.msra.mxu0 %v775
  %786 = vmatpush.xpose.msra.mxu0 %v772
  %787 = vmatpush.xpose.msra.mxu0 %v769
  %788 = vmatpush.xpose.msra.mxu0 %v766
  %789 = vmatpush.xpose.msra.mxu0 %v763
  %790 = vmatpush.xpose.msra.mxu0 %v760
  %791 = vmatpush.xpose.msra.mxu0 %v757
  %792 = vmatpush.xpose.msra.mxu0 %v754
  %793 = vmatmul.f32.gmra.mxu0 %v730
  %v794 = vpop.f32.mrf.mxu0
  %v795 = vadd.f32 %v43, %v794
  %796 = vmatmul.f32.gmra.mxu0 %v733
  %v797 = vpop.f32.mrf.mxu0
  %v798 = vadd.f32 %v44, %v797
  %799 = vmatmul.f32.gmra.mxu0 %v736
  %v800 = vpop.f32.mrf.mxu0
  %v801 = vadd.f32 %v45, %v800
  %802 = vmatmul.f32.gmra.mxu0 %v739
  %v803 = vpop.f32.mrf.mxu0
  %v804 = vadd.f32 %v46, %v803
  %805 = vmatmul.f32.gmra.mxu0 %v742
  %v806 = vpop.f32.mrf.mxu0
  %v807 = vadd.f32 %v47, %v806
  %808 = vmatmul.f32.gmra.mxu0 %v745
  %v809 = vpop.f32.mrf.mxu0
  %v810 = vadd.f32 %v48, %v809
  %811 = vmatmul.f32.gmra.mxu0 %v748
  %v812 = vpop.f32.mrf.mxu0
  %v813 = vadd.f32 %v49, %v812
  %814 = vmatmul.f32.gmra.mxu0 %v751
  %v815 = vpop.f32.mrf.mxu0
  %v816 = vadd.f32 %v50, %v815
  %817 = vdwg.mxu0
  %v818 = vsel %vm315, %v795, -inf
  %819 = vmax.xlane.f32.xlu0 %v818
  %v820 = vpop.xlane.xlu0 %819
  %v821 = vsel %vm315, %v798, -inf
  %822 = vmax.xlane.f32.xlu0 %v821
  %v823 = vpop.xlane.xlu0 %822
  %v824 = vsel %vm315, %v801, -inf
  %825 = vmax.xlane.f32.xlu0 %v824
  %v826 = vpop.xlane.xlu0 %825
  %v827 = vsel %vm315, %v804, -inf
  %828 = vmax.xlane.f32.xlu0 %v827
  %v829 = vpop.xlane.xlu0 %828
  %v830 = vsel %vm315, %v807, -inf
  %831 = vmax.xlane.f32.xlu0 %v830
  %v832 = vpop.xlane.xlu0 %831
  %v833 = vsel %vm315, %v810, -inf
  %834 = vmax.xlane.f32.xlu0 %v833
  %v835 = vpop.xlane.xlu0 %834
  %v836 = vsel %vm315, %v813, -inf
  %837 = vmax.xlane.f32.xlu0 %v836
  %v838 = vpop.xlane.xlu0 %837
  %v839 = vsel %vm315, %v816, -inf
  %840 = vmax.xlane.f32.xlu0 %v839
  %v841 = vpop.xlane.xlu0 %840
  %v842 = vsub.f32 %v795, %v820
  %v843 = vsub.f32 %v798, %v823
  %v844 = vsub.f32 %v801, %v826
  %v845 = vsub.f32 %v804, %v829
  %v846 = vsub.f32 %v807, %v832
  %v847 = vsub.f32 %v810, %v835
  %v848 = vsub.f32 %v813, %v838
  %v849 = vsub.f32 %v816, %v841
  %v850 = vmul.f32 %v842, 1.442695
  %v851 = vpow.pop %v850
  %v852 = vmul.f32 %v843, 1.442695
  %v853 = vpow.pop %v852
  %v854 = vmul.f32 %v844, 1.442695
  %v855 = vpow.pop %v854
  %v856 = vmul.f32 %v845, 1.442695
  %v857 = vpow.pop %v856
  %v858 = vmul.f32 %v846, 1.442695
  %v859 = vpow.pop %v858
  %v860 = vmul.f32 %v847, 1.442695
  %v861 = vpow.pop %v860
  %v862 = vmul.f32 %v848, 1.442695
  %v863 = vpow.pop %v862
  %v864 = vmul.f32 %v849, 1.442695
  %v865 = vpow.pop %v864
  %v866 = vsel %vm315, %v851, 0.0
  %867 = vadd.xlane.f32.xlu0 %v866
  %v868 = vpop.xlane.xlu0 %867
  %v869 = vsel %vm315, %v853, 0.0
  %870 = vadd.xlane.f32.xlu0 %v869
  %v871 = vpop.xlane.xlu0 %870
  %v872 = vsel %vm315, %v855, 0.0
  %873 = vadd.xlane.f32.xlu0 %v872
  %v874 = vpop.xlane.xlu0 %873
  %v875 = vsel %vm315, %v857, 0.0
  %876 = vadd.xlane.f32.xlu0 %v875
  %v877 = vpop.xlane.xlu0 %876
  %v878 = vsel %vm315, %v859, 0.0
  %879 = vadd.xlane.f32.xlu0 %v878
  %v880 = vpop.xlane.xlu0 %879
  %v881 = vsel %vm315, %v861, 0.0
  %882 = vadd.xlane.f32.xlu0 %v881
  %v883 = vpop.xlane.xlu0 %882
  %v884 = vsel %vm315, %v863, 0.0
  %885 = vadd.xlane.f32.xlu0 %v884
  %v886 = vpop.xlane.xlu0 %885
  %v887 = vsel %vm315, %v865, 0.0
  %888 = vadd.xlane.f32.xlu0 %v887
  %v889 = vpop.xlane.xlu0 %888
  %v890 = vrcp.pop %v868
  %v891 = vmul.f32 %v868, %v890
  %v892 = vsub.f32 1.0, %v891
  %v893 = vmul.f32 %v890, %v892
  %v894 = vadd.f32 %v890, %v893
  %vm895 = vweird.f32 %v868
  %vm896 = vweird.f32 %v890
  %vm897 = vmor %vm895, %vm896
  %v898 = vsel %vm897, %v890, %v894
  %v899 = vand.u32 2147483647, %v868
  %vm900 = vcmp.eq.f32.partialorder %v899, 8.507059e+37
  %v901 = vand.u32 %v868, 2147483648
  %v902 = vor.u32 1.1754944e-38, %v901
  %v903 = vsel %vm900, %v902, %v898
  %v904 = vmul.f32 %v851, %v903
  %v905 = vrcp.pop %v871
  %v906 = vmul.f32 %v871, %v905
  %v907 = vsub.f32 1.0, %v906
  %v908 = vmul.f32 %v905, %v907
  %v909 = vadd.f32 %v905, %v908
  %vm910 = vweird.f32 %v871
  %vm911 = vweird.f32 %v905
  %vm912 = vmor %vm910, %vm911
  %v913 = vsel %vm912, %v905, %v909
  %v914 = vand.u32 2147483647, %v871
  %vm915 = vcmp.eq.f32.partialorder %v914, 8.507059e+37
  %v916 = vand.u32 %v871, 2147483648
  %v917 = vor.u32 1.1754944e-38, %v916
  %v918 = vsel %vm915, %v917, %v913
  %v919 = vmul.f32 %v853, %v918
  %v920 = vrcp.pop %v874
  %v921 = vmul.f32 %v874, %v920
  %v922 = vsub.f32 1.0, %v921
  %v923 = vmul.f32 %v920, %v922
  %v924 = vadd.f32 %v920, %v923
  %vm925 = vweird.f32 %v874
  %vm926 = vweird.f32 %v920
  %vm927 = vmor %vm925, %vm926
  %v928 = vsel %vm927, %v920, %v924
  %v929 = vand.u32 2147483647, %v874
  %vm930 = vcmp.eq.f32.partialorder %v929, 8.507059e+37
  %v931 = vand.u32 %v874, 2147483648
  %v932 = vor.u32 1.1754944e-38, %v931
  %v933 = vsel %vm930, %v932, %v928
  %v934 = vmul.f32 %v855, %v933
  %v935 = vrcp.pop %v877
  %v936 = vmul.f32 %v877, %v935
  %v937 = vsub.f32 1.0, %v936
  %v938 = vmul.f32 %v935, %v937
  %v939 = vadd.f32 %v935, %v938
  %vm940 = vweird.f32 %v877
  %vm941 = vweird.f32 %v935
  %vm942 = vmor %vm940, %vm941
  %v943 = vsel %vm942, %v935, %v939
  %v944 = vand.u32 2147483647, %v877
  %vm945 = vcmp.eq.f32.partialorder %v944, 8.507059e+37
  %v946 = vand.u32 %v877, 2147483648
  %v947 = vor.u32 1.1754944e-38, %v946
  %v948 = vsel %vm945, %v947, %v943
  %v949 = vmul.f32 %v857, %v948
  %v950 = vrcp.pop %v880
  %v951 = vmul.f32 %v880, %v950
  %v952 = vsub.f32 1.0, %v951
  %v953 = vmul.f32 %v950, %v952
  %v954 = vadd.f32 %v950, %v953
  %vm955 = vweird.f32 %v880
  %vm956 = vweird.f32 %v950
  %vm957 = vmor %vm955, %vm956
  %v958 = vsel %vm957, %v950, %v954
  %v959 = vand.u32 2147483647, %v880
  %vm960 = vcmp.eq.f32.partialorder %v959, 8.507059e+37
  %v961 = vand.u32 %v880, 2147483648
  %v962 = vor.u32 1.1754944e-38, %v961
  %v963 = vsel %vm960, %v962, %v958
  %v964 = vmul.f32 %v859, %v963
  %v965 = vrcp.pop %v883
  %v966 = vmul.f32 %v883, %v965
  %v967 = vsub.f32 1.0, %v966
  %v968 = vmul.f32 %v965, %v967
  %v969 = vadd.f32 %v965, %v968
  %vm970 = vweird.f32 %v883
  %vm971 = vweird.f32 %v965
  %vm972 = vmor %vm970, %vm971
  %v973 = vsel %vm972, %v965, %v969
  %v974 = vand.u32 2147483647, %v883
  %vm975 = vcmp.eq.f32.partialorder %v974, 8.507059e+37
  %v976 = vand.u32 %v883, 2147483648
  %v977 = vor.u32 1.1754944e-38, %v976
  %v978 = vsel %vm975, %v977, %v973
  %v979 = vmul.f32 %v861, %v978
  %v980 = vrcp.pop %v886
  %v981 = vmul.f32 %v886, %v980
  %v982 = vsub.f32 1.0, %v981
  %v983 = vmul.f32 %v980, %v982
  %v984 = vadd.f32 %v980, %v983
  %vm985 = vweird.f32 %v886
  %vm986 = vweird.f32 %v980
  %vm987 = vmor %vm985, %vm986
  %v988 = vsel %vm987, %v980, %v984
  %v989 = vand.u32 2147483647, %v886
  %vm990 = vcmp.eq.f32.partialorder %v989, 8.507059e+37
  %v991 = vand.u32 %v886, 2147483648
  %v992 = vor.u32 1.1754944e-38, %v991
  %v993 = vsel %vm990, %v992, %v988
  %v994 = vmul.f32 %v863, %v993
  %v995 = vrcp.pop %v889
  %v996 = vmul.f32 %v889, %v995
  %v997 = vsub.f32 1.0, %v996
  %v998 = vmul.f32 %v995, %v997
  %v999 = vadd.f32 %v995, %v998
  %vm1000 = vweird.f32 %v889
  %vm1001 = vweird.f32 %v995
  %vm1002 = vmor %vm1000, %vm1001
  %v1003 = vsel %vm1002, %v995, %v999
  %v1004 = vand.u32 2147483647, %v889
  %vm1005 = vcmp.eq.f32.partialorder %v1004, 8.507059e+37
  %v1006 = vand.u32 %v889, 2147483648
  %v1007 = vor.u32 1.1754944e-38, %v1006
  %v1008 = vsel %vm1005, %v1007, %v1003
  %v1009 = vmul.f32 %v865, %v1008
  %v1011 = vsel %vm315, %v904, 0
  %v1014 = vsel %vm315, %v919, 0
  %v1017 = vsel %vm315, %v934, 0
  %v1020 = vsel %vm315, %v949, 0
  %v1023 = vsel %vm315, %v964, 0
  %v1026 = vsel %vm315, %v979, 0
  %v1029 = vsel %vm315, %v994, 0
  %v1032 = vsel %vm315, %v1009, 0
  %1034 = vmatpush.msra.mxu0 0.0
  %1035 = vmatpush.msra.mxu0 0.0
  %1036 = vmatpush.msra.mxu0 0.0
  %1037 = vmatpush.msra.mxu0 0.0
  %1038 = vmatpush.msra.mxu0 0.0
  %1039 = vmatpush.msra.mxu0 0.0
  %1040 = vmatpush.msra.mxu0 0.0
  %1041 = vmatpush.msra.mxu0 0.0
  %1042 = vmatpush.msra.mxu0 %v727
  %1043 = vmatpush.msra.mxu0 %v724
  %1044 = vmatpush.msra.mxu0 %v721
  %1045 = vmatpush.msra.mxu0 %v718
  %1046 = vmatpush.msra.mxu0 %v715
  %1047 = vmatpush.msra.mxu0 %v712
  %1048 = vmatpush.msra.mxu0 %v709
  %1049 = vmatpush.msra.mxu0 %v706
  %1050 = vmatmul.f32.gmra.mxu0 %v1011
  %v1051 = vpop.f32.mrf.mxu0
  %v1052 = vadd.f32 0.0, %v1051
  %1053 = vmatmul.f32.gmra.mxu0 %v1014
  %v1054 = vpop.f32.mrf.mxu0
  %v1055 = vadd.f32 0.0, %v1054
  %1056 = vmatmul.f32.gmra.mxu0 %v1017
  %v1057 = vpop.f32.mrf.mxu0
  %v1058 = vadd.f32 0.0, %v1057
  %1059 = vmatmul.f32.gmra.mxu0 %v1020
  %v1060 = vpop.f32.mrf.mxu0
  %v1061 = vadd.f32 0.0, %v1060
  %1062 = vmatmul.f32.gmra.mxu0 %v1023
  %v1063 = vpop.f32.mrf.mxu0
  %v1064 = vadd.f32 0.0, %v1063
  %1065 = vmatmul.f32.gmra.mxu0 %v1026
  %v1066 = vpop.f32.mrf.mxu0
  %v1067 = vadd.f32 0.0, %v1066
  %1068 = vmatmul.f32.gmra.mxu0 %v1029
  %v1069 = vpop.f32.mrf.mxu0
  %v1070 = vadd.f32 0.0, %v1069
  %1071 = vmatmul.f32.gmra.mxu0 %v1032
  %v1072 = vpop.f32.mrf.mxu0
  %v1073 = vadd.f32 0.0, %v1072
  %1074 = vdwg.mxu0
  %s1075 = scalar_lea.vmem %s8, 4
  %v1076 = vld [vmem:[%s1075] sm:$0xf]
  %v1078 = vsel %vm225, %v1052, 0
  %v1081 = vsel %vm225, %v1055, 0
  %v1084 = vsel %vm225, %v1058, 0
  %v1087 = vsel %vm225, %v1061, 0
  %v1090 = vsel %vm225, %v1064, 0
  %v1093 = vsel %vm225, %v1067, 0
  %v1096 = vsel %vm225, %v1070, 0
  %v1099 = vsel %vm225, %v1073, 0
  %vm1101 = vcmask 1043456
  %v1103 = vsel %vm1101, %v1076, 0
  %1105 = vmatpush.msra.mxu0 0.0
  %1106 = vmatpush.msra.mxu0 0.0
  %1107 = vmatpush.msra.mxu0 0.0
  %1108 = vmatpush.msra.mxu0 0.0
  %1109 = vmatpush.msra.mxu0 0.0
  %1110 = vmatpush.msra.mxu0 0.0
  %1111 = vmatpush.msra.mxu0 0.0
  %1112 = vmatpush.msra.mxu0 0.0
  %1113 = vmatpush.msra.mxu0 0.0
  %1114 = vmatpush.msra.mxu0 0.0
  %1115 = vmatpush.msra.mxu0 0.0
  %1116 = vmatpush.msra.mxu0 0.0
  %1117 = vmatpush.msra.mxu0 0.0
  %1118 = vmatpush.msra.mxu0 0.0
  %1119 = vmatpush.msra.mxu0 0.0
  %1120 = vmatpush.msra.mxu0 %v1103
  %1121 = vmatmul.f32.gmra.mxu0 %v1078
  %v1122 = vpop.f32.mrf.mxu0
  %v1123 = vadd.f32 0.0, %v1122
  %1124 = vmatmul.f32.gmra.mxu0 %v1081
  %v1125 = vpop.f32.mrf.mxu0
  %v1126 = vadd.f32 0.0, %v1125
  %1127 = vmatmul.f32.gmra.mxu0 %v1084
  %v1128 = vpop.f32.mrf.mxu0
  %v1129 = vadd.f32 0.0, %v1128
  %1130 = vmatmul.f32.gmra.mxu0 %v1087
  %v1131 = vpop.f32.mrf.mxu0
  %v1132 = vadd.f32 0.0, %v1131
  %1133 = vmatmul.f32.gmra.mxu0 %v1090
  %v1134 = vpop.f32.mrf.mxu0
  %v1135 = vadd.f32 0.0, %v1134
  %1136 = vmatmul.f32.gmra.mxu0 %v1093
  %v1137 = vpop.f32.mrf.mxu0
  %v1138 = vadd.f32 0.0, %v1137
  %1139 = vmatmul.f32.gmra.mxu0 %v1096
  %v1140 = vpop.f32.mrf.mxu0
  %v1141 = vadd.f32 0.0, %v1140
  %1142 = vmatmul.f32.gmra.mxu0 %v1099
  %v1143 = vpop.f32.mrf.mxu0
  %v1144 = vadd.f32 0.0, %v1143
  %1145 = vdwg.mxu0
  %v1147 = vsel %vm225, %v550, 0
  %v1150 = vsel %vm225, %v553, 0
  %v1153 = vsel %vm225, %v556, 0
  %v1156 = vsel %vm225, %v559, 0
  %v1159 = vsel %vm225, %v562, 0
  %v1162 = vsel %vm225, %v565, 0
  %v1165 = vsel %vm225, %v568, 0
  %v1168 = vsel %vm225, %v571, 0
  %v1171 = vsel %vm1101, %v573, 0
  %1173 = vmatpush.msra.mxu0 0.0
  %1174 = vmatpush.msra.mxu0 0.0
  %1175 = vmatpush.msra.mxu0 0.0
  %1176 = vmatpush.msra.mxu0 0.0
  %1177 = vmatpush.msra.mxu0 0.0
  %1178 = vmatpush.msra.mxu0 0.0
  %1179 = vmatpush.msra.mxu0 0.0
  %1180 = vmatpush.msra.mxu0 0.0
  %1181 = vmatpush.msra.mxu0 0.0
  %1182 = vmatpush.msra.mxu0 0.0
  %1183 = vmatpush.msra.mxu0 0.0
  %1184 = vmatpush.msra.mxu0 0.0
  %1185 = vmatpush.msra.mxu0 0.0
  %1186 = vmatpush.msra.mxu0 0.0
  %1187 = vmatpush.msra.mxu0 0.0
  %1188 = vmatpush.msra.mxu0 %v1171
  %1189 = vmatmul.f32.gmra.mxu0 %v1147
  %v1190 = vpop.f32.mrf.mxu0
  %v1191 = vadd.f32 %v1123, %v1190
  %1192 = vmatmul.f32.gmra.mxu0 %v1150
  %v1193 = vpop.f32.mrf.mxu0
  %v1194 = vadd.f32 %v1126, %v1193
  %1195 = vmatmul.f32.gmra.mxu0 %v1153
  %v1196 = vpop.f32.mrf.mxu0
  %v1197 = vadd.f32 %v1129, %v1196
  %1198 = vmatmul.f32.gmra.mxu0 %v1156
  %v1199 = vpop.f32.mrf.mxu0
  %v1200 = vadd.f32 %v1132, %v1199
  %1201 = vmatmul.f32.gmra.mxu0 %v1159
  %v1202 = vpop.f32.mrf.mxu0
  %v1203 = vadd.f32 %v1135, %v1202
  %1204 = vmatmul.f32.gmra.mxu0 %v1162
  %v1205 = vpop.f32.mrf.mxu0
  %v1206 = vadd.f32 %v1138, %v1205
  %1207 = vmatmul.f32.gmra.mxu0 %v1165
  %v1208 = vpop.f32.mrf.mxu0
  %v1209 = vadd.f32 %v1141, %v1208
  %1210 = vmatmul.f32.gmra.mxu0 %v1168
  %v1211 = vpop.f32.mrf.mxu0
  %v1212 = vadd.f32 %v1144, %v1211
  %1213 = vdwg.mxu0
  %s1214 = scalar_lea.vmem %s2, 32
  %v1215 = vld [vmem:[%s1214] sm:$0xff]
  %v1216 = vld [vmem:[%s1214 + $0x8] sm:$0xff]
  %s1217 = scalar_lea.vmem %s5, 2
  %v1218 = vld [vmem:[%s1217] sm:$0x1]
  %v1220 = vperm.slane %v1218, 0
  %1222 = vmatpush.msra.mxu0 0.0
  %1223 = vmatpush.msra.mxu0 0.0
  %1224 = vmatpush.msra.mxu0 0.0
  %1225 = vmatpush.msra.mxu0 0.0
  %1226 = vmatpush.msra.mxu0 0.0
  %1227 = vmatpush.msra.mxu0 0.0
  %1228 = vmatpush.msra.mxu0 0.0
  %1229 = vmatpush.msra.mxu0 0.0
  %1230 = vmatpush.msra.mxu0 0.0
  %1231 = vmatpush.msra.mxu0 0.0
  %1232 = vmatpush.msra.mxu0 0.0
  %1233 = vmatpush.msra.mxu0 0.0
  %1234 = vmatpush.msra.mxu0 0.0
  %1235 = vmatpush.msra.mxu0 0.0
  %1236 = vmatpush.msra.mxu0 %v1216
  %1237 = vmatpush.msra.mxu0 %v1215
  %1238 = vmatmul.f32.gmra.mxu0 %v59
  %v1239 = vpop.f32.mrf.mxu0
  %v1240 = vadd.f32 %v1220, %v1239
  %1241 = vmatmul.f32.gmra.mxu0 %v62
  %v1242 = vpop.f32.mrf.mxu0
  %v1243 = vadd.f32 %v1220, %v1242
  %1244 = vmatmul.f32.gmra.mxu0 %v65
  %v1245 = vpop.f32.mrf.mxu0
  %v1246 = vadd.f32 %v1220, %v1245
  %1247 = vmatmul.f32.gmra.mxu0 %v68
  %v1248 = vpop.f32.mrf.mxu0
  %v1249 = vadd.f32 %v1220, %v1248
  %1250 = vmatmul.f32.gmra.mxu0 %v71
  %v1251 = vpop.f32.mrf.mxu0
  %v1252 = vadd.f32 %v1220, %v1251
  %1253 = vmatmul.f32.gmra.mxu0 %v74
  %v1254 = vpop.f32.mrf.mxu0
  %v1255 = vadd.f32 %v1220, %v1254
  %1256 = vmatmul.f32.gmra.mxu0 %v77
  %v1257 = vpop.f32.mrf.mxu0
  %v1258 = vadd.f32 %v1220, %v1257
  %1259 = vmatmul.f32.gmra.mxu0 %v80
  %v1260 = vpop.f32.mrf.mxu0
  %v1261 = vadd.f32 %v1220, %v1260
  %1262 = vdwg.mxu0
  %v1263 = vmul.f32 %v1240, 0.5
  %v1264 = vmul.f32 %v1243, 0.5
  %v1265 = vmul.f32 %v1246, 0.5
  %v1266 = vmul.f32 %v1249, 0.5
  %v1267 = vmul.f32 %v1252, 0.5
  %v1268 = vmul.f32 %v1255, 0.5
  %v1269 = vmul.f32 %v1258, 0.5
  %v1270 = vmul.f32 %v1261, 0.5
  %s1271 = scalar_lea.vmem %s3, 32
  %v1272 = vld [vmem:[%s1271] sm:$0xff]
  %v1273 = vld [vmem:[%s1271 + $0x8] sm:$0xff]
  %s1274 = scalar_lea.vmem %s6, 2
  %v1275 = vld [vmem:[%s1274] sm:$0x1]
  %v1277 = vperm.slane %v1275, 0
  %1279 = vmatpush.msra.mxu0 0.0
  %1280 = vmatpush.msra.mxu0 0.0
  %1281 = vmatpush.msra.mxu0 0.0
  %1282 = vmatpush.msra.mxu0 0.0
  %1283 = vmatpush.msra.mxu0 0.0
  %1284 = vmatpush.msra.mxu0 0.0
  %1285 = vmatpush.msra.mxu0 0.0
  %1286 = vmatpush.msra.mxu0 0.0
  %1287 = vmatpush.msra.mxu0 0.0
  %1288 = vmatpush.msra.mxu0 0.0
  %1289 = vmatpush.msra.mxu0 0.0
  %1290 = vmatpush.msra.mxu0 0.0
  %1291 = vmatpush.msra.mxu0 0.0
  %1292 = vmatpush.msra.mxu0 0.0
  %1293 = vmatpush.msra.mxu0 %v1273
  %1294 = vmatpush.msra.mxu0 %v1272
  %1295 = vmatmul.f32.gmra.mxu0 %v59
  %v1296 = vpop.f32.mrf.mxu0
  %v1297 = vadd.f32 %v1277, %v1296
  %1298 = vmatmul.f32.gmra.mxu0 %v62
  %v1299 = vpop.f32.mrf.mxu0
  %v1300 = vadd.f32 %v1277, %v1299
  %1301 = vmatmul.f32.gmra.mxu0 %v65
  %v1302 = vpop.f32.mrf.mxu0
  %v1303 = vadd.f32 %v1277, %v1302
  %1304 = vmatmul.f32.gmra.mxu0 %v68
  %v1305 = vpop.f32.mrf.mxu0
  %v1306 = vadd.f32 %v1277, %v1305
  %1307 = vmatmul.f32.gmra.mxu0 %v71
  %v1308 = vpop.f32.mrf.mxu0
  %v1309 = vadd.f32 %v1277, %v1308
  %1310 = vmatmul.f32.gmra.mxu0 %v74
  %v1311 = vpop.f32.mrf.mxu0
  %v1312 = vadd.f32 %v1277, %v1311
  %1313 = vmatmul.f32.gmra.mxu0 %v77
  %v1314 = vpop.f32.mrf.mxu0
  %v1315 = vadd.f32 %v1277, %v1314
  %1316 = vmatmul.f32.gmra.mxu0 %v80
  %v1317 = vpop.f32.mrf.mxu0
  %v1318 = vadd.f32 %v1277, %v1317
  %1319 = vdwg.mxu0
  %s1320 = scalar_lea.vmem %s4, 32
  %v1321 = vld [vmem:[%s1320] sm:$0xff]
  %v1322 = vld [vmem:[%s1320 + $0x8] sm:$0xff]
  %s1323 = scalar_lea.vmem %s7, 2
  %v1324 = vld [vmem:[%s1323] sm:$0x1]
  %v1326 = vperm.slane %v1324, 0
  %1328 = vmatpush.msra.mxu0 0.0
  %1329 = vmatpush.msra.mxu0 0.0
  %1330 = vmatpush.msra.mxu0 0.0
  %1331 = vmatpush.msra.mxu0 0.0
  %1332 = vmatpush.msra.mxu0 0.0
  %1333 = vmatpush.msra.mxu0 0.0
  %1334 = vmatpush.msra.mxu0 0.0
  %1335 = vmatpush.msra.mxu0 0.0
  %1336 = vmatpush.msra.mxu0 0.0
  %1337 = vmatpush.msra.mxu0 0.0
  %1338 = vmatpush.msra.mxu0 0.0
  %1339 = vmatpush.msra.mxu0 0.0
  %1340 = vmatpush.msra.mxu0 0.0
  %1341 = vmatpush.msra.mxu0 0.0
  %1342 = vmatpush.msra.mxu0 %v1322
  %1343 = vmatpush.msra.mxu0 %v1321
  %1344 = vmatmul.f32.gmra.mxu0 %v59
  %v1345 = vpop.f32.mrf.mxu0
  %v1346 = vadd.f32 %v1326, %v1345
  %1347 = vmatmul.f32.gmra.mxu0 %v62
  %v1348 = vpop.f32.mrf.mxu0
  %v1349 = vadd.f32 %v1326, %v1348
  %1350 = vmatmul.f32.gmra.mxu0 %v65
  %v1351 = vpop.f32.mrf.mxu0
  %v1352 = vadd.f32 %v1326, %v1351
  %1353 = vmatmul.f32.gmra.mxu0 %v68
  %v1354 = vpop.f32.mrf.mxu0
  %v1355 = vadd.f32 %v1326, %v1354
  %1356 = vmatmul.f32.gmra.mxu0 %v71
  %v1357 = vpop.f32.mrf.mxu0
  %v1358 = vadd.f32 %v1326, %v1357
  %1359 = vmatmul.f32.gmra.mxu0 %v74
  %v1360 = vpop.f32.mrf.mxu0
  %v1361 = vadd.f32 %v1326, %v1360
  %1362 = vmatmul.f32.gmra.mxu0 %v77
  %v1363 = vpop.f32.mrf.mxu0
  %v1364 = vadd.f32 %v1326, %v1363
  %1365 = vmatmul.f32.gmra.mxu0 %v80
  %v1366 = vpop.f32.mrf.mxu0
  %v1367 = vadd.f32 %v1326, %v1366
  %1368 = vdwg.mxu0
  %v1370 = vsel %vm225, %v1263, 0
  %v1373 = vsel %vm225, %v1264, 0
  %v1376 = vsel %vm225, %v1265, 0
  %v1379 = vsel %vm225, %v1266, 0
  %v1382 = vsel %vm225, %v1267, 0
  %v1385 = vsel %vm225, %v1268, 0
  %v1388 = vsel %vm225, %v1269, 0
  %v1391 = vsel %vm225, %v1270, 0
  %v1394 = vsel %vm225, %v1297, 0
  %v1397 = vsel %vm225, %v1300, 0
  %v1400 = vsel %vm225, %v1303, 0
  %v1403 = vsel %vm225, %v1306, 0
  %v1406 = vsel %vm225, %v1309, 0
  %v1409 = vsel %vm225, %v1312, 0
  %v1412 = vsel %vm225, %v1315, 0
  %v1415 = vsel %vm225, %v1318, 0
  %1417 = vmatpush.xpose.msra.mxu0 0.0
  %1418 = vmatpush.xpose.msra.mxu0 0.0
  %1419 = vmatpush.xpose.msra.mxu0 0.0
  %1420 = vmatpush.xpose.msra.mxu0 0.0
  %1421 = vmatpush.xpose.msra.mxu0 0.0
  %1422 = vmatpush.xpose.msra.mxu0 0.0
  %1423 = vmatpush.xpose.msra.mxu0 0.0
  %1424 = vmatpush.xpose.msra.mxu0 0.0
  %1425 = vmatpush.xpose.msra.mxu0 %v1415
  %1426 = vmatpush.xpose.msra.mxu0 %v1412
  %1427 = vmatpush.xpose.msra.mxu0 %v1409
  %1428 = vmatpush.xpose.msra.mxu0 %v1406
  %1429 = vmatpush.xpose.msra.mxu0 %v1403
  %1430 = vmatpush.xpose.msra.mxu0 %v1400
  %1431 = vmatpush.xpose.msra.mxu0 %v1397
  %1432 = vmatpush.xpose.msra.mxu0 %v1394
  %1433 = vmatmul.f32.gmra.mxu0 %v1370
  %v1434 = vpop.f32.mrf.mxu0
  %v1435 = vadd.f32 %v43, %v1434
  %1436 = vmatmul.f32.gmra.mxu0 %v1373
  %v1437 = vpop.f32.mrf.mxu0
  %v1438 = vadd.f32 %v44, %v1437
  %1439 = vmatmul.f32.gmra.mxu0 %v1376
  %v1440 = vpop.f32.mrf.mxu0
  %v1441 = vadd.f32 %v45, %v1440
  %1442 = vmatmul.f32.gmra.mxu0 %v1379
  %v1443 = vpop.f32.mrf.mxu0
  %v1444 = vadd.f32 %v46, %v1443
  %1445 = vmatmul.f32.gmra.mxu0 %v1382
  %v1446 = vpop.f32.mrf.mxu0
  %v1447 = vadd.f32 %v47, %v1446
  %1448 = vmatmul.f32.gmra.mxu0 %v1385
  %v1449 = vpop.f32.mrf.mxu0
  %v1450 = vadd.f32 %v48, %v1449
  %1451 = vmatmul.f32.gmra.mxu0 %v1388
  %v1452 = vpop.f32.mrf.mxu0
  %v1453 = vadd.f32 %v49, %v1452
  %1454 = vmatmul.f32.gmra.mxu0 %v1391
  %v1455 = vpop.f32.mrf.mxu0
  %v1456 = vadd.f32 %v50, %v1455
  %1457 = vdwg.mxu0
  %v1458 = vsel %vm315, %v1435, -inf
  %1459 = vmax.xlane.f32.xlu0 %v1458
  %v1460 = vpop.xlane.xlu0 %1459
  %v1461 = vsel %vm315, %v1438, -inf
  %1462 = vmax.xlane.f32.xlu0 %v1461
  %v1463 = vpop.xlane.xlu0 %1462
  %v1464 = vsel %vm315, %v1441, -inf
  %1465 = vmax.xlane.f32.xlu0 %v1464
  %v1466 = vpop.xlane.xlu0 %1465
  %v1467 = vsel %vm315, %v1444, -inf
  %1468 = vmax.xlane.f32.xlu0 %v1467
  %v1469 = vpop.xlane.xlu0 %1468
  %v1470 = vsel %vm315, %v1447, -inf
  %1471 = vmax.xlane.f32.xlu0 %v1470
  %v1472 = vpop.xlane.xlu0 %1471
  %v1473 = vsel %vm315, %v1450, -inf
  %1474 = vmax.xlane.f32.xlu0 %v1473
  %v1475 = vpop.xlane.xlu0 %1474
  %v1476 = vsel %vm315, %v1453, -inf
  %1477 = vmax.xlane.f32.xlu0 %v1476
  %v1478 = vpop.xlane.xlu0 %1477
  %v1479 = vsel %vm315, %v1456, -inf
  %1480 = vmax.xlane.f32.xlu0 %v1479
  %v1481 = vpop.xlane.xlu0 %1480
  %v1482 = vsub.f32 %v1435, %v1460
  %v1483 = vsub.f32 %v1438, %v1463
  %v1484 = vsub.f32 %v1441, %v1466
  %v1485 = vsub.f32 %v1444, %v1469
  %v1486 = vsub.f32 %v1447, %v1472
  %v1487 = vsub.f32 %v1450, %v1475
  %v1488 = vsub.f32 %v1453, %v1478
  %v1489 = vsub.f32 %v1456, %v1481
  %v1490 = vmul.f32 %v1482, 1.442695
  %v1491 = vpow.pop %v1490
  %v1492 = vmul.f32 %v1483, 1.442695
  %v1493 = vpow.pop %v1492
  %v1494 = vmul.f32 %v1484, 1.442695
  %v1495 = vpow.pop %v1494
  %v1496 = vmul.f32 %v1485, 1.442695
  %v1497 = vpow.pop %v1496
  %v1498 = vmul.f32 %v1486, 1.442695
  %v1499 = vpow.pop %v1498
  %v1500 = vmul.f32 %v1487, 1.442695
  %v1501 = vpow.pop %v1500
  %v1502 = vmul.f32 %v1488, 1.442695
  %v1503 = vpow.pop %v1502
  %v1504 = vmul.f32 %v1489, 1.442695
  %v1505 = vpow.pop %v1504
  %v1506 = vsel %vm315, %v1491, 0.0
  %1507 = vadd.xlane.f32.xlu0 %v1506
  %v1508 = vpop.xlane.xlu0 %1507
  %v1509 = vsel %vm315, %v1493, 0.0
  %1510 = vadd.xlane.f32.xlu0 %v1509
  %v1511 = vpop.xlane.xlu0 %1510
  %v1512 = vsel %vm315, %v1495, 0.0
  %1513 = vadd.xlane.f32.xlu0 %v1512
  %v1514 = vpop.xlane.xlu0 %1513
  %v1515 = vsel %vm315, %v1497, 0.0
  %1516 = vadd.xlane.f32.xlu0 %v1515
  %v1517 = vpop.xlane.xlu0 %1516
  %v1518 = vsel %vm315, %v1499, 0.0
  %1519 = vadd.xlane.f32.xlu0 %v1518
  %v1520 = vpop.xlane.xlu0 %1519
  %v1521 = vsel %vm315, %v1501, 0.0
  %1522 = vadd.xlane.f32.xlu0 %v1521
  %v1523 = vpop.xlane.xlu0 %1522
  %v1524 = vsel %vm315, %v1503, 0.0
  %1525 = vadd.xlane.f32.xlu0 %v1524
  %v1526 = vpop.xlane.xlu0 %1525
  %v1527 = vsel %vm315, %v1505, 0.0
  %1528 = vadd.xlane.f32.xlu0 %v1527
  %v1529 = vpop.xlane.xlu0 %1528
  %v1530 = vrcp.pop %v1508
  %v1531 = vmul.f32 %v1508, %v1530
  %v1532 = vsub.f32 1.0, %v1531
  %v1533 = vmul.f32 %v1530, %v1532
  %v1534 = vadd.f32 %v1530, %v1533
  %vm1535 = vweird.f32 %v1508
  %vm1536 = vweird.f32 %v1530
  %vm1537 = vmor %vm1535, %vm1536
  %v1538 = vsel %vm1537, %v1530, %v1534
  %v1539 = vand.u32 2147483647, %v1508
  %vm1540 = vcmp.eq.f32.partialorder %v1539, 8.507059e+37
  %v1541 = vand.u32 %v1508, 2147483648
  %v1542 = vor.u32 1.1754944e-38, %v1541
  %v1543 = vsel %vm1540, %v1542, %v1538
  %v1544 = vmul.f32 %v1491, %v1543
  %v1545 = vrcp.pop %v1511
  %v1546 = vmul.f32 %v1511, %v1545
  %v1547 = vsub.f32 1.0, %v1546
  %v1548 = vmul.f32 %v1545, %v1547
  %v1549 = vadd.f32 %v1545, %v1548
  %vm1550 = vweird.f32 %v1511
  %vm1551 = vweird.f32 %v1545
  %vm1552 = vmor %vm1550, %vm1551
  %v1553 = vsel %vm1552, %v1545, %v1549
  %v1554 = vand.u32 2147483647, %v1511
  %vm1555 = vcmp.eq.f32.partialorder %v1554, 8.507059e+37
  %v1556 = vand.u32 %v1511, 2147483648
  %v1557 = vor.u32 1.1754944e-38, %v1556
  %v1558 = vsel %vm1555, %v1557, %v1553
  %v1559 = vmul.f32 %v1493, %v1558
  %v1560 = vrcp.pop %v1514
  %v1561 = vmul.f32 %v1514, %v1560
  %v1562 = vsub.f32 1.0, %v1561
  %v1563 = vmul.f32 %v1560, %v1562
  %v1564 = vadd.f32 %v1560, %v1563
  %vm1565 = vweird.f32 %v1514
  %vm1566 = vweird.f32 %v1560
  %vm1567 = vmor %vm1565, %vm1566
  %v1568 = vsel %vm1567, %v1560, %v1564
  %v1569 = vand.u32 2147483647, %v1514
  %vm1570 = vcmp.eq.f32.partialorder %v1569, 8.507059e+37
  %v1571 = vand.u32 %v1514, 2147483648
  %v1572 = vor.u32 1.1754944e-38, %v1571
  %v1573 = vsel %vm1570, %v1572, %v1568
  %v1574 = vmul.f32 %v1495, %v1573
  %v1575 = vrcp.pop %v1517
  %v1576 = vmul.f32 %v1517, %v1575
  %v1577 = vsub.f32 1.0, %v1576
  %v1578 = vmul.f32 %v1575, %v1577
  %v1579 = vadd.f32 %v1575, %v1578
  %vm1580 = vweird.f32 %v1517
  %vm1581 = vweird.f32 %v1575
  %vm1582 = vmor %vm1580, %vm1581
  %v1583 = vsel %vm1582, %v1575, %v1579
  %v1584 = vand.u32 2147483647, %v1517
  %vm1585 = vcmp.eq.f32.partialorder %v1584, 8.507059e+37
  %v1586 = vand.u32 %v1517, 2147483648
  %v1587 = vor.u32 1.1754944e-38, %v1586
  %v1588 = vsel %vm1585, %v1587, %v1583
  %v1589 = vmul.f32 %v1497, %v1588
  %v1590 = vrcp.pop %v1520
  %v1591 = vmul.f32 %v1520, %v1590
  %v1592 = vsub.f32 1.0, %v1591
  %v1593 = vmul.f32 %v1590, %v1592
  %v1594 = vadd.f32 %v1590, %v1593
  %vm1595 = vweird.f32 %v1520
  %vm1596 = vweird.f32 %v1590
  %vm1597 = vmor %vm1595, %vm1596
  %v1598 = vsel %vm1597, %v1590, %v1594
  %v1599 = vand.u32 2147483647, %v1520
  %vm1600 = vcmp.eq.f32.partialorder %v1599, 8.507059e+37
  %v1601 = vand.u32 %v1520, 2147483648
  %v1602 = vor.u32 1.1754944e-38, %v1601
  %v1603 = vsel %vm1600, %v1602, %v1598
  %v1604 = vmul.f32 %v1499, %v1603
  %v1605 = vrcp.pop %v1523
  %v1606 = vmul.f32 %v1523, %v1605
  %v1607 = vsub.f32 1.0, %v1606
  %v1608 = vmul.f32 %v1605, %v1607
  %v1609 = vadd.f32 %v1605, %v1608
  %vm1610 = vweird.f32 %v1523
  %vm1611 = vweird.f32 %v1605
  %vm1612 = vmor %vm1610, %vm1611
  %v1613 = vsel %vm1612, %v1605, %v1609
  %v1614 = vand.u32 2147483647, %v1523
  %vm1615 = vcmp.eq.f32.partialorder %v1614, 8.507059e+37
  %v1616 = vand.u32 %v1523, 2147483648
  %v1617 = vor.u32 1.1754944e-38, %v1616
  %v1618 = vsel %vm1615, %v1617, %v1613
  %v1619 = vmul.f32 %v1501, %v1618
  %v1620 = vrcp.pop %v1526
  %v1621 = vmul.f32 %v1526, %v1620
  %v1622 = vsub.f32 1.0, %v1621
  %v1623 = vmul.f32 %v1620, %v1622
  %v1624 = vadd.f32 %v1620, %v1623
  %vm1625 = vweird.f32 %v1526
  %vm1626 = vweird.f32 %v1620
  %vm1627 = vmor %vm1625, %vm1626
  %v1628 = vsel %vm1627, %v1620, %v1624
  %v1629 = vand.u32 2147483647, %v1526
  %vm1630 = vcmp.eq.f32.partialorder %v1629, 8.507059e+37
  %v1631 = vand.u32 %v1526, 2147483648
  %v1632 = vor.u32 1.1754944e-38, %v1631
  %v1633 = vsel %vm1630, %v1632, %v1628
  %v1634 = vmul.f32 %v1503, %v1633
  %v1635 = vrcp.pop %v1529
  %v1636 = vmul.f32 %v1529, %v1635
  %v1637 = vsub.f32 1.0, %v1636
  %v1638 = vmul.f32 %v1635, %v1637
  %v1639 = vadd.f32 %v1635, %v1638
  %vm1640 = vweird.f32 %v1529
  %vm1641 = vweird.f32 %v1635
  %vm1642 = vmor %vm1640, %vm1641
  %v1643 = vsel %vm1642, %v1635, %v1639
  %v1644 = vand.u32 2147483647, %v1529
  %vm1645 = vcmp.eq.f32.partialorder %v1644, 8.507059e+37
  %v1646 = vand.u32 %v1529, 2147483648
  %v1647 = vor.u32 1.1754944e-38, %v1646
  %v1648 = vsel %vm1645, %v1647, %v1643
  %v1649 = vmul.f32 %v1505, %v1648
  %v1651 = vsel %vm315, %v1544, 0
  %v1654 = vsel %vm315, %v1559, 0
  %v1657 = vsel %vm315, %v1574, 0
  %v1660 = vsel %vm315, %v1589, 0
  %v1663 = vsel %vm315, %v1604, 0
  %v1666 = vsel %vm315, %v1619, 0
  %v1669 = vsel %vm315, %v1634, 0
  %v1672 = vsel %vm315, %v1649, 0
  %1674 = vmatpush.msra.mxu0 0.0
  %1675 = vmatpush.msra.mxu0 0.0
  %1676 = vmatpush.msra.mxu0 0.0
  %1677 = vmatpush.msra.mxu0 0.0
  %1678 = vmatpush.msra.mxu0 0.0
  %1679 = vmatpush.msra.mxu0 0.0
  %1680 = vmatpush.msra.mxu0 0.0
  %1681 = vmatpush.msra.mxu0 0.0
  %1682 = vmatpush.msra.mxu0 %v1367
  %1683 = vmatpush.msra.mxu0 %v1364
  %1684 = vmatpush.msra.mxu0 %v1361
  %1685 = vmatpush.msra.mxu0 %v1358
  %1686 = vmatpush.msra.mxu0 %v1355
  %1687 = vmatpush.msra.mxu0 %v1352
  %1688 = vmatpush.msra.mxu0 %v1349
  %1689 = vmatpush.msra.mxu0 %v1346
  %1690 = vmatmul.f32.gmra.mxu0 %v1651
  %v1691 = vpop.f32.mrf.mxu0
  %v1692 = vadd.f32 0.0, %v1691
  %1693 = vmatmul.f32.gmra.mxu0 %v1654
  %v1694 = vpop.f32.mrf.mxu0
  %v1695 = vadd.f32 0.0, %v1694
  %1696 = vmatmul.f32.gmra.mxu0 %v1657
  %v1697 = vpop.f32.mrf.mxu0
  %v1698 = vadd.f32 0.0, %v1697
  %1699 = vmatmul.f32.gmra.mxu0 %v1660
  %v1700 = vpop.f32.mrf.mxu0
  %v1701 = vadd.f32 0.0, %v1700
  %1702 = vmatmul.f32.gmra.mxu0 %v1663
  %v1703 = vpop.f32.mrf.mxu0
  %v1704 = vadd.f32 0.0, %v1703
  %1705 = vmatmul.f32.gmra.mxu0 %v1666
  %v1706 = vpop.f32.mrf.mxu0
  %v1707 = vadd.f32 0.0, %v1706
  %1708 = vmatmul.f32.gmra.mxu0 %v1669
  %v1709 = vpop.f32.mrf.mxu0
  %v1710 = vadd.f32 0.0, %v1709
  %1711 = vmatmul.f32.gmra.mxu0 %v1672
  %v1712 = vpop.f32.mrf.mxu0
  %v1713 = vadd.f32 0.0, %v1712
  %1714 = vdwg.mxu0
  %s1715 = scalar_lea.vmem %s8, 8
  %v1716 = vld [vmem:[%s1715] sm:$0xf]
  %v1718 = vsel %vm225, %v1692, 0
  %v1721 = vsel %vm225, %v1695, 0
  %v1724 = vsel %vm225, %v1698, 0
  %v1727 = vsel %vm225, %v1701, 0
  %v1730 = vsel %vm225, %v1704, 0
  %v1733 = vsel %vm225, %v1707, 0
  %v1736 = vsel %vm225, %v1710, 0
  %v1739 = vsel %vm225, %v1713, 0
  %v1742 = vsel %vm1101, %v1716, 0
  %1744 = vmatpush.msra.mxu0 0.0
  %1745 = vmatpush.msra.mxu0 0.0
  %1746 = vmatpush.msra.mxu0 0.0
  %1747 = vmatpush.msra.mxu0 0.0
  %1748 = vmatpush.msra.mxu0 0.0
  %1749 = vmatpush.msra.mxu0 0.0
  %1750 = vmatpush.msra.mxu0 0.0
  %1751 = vmatpush.msra.mxu0 0.0
  %1752 = vmatpush.msra.mxu0 0.0
  %1753 = vmatpush.msra.mxu0 0.0
  %1754 = vmatpush.msra.mxu0 0.0
  %1755 = vmatpush.msra.mxu0 0.0
  %1756 = vmatpush.msra.mxu0 0.0
  %1757 = vmatpush.msra.mxu0 0.0
  %1758 = vmatpush.msra.mxu0 0.0
  %1759 = vmatpush.msra.mxu0 %v1742
  %1760 = vmatmul.f32.gmra.mxu0 %v1718
  %v1761 = vpop.f32.mrf.mxu0
  %v1762 = vadd.f32 0.0, %v1761
  %1763 = vmatmul.f32.gmra.mxu0 %v1721
  %v1764 = vpop.f32.mrf.mxu0
  %v1765 = vadd.f32 0.0, %v1764
  %1766 = vmatmul.f32.gmra.mxu0 %v1724
  %v1767 = vpop.f32.mrf.mxu0
  %v1768 = vadd.f32 0.0, %v1767
  %1769 = vmatmul.f32.gmra.mxu0 %v1727
  %v1770 = vpop.f32.mrf.mxu0
  %v1771 = vadd.f32 0.0, %v1770
  %1772 = vmatmul.f32.gmra.mxu0 %v1730
  %v1773 = vpop.f32.mrf.mxu0
  %v1774 = vadd.f32 0.0, %v1773
  %1775 = vmatmul.f32.gmra.mxu0 %v1733
  %v1776 = vpop.f32.mrf.mxu0
  %v1777 = vadd.f32 0.0, %v1776
  %1778 = vmatmul.f32.gmra.mxu0 %v1736
  %v1779 = vpop.f32.mrf.mxu0
  %v1780 = vadd.f32 0.0, %v1779
  %1781 = vmatmul.f32.gmra.mxu0 %v1739
  %v1782 = vpop.f32.mrf.mxu0
  %v1783 = vadd.f32 0.0, %v1782
  %1784 = vdwg.mxu0
  %v1785 = vadd.f32 %v1191, %v1762
  %v1786 = vadd.f32 %v1194, %v1765
  %v1787 = vadd.f32 %v1197, %v1768
  %v1788 = vadd.f32 %v1200, %v1771
  %v1789 = vadd.f32 %v1203, %v1774
  %v1790 = vadd.f32 %v1206, %v1777
  %v1791 = vadd.f32 %v1209, %v1780
  %v1792 = vadd.f32 %v1212, %v1783
  %s1793 = scalar_lea.vmem %s2, 48
  %v1794 = vld [vmem:[%s1793] sm:$0xff]
  %v1795 = vld [vmem:[%s1793 + $0x8] sm:$0xff]
  %s1796 = scalar_lea.vmem %s5, 3
  %v1797 = vld [vmem:[%s1796] sm:$0x1]
  %v1799 = vperm.slane %v1797, 0
  %1801 = vmatpush.msra.mxu0 0.0
  %1802 = vmatpush.msra.mxu0 0.0
  %1803 = vmatpush.msra.mxu0 0.0
  %1804 = vmatpush.msra.mxu0 0.0
  %1805 = vmatpush.msra.mxu0 0.0
  %1806 = vmatpush.msra.mxu0 0.0
  %1807 = vmatpush.msra.mxu0 0.0
  %1808 = vmatpush.msra.mxu0 0.0
  %1809 = vmatpush.msra.mxu0 0.0
  %1810 = vmatpush.msra.mxu0 0.0
  %1811 = vmatpush.msra.mxu0 0.0
  %1812 = vmatpush.msra.mxu0 0.0
  %1813 = vmatpush.msra.mxu0 0.0
  %1814 = vmatpush.msra.mxu0 0.0
  %1815 = vmatpush.msra.mxu0 %v1795
  %1816 = vmatpush.msra.mxu0 %v1794
  %1817 = vmatmul.f32.gmra.mxu0 %v59
  %v1818 = vpop.f32.mrf.mxu0
  %v1819 = vadd.f32 %v1799, %v1818
  %1820 = vmatmul.f32.gmra.mxu0 %v62
  %v1821 = vpop.f32.mrf.mxu0
  %v1822 = vadd.f32 %v1799, %v1821
  %1823 = vmatmul.f32.gmra.mxu0 %v65
  %v1824 = vpop.f32.mrf.mxu0
  %v1825 = vadd.f32 %v1799, %v1824
  %1826 = vmatmul.f32.gmra.mxu0 %v68
  %v1827 = vpop.f32.mrf.mxu0
  %v1828 = vadd.f32 %v1799, %v1827
  %1829 = vmatmul.f32.gmra.mxu0 %v71
  %v1830 = vpop.f32.mrf.mxu0
  %v1831 = vadd.f32 %v1799, %v1830
  %1832 = vmatmul.f32.gmra.mxu0 %v74
  %v1833 = vpop.f32.mrf.mxu0
  %v1834 = vadd.f32 %v1799, %v1833
  %1835 = vmatmul.f32.gmra.mxu0 %v77
  %v1836 = vpop.f32.mrf.mxu0
  %v1837 = vadd.f32 %v1799, %v1836
  %1838 = vmatmul.f32.gmra.mxu0 %v80
  %v1839 = vpop.f32.mrf.mxu0
  %v1840 = vadd.f32 %v1799, %v1839
  %1841 = vdwg.mxu0
  %v1842 = vmul.f32 %v1819, 0.5
  %v1843 = vmul.f32 %v1822, 0.5
  %v1844 = vmul.f32 %v1825, 0.5
  %v1845 = vmul.f32 %v1828, 0.5
  %v1846 = vmul.f32 %v1831, 0.5
  %v1847 = vmul.f32 %v1834, 0.5
  %v1848 = vmul.f32 %v1837, 0.5
  %v1849 = vmul.f32 %v1840, 0.5
  %s1850 = scalar_lea.vmem %s3, 48
  %v1851 = vld [vmem:[%s1850] sm:$0xff]
  %v1852 = vld [vmem:[%s1850 + $0x8] sm:$0xff]
  %s1853 = scalar_lea.vmem %s6, 3
  %v1854 = vld [vmem:[%s1853] sm:$0x1]
  %v1856 = vperm.slane %v1854, 0
  %1858 = vmatpush.msra.mxu0 0.0
  %1859 = vmatpush.msra.mxu0 0.0
  %1860 = vmatpush.msra.mxu0 0.0
  %1861 = vmatpush.msra.mxu0 0.0
  %1862 = vmatpush.msra.mxu0 0.0
  %1863 = vmatpush.msra.mxu0 0.0
  %1864 = vmatpush.msra.mxu0 0.0
  %1865 = vmatpush.msra.mxu0 0.0
  %1866 = vmatpush.msra.mxu0 0.0
  %1867 = vmatpush.msra.mxu0 0.0
  %1868 = vmatpush.msra.mxu0 0.0
  %1869 = vmatpush.msra.mxu0 0.0
  %1870 = vmatpush.msra.mxu0 0.0
  %1871 = vmatpush.msra.mxu0 0.0
  %1872 = vmatpush.msra.mxu0 %v1852
  %1873 = vmatpush.msra.mxu0 %v1851
  %1874 = vmatmul.f32.gmra.mxu0 %v59
  %v1875 = vpop.f32.mrf.mxu0
  %v1876 = vadd.f32 %v1856, %v1875
  %1877 = vmatmul.f32.gmra.mxu0 %v62
  %v1878 = vpop.f32.mrf.mxu0
  %v1879 = vadd.f32 %v1856, %v1878
  %1880 = vmatmul.f32.gmra.mxu0 %v65
  %v1881 = vpop.f32.mrf.mxu0
  %v1882 = vadd.f32 %v1856, %v1881
  %1883 = vmatmul.f32.gmra.mxu0 %v68
  %v1884 = vpop.f32.mrf.mxu0
  %v1885 = vadd.f32 %v1856, %v1884
  %1886 = vmatmul.f32.gmra.mxu0 %v71
  %v1887 = vpop.f32.mrf.mxu0
  %v1888 = vadd.f32 %v1856, %v1887
  %1889 = vmatmul.f32.gmra.mxu0 %v74
  %v1890 = vpop.f32.mrf.mxu0
  %v1891 = vadd.f32 %v1856, %v1890
  %1892 = vmatmul.f32.gmra.mxu0 %v77
  %v1893 = vpop.f32.mrf.mxu0
  %v1894 = vadd.f32 %v1856, %v1893
  %1895 = vmatmul.f32.gmra.mxu0 %v80
  %v1896 = vpop.f32.mrf.mxu0
  %v1897 = vadd.f32 %v1856, %v1896
  %1898 = vdwg.mxu0
  %s1899 = scalar_lea.vmem %s4, 48
  %v1900 = vld [vmem:[%s1899] sm:$0xff]
  %v1901 = vld [vmem:[%s1899 + $0x8] sm:$0xff]
  %s1902 = scalar_lea.vmem %s7, 3
  %v1903 = vld [vmem:[%s1902] sm:$0x1]
  %v1905 = vperm.slane %v1903, 0
  %1907 = vmatpush.msra.mxu0 0.0
  %1908 = vmatpush.msra.mxu0 0.0
  %1909 = vmatpush.msra.mxu0 0.0
  %1910 = vmatpush.msra.mxu0 0.0
  %1911 = vmatpush.msra.mxu0 0.0
  %1912 = vmatpush.msra.mxu0 0.0
  %1913 = vmatpush.msra.mxu0 0.0
  %1914 = vmatpush.msra.mxu0 0.0
  %1915 = vmatpush.msra.mxu0 0.0
  %1916 = vmatpush.msra.mxu0 0.0
  %1917 = vmatpush.msra.mxu0 0.0
  %1918 = vmatpush.msra.mxu0 0.0
  %1919 = vmatpush.msra.mxu0 0.0
  %1920 = vmatpush.msra.mxu0 0.0
  %1921 = vmatpush.msra.mxu0 %v1901
  %1922 = vmatpush.msra.mxu0 %v1900
  %1923 = vmatmul.f32.gmra.mxu0 %v59
  %v1924 = vpop.f32.mrf.mxu0
  %v1925 = vadd.f32 %v1905, %v1924
  %1926 = vmatmul.f32.gmra.mxu0 %v62
  %v1927 = vpop.f32.mrf.mxu0
  %v1928 = vadd.f32 %v1905, %v1927
  %1929 = vmatmul.f32.gmra.mxu0 %v65
  %v1930 = vpop.f32.mrf.mxu0
  %v1931 = vadd.f32 %v1905, %v1930
  %1932 = vmatmul.f32.gmra.mxu0 %v68
  %v1933 = vpop.f32.mrf.mxu0
  %v1934 = vadd.f32 %v1905, %v1933
  %1935 = vmatmul.f32.gmra.mxu0 %v71
  %v1936 = vpop.f32.mrf.mxu0
  %v1937 = vadd.f32 %v1905, %v1936
  %1938 = vmatmul.f32.gmra.mxu0 %v74
  %v1939 = vpop.f32.mrf.mxu0
  %v1940 = vadd.f32 %v1905, %v1939
  %1941 = vmatmul.f32.gmra.mxu0 %v77
  %v1942 = vpop.f32.mrf.mxu0
  %v1943 = vadd.f32 %v1905, %v1942
  %1944 = vmatmul.f32.gmra.mxu0 %v80
  %v1945 = vpop.f32.mrf.mxu0
  %v1946 = vadd.f32 %v1905, %v1945
  %1947 = vdwg.mxu0
  %v1949 = vsel %vm225, %v1842, 0
  %v1952 = vsel %vm225, %v1843, 0
  %v1955 = vsel %vm225, %v1844, 0
  %v1958 = vsel %vm225, %v1845, 0
  %v1961 = vsel %vm225, %v1846, 0
  %v1964 = vsel %vm225, %v1847, 0
  %v1967 = vsel %vm225, %v1848, 0
  %v1970 = vsel %vm225, %v1849, 0
  %v1973 = vsel %vm225, %v1876, 0
  %v1976 = vsel %vm225, %v1879, 0
  %v1979 = vsel %vm225, %v1882, 0
  %v1982 = vsel %vm225, %v1885, 0
  %v1985 = vsel %vm225, %v1888, 0
  %v1988 = vsel %vm225, %v1891, 0
  %v1991 = vsel %vm225, %v1894, 0
  %v1994 = vsel %vm225, %v1897, 0
  %1996 = vmatpush.xpose.msra.mxu0 0.0
  %1997 = vmatpush.xpose.msra.mxu0 0.0
  %1998 = vmatpush.xpose.msra.mxu0 0.0
  %1999 = vmatpush.xpose.msra.mxu0 0.0
  %2000 = vmatpush.xpose.msra.mxu0 0.0
  %2001 = vmatpush.xpose.msra.mxu0 0.0
  %2002 = vmatpush.xpose.msra.mxu0 0.0
  %2003 = vmatpush.xpose.msra.mxu0 0.0
  %2004 = vmatpush.xpose.msra.mxu0 %v1994
  %2005 = vmatpush.xpose.msra.mxu0 %v1991
  %2006 = vmatpush.xpose.msra.mxu0 %v1988
  %2007 = vmatpush.xpose.msra.mxu0 %v1985
  %2008 = vmatpush.xpose.msra.mxu0 %v1982
  %2009 = vmatpush.xpose.msra.mxu0 %v1979
  %2010 = vmatpush.xpose.msra.mxu0 %v1976
  %2011 = vmatpush.xpose.msra.mxu0 %v1973
  %2012 = vmatmul.f32.gmra.mxu0 %v1949
  %v2013 = vpop.f32.mrf.mxu0
  %v2014 = vadd.f32 %v43, %v2013
  %2015 = vmatmul.f32.gmra.mxu0 %v1952
  %v2016 = vpop.f32.mrf.mxu0
  %v2017 = vadd.f32 %v44, %v2016
  %2018 = vmatmul.f32.gmra.mxu0 %v1955
  %v2019 = vpop.f32.mrf.mxu0
  %v2020 = vadd.f32 %v45, %v2019
  %2021 = vmatmul.f32.gmra.mxu0 %v1958
  %v2022 = vpop.f32.mrf.mxu0
  %v2023 = vadd.f32 %v46, %v2022
  %2024 = vmatmul.f32.gmra.mxu0 %v1961
  %v2025 = vpop.f32.mrf.mxu0
  %v2026 = vadd.f32 %v47, %v2025
  %2027 = vmatmul.f32.gmra.mxu0 %v1964
  %v2028 = vpop.f32.mrf.mxu0
  %v2029 = vadd.f32 %v48, %v2028
  %2030 = vmatmul.f32.gmra.mxu0 %v1967
  %v2031 = vpop.f32.mrf.mxu0
  %v2032 = vadd.f32 %v49, %v2031
  %2033 = vmatmul.f32.gmra.mxu0 %v1970
  %v2034 = vpop.f32.mrf.mxu0
  %v2035 = vadd.f32 %v50, %v2034
  %2036 = vdwg.mxu0
  %v2037 = vsel %vm315, %v2014, -inf
  %2038 = vmax.xlane.f32.xlu0 %v2037
  %v2039 = vpop.xlane.xlu0 %2038
  %v2040 = vsel %vm315, %v2017, -inf
  %2041 = vmax.xlane.f32.xlu0 %v2040
  %v2042 = vpop.xlane.xlu0 %2041
  %v2043 = vsel %vm315, %v2020, -inf
  %2044 = vmax.xlane.f32.xlu0 %v2043
  %v2045 = vpop.xlane.xlu0 %2044
  %v2046 = vsel %vm315, %v2023, -inf
  %2047 = vmax.xlane.f32.xlu0 %v2046
  %v2048 = vpop.xlane.xlu0 %2047
  %v2049 = vsel %vm315, %v2026, -inf
  %2050 = vmax.xlane.f32.xlu0 %v2049
  %v2051 = vpop.xlane.xlu0 %2050
  %v2052 = vsel %vm315, %v2029, -inf
  %2053 = vmax.xlane.f32.xlu0 %v2052
  %v2054 = vpop.xlane.xlu0 %2053
  %v2055 = vsel %vm315, %v2032, -inf
  %2056 = vmax.xlane.f32.xlu0 %v2055
  %v2057 = vpop.xlane.xlu0 %2056
  %v2058 = vsel %vm315, %v2035, -inf
  %2059 = vmax.xlane.f32.xlu0 %v2058
  %v2060 = vpop.xlane.xlu0 %2059
  %v2061 = vsub.f32 %v2014, %v2039
  %v2062 = vsub.f32 %v2017, %v2042
  %v2063 = vsub.f32 %v2020, %v2045
  %v2064 = vsub.f32 %v2023, %v2048
  %v2065 = vsub.f32 %v2026, %v2051
  %v2066 = vsub.f32 %v2029, %v2054
  %v2067 = vsub.f32 %v2032, %v2057
  %v2068 = vsub.f32 %v2035, %v2060
  %v2069 = vmul.f32 %v2061, 1.442695
  %v2070 = vpow.pop %v2069
  %v2071 = vmul.f32 %v2062, 1.442695
  %v2072 = vpow.pop %v2071
  %v2073 = vmul.f32 %v2063, 1.442695
  %v2074 = vpow.pop %v2073
  %v2075 = vmul.f32 %v2064, 1.442695
  %v2076 = vpow.pop %v2075
  %v2077 = vmul.f32 %v2065, 1.442695
  %v2078 = vpow.pop %v2077
  %v2079 = vmul.f32 %v2066, 1.442695
  %v2080 = vpow.pop %v2079
  %v2081 = vmul.f32 %v2067, 1.442695
  %v2082 = vpow.pop %v2081
  %v2083 = vmul.f32 %v2068, 1.442695
  %v2084 = vpow.pop %v2083
  %v2085 = vsel %vm315, %v2070, 0.0
  %2086 = vadd.xlane.f32.xlu0 %v2085
  %v2087 = vpop.xlane.xlu0 %2086
  %v2088 = vsel %vm315, %v2072, 0.0
  %2089 = vadd.xlane.f32.xlu0 %v2088
  %v2090 = vpop.xlane.xlu0 %2089
  %v2091 = vsel %vm315, %v2074, 0.0
  %2092 = vadd.xlane.f32.xlu0 %v2091
  %v2093 = vpop.xlane.xlu0 %2092
  %v2094 = vsel %vm315, %v2076, 0.0
  %2095 = vadd.xlane.f32.xlu0 %v2094
  %v2096 = vpop.xlane.xlu0 %2095
  %v2097 = vsel %vm315, %v2078, 0.0
  %2098 = vadd.xlane.f32.xlu0 %v2097
  %v2099 = vpop.xlane.xlu0 %2098
  %v2100 = vsel %vm315, %v2080, 0.0
  %2101 = vadd.xlane.f32.xlu0 %v2100
  %v2102 = vpop.xlane.xlu0 %2101
  %v2103 = vsel %vm315, %v2082, 0.0
  %2104 = vadd.xlane.f32.xlu0 %v2103
  %v2105 = vpop.xlane.xlu0 %2104
  %v2106 = vsel %vm315, %v2084, 0.0
  %2107 = vadd.xlane.f32.xlu0 %v2106
  %v2108 = vpop.xlane.xlu0 %2107
  %v2109 = vrcp.pop %v2087
  %v2110 = vmul.f32 %v2087, %v2109
  %v2111 = vsub.f32 1.0, %v2110
  %v2112 = vmul.f32 %v2109, %v2111
  %v2113 = vadd.f32 %v2109, %v2112
  %vm2114 = vweird.f32 %v2087
  %vm2115 = vweird.f32 %v2109
  %vm2116 = vmor %vm2114, %vm2115
  %v2117 = vsel %vm2116, %v2109, %v2113
  %v2118 = vand.u32 2147483647, %v2087
  %vm2119 = vcmp.eq.f32.partialorder %v2118, 8.507059e+37
  %v2120 = vand.u32 %v2087, 2147483648
  %v2121 = vor.u32 1.1754944e-38, %v2120
  %v2122 = vsel %vm2119, %v2121, %v2117
  %v2123 = vmul.f32 %v2070, %v2122
  %v2124 = vrcp.pop %v2090
  %v2125 = vmul.f32 %v2090, %v2124
  %v2126 = vsub.f32 1.0, %v2125
  %v2127 = vmul.f32 %v2124, %v2126
  %v2128 = vadd.f32 %v2124, %v2127
  %vm2129 = vweird.f32 %v2090
  %vm2130 = vweird.f32 %v2124
  %vm2131 = vmor %vm2129, %vm2130
  %v2132 = vsel %vm2131, %v2124, %v2128
  %v2133 = vand.u32 2147483647, %v2090
  %vm2134 = vcmp.eq.f32.partialorder %v2133, 8.507059e+37
  %v2135 = vand.u32 %v2090, 2147483648
  %v2136 = vor.u32 1.1754944e-38, %v2135
  %v2137 = vsel %vm2134, %v2136, %v2132
  %v2138 = vmul.f32 %v2072, %v2137
  %v2139 = vrcp.pop %v2093
  %v2140 = vmul.f32 %v2093, %v2139
  %v2141 = vsub.f32 1.0, %v2140
  %v2142 = vmul.f32 %v2139, %v2141
  %v2143 = vadd.f32 %v2139, %v2142
  %vm2144 = vweird.f32 %v2093
  %vm2145 = vweird.f32 %v2139
  %vm2146 = vmor %vm2144, %vm2145
  %v2147 = vsel %vm2146, %v2139, %v2143
  %v2148 = vand.u32 2147483647, %v2093
  %vm2149 = vcmp.eq.f32.partialorder %v2148, 8.507059e+37
  %v2150 = vand.u32 %v2093, 2147483648
  %v2151 = vor.u32 1.1754944e-38, %v2150
  %v2152 = vsel %vm2149, %v2151, %v2147
  %v2153 = vmul.f32 %v2074, %v2152
  %v2154 = vrcp.pop %v2096
  %v2155 = vmul.f32 %v2096, %v2154
  %v2156 = vsub.f32 1.0, %v2155
  %v2157 = vmul.f32 %v2154, %v2156
  %v2158 = vadd.f32 %v2154, %v2157
  %vm2159 = vweird.f32 %v2096
  %vm2160 = vweird.f32 %v2154
  %vm2161 = vmor %vm2159, %vm2160
  %v2162 = vsel %vm2161, %v2154, %v2158
  %v2163 = vand.u32 2147483647, %v2096
  %vm2164 = vcmp.eq.f32.partialorder %v2163, 8.507059e+37
  %v2165 = vand.u32 %v2096, 2147483648
  %v2166 = vor.u32 1.1754944e-38, %v2165
  %v2167 = vsel %vm2164, %v2166, %v2162
  %v2168 = vmul.f32 %v2076, %v2167
  %v2169 = vrcp.pop %v2099
  %v2170 = vmul.f32 %v2099, %v2169
  %v2171 = vsub.f32 1.0, %v2170
  %v2172 = vmul.f32 %v2169, %v2171
  %v2173 = vadd.f32 %v2169, %v2172
  %vm2174 = vweird.f32 %v2099
  %vm2175 = vweird.f32 %v2169
  %vm2176 = vmor %vm2174, %vm2175
  %v2177 = vsel %vm2176, %v2169, %v2173
  %v2178 = vand.u32 2147483647, %v2099
  %vm2179 = vcmp.eq.f32.partialorder %v2178, 8.507059e+37
  %v2180 = vand.u32 %v2099, 2147483648
  %v2181 = vor.u32 1.1754944e-38, %v2180
  %v2182 = vsel %vm2179, %v2181, %v2177
  %v2183 = vmul.f32 %v2078, %v2182
  %v2184 = vrcp.pop %v2102
  %v2185 = vmul.f32 %v2102, %v2184
  %v2186 = vsub.f32 1.0, %v2185
  %v2187 = vmul.f32 %v2184, %v2186
  %v2188 = vadd.f32 %v2184, %v2187
  %vm2189 = vweird.f32 %v2102
  %vm2190 = vweird.f32 %v2184
  %vm2191 = vmor %vm2189, %vm2190
  %v2192 = vsel %vm2191, %v2184, %v2188
  %v2193 = vand.u32 2147483647, %v2102
  %vm2194 = vcmp.eq.f32.partialorder %v2193, 8.507059e+37
  %v2195 = vand.u32 %v2102, 2147483648
  %v2196 = vor.u32 1.1754944e-38, %v2195
  %v2197 = vsel %vm2194, %v2196, %v2192
  %v2198 = vmul.f32 %v2080, %v2197
  %v2199 = vrcp.pop %v2105
  %v2200 = vmul.f32 %v2105, %v2199
  %v2201 = vsub.f32 1.0, %v2200
  %v2202 = vmul.f32 %v2199, %v2201
  %v2203 = vadd.f32 %v2199, %v2202
  %vm2204 = vweird.f32 %v2105
  %vm2205 = vweird.f32 %v2199
  %vm2206 = vmor %vm2204, %vm2205
  %v2207 = vsel %vm2206, %v2199, %v2203
  %v2208 = vand.u32 2147483647, %v2105
  %vm2209 = vcmp.eq.f32.partialorder %v2208, 8.507059e+37
  %v2210 = vand.u32 %v2105, 2147483648
  %v2211 = vor.u32 1.1754944e-38, %v2210
  %v2212 = vsel %vm2209, %v2211, %v2207
  %v2213 = vmul.f32 %v2082, %v2212
  %v2214 = vrcp.pop %v2108
  %v2215 = vmul.f32 %v2108, %v2214
  %v2216 = vsub.f32 1.0, %v2215
  %v2217 = vmul.f32 %v2214, %v2216
  %v2218 = vadd.f32 %v2214, %v2217
  %vm2219 = vweird.f32 %v2108
  %vm2220 = vweird.f32 %v2214
  %vm2221 = vmor %vm2219, %vm2220
  %v2222 = vsel %vm2221, %v2214, %v2218
  %v2223 = vand.u32 2147483647, %v2108
  %vm2224 = vcmp.eq.f32.partialorder %v2223, 8.507059e+37
  %v2225 = vand.u32 %v2108, 2147483648
  %v2226 = vor.u32 1.1754944e-38, %v2225
  %v2227 = vsel %vm2224, %v2226, %v2222
  %v2228 = vmul.f32 %v2084, %v2227
  %v2230 = vsel %vm315, %v2123, 0
  %v2233 = vsel %vm315, %v2138, 0
  %v2236 = vsel %vm315, %v2153, 0
  %v2239 = vsel %vm315, %v2168, 0
  %v2242 = vsel %vm315, %v2183, 0
  %v2245 = vsel %vm315, %v2198, 0
  %v2248 = vsel %vm315, %v2213, 0
  %v2251 = vsel %vm315, %v2228, 0
  %2253 = vmatpush.msra.mxu0 0.0
  %2254 = vmatpush.msra.mxu0 0.0
  %2255 = vmatpush.msra.mxu0 0.0
  %2256 = vmatpush.msra.mxu0 0.0
  %2257 = vmatpush.msra.mxu0 0.0
  %2258 = vmatpush.msra.mxu0 0.0
  %2259 = vmatpush.msra.mxu0 0.0
  %2260 = vmatpush.msra.mxu0 0.0
  %2261 = vmatpush.msra.mxu0 %v1946
  %2262 = vmatpush.msra.mxu0 %v1943
  %2263 = vmatpush.msra.mxu0 %v1940
  %2264 = vmatpush.msra.mxu0 %v1937
  %2265 = vmatpush.msra.mxu0 %v1934
  %2266 = vmatpush.msra.mxu0 %v1931
  %2267 = vmatpush.msra.mxu0 %v1928
  %2268 = vmatpush.msra.mxu0 %v1925
  %2269 = vmatmul.f32.gmra.mxu0 %v2230
  %v2270 = vpop.f32.mrf.mxu0
  %v2271 = vadd.f32 0.0, %v2270
  %2272 = vmatmul.f32.gmra.mxu0 %v2233
  %v2273 = vpop.f32.mrf.mxu0
  %v2274 = vadd.f32 0.0, %v2273
  %2275 = vmatmul.f32.gmra.mxu0 %v2236
  %v2276 = vpop.f32.mrf.mxu0
  %v2277 = vadd.f32 0.0, %v2276
  %2278 = vmatmul.f32.gmra.mxu0 %v2239
  %v2279 = vpop.f32.mrf.mxu0
  %v2280 = vadd.f32 0.0, %v2279
  %2281 = vmatmul.f32.gmra.mxu0 %v2242
  %v2282 = vpop.f32.mrf.mxu0
  %v2283 = vadd.f32 0.0, %v2282
  %2284 = vmatmul.f32.gmra.mxu0 %v2245
  %v2285 = vpop.f32.mrf.mxu0
  %v2286 = vadd.f32 0.0, %v2285
  %2287 = vmatmul.f32.gmra.mxu0 %v2248
  %v2288 = vpop.f32.mrf.mxu0
  %v2289 = vadd.f32 0.0, %v2288
  %2290 = vmatmul.f32.gmra.mxu0 %v2251
  %v2291 = vpop.f32.mrf.mxu0
  %v2292 = vadd.f32 0.0, %v2291
  %2293 = vdwg.mxu0
  %s2294 = scalar_lea.vmem %s8, 12
  %v2295 = vld [vmem:[%s2294] sm:$0xf]
  %v2297 = vsel %vm225, %v2271, 0
  %v2300 = vsel %vm225, %v2274, 0
  %v2303 = vsel %vm225, %v2277, 0
  %v2306 = vsel %vm225, %v2280, 0
  %v2309 = vsel %vm225, %v2283, 0
  %v2312 = vsel %vm225, %v2286, 0
  %v2315 = vsel %vm225, %v2289, 0
  %v2318 = vsel %vm225, %v2292, 0
  %v2321 = vsel %vm1101, %v2295, 0
  %2323 = vmatpush.msra.mxu0 0.0
  %2324 = vmatpush.msra.mxu0 0.0
  %2325 = vmatpush.msra.mxu0 0.0
  %2326 = vmatpush.msra.mxu0 0.0
  %2327 = vmatpush.msra.mxu0 0.0
  %2328 = vmatpush.msra.mxu0 0.0
  %2329 = vmatpush.msra.mxu0 0.0
  %2330 = vmatpush.msra.mxu0 0.0
  %2331 = vmatpush.msra.mxu0 0.0
  %2332 = vmatpush.msra.mxu0 0.0
  %2333 = vmatpush.msra.mxu0 0.0
  %2334 = vmatpush.msra.mxu0 0.0
  %2335 = vmatpush.msra.mxu0 0.0
  %2336 = vmatpush.msra.mxu0 0.0
  %2337 = vmatpush.msra.mxu0 0.0
  %2338 = vmatpush.msra.mxu0 %v2321
  %2339 = vmatmul.f32.gmra.mxu0 %v2297
  %v2340 = vpop.f32.mrf.mxu0
  %v2341 = vadd.f32 0.0, %v2340
  %2342 = vmatmul.f32.gmra.mxu0 %v2300
  %v2343 = vpop.f32.mrf.mxu0
  %v2344 = vadd.f32 0.0, %v2343
  %2345 = vmatmul.f32.gmra.mxu0 %v2303
  %v2346 = vpop.f32.mrf.mxu0
  %v2347 = vadd.f32 0.0, %v2346
  %2348 = vmatmul.f32.gmra.mxu0 %v2306
  %v2349 = vpop.f32.mrf.mxu0
  %v2350 = vadd.f32 0.0, %v2349
  %2351 = vmatmul.f32.gmra.mxu0 %v2309
  %v2352 = vpop.f32.mrf.mxu0
  %v2353 = vadd.f32 0.0, %v2352
  %2354 = vmatmul.f32.gmra.mxu0 %v2312
  %v2355 = vpop.f32.mrf.mxu0
  %v2356 = vadd.f32 0.0, %v2355
  %2357 = vmatmul.f32.gmra.mxu0 %v2315
  %v2358 = vpop.f32.mrf.mxu0
  %v2359 = vadd.f32 0.0, %v2358
  %2360 = vmatmul.f32.gmra.mxu0 %v2318
  %v2361 = vpop.f32.mrf.mxu0
  %v2362 = vadd.f32 0.0, %v2361
  %2363 = vdwg.mxu0
  %v2364 = vadd.f32 %v1785, %v2341
  %v2365 = vadd.f32 %v1786, %v2344
  %v2366 = vadd.f32 %v1787, %v2347
  %v2367 = vadd.f32 %v1788, %v2350
  %v2368 = vadd.f32 %v1789, %v2353
  %v2369 = vadd.f32 %v1790, %v2356
  %v2370 = vadd.f32 %v1791, %v2359
  %v2371 = vadd.f32 %v1792, %v2362
  %v2372 = vld [vmem:[%s9] sm:$0x1]
  %v2374 = vperm.slane %v2372, 0
  %v2376 = vadd.f32 %v2364, %v2374
  %v2377 = vadd.f32 %v2365, %v2374
  %v2378 = vadd.f32 %v2366, %v2374
  %v2379 = vadd.f32 %v2367, %v2374
  %v2380 = vadd.f32 %v2368, %v2374
  %v2381 = vadd.f32 %v2369, %v2374
  %v2382 = vadd.f32 %v2370, %v2374
  %v2383 = vadd.f32 %v2371, %v2374
  %2384 = vst.msk [vmem:[%s10] sm:$0xff] %vm57, %v2376
  %2385 = vst.msk [vmem:[%s10 + $0x8] sm:$0xff] %vm57, %v2377
  %2386 = vst.msk [vmem:[%s10 + $0x10] sm:$0xff] %vm57, %v2378
  %2387 = vst.msk [vmem:[%s10 + $0x18] sm:$0xff] %vm57, %v2379
  %2388 = vst.msk [vmem:[%s10 + $0x20] sm:$0xff] %vm57, %v2380
  %2389 = vst.msk [vmem:[%s10 + $0x28] sm:$0xff] %vm57, %v2381
  %2390 = vst.msk [vmem:[%s10 + $0x30] sm:$0xff] %vm57, %v2382
  %2391 = vst.msk [vmem:[%s10 + $0x38] sm:$0xff] %vm57, %v2383
  // Predicated region
  $region42: #{dualpath_block_forward.2} parent=0 // pred_check
    _
  $region43: #{dualpath_block_forward.2} parent=0 // pred_check_branch
    %2393 = sbr.rel (0) target = $region45
  $region44: #{dualpath_block_forward.2} parent=0 // pred_region
    _
  $region45: #{dualpath_block_forward.2} parent=0 // pred_fallthru
    _
  // Predicated region
  $region46: #{dualpath_block_forward.2} parent=0 // pred_check
    _
  $region47: #{dualpath_block_forward.2} parent=0 // pred_check_branch
    %2395 = sbr.rel (0) target = $region49
  $region48: #{dualpath_block_forward.2} parent=0 // pred_region
    _
  $region49: #{dualpath_block_forward.2} parent=0 // pred_fallthru
    _

// kernel: dualpath_block_forward.3
$region0: #{dualpath_block_forward.3}
  #allocation0 [shape = 'u32[]', space=smem, size = 0x4, offset = 0x4, fixed_abs, tag = 'smem constant byte address 0x4 - core index']
  #allocation1 [shape = 'u32[72,128]{1,0:T(1,128)}', space=vmem, size = 0x9000, scoped, tag = 'internal scratch']
  #allocation2 [shape = 'f32[16,16]{1,0:T(8,128)}', space=vmem, size = 0x2000, scoped, tag = 'scratch operand']
  %s0 = inlined_call_operand.vmem [shape: f32[64,16], index: 0, kind: input, shape index: {}]
  %s1 = inlined_call_operand.vmem [shape: f32[64,16], index: 1, kind: input, shape index: {}]
  %s2 = inlined_call_operand.vmem [shape: f32[1,16], index: 2, kind: input, shape index: {}]
  %s3 = inlined_call_operand.vmem [shape: f32[1,16], index: 3, kind: input, shape index: {}]
  %s4 = inlined_call_operand.vmem [shape: f32[3,16,16], index: 4, kind: input, shape index: {}]
  %s5 = inlined_call_operand.vmem [shape: f32[3,16,16], index: 5, kind: input, shape index: {}]
  %s6 = inlined_call_operand.vmem [shape: f32[3,1,16], index: 6, kind: input, shape index: {}]
  %s7 = inlined_call_operand.vmem [shape: f32[3,16,16], index: 7, kind: input, shape index: {}]
  %s8 = inlined_call_operand.vmem [shape: f32[3,1,16], index: 8, kind: input, shape index: {}]
  %s9 = inlined_call_operand.vmem [shape: f32[3,16,16], index: 9, kind: input, shape index: {}]
  %s10 = inlined_call_operand.vmem [shape: f32[3,1,16], index: 10, kind: input, shape index: {}]
  %s11 = inlined_call_operand.vmem [shape: f32[3,16,16], index: 11, kind: input, shape index: {}]
  %s12 = inlined_call_operand.vmem [shape: f32[3,1,16], index: 12, kind: input, shape index: {}]
  %s13 = inlined_call_operand.vmem [shape: f32[16,16], index: 13, kind: input, shape index: {}]
  %s14 = inlined_call_operand.vmem [shape: f32[1,16], index: 14, kind: input, shape index: {}]
  %s15 = inlined_call_operand.vmem [shape: f32[1,16], index: 15, kind: input, shape index: {}]
  %s16 = inlined_call_operand.vmem [shape: f32[1,16], index: 16, kind: input, shape index: {}]
  %s17 = inlined_call_operand.vmem [shape: f32[64,16], index: 17, kind: output, shape index: {}]
  %s18 = sld [smem:[#allocation0]]
  $region78: #{dualpath_block_forward.3} parent=0
    _
  %s20 = ssub.s32 1, %s18
  %s21 = scalar_select 0, %s20, %s18
  // Predicated region
  $region2: #{dualpath_block_forward.3} parent=0 // pred_check
    _
  $region3: #{dualpath_block_forward.3} parent=0 // pred_check_branch
    %23 = sbr.rel (0) target = $region5
  $region4: #{dualpath_block_forward.3} parent=0 // pred_region
    _
  $region5: #{dualpath_block_forward.3} parent=0 // pred_fallthru
    _
  // Predicated region
  $region6: #{dualpath_block_forward.3} parent=0 // pred_check
    _
  $region7: #{dualpath_block_forward.3} parent=0 // pred_check_branch
    %25 = sbr.rel (0) target = $region9
  $region8: #{dualpath_block_forward.3} parent=0 // pred_region
    _
  $region9: #{dualpath_block_forward.3} parent=0 // pred_fallthru
    _
  // Predicated region
  $region10: #{dualpath_block_forward.3} parent=0 // pred_check
    _
  $region11: #{dualpath_block_forward.3} parent=0 // pred_check_branch
    %27 = sbr.rel (0) target = $region13
  $region12: #{dualpath_block_forward.3} parent=0 // pred_region
    _
  $region13: #{dualpath_block_forward.3} parent=0 // pred_fallthru
    _
  // Predicated region
  $region14: #{dualpath_block_forward.3} parent=0 // pred_check
    _
  $region15: #{dualpath_block_forward.3} parent=0 // pred_check_branch
    %29 = sbr.rel (0) target = $region17
  $region16: #{dualpath_block_forward.3} parent=0 // pred_region
    _
  $region17: #{dualpath_block_forward.3} parent=0 // pred_fallthru
    _
  // Predicated region
  $region18: #{dualpath_block_forward.3} parent=0 // pred_check
    _
  $region19: #{dualpath_block_forward.3} parent=0 // pred_check_branch
    %31 = sbr.rel (0) target = $region21
  $region20: #{dualpath_block_forward.3} parent=0 // pred_region
    _
  $region21: #{dualpath_block_forward.3} parent=0 // pred_fallthru
    _
  // Predicated region
  $region22: #{dualpath_block_forward.3} parent=0 // pred_check
    _
  $region23: #{dualpath_block_forward.3} parent=0 // pred_check_branch
    %33 = sbr.rel (0) target = $region25
  $region24: #{dualpath_block_forward.3} parent=0 // pred_region
    _
  $region25: #{dualpath_block_forward.3} parent=0 // pred_fallthru
    _
  // Predicated region
  $region26: #{dualpath_block_forward.3} parent=0 // pred_check
    _
  $region27: #{dualpath_block_forward.3} parent=0 // pred_check_branch
    %35 = sbr.rel (0) target = $region29
  $region28: #{dualpath_block_forward.3} parent=0 // pred_region
    _
  $region29: #{dualpath_block_forward.3} parent=0 // pred_fallthru
    _
  // Predicated region
  $region30: #{dualpath_block_forward.3} parent=0 // pred_check
    _
  $region31: #{dualpath_block_forward.3} parent=0 // pred_check_branch
    %37 = sbr.rel (0) target = $region33
  $region32: #{dualpath_block_forward.3} parent=0 // pred_region
    _
  $region33: #{dualpath_block_forward.3} parent=0 // pred_fallthru
    _
  // Predicated region
  $region34: #{dualpath_block_forward.3} parent=0 // pred_check
    _
  $region35: #{dualpath_block_forward.3} parent=0 // pred_check_branch
    %39 = sbr.rel (0) target = $region37
  $region36: #{dualpath_block_forward.3} parent=0 // pred_region
    _
  $region37: #{dualpath_block_forward.3} parent=0 // pred_fallthru
    _
  // Predicated region
  $region38: #{dualpath_block_forward.3} parent=0 // pred_check
    _
  $region39: #{dualpath_block_forward.3} parent=0 // pred_check_branch
    %41 = sbr.rel (0) target = $region41
  $region40: #{dualpath_block_forward.3} parent=0 // pred_region
    _
  $region41: #{dualpath_block_forward.3} parent=0 // pred_fallthru
    _
  // Predicated region
  $region42: #{dualpath_block_forward.3} parent=0 // pred_check
    _
  $region43: #{dualpath_block_forward.3} parent=0 // pred_check_branch
    %43 = sbr.rel (0) target = $region45
  $region44: #{dualpath_block_forward.3} parent=0 // pred_region
    _
  $region45: #{dualpath_block_forward.3} parent=0 // pred_fallthru
    _
  // Predicated region
  $region46: #{dualpath_block_forward.3} parent=0 // pred_check
    _
  $region47: #{dualpath_block_forward.3} parent=0 // pred_check_branch
    %45 = sbr.rel (0) target = $region49
  $region48: #{dualpath_block_forward.3} parent=0 // pred_region
    _
  $region49: #{dualpath_block_forward.3} parent=0 // pred_fallthru
    _
  // Predicated region
  $region50: #{dualpath_block_forward.3} parent=0 // pred_check
    _
  $region51: #{dualpath_block_forward.3} parent=0 // pred_check_branch
    %47 = sbr.rel (0) target = $region53
  $region52: #{dualpath_block_forward.3} parent=0 // pred_region
    _
  $region53: #{dualpath_block_forward.3} parent=0 // pred_fallthru
    _
  // Predicated region
  $region54: #{dualpath_block_forward.3} parent=0 // pred_check
    _
  $region55: #{dualpath_block_forward.3} parent=0 // pred_check_branch
    %49 = sbr.rel (0) target = $region57
  $region56: #{dualpath_block_forward.3} parent=0 // pred_region
    _
  $region57: #{dualpath_block_forward.3} parent=0 // pred_fallthru
    _
  // Predicated region
  $region58: #{dualpath_block_forward.3} parent=0 // pred_check
    _
  $region59: #{dualpath_block_forward.3} parent=0 // pred_check_branch
    %51 = sbr.rel (0) target = $region61
  $region60: #{dualpath_block_forward.3} parent=0 // pred_region
    _
  $region61: #{dualpath_block_forward.3} parent=0 // pred_fallthru
    _
  // Predicated region
  $region62: #{dualpath_block_forward.3} parent=0 // pred_check
    _
  $region63: #{dualpath_block_forward.3} parent=0 // pred_check_branch
    %53 = sbr.rel (0) target = $region65
  $region64: #{dualpath_block_forward.3} parent=0 // pred_region
    _
  $region65: #{dualpath_block_forward.3} parent=0 // pred_fallthru
    _
  // Predicated region
  $region66: #{dualpath_block_forward.3} parent=0 // pred_check
    _
  $region67: #{dualpath_block_forward.3} parent=0 // pred_check_branch
    %55 = sbr.rel (0) target = $region69
  $region68: #{dualpath_block_forward.3} parent=0 // pred_region
    _
  $region69: #{dualpath_block_forward.3} parent=0 // pred_fallthru
    _
  %v56 = vld [vmem:[%s1] sm:$0xff]
  %v57 = vld [vmem:[%s1 + $0x8] sm:$0xff]
  %v58 = vld [vmem:[%s1 + $0x10] sm:$0xff]
  %v59 = vld [vmem:[%s1 + $0x18] sm:$0xff]
  %v60 = vld [vmem:[%s1 + $0x20] sm:$0xff]
  %v61 = vld [vmem:[%s1 + $0x28] sm:$0xff]
  %v62 = vld [vmem:[%s1 + $0x30] sm:$0xff]
  %v63 = vld [vmem:[%s1 + $0x38] sm:$0xff]
  %vm64 = vcmask 130048
  %v65 = vsel %vm64, %v56, 0.0
  %66 = vadd.xlane.f32.xlu0 %v65
  %v67 = vpop.xlane.xlu0 %66
  %v68 = vsel %vm64, %v57, 0.0
  %69 = vadd.xlane.f32.xlu0 %v68
  %v70 = vpop.xlane.xlu0 %69
  %v71 = vsel %vm64, %v58, 0.0
  %72 = vadd.xlane.f32.xlu0 %v71
  %v73 = vpop.xlane.xlu0 %72
  %v74 = vsel %vm64, %v59, 0.0
  %75 = vadd.xlane.f32.xlu0 %v74
  %v76 = vpop.xlane.xlu0 %75
  %v77 = vsel %vm64, %v60, 0.0
  %78 = vadd.xlane.f32.xlu0 %v77
  %v79 = vpop.xlane.xlu0 %78
  %v80 = vsel %vm64, %v61, 0.0
  %81 = vadd.xlane.f32.xlu0 %v80
  %v82 = vpop.xlane.xlu0 %81
  %v83 = vsel %vm64, %v62, 0.0
  %84 = vadd.xlane.f32.xlu0 %v83
  %v85 = vpop.xlane.xlu0 %84
  %v86 = vsel %vm64, %v63, 0.0
  %87 = vadd.xlane.f32.xlu0 %v86
  %v88 = vpop.xlane.xlu0 %87
  %v89 = vrcp.pop 16.0
  %v90 = vmul.f32 16.0, %v89
  %v91 = vsub.f32 1.0, %v90
  %v92 = vmul.f32 %v89, %v91
  %v93 = vadd.f32 %v89, %v92
  %vm94 = vweird.f32 %v89
  %v95 = vsel %vm94, %v89, %v93
  %v96 = vmul.f32 %v67, %v95
  %v97 = vmul.f32 %v70, %v95
  %v98 = vmul.f32 %v73, %v95
  %v99 = vmul.f32 %v76, %v95
  %v100 = vmul.f32 %v79, %v95
  %v101 = vmul.f32 %v82, %v95
  %v102 = vmul.f32 %v85, %v95
  %v103 = vmul.f32 %v88, %v95
  %v104 = vsub.f32 %v56, %v96
  %v105 = vsub.f32 %v57, %v97
  %v106 = vsub.f32 %v58, %v98
  %v107 = vsub.f32 %v59, %v99
  %v108 = vsub.f32 %v60, %v100
  %v109 = vsub.f32 %v61, %v101
  %v110 = vsub.f32 %v62, %v102
  %v111 = vsub.f32 %v63, %v103
  %v112 = vmul.f32 %v104, %v104
  %v113 = vmul.f32 %v105, %v105
  %v114 = vmul.f32 %v106, %v106
  %v115 = vmul.f32 %v107, %v107
  %v116 = vmul.f32 %v108, %v108
  %v117 = vmul.f32 %v109, %v109
  %v118 = vmul.f32 %v110, %v110
  %v119 = vmul.f32 %v111, %v111
  %v120 = vsel %vm64, %v112, 0.0
  %121 = vadd.xlane.f32.xlu0 %v120
  %v122 = vpop.xlane.xlu0 %121
  %v123 = vsel %vm64, %v113, 0.0
  %124 = vadd.xlane.f32.xlu0 %v123
  %v125 = vpop.xlane.xlu0 %124
  %v126 = vsel %vm64, %v114, 0.0
  %127 = vadd.xlane.f32.xlu0 %v126
  %v128 = vpop.xlane.xlu0 %127
  %v129 = vsel %vm64, %v115, 0.0
  %130 = vadd.xlane.f32.xlu0 %v129
  %v131 = vpop.xlane.xlu0 %130
  %v132 = vsel %vm64, %v116, 0.0
  %133 = vadd.xlane.f32.xlu0 %v132
  %v134 = vpop.xlane.xlu0 %133
  %v135 = vsel %vm64, %v117, 0.0
  %136 = vadd.xlane.f32.xlu0 %v135
  %v137 = vpop.xlane.xlu0 %136
  %v138 = vsel %vm64, %v118, 0.0
  %139 = vadd.xlane.f32.xlu0 %v138
  %v140 = vpop.xlane.xlu0 %139
  %v141 = vsel %vm64, %v119, 0.0
  %142 = vadd.xlane.f32.xlu0 %v141
  %v143 = vpop.xlane.xlu0 %142
  %v144 = vmul.f32 %v122, %v95
  %v145 = vmul.f32 %v125, %v95
  %v146 = vmul.f32 %v128, %v95
  %v147 = vmul.f32 %v131, %v95
  %v148 = vmul.f32 %v134, %v95
  %v149 = vmul.f32 %v137, %v95
  %v150 = vmul.f32 %v140, %v95
  %v151 = vmul.f32 %v143, %v95
  %v152 = vadd.f32 %v144, 1e-05
  %v153 = vadd.f32 %v145, 1e-05
  %v154 = vadd.f32 %v146, 1e-05
  %v155 = vadd.f32 %v147, 1e-05
  %v156 = vadd.f32 %v148, 1e-05
  %v157 = vadd.f32 %v149, 1e-05
  %v158 = vadd.f32 %v150, 1e-05
  %v159 = vadd.f32 %v151, 1e-05
  %v160 = vrsqrt.pop %v152
  %v161 = vmul.f32 %v160, %v152
  %v162 = vmul.f32 %v161, %v160
  %v163 = vmul.f32 0.5, %v162
  %v164 = vsub.f32 1.5, %v163
  %v165 = vmul.f32 %v160, %v164
  %vm166 = vweird.f32 %v152
  %vm167 = vweird.f32 %v160
  %vm168 = vmor %vm166, %vm167
  %v169 = vsel %vm168, %v160, %v165
  %v170 = vrsqrt.pop %v153
  %v171 = vmul.f32 %v170, %v153
  %v172 = vmul.f32 %v171, %v170
  %v173 = vmul.f32 0.5, %v172
  %v174 = vsub.f32 1.5, %v173
  %v175 = vmul.f32 %v170, %v174
  %vm176 = vweird.f32 %v153
  %vm177 = vweird.f32 %v170
  %vm178 = vmor %vm176, %vm177
  %v179 = vsel %vm178, %v170, %v175
  %v180 = vrsqrt.pop %v154
  %v181 = vmul.f32 %v180, %v154
  %v182 = vmul.f32 %v181, %v180
  %v183 = vmul.f32 0.5, %v182
  %v184 = vsub.f32 1.5, %v183
  %v185 = vmul.f32 %v180, %v184
  %vm186 = vweird.f32 %v154
  %vm187 = vweird.f32 %v180
  %vm188 = vmor %vm186, %vm187
  %v189 = vsel %vm188, %v180, %v185
  %v190 = vrsqrt.pop %v155
  %v191 = vmul.f32 %v190, %v155
  %v192 = vmul.f32 %v191, %v190
  %v193 = vmul.f32 0.5, %v192
  %v194 = vsub.f32 1.5, %v193
  %v195 = vmul.f32 %v190, %v194
  %vm196 = vweird.f32 %v155
  %vm197 = vweird.f32 %v190
  %vm198 = vmor %vm196, %vm197
  %v199 = vsel %vm198, %v190, %v195
  %v200 = vrsqrt.pop %v156
  %v201 = vmul.f32 %v200, %v156
  %v202 = vmul.f32 %v201, %v200
  %v203 = vmul.f32 0.5, %v202
  %v204 = vsub.f32 1.5, %v203
  %v205 = vmul.f32 %v200, %v204
  %vm206 = vweird.f32 %v156
  %vm207 = vweird.f32 %v200
  %vm208 = vmor %vm206, %vm207
  %v209 = vsel %vm208, %v200, %v205
  %v210 = vrsqrt.pop %v157
  %v211 = vmul.f32 %v210, %v157
  %v212 = vmul.f32 %v211, %v210
  %v213 = vmul.f32 0.5, %v212
  %v214 = vsub.f32 1.5, %v213
  %v215 = vmul.f32 %v210, %v214
  %vm216 = vweird.f32 %v157
  %vm217 = vweird.f32 %v210
  %vm218 = vmor %vm216, %vm217
  %v219 = vsel %vm218, %v210, %v215
  %v220 = vrsqrt.pop %v158
  %v221 = vmul.f32 %v220, %v158
  %v222 = vmul.f32 %v221, %v220
  %v223 = vmul.f32 0.5, %v222
  %v224 = vsub.f32 1.5, %v223
  %v225 = vmul.f32 %v220, %v224
  %vm226 = vweird.f32 %v158
  %vm227 = vweird.f32 %v220
  %vm228 = vmor %vm226, %vm227
  %v229 = vsel %vm228, %v220, %v225
  %v230 = vrsqrt.pop %v159
  %v231 = vmul.f32 %v230, %v159
  %v232 = vmul.f32 %v231, %v230
  %v233 = vmul.f32 0.5, %v232
  %v234 = vsub.f32 1.5, %v233
  %v235 = vmul.f32 %v230, %v234
  %vm236 = vweird.f32 %v159
  %vm237 = vweird.f32 %v230
  %vm238 = vmor %vm236, %vm237
  %v239 = vsel %vm238, %v230, %v235
  %v240 = vmul.f32 %v104, %v169
  %v241 = vmul.f32 %v105, %v179
  %v242 = vmul.f32 %v106, %v189
  %v243 = vmul.f32 %v107, %v199
  %v244 = vmul.f32 %v108, %v209
  %v245 = vmul.f32 %v109, %v219
  %v246 = vmul.f32 %v110, %v229
  %v247 = vmul.f32 %v111, %v239
  %v248 = vld [vmem:[%s2] sm:$0x1]
  %v250 = vperm.slane %v248, 0
  %v252 = vmul.f32 %v240, %v250
  %v253 = vmul.f32 %v241, %v250
  %v254 = vmul.f32 %v242, %v250
  %v255 = vmul.f32 %v243, %v250
  %v256 = vmul.f32 %v244, %v250
  %v257 = vmul.f32 %v245, %v250
  %v258 = vmul.f32 %v246, %v250
  %v259 = vmul.f32 %v247, %v250
  %v260 = vld [vmem:[%s3] sm:$0x1]
  %v262 = vperm.slane %v260, 0
  %v264 = vadd.f32 %v252, %v262
  %v265 = vadd.f32 %v253, %v262
  %v266 = vadd.f32 %v254, %v262
  %v267 = vadd.f32 %v255, %v262
  %v268 = vadd.f32 %v256, %v262
  %v269 = vadd.f32 %v257, %v262
  %v270 = vadd.f32 %v258, %v262
  %v271 = vadd.f32 %v259, %v262
  %v272 = vld [vmem:[%s0] sm:$0xff]
  %v273 = vld [vmem:[%s0 + $0x8] sm:$0xff]
  %v274 = vld [vmem:[%s0 + $0x10] sm:$0xff]
  %v275 = vld [vmem:[%s0 + $0x18] sm:$0xff]
  %v276 = vld [vmem:[%s0 + $0x20] sm:$0xff]
  %v277 = vld [vmem:[%s0 + $0x28] sm:$0xff]
  %v278 = vld [vmem:[%s0 + $0x30] sm:$0xff]
  %v279 = vld [vmem:[%s0 + $0x38] sm:$0xff]
  %v280 = vadd.f32 %v272, %v264
  %v281 = vadd.f32 %v273, %v265
  %v282 = vadd.f32 %v274, %v266
  %v283 = vadd.f32 %v275, %v267
  %v284 = vadd.f32 %v276, %v268
  %v285 = vadd.f32 %v277, %v269
  %v286 = vadd.f32 %v278, %v270
  %v287 = vadd.f32 %v279, %v271
  %v288 = vmax.f32 %v280, %v282
  %v289 = vmax.f32 %v281, %v283
  %v290 = vmax.f32 %v288, %v284
  %v291 = vmax.f32 %v289, %v285
  %v292 = vmax.f32 %v290, %v286
  %v293 = vmax.f32 %v291, %v287
  %v294 = vsub.f32 %v280, %v292
  %v295 = vsub.f32 %v281, %v293
  %v296 = vmul.f32 %v294, 1.442695
  %v297 = vpow.pop %v296
  %v298 = vmul.f32 %v295, 1.442695
  %v299 = vpow.pop %v298
  %v300 = vsub.f32 %v282, %v292
  %v301 = vsub.f32 %v283, %v293
  %v302 = vmul.f32 %v300, 1.442695
  %v303 = vpow.pop %v302
  %v304 = vmul.f32 %v301, 1.442695
  %v305 = vpow.pop %v304
  %v306 = vsub.f32 %v284, %v292
  %v307 = vsub.f32 %v285, %v293
  %v308 = vmul.f32 %v306, 1.442695
  %v309 = vpow.pop %v308
  %v310 = vmul.f32 %v307, 1.442695
  %v311 = vpow.pop %v310
  %v312 = vsub.f32 %v286, %v292
  %v313 = vsub.f32 %v287, %v293
  %v314 = vmul.f32 %v312, 1.442695
  %v315 = vpow.pop %v314
  %v316 = vmul.f32 %v313, 1.442695
  %v317 = vpow.pop %v316
  %v318 = vadd.f32 %v297, 0.0
  %v319 = vadd.f32 %v299, 0.0
  %v320 = vadd.f32 %v318, %v303
  %v321 = vadd.f32 %v319, %v305
  %v322 = vadd.f32 %v320, %v309
  %v323 = vadd.f32 %v321, %v311
  %v324 = vadd.f32 %v322, %v315
  %v325 = vadd.f32 %v323, %v317
  %v326 = vrcp.pop %v324
  %v327 = vmul.f32 %v324, %v326
  %v328 = vsub.f32 1.0, %v327
  %v329 = vmul.f32 %v326, %v328
  %v330 = vadd.f32 %v326, %v329
  %vm331 = vweird.f32 %v324
  %vm332 = vweird.f32 %v326
  %vm333 = vmor %vm331, %vm332
  %v334 = vsel %vm333, %v326, %v330
  %v335 = vand.u32 2147483647, %v324
  %vm336 = vcmp.eq.f32.partialorder %v335, 8.507059e+37
  %v337 = vand.u32 %v324, 2147483648
  %v338 = vor.u32 1.1754944e-38, %v337
  %v339 = vsel %vm336, %v338, %v334
  %v340 = vmul.f32 1.0, %v339
  %v341 = vrcp.pop %v325
  %v342 = vmul.f32 %v325, %v341
  %v343 = vsub.f32 1.0, %v342
  %v344 = vmul.f32 %v341, %v343
  %v345 = vadd.f32 %v341, %v344
  %vm346 = vweird.f32 %v325
  %vm347 = vweird.f32 %v341
  %vm348 = vmor %vm346, %vm347
  %v349 = vsel %vm348, %v341, %v345
  %v350 = vand.u32 2147483647, %v325
  %vm351 = vcmp.eq.f32.partialorder %v350, 8.507059e+37
  %v352 = vand.u32 %v325, 2147483648
  %v353 = vor.u32 1.1754944e-38, %v352
  %v354 = vsel %vm351, %v353, %v349
  %v355 = vmul.f32 1.0, %v354
  %v356 = vmul.f32 %v297, %v280
  %v357 = vmul.f32 %v299, %v281
  %v358 = vadd.f32 %v356, 0.0
  %v359 = vadd.f32 %v357, 0.0
  %v360 = vmul.f32 %v303, %v282
  %v361 = vmul.f32 %v305, %v283
  %v362 = vadd.f32 %v358, %v360
  %v363 = vadd.f32 %v359, %v361
  %v364 = vmul.f32 %v309, %v284
  %v365 = vmul.f32 %v311, %v285
  %v366 = vadd.f32 %v362, %v364
  %v367 = vadd.f32 %v363, %v365
  %v368 = vmul.f32 %v315, %v286
  %v369 = vmul.f32 %v317, %v287
  %v370 = vadd.f32 %v366, %v368
  %v371 = vadd.f32 %v367, %v369
  %v372 = vmul.f32 %v370, %v340
  %v373 = vmul.f32 %v371, %v355
  %v374 = vsub.f32 %v280, %v372
  %v375 = vsub.f32 %v281, %v373
  %v376 = vmul.f32 %v374, %v374
  %v377 = vmul.f32 %v375, %v375
  %v378 = vmul.f32 %v297, %v376
  %v379 = vmul.f32 %v299, %v377
  %v380 = vadd.f32 %v378, 0.0
  %v381 = vadd.f32 %v379, 0.0
  %v382 = vsub.f32 %v282, %v372
  %v383 = vsub.f32 %v283, %v373
  %v384 = vmul.f32 %v382, %v382
  %v385 = vmul.f32 %v383, %v383
  %v386 = vmul.f32 %v303, %v384
  %v387 = vmul.f32 %v305, %v385
  %v388 = vadd.f32 %v380, %v386
  %v389 = vadd.f32 %v381, %v387
  %v390 = vsub.f32 %v284, %v372
  %v391 = vsub.f32 %v285, %v373
  %v392 = vmul.f32 %v390, %v390
  %v393 = vmul.f32 %v391, %v391
  %v394 = vmul.f32 %v309, %v392
  %v395 = vmul.f32 %v311, %v393
  %v396 = vadd.f32 %v388, %v394
  %v397 = vadd.f32 %v389, %v395
  %v398 = vsub.f32 %v286, %v372
  %v399 = vsub.f32 %v287, %v373
  %v400 = vmul.f32 %v398, %v398
  %v401 = vmul.f32 %v399, %v399
  %v402 = vmul.f32 %v315, %v400
  %v403 = vmul.f32 %v317, %v401
  %v404 = vadd.f32 %v396, %v402
  %v405 = vadd.f32 %v397, %v403
  %v406 = vmul.f32 %v404, %v340
  %v407 = vmul.f32 %v405, %v355
  %v408 = vadd.f32 %v406, 1e-05
  %v409 = vadd.f32 %v407, 1e-05
  %v410 = vrsqrt.pop %v408
  %v411 = vmul.f32 %v410, %v408
  %v412 = vmul.f32 %v411, %v410
  %v413 = vmul.f32 0.5, %v412
  %v414 = vsub.f32 1.5, %v413
  %v415 = vmul.f32 %v410, %v414
  %v416 = vmul.f32 %v408, %v415
  %vm417 = vcmp.eq.f32.partialorder %v408, inf
  %v418 = vsel %vm417, %v408, %v416
  %vm419 = vcmp.eq.f32.partialorder %v408, 0.0
  %v420 = vand.u32 %v408, 2147483648
  %v421 = vsel %vm419, %v420, %v418
  %v422 = vrsqrt.pop %v409
  %v423 = vmul.f32 %v422, %v409
  %v424 = vmul.f32 %v423, %v422
  %v425 = vmul.f32 0.5, %v424
  %v426 = vsub.f32 1.5, %v425
  %v427 = vmul.f32 %v422, %v426
  %v428 = vmul.f32 %v409, %v427
  %vm429 = vcmp.eq.f32.partialorder %v409, inf
  %v430 = vsel %vm429, %v409, %v428
  %vm431 = vcmp.eq.f32.partialorder %v409, 0.0
  %v432 = vand.u32 %v409, 2147483648
  %v433 = vsel %vm431, %v432, %v430
  %v434 = vld [vmem:[%s4] sm:$0xff]
  %v435 = vld [vmem:[%s4 + $0x8] sm:$0xff]
  %v436 = vld [vmem:[%s5] sm:$0xff]
  %v437 = vld [vmem:[%s5 + $0x8] sm:$0xff]
  %v439 = vsel %vm64, %v421, 0
  %v442 = vsel %vm64, %v433, 0
  %444 = vmatpush.msra.mxu0 0.0
  %445 = vmatpush.msra.mxu0 0.0
  %446 = vmatpush.msra.mxu0 0.0
  %447 = vmatpush.msra.mxu0 0.0
  %448 = vmatpush.msra.mxu0 0.0
  %449 = vmatpush.msra.mxu0 0.0
  %450 = vmatpush.msra.mxu0 0.0
  %451 = vmatpush.msra.mxu0 0.0
  %452 = vmatpush.msra.mxu0 0.0
  %453 = vmatpush.msra.mxu0 0.0
  %454 = vmatpush.msra.mxu0 0.0
  %455 = vmatpush.msra.mxu0 0.0
  %456 = vmatpush.msra.mxu0 0.0
  %457 = vmatpush.msra.mxu0 0.0
  %458 = vmatpush.msra.mxu0 %v437
  %459 = vmatpush.msra.mxu0 %v436
  %460 = vmatmul.f32.gmra.mxu0 %v439
  %v461 = vpop.f32.mrf.mxu0
  %v462 = vadd.f32 0.0, %v461
  %463 = vmatmul.f32.gmra.mxu0 %v442
  %v464 = vpop.f32.mrf.mxu0
  %v465 = vadd.f32 0.0, %v464
  %466 = vdwg.mxu0
  %v468 = vsel %vm64, %v372, 0
  %v471 = vsel %vm64, %v373, 0
  %473 = vmatpush.msra.mxu0 0.0
  %474 = vmatpush.msra.mxu0 0.0
  %475 = vmatpush.msra.mxu0 0.0
  %476 = vmatpush.msra.mxu0 0.0
  %477 = vmatpush.msra.mxu0 0.0
  %478 = vmatpush.msra.mxu0 0.0
  %479 = vmatpush.msra.mxu0 0.0
  %480 = vmatpush.msra.mxu0 0.0
  %481 = vmatpush.msra.mxu0 0.0
  %482 = vmatpush.msra.mxu0 0.0
  %483 = vmatpush.msra.mxu0 0.0
  %484 = vmatpush.msra.mxu0 0.0
  %485 = vmatpush.msra.mxu0 0.0
  %486 = vmatpush.msra.mxu0 0.0
  %487 = vmatpush.msra.mxu0 %v435
  %488 = vmatpush.msra.mxu0 %v434
  %489 = vmatmul.f32.gmra.mxu0 %v468
  %v490 = vpop.f32.mrf.mxu0
  %v491 = vadd.f32 %v462, %v490
  %492 = vmatmul.f32.gmra.mxu0 %v471
  %v493 = vpop.f32.mrf.mxu0
  %v494 = vadd.f32 %v465, %v493
  %495 = vdwg.mxu0
  %v496 = vld [vmem:[%s6] sm:$0x1]
  %v498 = vperm.slane %v496, 0
  %v500 = vadd.f32 %v491, %v498
  %v501 = vadd.f32 %v494, %v498
  %s502 = scalar_lea.vmem %s4, 16
  %v503 = vld [vmem:[%s502] sm:$0xff]
  %v504 = vld [vmem:[%s502 + $0x8] sm:$0xff]
  %s505 = scalar_lea.vmem %s5, 16
  %v506 = vld [vmem:[%s505] sm:$0xff]
  %v507 = vld [vmem:[%s505 + $0x8] sm:$0xff]
  %508 = vmatpush.msra.mxu0 0.0
  %509 = vmatpush.msra.mxu0 0.0
  %510 = vmatpush.msra.mxu0 0.0
  %511 = vmatpush.msra.mxu0 0.0
  %512 = vmatpush.msra.mxu0 0.0
  %513 = vmatpush.msra.mxu0 0.0
  %514 = vmatpush.msra.mxu0 0.0
  %515 = vmatpush.msra.mxu0 0.0
  %516 = vmatpush.msra.mxu0 0.0
  %517 = vmatpush.msra.mxu0 0.0
  %518 = vmatpush.msra.mxu0 0.0
  %519 = vmatpush.msra.mxu0 0.0
  %520 = vmatpush.msra.mxu0 0.0
  %521 = vmatpush.msra.mxu0 0.0
  %522 = vmatpush.msra.mxu0 %v507
  %523 = vmatpush.msra.mxu0 %v506
  %524 = vmatmul.f32.gmra.mxu0 %v439
  %v525 = vpop.f32.mrf.mxu0
  %v526 = vadd.f32 0.0, %v525
  %527 = vmatmul.f32.gmra.mxu0 %v442
  %v528 = vpop.f32.mrf.mxu0
  %v529 = vadd.f32 0.0, %v528
  %530 = vdwg.mxu0
  %531 = vmatpush.msra.mxu0 0.0
  %532 = vmatpush.msra.mxu0 0.0
  %533 = vmatpush.msra.mxu0 0.0
  %534 = vmatpush.msra.mxu0 0.0
  %535 = vmatpush.msra.mxu0 0.0
  %536 = vmatpush.msra.mxu0 0.0
  %537 = vmatpush.msra.mxu0 0.0
  %538 = vmatpush.msra.mxu0 0.0
  %539 = vmatpush.msra.mxu0 0.0
  %540 = vmatpush.msra.mxu0 0.0
  %541 = vmatpush.msra.mxu0 0.0
  %542 = vmatpush.msra.mxu0 0.0
  %543 = vmatpush.msra.mxu0 0.0
  %544 = vmatpush.msra.mxu0 0.0
  %545 = vmatpush.msra.mxu0 %v504
  %546 = vmatpush.msra.mxu0 %v503
  %547 = vmatmul.f32.gmra.mxu0 %v468
  %v548 = vpop.f32.mrf.mxu0
  %v549 = vadd.f32 %v526, %v548
  %550 = vmatmul.f32.gmra.mxu0 %v471
  %v551 = vpop.f32.mrf.mxu0
  %v552 = vadd.f32 %v529, %v551
  %553 = vdwg.mxu0
  %s554 = scalar_lea.vmem %s6, 1
  %v555 = vld [vmem:[%s554] sm:$0x1]
  %v557 = vperm.slane %v555, 0
  %v559 = vadd.f32 %v549, %v557
  %v560 = vadd.f32 %v552, %v557
  %s561 = scalar_lea.vmem %s4, 32
  %v562 = vld [vmem:[%s561] sm:$0xff]
  %v563 = vld [vmem:[%s561 + $0x8] sm:$0xff]
  %s564 = scalar_lea.vmem %s5, 32
  %v565 = vld [vmem:[%s564] sm:$0xff]
  %v566 = vld [vmem:[%s564 + $0x8] sm:$0xff]
  %567 = vmatpush.msra.mxu0 0.0
  %568 = vmatpush.msra.mxu0 0.0
  %569 = vmatpush.msra.mxu0 0.0
  %570 = vmatpush.msra.mxu0 0.0
  %571 = vmatpush.msra.mxu0 0.0
  %572 = vmatpush.msra.mxu0 0.0
  %573 = vmatpush.msra.mxu0 0.0
  %574 = vmatpush.msra.mxu0 0.0
  %575 = vmatpush.msra.mxu0 0.0
  %576 = vmatpush.msra.mxu0 0.0
  %577 = vmatpush.msra.mxu0 0.0
  %578 = vmatpush.msra.mxu0 0.0
  %579 = vmatpush.msra.mxu0 0.0
  %580 = vmatpush.msra.mxu0 0.0
  %581 = vmatpush.msra.mxu0 %v566
  %582 = vmatpush.msra.mxu0 %v565
  %583 = vmatmul.f32.gmra.mxu0 %v439
  %v584 = vpop.f32.mrf.mxu0
  %v585 = vadd.f32 0.0, %v584
  %586 = vmatmul.f32.gmra.mxu0 %v442
  %v587 = vpop.f32.mrf.mxu0
  %v588 = vadd.f32 0.0, %v587
  %589 = vdwg.mxu0
  %590 = vmatpush.msra.mxu0 0.0
  %591 = vmatpush.msra.mxu0 0.0
  %592 = vmatpush.msra.mxu0 0.0
  %593 = vmatpush.msra.mxu0 0.0
  %594 = vmatpush.msra.mxu0 0.0
  %595 = vmatpush.msra.mxu0 0.0
  %596 = vmatpush.msra.mxu0 0.0
  %597 = vmatpush.msra.mxu0 0.0
  %598 = vmatpush.msra.mxu0 0.0
  %599 = vmatpush.msra.mxu0 0.0
  %600 = vmatpush.msra.mxu0 0.0
  %601 = vmatpush.msra.mxu0 0.0
  %602 = vmatpush.msra.mxu0 0.0
  %603 = vmatpush.msra.mxu0 0.0
  %604 = vmatpush.msra.mxu0 %v563
  %605 = vmatpush.msra.mxu0 %v562
  %606 = vmatmul.f32.gmra.mxu0 %v468
  %v607 = vpop.f32.mrf.mxu0
  %v608 = vadd.f32 %v585, %v607
  %609 = vmatmul.f32.gmra.mxu0 %v471
  %v610 = vpop.f32.mrf.mxu0
  %v611 = vadd.f32 %v588, %v610
  %612 = vdwg.mxu0
  %s613 = scalar_lea.vmem %s6, 2
  %v614 = vld [vmem:[%s613] sm:$0x1]
  %v616 = vperm.slane %v614, 0
  %v618 = vadd.f32 %v608, %v616
  %v619 = vadd.f32 %v611, %v616
  %v620 = vld [vmem:[%s7] sm:$0xff]
  %v621 = vld [vmem:[%s7 + $0x8] sm:$0xff]
  %v622 = vld [vmem:[%s8] sm:$0x1]
  %v624 = vperm.slane %v622, 0
  %v627 = vsel %vm64, 0.0, 0
  %629 = vmatpush.msra.mxu0 0.0
  %630 = vmatpush.msra.mxu0 0.0
  %631 = vmatpush.msra.mxu0 0.0
  %632 = vmatpush.msra.mxu0 0.0
  %633 = vmatpush.msra.mxu0 0.0
  %634 = vmatpush.msra.mxu0 0.0
  %635 = vmatpush.msra.mxu0 0.0
  %636 = vmatpush.msra.mxu0 0.0
  %637 = vmatpush.msra.mxu0 0.0
  %638 = vmatpush.msra.mxu0 0.0
  %639 = vmatpush.msra.mxu0 0.0
  %640 = vmatpush.msra.mxu0 0.0
  %641 = vmatpush.msra.mxu0 0.0
  %642 = vmatpush.msra.mxu0 0.0
  %643 = vmatpush.msra.mxu0 %v621
  %644 = vmatpush.msra.mxu0 %v620
  %645 = vmatmul.f32.gmra.mxu0 %v627
  %v646 = vpop.f32.mrf.mxu0
  %v647 = vadd.f32 %v624, %v646
  %648 = vdwg.mxu0
  %s649 = scalar_lea.vmem %s7, 16
  %v650 = vld [vmem:[%s649] sm:$0xff]
  %v651 = vld [vmem:[%s649 + $0x8] sm:$0xff]
  %s652 = scalar_lea.vmem %s8, 1
  %v653 = vld [vmem:[%s652] sm:$0x1]
  %v655 = vperm.slane %v653, 0
  %657 = vmatpush.msra.mxu0 0.0
  %658 = vmatpush.msra.mxu0 0.0
  %659 = vmatpush.msra.mxu0 0.0
  %660 = vmatpush.msra.mxu0 0.0
  %661 = vmatpush.msra.mxu0 0.0
  %662 = vmatpush.msra.mxu0 0.0
  %663 = vmatpush.msra.mxu0 0.0
  %664 = vmatpush.msra.mxu0 0.0
  %665 = vmatpush.msra.mxu0 0.0
  %666 = vmatpush.msra.mxu0 0.0
  %667 = vmatpush.msra.mxu0 0.0
  %668 = vmatpush.msra.mxu0 0.0
  %669 = vmatpush.msra.mxu0 0.0
  %670 = vmatpush.msra.mxu0 0.0
  %671 = vmatpush.msra.mxu0 %v651
  %672 = vmatpush.msra.mxu0 %v650
  %673 = vmatmul.f32.gmra.mxu0 %v627
  %v674 = vpop.f32.mrf.mxu0
  %v675 = vadd.f32 %v655, %v674
  %676 = vdwg.mxu0
  %s677 = scalar_lea.vmem %s7, 32
  %v678 = vld [vmem:[%s677] sm:$0xff]
  %v679 = vld [vmem:[%s677 + $0x8] sm:$0xff]
  %s680 = scalar_lea.vmem %s8, 2
  %v681 = vld [vmem:[%s680] sm:$0x1]
  %v683 = vperm.slane %v681, 0
  %685 = vmatpush.msra.mxu0 0.0
  %686 = vmatpush.msra.mxu0 0.0
  %687 = vmatpush.msra.mxu0 0.0
  %688 = vmatpush.msra.mxu0 0.0
  %689 = vmatpush.msra.mxu0 0.0
  %690 = vmatpush.msra.mxu0 0.0
  %691 = vmatpush.msra.mxu0 0.0
  %692 = vmatpush.msra.mxu0 0.0
  %693 = vmatpush.msra.mxu0 0.0
  %694 = vmatpush.msra.mxu0 0.0
  %695 = vmatpush.msra.mxu0 0.0
  %696 = vmatpush.msra.mxu0 0.0
  %697 = vmatpush.msra.mxu0 0.0
  %698 = vmatpush.msra.mxu0 0.0
  %699 = vmatpush.msra.mxu0 %v679
  %700 = vmatpush.msra.mxu0 %v678
  %701 = vmatmul.f32.gmra.mxu0 %v627
  %v702 = vpop.f32.mrf.mxu0
  %v703 = vadd.f32 %v683, %v702
  %704 = vdwg.mxu0
  %v705 = vadd.f32 %v500, %v647
  %v706 = vsub.f32 0.0, %v705
  %v707 = vmul.f32 %v706, 1.442695
  %v708 = vpow.pop %v707
  %v709 = vadd.f32 %v708, 1.0
  %v710 = vrcp.pop %v709
  %v711 = vmul.f32 %v709, %v710
  %v712 = vsub.f32 1.0, %v711
  %v713 = vmul.f32 %v710, %v712
  %v714 = vadd.f32 %v710, %v713
  %vm715 = vweird.f32 %v709
  %vm716 = vweird.f32 %v710
  %vm717 = vmor %vm715, %vm716
  %v718 = vsel %vm717, %v710, %v714
  %v719 = vand.u32 2147483647, %v709
  %vm720 = vcmp.eq.f32.partialorder %v719, 8.507059e+37
  %v721 = vand.u32 %v709, 2147483648
  %v722 = vor.u32 1.1754944e-38, %v721
  %v723 = vsel %vm720, %v722, %v718
  %v724 = vmul.f32 1.0, %v723
  %v725 = vadd.f32 %v559, %v675
  %v726 = vsub.f32 0.0, %v725
  %v727 = vmul.f32 %v726, 1.442695
  %v728 = vpow.pop %v727
  %v729 = vadd.f32 %v728, 1.0
  %v730 = vrcp.pop %v729
  %v731 = vmul.f32 %v729, %v730
  %v732 = vsub.f32 1.0, %v731
  %v733 = vmul.f32 %v730, %v732
  %v734 = vadd.f32 %v730, %v733
  %vm735 = vweird.f32 %v729
  %vm736 = vweird.f32 %v730
  %vm737 = vmor %vm735, %vm736
  %v738 = vsel %vm737, %v730, %v734
  %v739 = vand.u32 2147483647, %v729
  %vm740 = vcmp.eq.f32.partialorder %v739, 8.507059e+37
  %v741 = vand.u32 %v729, 2147483648
  %v742 = vor.u32 1.1754944e-38, %v741
  %v743 = vsel %vm740, %v742, %v738
  %v744 = vmul.f32 1.0, %v743
  %v745 = vmul.f32 %v724, %v703
  %v746 = vadd.f32 %v618, %v745
  %v747 = vtanh.pop %v746
  %v748 = vsub.f32 1.0, %v744
  %v749 = vmul.f32 %v748, %v747
  %v750 = vmul.f32 %v744, 0.0
  %v751 = vadd.f32 %v749, %v750
  %v752 = vld [vmem:[%s9] sm:$0xff]
  %v753 = vld [vmem:[%s9 + $0x8] sm:$0xff]
  %v754 = vld [vmem:[%s10] sm:$0x1]
  %v756 = vperm.slane %v754, 0
  %v759 = vsel %vm64, %v751, 0
  %761 = vmatpush.msra.mxu0 0.0
  %762 = vmatpush.msra.mxu0 0.0
  %763 = vmatpush.msra.mxu0 0.0
  %764 = vmatpush.msra.mxu0 0.0
  %765 = vmatpush.msra.mxu0 0.0
  %766 = vmatpush.msra.mxu0 0.0
  %767 = vmatpush.msra.mxu0 0.0
  %768 = vmatpush.msra.mxu0 0.0
  %769 = vmatpush.msra.mxu0 0.0
  %770 = vmatpush.msra.mxu0 0.0
  %771 = vmatpush.msra.mxu0 0.0
  %772 = vmatpush.msra.mxu0 0.0
  %773 = vmatpush.msra.mxu0 0.0
  %774 = vmatpush.msra.mxu0 0.0
  %775 = vmatpush.msra.mxu0 %v753
  %776 = vmatpush.msra.mxu0 %v752
  %777 = vmatmul.f32.gmra.mxu0 %v759
  %v778 = vpop.f32.mrf.mxu0
  %v779 = vadd.f32 %v756, %v778
  %780 = vdwg.mxu0
  %s781 = scalar_lea.vmem %s9, 16
  %v782 = vld [vmem:[%s781] sm:$0xff]
  %v783 = vld [vmem:[%s781 + $0x8] sm:$0xff]
  %s784 = scalar_lea.vmem %s10, 1
  %v785 = vld [vmem:[%s784] sm:$0x1]
  %v787 = vperm.slane %v785, 0
  %789 = vmatpush.msra.mxu0 0.0
  %790 = vmatpush.msra.mxu0 0.0
  %791 = vmatpush.msra.mxu0 0.0
  %792 = vmatpush.msra.mxu0 0.0
  %793 = vmatpush.msra.mxu0 0.0
  %794 = vmatpush.msra.mxu0 0.0
  %795 = vmatpush.msra.mxu0 0.0
  %796 = vmatpush.msra.mxu0 0.0
  %797 = vmatpush.msra.mxu0 0.0
  %798 = vmatpush.msra.mxu0 0.0
  %799 = vmatpush.msra.mxu0 0.0
  %800 = vmatpush.msra.mxu0 0.0
  %801 = vmatpush.msra.mxu0 0.0
  %802 = vmatpush.msra.mxu0 0.0
  %803 = vmatpush.msra.mxu0 %v783
  %804 = vmatpush.msra.mxu0 %v782
  %805 = vmatmul.f32.gmra.mxu0 %v759
  %v806 = vpop.f32.mrf.mxu0
  %v807 = vadd.f32 %v787, %v806
  %808 = vdwg.mxu0
  %s809 = scalar_lea.vmem %s9, 32
  %v810 = vld [vmem:[%s809] sm:$0xff]
  %v811 = vld [vmem:[%s809 + $0x8] sm:$0xff]
  %s812 = scalar_lea.vmem %s10, 2
  %v813 = vld [vmem:[%s812] sm:$0x1]
  %v815 = vperm.slane %v813, 0
  %817 = vmatpush.msra.mxu0 0.0
  %818 = vmatpush.msra.mxu0 0.0
  %819 = vmatpush.msra.mxu0 0.0
  %820 = vmatpush.msra.mxu0 0.0
  %821 = vmatpush.msra.mxu0 0.0
  %822 = vmatpush.msra.mxu0 0.0
  %823 = vmatpush.msra.mxu0 0.0
  %824 = vmatpush.msra.mxu0 0.0
  %825 = vmatpush.msra.mxu0 0.0
  %826 = vmatpush.msra.mxu0 0.0
  %827 = vmatpush.msra.mxu0 0.0
  %828 = vmatpush.msra.mxu0 0.0
  %829 = vmatpush.msra.mxu0 0.0
  %830 = vmatpush.msra.mxu0 0.0
  %831 = vmatpush.msra.mxu0 %v811
  %832 = vmatpush.msra.mxu0 %v810
  %833 = vmatmul.f32.gmra.mxu0 %v759
  %v834 = vpop.f32.mrf.mxu0
  %v835 = vadd.f32 %v815, %v834
  %836 = vdwg.mxu0
  %v837 = vld [vmem:[%s11] sm:$0xff]
  %v838 = vld [vmem:[%s11 + $0x8] sm:$0xff]
  %v839 = vld [vmem:[%s12] sm:$0x1]
  %v841 = vperm.slane %v839, 0
  %843 = vmatpush.msra.mxu0 0.0
  %844 = vmatpush.msra.mxu0 0.0
  %845 = vmatpush.msra.mxu0 0.0
  %846 = vmatpush.msra.mxu0 0.0
  %847 = vmatpush.msra.mxu0 0.0
  %848 = vmatpush.msra.mxu0 0.0
  %849 = vmatpush.msra.mxu0 0.0
  %850 = vmatpush.msra.mxu0 0.0
  %851 = vmatpush.msra.mxu0 0.0
  %852 = vmatpush.msra.mxu0 0.0
  %853 = vmatpush.msra.mxu0 0.0
  %854 = vmatpush.msra.mxu0 0.0
  %855 = vmatpush.msra.mxu0 0.0
  %856 = vmatpush.msra.mxu0 0.0
  %857 = vmatpush.msra.mxu0 %v838
  %858 = vmatpush.msra.mxu0 %v837
  %859 = vmatmul.f32.gmra.mxu0 %v627
  %v860 = vpop.f32.mrf.mxu0
  %v861 = vadd.f32 %v841, %v860
  %862 = vdwg.mxu0
  %s863 = scalar_lea.vmem %s11, 16
  %v864 = vld [vmem:[%s863] sm:$0xff]
  %v865 = vld [vmem:[%s863 + $0x8] sm:$0xff]
  %s866 = scalar_lea.vmem %s12, 1
  %v867 = vld [vmem:[%s866] sm:$0x1]
  %v869 = vperm.slane %v867, 0
  %871 = vmatpush.msra.mxu0 0.0
  %872 = vmatpush.msra.mxu0 0.0
  %873 = vmatpush.msra.mxu0 0.0
  %874 = vmatpush.msra.mxu0 0.0
  %875 = vmatpush.msra.mxu0 0.0
  %876 = vmatpush.msra.mxu0 0.0
  %877 = vmatpush.msra.mxu0 0.0
  %878 = vmatpush.msra.mxu0 0.0
  %879 = vmatpush.msra.mxu0 0.0
  %880 = vmatpush.msra.mxu0 0.0
  %881 = vmatpush.msra.mxu0 0.0
  %882 = vmatpush.msra.mxu0 0.0
  %883 = vmatpush.msra.mxu0 0.0
  %884 = vmatpush.msra.mxu0 0.0
  %885 = vmatpush.msra.mxu0 %v865
  %886 = vmatpush.msra.mxu0 %v864
  %887 = vmatmul.f32.gmra.mxu0 %v627
  %v888 = vpop.f32.mrf.mxu0
  %v889 = vadd.f32 %v869, %v888
  %890 = vdwg.mxu0
  %s891 = scalar_lea.vmem %s11, 32
  %v892 = vld [vmem:[%s891] sm:$0xff]
  %v893 = vld [vmem:[%s891 + $0x8] sm:$0xff]
  %s894 = scalar_lea.vmem %s12, 2
  %v895 = vld [vmem:[%s894] sm:$0x1]
  %v897 = vperm.slane %v895, 0
  %899 = vmatpush.msra.mxu0 0.0
  %900 = vmatpush.msra.mxu0 0.0
  %901 = vmatpush.msra.mxu0 0.0
  %902 = vmatpush.msra.mxu0 0.0
  %903 = vmatpush.msra.mxu0 0.0
  %904 = vmatpush.msra.mxu0 0.0
  %905 = vmatpush.msra.mxu0 0.0
  %906 = vmatpush.msra.mxu0 0.0
  %907 = vmatpush.msra.mxu0 0.0
  %908 = vmatpush.msra.mxu0 0.0
  %909 = vmatpush.msra.mxu0 0.0
  %910 = vmatpush.msra.mxu0 0.0
  %911 = vmatpush.msra.mxu0 0.0
  %912 = vmatpush.msra.mxu0 0.0
  %913 = vmatpush.msra.mxu0 %v893
  %914 = vmatpush.msra.mxu0 %v892
  %915 = vmatmul.f32.gmra.mxu0 %v627
  %v916 = vpop.f32.mrf.mxu0
  %v917 = vadd.f32 %v897, %v916
  %918 = vdwg.mxu0
  %v919 = vadd.f32 %v779, %v861
  %v920 = vsub.f32 0.0, %v919
  %v921 = vmul.f32 %v920, 1.442695
  %v922 = vpow.pop %v921
  %v923 = vadd.f32 %v922, 1.0
  %v924 = vrcp.pop %v923
  %v925 = vmul.f32 %v923, %v924
  %v926 = vsub.f32 1.0, %v925
  %v927 = vmul.f32 %v924, %v926
  %v928 = vadd.f32 %v924, %v927
  %vm929 = vweird.f32 %v923
  %vm930 = vweird.f32 %v924
  %vm931 = vmor %vm929, %vm930
  %v932 = vsel %vm931, %v924, %v928
  %v933 = vand.u32 2147483647, %v923
  %vm934 = vcmp.eq.f32.partialorder %v933, 8.507059e+37
  %v935 = vand.u32 %v923, 2147483648
  %v936 = vor.u32 1.1754944e-38, %v935
  %v937 = vsel %vm934, %v936, %v932
  %v938 = vmul.f32 1.0, %v937
  %v939 = vadd.f32 %v807, %v889
  %v940 = vsub.f32 0.0, %v939
  %v941 = vmul.f32 %v940, 1.442695
  %v942 = vpow.pop %v941
  %v943 = vadd.f32 %v942, 1.0
  %v944 = vrcp.pop %v943
  %v945 = vmul.f32 %v943, %v944
  %v946 = vsub.f32 1.0, %v945
  %v947 = vmul.f32 %v944, %v946
  %v948 = vadd.f32 %v944, %v947
  %vm949 = vweird.f32 %v943
  %vm950 = vweird.f32 %v944
  %vm951 = vmor %vm949, %vm950
  %v952 = vsel %vm951, %v944, %v948
  %v953 = vand.u32 2147483647, %v943
  %vm954 = vcmp.eq.f32.partialorder %v953, 8.507059e+37
  %v955 = vand.u32 %v943, 2147483648
  %v956 = vor.u32 1.1754944e-38, %v955
  %v957 = vsel %vm954, %v956, %v952
  %v958 = vmul.f32 1.0, %v957
  %v959 = vmul.f32 %v938, %v917
  %v960 = vadd.f32 %v835, %v959
  %v961 = vtanh.pop %v960
  %v962 = vsub.f32 1.0, %v958
  %v963 = vmul.f32 %v962, %v961
  %v964 = vmul.f32 %v958, 0.0
  %v965 = vadd.f32 %v963, %v964
  %vm966 = vcmask 123904
  %967 = vst.msk [vmem:[#allocation2] sm:$0x3] %vm966, %v965
  %v968 = vld [vmem:[%s7] sm:$0xff]
  %v969 = vld [vmem:[%s7 + $0x8] sm:$0xff]
  %v970 = vld [vmem:[%s8] sm:$0x1]
  %v972 = vperm.slane %v970, 0
  %974 = vmatpush.msra.mxu0 0.0
  %975 = vmatpush.msra.mxu0 0.0
  %976 = vmatpush.msra.mxu0 0.0
  %977 = vmatpush.msra.mxu0 0.0
  %978 = vmatpush.msra.mxu0 0.0
  %979 = vmatpush.msra.mxu0 0.0
  %980 = vmatpush.msra.mxu0 0.0
  %981 = vmatpush.msra.mxu0 0.0
  %982 = vmatpush.msra.mxu0 0.0
  %983 = vmatpush.msra.mxu0 0.0
  %984 = vmatpush.msra.mxu0 0.0
  %985 = vmatpush.msra.mxu0 0.0
  %986 = vmatpush.msra.mxu0 0.0
  %987 = vmatpush.msra.mxu0 0.0
  %988 = vmatpush.msra.mxu0 %v969
  %989 = vmatpush.msra.mxu0 %v968
  %990 = vmatmul.f32.gmra.mxu0 %v759
  %v991 = vpop.f32.mrf.mxu0
  %v992 = vadd.f32 %v972, %v991
  %993 = vdwg.mxu0
  %v994 = vld [vmem:[%s649] sm:$0xff]
  %v995 = vld [vmem:[%s649 + $0x8] sm:$0xff]
  %v996 = vld [vmem:[%s652] sm:$0x1]
  %v998 = vperm.slane %v996, 0
  %1000 = vmatpush.msra.mxu0 0.0
  %1001 = vmatpush.msra.mxu0 0.0
  %1002 = vmatpush.msra.mxu0 0.0
  %1003 = vmatpush.msra.mxu0 0.0
  %1004 = vmatpush.msra.mxu0 0.0
  %1005 = vmatpush.msra.mxu0 0.0
  %1006 = vmatpush.msra.mxu0 0.0
  %1007 = vmatpush.msra.mxu0 0.0
  %1008 = vmatpush.msra.mxu0 0.0
  %1009 = vmatpush.msra.mxu0 0.0
  %1010 = vmatpush.msra.mxu0 0.0
  %1011 = vmatpush.msra.mxu0 0.0
  %1012 = vmatpush.msra.mxu0 0.0
  %1013 = vmatpush.msra.mxu0 0.0
  %1014 = vmatpush.msra.mxu0 %v995
  %1015 = vmatpush.msra.mxu0 %v994
  %1016 = vmatmul.f32.gmra.mxu0 %v759
  %v1017 = vpop.f32.mrf.mxu0
  %v1018 = vadd.f32 %v998, %v1017
  %1019 = vdwg.mxu0
  %v1020 = vld [vmem:[%s677] sm:$0xff]
  %v1021 = vld [vmem:[%s677 + $0x8] sm:$0xff]
  %v1022 = vld [vmem:[%s680] sm:$0x1]
  %v1024 = vperm.slane %v1022, 0
  %1026 = vmatpush.msra.mxu0 0.0
  %1027 = vmatpush.msra.mxu0 0.0
  %1028 = vmatpush.msra.mxu0 0.0
  %1029 = vmatpush.msra.mxu0 0.0
  %1030 = vmatpush.msra.mxu0 0.0
  %1031 = vmatpush.msra.mxu0 0.0
  %1032 = vmatpush.msra.mxu0 0.0
  %1033 = vmatpush.msra.mxu0 0.0
  %1034 = vmatpush.msra.mxu0 0.0
  %1035 = vmatpush.msra.mxu0 0.0
  %1036 = vmatpush.msra.mxu0 0.0
  %1037 = vmatpush.msra.mxu0 0.0
  %1038 = vmatpush.msra.mxu0 0.0
  %1039 = vmatpush.msra.mxu0 0.0
  %1040 = vmatpush.msra.mxu0 %v1021
  %1041 = vmatpush.msra.mxu0 %v1020
  %1042 = vmatmul.f32.gmra.mxu0 %v759
  %v1043 = vpop.f32.mrf.mxu0
  %v1044 = vadd.f32 %v1024, %v1043
  %1045 = vdwg.mxu0
  %v1047 = vrot.slane %v992, 6
  %v1049 = vadd.f32 %v500, %v1047
  %v1050 = vsub.f32 0.0, %v1049
  %v1051 = vmul.f32 %v1050, 1.442695
  %v1052 = vpow.pop %v1051
  %v1053 = vadd.f32 %v1052, 1.0
  %v1054 = vrcp.pop %v1053
  %v1055 = vmul.f32 %v1053, %v1054
  %v1056 = vsub.f32 1.0, %v1055
  %v1057 = vmul.f32 %v1054, %v1056
  %v1058 = vadd.f32 %v1054, %v1057
  %vm1059 = vweird.f32 %v1053
  %vm1060 = vweird.f32 %v1054
  %vm1061 = vmor %vm1059, %vm1060
  %v1062 = vsel %vm1061, %v1054, %v1058
  %v1063 = vand.u32 2147483647, %v1053
  %vm1064 = vcmp.eq.f32.partialorder %v1063, 8.507059e+37
  %v1065 = vand.u32 %v1053, 2147483648
  %v1066 = vor.u32 1.1754944e-38, %v1065
  %v1067 = vsel %vm1064, %v1066, %v1062
  %v1068 = vmul.f32 1.0, %v1067
  %v1070 = vrot.slane %v1018, 6
  %v1072 = vadd.f32 %v559, %v1070
  %v1073 = vsub.f32 0.0, %v1072
  %v1074 = vmul.f32 %v1073, 1.442695
  %v1075 = vpow.pop %v1074
  %v1076 = vadd.f32 %v1075, 1.0
  %v1077 = vrcp.pop %v1076
  %v1078 = vmul.f32 %v1076, %v1077
  %v1079 = vsub.f32 1.0, %v1078
  %v1080 = vmul.f32 %v1077, %v1079
  %v1081 = vadd.f32 %v1077, %v1080
  %vm1082 = vweird.f32 %v1076
  %vm1083 = vweird.f32 %v1077
  %vm1084 = vmor %vm1082, %vm1083
  %v1085 = vsel %vm1084, %v1077, %v1081
  %v1086 = vand.u32 2147483647, %v1076
  %vm1087 = vcmp.eq.f32.partialorder %v1086, 8.507059e+37
  %v1088 = vand.u32 %v1076, 2147483648
  %v1089 = vor.u32 1.1754944e-38, %v1088
  %v1090 = vsel %vm1087, %v1089, %v1085
  %v1091 = vmul.f32 1.0, %v1090
  %v1093 = vrot.slane %v1044, 6
  %v1095 = vmul.f32 %v1068, %v1093
  %v1096 = vadd.f32 %v618, %v1095
  %v1097 = vtanh.pop %v1096
  %v1098 = vsub.f32 1.0, %v1091
  %v1099 = vmul.f32 %v1098, %v1097
  %v1100 = vrot.slane %v751, 6
  %v1102 = vmul.f32 %v1091, %v1100
  %v1103 = vadd.f32 %v1099, %v1102
  %v1104 = vld [vmem:[%s9] sm:$0xff]
  %v1105 = vld [vmem:[%s9 + $0x8] sm:$0xff]
  %v1106 = vld [vmem:[%s10] sm:$0x1]
  %v1108 = vperm.slane %v1106, 0
  %v1111 = vrot.slane %v1103, 2
  %v1112 = vsel %vm64, %v1111, 0
  %1114 = vmatpush.msra.mxu0 0.0
  %1115 = vmatpush.msra.mxu0 0.0
  %1116 = vmatpush.msra.mxu0 0.0
  %1117 = vmatpush.msra.mxu0 0.0
  %1118 = vmatpush.msra.mxu0 0.0
  %1119 = vmatpush.msra.mxu0 0.0
  %1120 = vmatpush.msra.mxu0 0.0
  %1121 = vmatpush.msra.mxu0 0.0
  %1122 = vmatpush.msra.mxu0 0.0
  %1123 = vmatpush.msra.mxu0 0.0
  %1124 = vmatpush.msra.mxu0 0.0
  %1125 = vmatpush.msra.mxu0 0.0
  %1126 = vmatpush.msra.mxu0 0.0
  %1127 = vmatpush.msra.mxu0 0.0
  %1128 = vmatpush.msra.mxu0 %v1105
  %1129 = vmatpush.msra.mxu0 %v1104
  %1130 = vmatmul.f32.gmra.mxu0 %v1112
  %v1131 = vpop.f32.mrf.mxu0
  %v1132 = vadd.f32 %v1108, %v1131
  %1133 = vdwg.mxu0
  %v1134 = vld [vmem:[%s781] sm:$0xff]
  %v1135 = vld [vmem:[%s781 + $0x8] sm:$0xff]
  %v1136 = vld [vmem:[%s784] sm:$0x1]
  %v1138 = vperm.slane %v1136, 0
  %1140 = vmatpush.msra.mxu0 0.0
  %1141 = vmatpush.msra.mxu0 0.0
  %1142 = vmatpush.msra.mxu0 0.0
  %1143 = vmatpush.msra.mxu0 0.0
  %1144 = vmatpush.msra.mxu0 0.0
  %1145 = vmatpush.msra.mxu0 0.0
  %1146 = vmatpush.msra.mxu0 0.0
  %1147 = vmatpush.msra.mxu0 0.0
  %1148 = vmatpush.msra.mxu0 0.0
  %1149 = vmatpush.msra.mxu0 0.0
  %1150 = vmatpush.msra.mxu0 0.0
  %1151 = vmatpush.msra.mxu0 0.0
  %1152 = vmatpush.msra.mxu0 0.0
  %1153 = vmatpush.msra.mxu0 0.0
  %1154 = vmatpush.msra.mxu0 %v1135
  %1155 = vmatpush.msra.mxu0 %v1134
  %1156 = vmatmul.f32.gmra.mxu0 %v1112
  %v1157 = vpop.f32.mrf.mxu0
  %v1158 = vadd.f32 %v1138, %v1157
  %1159 = vdwg.mxu0
  %v1160 = vld [vmem:[%s809] sm:$0xff]
  %v1161 = vld [vmem:[%s809 + $0x8] sm:$0xff]
  %v1162 = vld [vmem:[%s812] sm:$0x1]
  %v1164 = vperm.slane %v1162, 0
  %1166 = vmatpush.msra.mxu0 0.0
  %1167 = vmatpush.msra.mxu0 0.0
  %1168 = vmatpush.msra.mxu0 0.0
  %1169 = vmatpush.msra.mxu0 0.0
  %1170 = vmatpush.msra.mxu0 0.0
  %1171 = vmatpush.msra.mxu0 0.0
  %1172 = vmatpush.msra.mxu0 0.0
  %1173 = vmatpush.msra.mxu0 0.0
  %1174 = vmatpush.msra.mxu0 0.0
  %1175 = vmatpush.msra.mxu0 0.0
  %1176 = vmatpush.msra.mxu0 0.0
  %1177 = vmatpush.msra.mxu0 0.0
  %1178 = vmatpush.msra.mxu0 0.0
  %1179 = vmatpush.msra.mxu0 0.0
  %1180 = vmatpush.msra.mxu0 %v1161
  %1181 = vmatpush.msra.mxu0 %v1160
  %1182 = vmatmul.f32.gmra.mxu0 %v1112
  %v1183 = vpop.f32.mrf.mxu0
  %v1184 = vadd.f32 %v1164, %v1183
  %1185 = vdwg.mxu0
  %v1186 = vld [vmem:[%s11] sm:$0xff]
  %v1187 = vld [vmem:[%s11 + $0x8] sm:$0xff]
  %v1188 = vld [vmem:[%s12] sm:$0x1]
  %v1190 = vperm.slane %v1188, 0
  %v1193 = vsel %vm64, %v965, 0
  %1195 = vmatpush.msra.mxu0 0.0
  %1196 = vmatpush.msra.mxu0 0.0
  %1197 = vmatpush.msra.mxu0 0.0
  %1198 = vmatpush.msra.mxu0 0.0
  %1199 = vmatpush.msra.mxu0 0.0
  %1200 = vmatpush.msra.mxu0 0.0
  %1201 = vmatpush.msra.mxu0 0.0
  %1202 = vmatpush.msra.mxu0 0.0
  %1203 = vmatpush.msra.mxu0 0.0
  %1204 = vmatpush.msra.mxu0 0.0
  %1205 = vmatpush.msra.mxu0 0.0
  %1206 = vmatpush.msra.mxu0 0.0
  %1207 = vmatpush.msra.mxu0 0.0
  %1208 = vmatpush.msra.mxu0 0.0
  %1209 = vmatpush.msra.mxu0 %v1187
  %1210 = vmatpush.msra.mxu0 %v1186
  %1211 = vmatmul.f32.gmra.mxu0 %v1193
  %v1212 = vpop.f32.mrf.mxu0
  %v1213 = vadd.f32 %v1190, %v1212
  %1214 = vdwg.mxu0
  %v1215 = vld [vmem:[%s863] sm:$0xff]
  %v1216 = vld [vmem:[%s863 + $0x8] sm:$0xff]
  %v1217 = vld [vmem:[%s866] sm:$0x1]
  %v1219 = vperm.slane %v1217, 0
  %1221 = vmatpush.msra.mxu0 0.0
  %1222 = vmatpush.msra.mxu0 0.0
  %1223 = vmatpush.msra.mxu0 0.0
  %1224 = vmatpush.msra.mxu0 0.0
  %1225 = vmatpush.msra.mxu0 0.0
  %1226 = vmatpush.msra.mxu0 0.0
  %1227 = vmatpush.msra.mxu0 0.0
  %1228 = vmatpush.msra.mxu0 0.0
  %1229 = vmatpush.msra.mxu0 0.0
  %1230 = vmatpush.msra.mxu0 0.0
  %1231 = vmatpush.msra.mxu0 0.0
  %1232 = vmatpush.msra.mxu0 0.0
  %1233 = vmatpush.msra.mxu0 0.0
  %1234 = vmatpush.msra.mxu0 0.0
  %1235 = vmatpush.msra.mxu0 %v1216
  %1236 = vmatpush.msra.mxu0 %v1215
  %1237 = vmatmul.f32.gmra.mxu0 %v1193
  %v1238 = vpop.f32.mrf.mxu0
  %v1239 = vadd.f32 %v1219, %v1238
  %1240 = vdwg.mxu0
  %v1241 = vld [vmem:[%s891] sm:$0xff]
  %v1242 = vld [vmem:[%s891 + $0x8] sm:$0xff]
  %v1243 = vld [vmem:[%s894] sm:$0x1]
  %v1245 = vperm.slane %v1243, 0
  %1247 = vmatpush.msra.mxu0 0.0
  %1248 = vmatpush.msra.mxu0 0.0
  %1249 = vmatpush.msra.mxu0 0.0
  %1250 = vmatpush.msra.mxu0 0.0
  %1251 = vmatpush.msra.mxu0 0.0
  %1252 = vmatpush.msra.mxu0 0.0
  %1253 = vmatpush.msra.mxu0 0.0
  %1254 = vmatpush.msra.mxu0 0.0
  %1255 = vmatpush.msra.mxu0 0.0
  %1256 = vmatpush.msra.mxu0 0.0
  %1257 = vmatpush.msra.mxu0 0.0
  %1258 = vmatpush.msra.mxu0 0.0
  %1259 = vmatpush.msra.mxu0 0.0
  %1260 = vmatpush.msra.mxu0 0.0
  %1261 = vmatpush.msra.mxu0 %v1242
  %1262 = vmatpush.msra.mxu0 %v1241
  %1263 = vmatmul.f32.gmra.mxu0 %v1193
  %v1264 = vpop.f32.mrf.mxu0
  %v1265 = vadd.f32 %v1245, %v1264
  %1266 = vdwg.mxu0
  %v1267 = vadd.f32 %v1132, %v1213
  %v1268 = vsub.f32 0.0, %v1267
  %v1269 = vmul.f32 %v1268, 1.442695
  %v1270 = vpow.pop %v1269
  %v1271 = vadd.f32 %v1270, 1.0
  %v1272 = vrcp.pop %v1271
  %v1273 = vmul.f32 %v1271, %v1272
  %v1274 = vsub.f32 1.0, %v1273
  %v1275 = vmul.f32 %v1272, %v1274
  %v1276 = vadd.f32 %v1272, %v1275
  %vm1277 = vweird.f32 %v1271
  %vm1278 = vweird.f32 %v1272
  %vm1279 = vmor %vm1277, %vm1278
  %v1280 = vsel %vm1279, %v1272, %v1276
  %v1281 = vand.u32 2147483647, %v1271
  %vm1282 = vcmp.eq.f32.partialorder %v1281, 8.507059e+37
  %v1283 = vand.u32 %v1271, 2147483648
  %v1284 = vor.u32 1.1754944e-38, %v1283
  %v1285 = vsel %vm1282, %v1284, %v1280
  %v1286 = vmul.f32 1.0, %v1285
  %v1287 = vadd.f32 %v1158, %v1239
  %v1288 = vsub.f32 0.0, %v1287
  %v1289 = vmul.f32 %v1288, 1.442695
  %v1290 = vpow.pop %v1289
  %v1291 = vadd.f32 %v1290, 1.0
  %v1292 = vrcp.pop %v1291
  %v1293 = vmul.f32 %v1291, %v1292
  %v1294 = vsub.f32 1.0, %v1293
  %v1295 = vmul.f32 %v1292, %v1294
  %v1296 = vadd.f32 %v1292, %v1295
  %vm1297 = vweird.f32 %v1291
  %vm1298 = vweird.f32 %v1292
  %vm1299 = vmor %vm1297, %vm1298
  %v1300 = vsel %vm1299, %v1292, %v1296
  %v1301 = vand.u32 2147483647, %v1291
  %vm1302 = vcmp.eq.f32.partialorder %v1301, 8.507059e+37
  %v1303 = vand.u32 %v1291, 2147483648
  %v1304 = vor.u32 1.1754944e-38, %v1303
  %v1305 = vsel %vm1302, %v1304, %v1300
  %v1306 = vmul.f32 1.0, %v1305
  %v1307 = vmul.f32 %v1286, %v1265
  %v1308 = vadd.f32 %v1184, %v1307
  %v1309 = vtanh.pop %v1308
  %v1310 = vsub.f32 1.0, %v1306
  %v1311 = vmul.f32 %v1310, %v1309
  %v1312 = vmul.f32 %v1306, %v965
  %v1313 = vadd.f32 %v1311, %v1312
  %1314 = vst.msk [vmem:[#allocation2 + $0x2] sm:$0x3] %vm966, %v1313
  %v1315 = vld [vmem:[%s7] sm:$0xff]
  %v1316 = vld [vmem:[%s7 + $0x8] sm:$0xff]
  %v1317 = vld [vmem:[%s8] sm:$0x1]
  %v1319 = vperm.slane %v1317, 0
  %1321 = vmatpush.msra.mxu0 0.0
  %1322 = vmatpush.msra.mxu0 0.0
  %1323 = vmatpush.msra.mxu0 0.0
  %1324 = vmatpush.msra.mxu0 0.0
  %1325 = vmatpush.msra.mxu0 0.0
  %1326 = vmatpush.msra.mxu0 0.0
  %1327 = vmatpush.msra.mxu0 0.0
  %1328 = vmatpush.msra.mxu0 0.0
  %1329 = vmatpush.msra.mxu0 0.0
  %1330 = vmatpush.msra.mxu0 0.0
  %1331 = vmatpush.msra.mxu0 0.0
  %1332 = vmatpush.msra.mxu0 0.0
  %1333 = vmatpush.msra.mxu0 0.0
  %1334 = vmatpush.msra.mxu0 0.0
  %1335 = vmatpush.msra.mxu0 %v1316
  %1336 = vmatpush.msra.mxu0 %v1315
  %1337 = vmatmul.f32.gmra.mxu0 %v1112
  %v1338 = vpop.f32.mrf.mxu0
  %v1339 = vadd.f32 %v1319, %v1338
  %1340 = vdwg.mxu0
  %v1341 = vld [vmem:[%s649] sm:$0xff]
  %v1342 = vld [vmem:[%s649 + $0x8] sm:$0xff]
  %v1343 = vld [vmem:[%s652] sm:$0x1]
  %v1345 = vperm.slane %v1343, 0
  %1347 = vmatpush.msra.mxu0 0.0
  %1348 = vmatpush.msra.mxu0 0.0
  %1349 = vmatpush.msra.mxu0 0.0
  %1350 = vmatpush.msra.mxu0 0.0
  %1351 = vmatpush.msra.mxu0 0.0
  %1352 = vmatpush.msra.mxu0 0.0
  %1353 = vmatpush.msra.mxu0 0.0
  %1354 = vmatpush.msra.mxu0 0.0
  %1355 = vmatpush.msra.mxu0 0.0
  %1356 = vmatpush.msra.mxu0 0.0
  %1357 = vmatpush.msra.mxu0 0.0
  %1358 = vmatpush.msra.mxu0 0.0
  %1359 = vmatpush.msra.mxu0 0.0
  %1360 = vmatpush.msra.mxu0 0.0
  %1361 = vmatpush.msra.mxu0 %v1342
  %1362 = vmatpush.msra.mxu0 %v1341
  %1363 = vmatmul.f32.gmra.mxu0 %v1112
  %v1364 = vpop.f32.mrf.mxu0
  %v1365 = vadd.f32 %v1345, %v1364
  %1366 = vdwg.mxu0
  %v1367 = vld [vmem:[%s677] sm:$0xff]
  %v1368 = vld [vmem:[%s677 + $0x8] sm:$0xff]
  %v1369 = vld [vmem:[%s680] sm:$0x1]
  %v1371 = vperm.slane %v1369, 0
  %1373 = vmatpush.msra.mxu0 0.0
  %1374 = vmatpush.msra.mxu0 0.0
  %1375 = vmatpush.msra.mxu0 0.0
  %1376 = vmatpush.msra.mxu0 0.0
  %1377 = vmatpush.msra.mxu0 0.0
  %1378 = vmatpush.msra.mxu0 0.0
  %1379 = vmatpush.msra.mxu0 0.0
  %1380 = vmatpush.msra.mxu0 0.0
  %1381 = vmatpush.msra.mxu0 0.0
  %1382 = vmatpush.msra.mxu0 0.0
  %1383 = vmatpush.msra.mxu0 0.0
  %1384 = vmatpush.msra.mxu0 0.0
  %1385 = vmatpush.msra.mxu0 0.0
  %1386 = vmatpush.msra.mxu0 0.0
  %1387 = vmatpush.msra.mxu0 %v1368
  %1388 = vmatpush.msra.mxu0 %v1367
  %1389 = vmatmul.f32.gmra.mxu0 %v1112
  %v1390 = vpop.f32.mrf.mxu0
  %v1391 = vadd.f32 %v1371, %v1390
  %1392 = vdwg.mxu0
  %v1394 = vrot.slane %v1339, 4
  %v1396 = vadd.f32 %v500, %v1394
  %v1397 = vsub.f32 0.0, %v1396
  %v1398 = vmul.f32 %v1397, 1.442695
  %v1399 = vpow.pop %v1398
  %v1400 = vadd.f32 %v1399, 1.0
  %v1401 = vrcp.pop %v1400
  %v1402 = vmul.f32 %v1400, %v1401
  %v1403 = vsub.f32 1.0, %v1402
  %v1404 = vmul.f32 %v1401, %v1403
  %v1405 = vadd.f32 %v1401, %v1404
  %vm1406 = vweird.f32 %v1400
  %vm1407 = vweird.f32 %v1401
  %vm1408 = vmor %vm1406, %vm1407
  %v1409 = vsel %vm1408, %v1401, %v1405
  %v1410 = vand.u32 2147483647, %v1400
  %vm1411 = vcmp.eq.f32.partialorder %v1410, 8.507059e+37
  %v1412 = vand.u32 %v1400, 2147483648
  %v1413 = vor.u32 1.1754944e-38, %v1412
  %v1414 = vsel %vm1411, %v1413, %v1409
  %v1415 = vmul.f32 1.0, %v1414
  %v1417 = vrot.slane %v1365, 4
  %v1419 = vadd.f32 %v559, %v1417
  %v1420 = vsub.f32 0.0, %v1419
  %v1421 = vmul.f32 %v1420, 1.442695
  %v1422 = vpow.pop %v1421
  %v1423 = vadd.f32 %v1422, 1.0
  %v1424 = vrcp.pop %v1423
  %v1425 = vmul.f32 %v1423, %v1424
  %v1426 = vsub.f32 1.0, %v1425
  %v1427 = vmul.f32 %v1424, %v1426
  %v1428 = vadd.f32 %v1424, %v1427
  %vm1429 = vweird.f32 %v1423
  %vm1430 = vweird.f32 %v1424
  %vm1431 = vmor %vm1429, %vm1430
  %v1432 = vsel %vm1431, %v1424, %v1428
  %v1433 = vand.u32 2147483647, %v1423
  %vm1434 = vcmp.eq.f32.partialorder %v1433, 8.507059e+37
  %v1435 = vand.u32 %v1423, 2147483648
  %v1436 = vor.u32 1.1754944e-38, %v1435
  %v1437 = vsel %vm1434, %v1436, %v1432
  %v1438 = vmul.f32 1.0, %v1437
  %v1440 = vrot.slane %v1391, 4
  %v1442 = vmul.f32 %v1415, %v1440
  %v1443 = vadd.f32 %v618, %v1442
  %v1444 = vtanh.pop %v1443
  %v1445 = vsub.f32 1.0, %v1438
  %v1446 = vmul.f32 %v1445, %v1444
  %v1447 = vrot.slane %v1103, 6
  %v1449 = vmul.f32 %v1438, %v1447
  %v1450 = vadd.f32 %v1446, %v1449
  %v1451 = vld [vmem:[%s9] sm:$0xff]
  %v1452 = vld [vmem:[%s9 + $0x8] sm:$0xff]
  %v1453 = vld [vmem:[%s10] sm:$0x1]
  %v1455 = vperm.slane %v1453, 0
  %v1458 = vrot.slane %v1450, 4
  %v1459 = vsel %vm64, %v1458, 0
  %1461 = vmatpush.msra.mxu0 0.0
  %1462 = vmatpush.msra.mxu0 0.0
  %1463 = vmatpush.msra.mxu0 0.0
  %1464 = vmatpush.msra.mxu0 0.0
  %1465 = vmatpush.msra.mxu0 0.0
  %1466 = vmatpush.msra.mxu0 0.0
  %1467 = vmatpush.msra.mxu0 0.0
  %1468 = vmatpush.msra.mxu0 0.0
  %1469 = vmatpush.msra.mxu0 0.0
  %1470 = vmatpush.msra.mxu0 0.0
  %1471 = vmatpush.msra.mxu0 0.0
  %1472 = vmatpush.msra.mxu0 0.0
  %1473 = vmatpush.msra.mxu0 0.0
  %1474 = vmatpush.msra.mxu0 0.0
  %1475 = vmatpush.msra.mxu0 %v1452
  %1476 = vmatpush.msra.mxu0 %v1451
  %1477 = vmatmul.f32.gmra.mxu0 %v1459
  %v1478 = vpop.f32.mrf.mxu0
  %v1479 = vadd.f32 %v1455, %v1478
  %1480 = vdwg.mxu0
  %v1481 = vld [vmem:[%s781] sm:$0xff]
  %v1482 = vld [vmem:[%s781 + $0x8] sm:$0xff]
  %v1483 = vld [vmem:[%s784] sm:$0x1]
  %v1485 = vperm.slane %v1483, 0
  %1487 = vmatpush.msra.mxu0 0.0
  %1488 = vmatpush.msra.mxu0 0.0
  %1489 = vmatpush.msra.mxu0 0.0
  %1490 = vmatpush.msra.mxu0 0.0
  %1491 = vmatpush.msra.mxu0 0.0
  %1492 = vmatpush.msra.mxu0 0.0
  %1493 = vmatpush.msra.mxu0 0.0
  %1494 = vmatpush.msra.mxu0 0.0
  %1495 = vmatpush.msra.mxu0 0.0
  %1496 = vmatpush.msra.mxu0 0.0
  %1497 = vmatpush.msra.mxu0 0.0
  %1498 = vmatpush.msra.mxu0 0.0
  %1499 = vmatpush.msra.mxu0 0.0
  %1500 = vmatpush.msra.mxu0 0.0
  %1501 = vmatpush.msra.mxu0 %v1482
  %1502 = vmatpush.msra.mxu0 %v1481
  %1503 = vmatmul.f32.gmra.mxu0 %v1459
  %v1504 = vpop.f32.mrf.mxu0
  %v1505 = vadd.f32 %v1485, %v1504
  %1506 = vdwg.mxu0
  %v1507 = vld [vmem:[%s809] sm:$0xff]
  %v1508 = vld [vmem:[%s809 + $0x8] sm:$0xff]
  %v1509 = vld [vmem:[%s812] sm:$0x1]
  %v1511 = vperm.slane %v1509, 0
  %1513 = vmatpush.msra.mxu0 0.0
  %1514 = vmatpush.msra.mxu0 0.0
  %1515 = vmatpush.msra.mxu0 0.0
  %1516 = vmatpush.msra.mxu0 0.0
  %1517 = vmatpush.msra.mxu0 0.0
  %1518 = vmatpush.msra.mxu0 0.0
  %1519 = vmatpush.msra.mxu0 0.0
  %1520 = vmatpush.msra.mxu0 0.0
  %1521 = vmatpush.msra.mxu0 0.0
  %1522 = vmatpush.msra.mxu0 0.0
  %1523 = vmatpush.msra.mxu0 0.0
  %1524 = vmatpush.msra.mxu0 0.0
  %1525 = vmatpush.msra.mxu0 0.0
  %1526 = vmatpush.msra.mxu0 0.0
  %1527 = vmatpush.msra.mxu0 %v1508
  %1528 = vmatpush.msra.mxu0 %v1507
  %1529 = vmatmul.f32.gmra.mxu0 %v1459
  %v1530 = vpop.f32.mrf.mxu0
  %v1531 = vadd.f32 %v1511, %v1530
  %1532 = vdwg.mxu0
  %v1533 = vld [vmem:[%s11] sm:$0xff]
  %v1534 = vld [vmem:[%s11 + $0x8] sm:$0xff]
  %v1535 = vld [vmem:[%s12] sm:$0x1]
  %v1537 = vperm.slane %v1535, 0
  %v1540 = vsel %vm64, %v1313, 0
  %1542 = vmatpush.msra.mxu0 0.0
  %1543 = vmatpush.msra.mxu0 0.0
  %1544 = vmatpush.msra.mxu0 0.0
  %1545 = vmatpush.msra.mxu0 0.0
  %1546 = vmatpush.msra.mxu0 0.0
  %1547 = vmatpush.msra.mxu0 0.0
  %1548 = vmatpush.msra.mxu0 0.0
  %1549 = vmatpush.msra.mxu0 0.0
  %1550 = vmatpush.msra.mxu0 0.0
  %1551 = vmatpush.msra.mxu0 0.0
  %1552 = vmatpush.msra.mxu0 0.0
  %1553 = vmatpush.msra.mxu0 0.0
  %1554 = vmatpush.msra.mxu0 0.0
  %1555 = vmatpush.msra.mxu0 0.0
  %1556 = vmatpush.msra.mxu0 %v1534
  %1557 = vmatpush.msra.mxu0 %v1533
  %1558 = vmatmul.f32.gmra.mxu0 %v1540
  %v1559 = vpop.f32.mrf.mxu0
  %v1560 = vadd.f32 %v1537, %v1559
  %1561 = vdwg.mxu0
  %v1562 = vld [vmem:[%s863] sm:$0xff]
  %v1563 = vld [vmem:[%s863 + $0x8] sm:$0xff]
  %v1564 = vld [vmem:[%s866] sm:$0x1]
  %v1566 = vperm.slane %v1564, 0
  %1568 = vmatpush.msra.mxu0 0.0
  %1569 = vmatpush.msra.mxu0 0.0
  %1570 = vmatpush.msra.mxu0 0.0
  %1571 = vmatpush.msra.mxu0 0.0
  %1572 = vmatpush.msra.mxu0 0.0
  %1573 = vmatpush.msra.mxu0 0.0
  %1574 = vmatpush.msra.mxu0 0.0
  %1575 = vmatpush.msra.mxu0 0.0
  %1576 = vmatpush.msra.mxu0 0.0
  %1577 = vmatpush.msra.mxu0 0.0
  %1578 = vmatpush.msra.mxu0 0.0
  %1579 = vmatpush.msra.mxu0 0.0
  %1580 = vmatpush.msra.mxu0 0.0
  %1581 = vmatpush.msra.mxu0 0.0
  %1582 = vmatpush.msra.mxu0 %v1563
  %1583 = vmatpush.msra.mxu0 %v1562
  %1584 = vmatmul.f32.gmra.mxu0 %v1540
  %v1585 = vpop.f32.mrf.mxu0
  %v1586 = vadd.f32 %v1566, %v1585
  %1587 = vdwg.mxu0
  %v1588 = vld [vmem:[%s891] sm:$0xff]
  %v1589 = vld [vmem:[%s891 + $0x8] sm:$0xff]
  %v1590 = vld [vmem:[%s894] sm:$0x1]
  %v1592 = vperm.slane %v1590, 0
  %1594 = vmatpush.msra.mxu0 0.0
  %1595 = vmatpush.msra.mxu0 0.0
  %1596 = vmatpush.msra.mxu0 0.0
  %1597 = vmatpush.msra.mxu0 0.0
  %1598 = vmatpush.msra.mxu0 0.0
  %1599 = vmatpush.msra.mxu0 0.0
  %1600 = vmatpush.msra.mxu0 0.0
  %1601 = vmatpush.msra.mxu0 0.0
  %1602 = vmatpush.msra.mxu0 0.0
  %1603 = vmatpush.msra.mxu0 0.0
  %1604 = vmatpush.msra.mxu0 0.0
  %1605 = vmatpush.msra.mxu0 0.0
  %1606 = vmatpush.msra.mxu0 0.0
  %1607 = vmatpush.msra.mxu0 0.0
  %1608 = vmatpush.msra.mxu0 %v1589
  %1609 = vmatpush.msra.mxu0 %v1588
  %1610 = vmatmul.f32.gmra.mxu0 %v1540
  %v1611 = vpop.f32.mrf.mxu0
  %v1612 = vadd.f32 %v1592, %v1611
  %1613 = vdwg.mxu0
  %v1614 = vadd.f32 %v1479, %v1560
  %v1615 = vsub.f32 0.0, %v1614
  %v1616 = vmul.f32 %v1615, 1.442695
  %v1617 = vpow.pop %v1616
  %v1618 = vadd.f32 %v1617, 1.0
  %v1619 = vrcp.pop %v1618
  %v1620 = vmul.f32 %v1618, %v1619
  %v1621 = vsub.f32 1.0, %v1620
  %v1622 = vmul.f32 %v1619, %v1621
  %v1623 = vadd.f32 %v1619, %v1622
  %vm1624 = vweird.f32 %v1618
  %vm1625 = vweird.f32 %v1619
  %vm1626 = vmor %vm1624, %vm1625
  %v1627 = vsel %vm1626, %v1619, %v1623
  %v1628 = vand.u32 2147483647, %v1618
  %vm1629 = vcmp.eq.f32.partialorder %v1628, 8.507059e+37
  %v1630 = vand.u32 %v1618, 2147483648
  %v1631 = vor.u32 1.1754944e-38, %v1630
  %v1632 = vsel %vm1629, %v1631, %v1627
  %v1633 = vmul.f32 1.0, %v1632
  %v1634 = vadd.f32 %v1505, %v1586
  %v1635 = vsub.f32 0.0, %v1634
  %v1636 = vmul.f32 %v1635, 1.442695
  %v1637 = vpow.pop %v1636
  %v1638 = vadd.f32 %v1637, 1.0
  %v1639 = vrcp.pop %v1638
  %v1640 = vmul.f32 %v1638, %v1639
  %v1641 = vsub.f32 1.0, %v1640
  %v1642 = vmul.f32 %v1639, %v1641
  %v1643 = vadd.f32 %v1639, %v1642
  %vm1644 = vweird.f32 %v1638
  %vm1645 = vweird.f32 %v1639
  %vm1646 = vmor %vm1644, %vm1645
  %v1647 = vsel %vm1646, %v1639, %v1643
  %v1648 = vand.u32 2147483647, %v1638
  %vm1649 = vcmp.eq.f32.partialorder %v1648, 8.507059e+37
  %v1650 = vand.u32 %v1638, 2147483648
  %v1651 = vor.u32 1.1754944e-38, %v1650
  %v1652 = vsel %vm1649, %v1651, %v1647
  %v1653 = vmul.f32 1.0, %v1652
  %v1654 = vmul.f32 %v1633, %v1612
  %v1655 = vadd.f32 %v1531, %v1654
  %v1656 = vtanh.pop %v1655
  %v1657 = vsub.f32 1.0, %v1653
  %v1658 = vmul.f32 %v1657, %v1656
  %v1659 = vmul.f32 %v1653, %v1313
  %v1660 = vadd.f32 %v1658, %v1659
  %1661 = vst.msk [vmem:[#allocation2 + $0x4] sm:$0x3] %vm966, %v1660
  %v1662 = vld [vmem:[%s7] sm:$0xff]
  %v1663 = vld [vmem:[%s7 + $0x8] sm:$0xff]
  %v1664 = vld [vmem:[%s8] sm:$0x1]
  %v1666 = vperm.slane %v1664, 0
  %1668 = vmatpush.msra.mxu0 0.0
  %1669 = vmatpush.msra.mxu0 0.0
  %1670 = vmatpush.msra.mxu0 0.0
  %1671 = vmatpush.msra.mxu0 0.0
  %1672 = vmatpush.msra.mxu0 0.0
  %1673 = vmatpush.msra.mxu0 0.0
  %1674 = vmatpush.msra.mxu0 0.0
  %1675 = vmatpush.msra.mxu0 0.0
  %1676 = vmatpush.msra.mxu0 0.0
  %1677 = vmatpush.msra.mxu0 0.0
  %1678 = vmatpush.msra.mxu0 0.0
  %1679 = vmatpush.msra.mxu0 0.0
  %1680 = vmatpush.msra.mxu0 0.0
  %1681 = vmatpush.msra.mxu0 0.0
  %1682 = vmatpush.msra.mxu0 %v1663
  %1683 = vmatpush.msra.mxu0 %v1662
  %1684 = vmatmul.f32.gmra.mxu0 %v1459
  %v1685 = vpop.f32.mrf.mxu0
  %v1686 = vadd.f32 %v1666, %v1685
  %1687 = vdwg.mxu0
  %v1688 = vld [vmem:[%s649] sm:$0xff]
  %v1689 = vld [vmem:[%s649 + $0x8] sm:$0xff]
  %v1690 = vld [vmem:[%s652] sm:$0x1]
  %v1692 = vperm.slane %v1690, 0
  %1694 = vmatpush.msra.mxu0 0.0
  %1695 = vmatpush.msra.mxu0 0.0
  %1696 = vmatpush.msra.mxu0 0.0
  %1697 = vmatpush.msra.mxu0 0.0
  %1698 = vmatpush.msra.mxu0 0.0
  %1699 = vmatpush.msra.mxu0 0.0
  %1700 = vmatpush.msra.mxu0 0.0
  %1701 = vmatpush.msra.mxu0 0.0
  %1702 = vmatpush.msra.mxu0 0.0
  %1703 = vmatpush.msra.mxu0 0.0
  %1704 = vmatpush.msra.mxu0 0.0
  %1705 = vmatpush.msra.mxu0 0.0
  %1706 = vmatpush.msra.mxu0 0.0
  %1707 = vmatpush.msra.mxu0 0.0
  %1708 = vmatpush.msra.mxu0 %v1689
  %1709 = vmatpush.msra.mxu0 %v1688
  %1710 = vmatmul.f32.gmra.mxu0 %v1459
  %v1711 = vpop.f32.mrf.mxu0
  %v1712 = vadd.f32 %v1692, %v1711
  %1713 = vdwg.mxu0
  %v1714 = vld [vmem:[%s677] sm:$0xff]
  %v1715 = vld [vmem:[%s677 + $0x8] sm:$0xff]
  %v1716 = vld [vmem:[%s680] sm:$0x1]
  %v1718 = vperm.slane %v1716, 0
  %1720 = vmatpush.msra.mxu0 0.0
  %1721 = vmatpush.msra.mxu0 0.0
  %1722 = vmatpush.msra.mxu0 0.0
  %1723 = vmatpush.msra.mxu0 0.0
  %1724 = vmatpush.msra.mxu0 0.0
  %1725 = vmatpush.msra.mxu0 0.0
  %1726 = vmatpush.msra.mxu0 0.0
  %1727 = vmatpush.msra.mxu0 0.0
  %1728 = vmatpush.msra.mxu0 0.0
  %1729 = vmatpush.msra.mxu0 0.0
  %1730 = vmatpush.msra.mxu0 0.0
  %1731 = vmatpush.msra.mxu0 0.0
  %1732 = vmatpush.msra.mxu0 0.0
  %1733 = vmatpush.msra.mxu0 0.0
  %1734 = vmatpush.msra.mxu0 %v1715
  %1735 = vmatpush.msra.mxu0 %v1714
  %1736 = vmatmul.f32.gmra.mxu0 %v1459
  %v1737 = vpop.f32.mrf.mxu0
  %v1738 = vadd.f32 %v1718, %v1737
  %1739 = vdwg.mxu0
  %v1741 = vrot.slane %v1686, 2
  %v1743 = vadd.f32 %v500, %v1741
  %v1744 = vsub.f32 0.0, %v1743
  %v1745 = vmul.f32 %v1744, 1.442695
  %v1746 = vpow.pop %v1745
  %v1747 = vadd.f32 %v1746, 1.0
  %v1748 = vrcp.pop %v1747
  %v1749 = vmul.f32 %v1747, %v1748
  %v1750 = vsub.f32 1.0, %v1749
  %v1751 = vmul.f32 %v1748, %v1750
  %v1752 = vadd.f32 %v1748, %v1751
  %vm1753 = vweird.f32 %v1747
  %vm1754 = vweird.f32 %v1748
  %vm1755 = vmor %vm1753, %vm1754
  %v1756 = vsel %vm1755, %v1748, %v1752
  %v1757 = vand.u32 2147483647, %v1747
  %vm1758 = vcmp.eq.f32.partialorder %v1757, 8.507059e+37
  %v1759 = vand.u32 %v1747, 2147483648
  %v1760 = vor.u32 1.1754944e-38, %v1759
  %v1761 = vsel %vm1758, %v1760, %v1756
  %v1762 = vmul.f32 1.0, %v1761
  %v1764 = vrot.slane %v1712, 2
  %v1766 = vadd.f32 %v559, %v1764
  %v1767 = vsub.f32 0.0, %v1766
  %v1768 = vmul.f32 %v1767, 1.442695
  %v1769 = vpow.pop %v1768
  %v1770 = vadd.f32 %v1769, 1.0
  %v1771 = vrcp.pop %v1770
  %v1772 = vmul.f32 %v1770, %v1771
  %v1773 = vsub.f32 1.0, %v1772
  %v1774 = vmul.f32 %v1771, %v1773
  %v1775 = vadd.f32 %v1771, %v1774
  %vm1776 = vweird.f32 %v1770
  %vm1777 = vweird.f32 %v1771
  %vm1778 = vmor %vm1776, %vm1777
  %v1779 = vsel %vm1778, %v1771, %v1775
  %v1780 = vand.u32 2147483647, %v1770
  %vm1781 = vcmp.eq.f32.partialorder %v1780, 8.507059e+37
  %v1782 = vand.u32 %v1770, 2147483648
  %v1783 = vor.u32 1.1754944e-38, %v1782
  %v1784 = vsel %vm1781, %v1783, %v1779
  %v1785 = vmul.f32 1.0, %v1784
  %v1787 = vrot.slane %v1738, 2
  %v1789 = vmul.f32 %v1762, %v1787
  %v1790 = vadd.f32 %v618, %v1789
  %v1791 = vtanh.pop %v1790
  %v1792 = vsub.f32 1.0, %v1785
  %v1793 = vmul.f32 %v1792, %v1791
  %v1794 = vrot.slane %v1450, 6
  %v1796 = vmul.f32 %v1785, %v1794
  %v1797 = vadd.f32 %v1793, %v1796
  %v1798 = vld [vmem:[%s9] sm:$0xff]
  %v1799 = vld [vmem:[%s9 + $0x8] sm:$0xff]
  %v1800 = vld [vmem:[%s10] sm:$0x1]
  %v1802 = vperm.slane %v1800, 0
  %v1805 = vrot.slane %v1797, 6
  %v1806 = vsel %vm64, %v1805, 0
  %1808 = vmatpush.msra.mxu0 0.0
  %1809 = vmatpush.msra.mxu0 0.0
  %1810 = vmatpush.msra.mxu0 0.0
  %1811 = vmatpush.msra.mxu0 0.0
  %1812 = vmatpush.msra.mxu0 0.0
  %1813 = vmatpush.msra.mxu0 0.0
  %1814 = vmatpush.msra.mxu0 0.0
  %1815 = vmatpush.msra.mxu0 0.0
  %1816 = vmatpush.msra.mxu0 0.0
  %1817 = vmatpush.msra.mxu0 0.0
  %1818 = vmatpush.msra.mxu0 0.0
  %1819 = vmatpush.msra.mxu0 0.0
  %1820 = vmatpush.msra.mxu0 0.0
  %1821 = vmatpush.msra.mxu0 0.0
  %1822 = vmatpush.msra.mxu0 %v1799
  %1823 = vmatpush.msra.mxu0 %v1798
  %1824 = vmatmul.f32.gmra.mxu0 %v1806
  %v1825 = vpop.f32.mrf.mxu0
  %v1826 = vadd.f32 %v1802, %v1825
  %1827 = vdwg.mxu0
  %v1828 = vld [vmem:[%s781] sm:$0xff]
  %v1829 = vld [vmem:[%s781 + $0x8] sm:$0xff]
  %v1830 = vld [vmem:[%s784] sm:$0x1]
  %v1832 = vperm.slane %v1830, 0
  %1834 = vmatpush.msra.mxu0 0.0
  %1835 = vmatpush.msra.mxu0 0.0
  %1836 = vmatpush.msra.mxu0 0.0
  %1837 = vmatpush.msra.mxu0 0.0
  %1838 = vmatpush.msra.mxu0 0.0
  %1839 = vmatpush.msra.mxu0 0.0
  %1840 = vmatpush.msra.mxu0 0.0
  %1841 = vmatpush.msra.mxu0 0.0
  %1842 = vmatpush.msra.mxu0 0.0
  %1843 = vmatpush.msra.mxu0 0.0
  %1844 = vmatpush.msra.mxu0 0.0
  %1845 = vmatpush.msra.mxu0 0.0
  %1846 = vmatpush.msra.mxu0 0.0
  %1847 = vmatpush.msra.mxu0 0.0
  %1848 = vmatpush.msra.mxu0 %v1829
  %1849 = vmatpush.msra.mxu0 %v1828
  %1850 = vmatmul.f32.gmra.mxu0 %v1806
  %v1851 = vpop.f32.mrf.mxu0
  %v1852 = vadd.f32 %v1832, %v1851
  %1853 = vdwg.mxu0
  %v1854 = vld [vmem:[%s809] sm:$0xff]
  %v1855 = vld [vmem:[%s809 + $0x8] sm:$0xff]
  %v1856 = vld [vmem:[%s812] sm:$0x1]
  %v1858 = vperm.slane %v1856, 0
  %1860 = vmatpush.msra.mxu0 0.0
  %1861 = vmatpush.msra.mxu0 0.0
  %1862 = vmatpush.msra.mxu0 0.0
  %1863 = vmatpush.msra.mxu0 0.0
  %1864 = vmatpush.msra.mxu0 0.0
  %1865 = vmatpush.msra.mxu0 0.0
  %1866 = vmatpush.msra.mxu0 0.0
  %1867 = vmatpush.msra.mxu0 0.0
  %1868 = vmatpush.msra.mxu0 0.0
  %1869 = vmatpush.msra.mxu0 0.0
  %1870 = vmatpush.msra.mxu0 0.0
  %1871 = vmatpush.msra.mxu0 0.0
  %1872 = vmatpush.msra.mxu0 0.0
  %1873 = vmatpush.msra.mxu0 0.0
  %1874 = vmatpush.msra.mxu0 %v1855
  %1875 = vmatpush.msra.mxu0 %v1854
  %1876 = vmatmul.f32.gmra.mxu0 %v1806
  %v1877 = vpop.f32.mrf.mxu0
  %v1878 = vadd.f32 %v1858, %v1877
  %1879 = vdwg.mxu0
  %v1880 = vld [vmem:[%s11] sm:$0xff]
  %v1881 = vld [vmem:[%s11 + $0x8] sm:$0xff]
  %v1882 = vld [vmem:[%s12] sm:$0x1]
  %v1884 = vperm.slane %v1882, 0
  %v1887 = vsel %vm64, %v1660, 0
  %1889 = vmatpush.msra.mxu0 0.0
  %1890 = vmatpush.msra.mxu0 0.0
  %1891 = vmatpush.msra.mxu0 0.0
  %1892 = vmatpush.msra.mxu0 0.0
  %1893 = vmatpush.msra.mxu0 0.0
  %1894 = vmatpush.msra.mxu0 0.0
  %1895 = vmatpush.msra.mxu0 0.0
  %1896 = vmatpush.msra.mxu0 0.0
  %1897 = vmatpush.msra.mxu0 0.0
  %1898 = vmatpush.msra.mxu0 0.0
  %1899 = vmatpush.msra.mxu0 0.0
  %1900 = vmatpush.msra.mxu0 0.0
  %1901 = vmatpush.msra.mxu0 0.0
  %1902 = vmatpush.msra.mxu0 0.0
  %1903 = vmatpush.msra.mxu0 %v1881
  %1904 = vmatpush.msra.mxu0 %v1880
  %1905 = vmatmul.f32.gmra.mxu0 %v1887
  %v1906 = vpop.f32.mrf.mxu0
  %v1907 = vadd.f32 %v1884, %v1906
  %1908 = vdwg.mxu0
  %v1909 = vld [vmem:[%s863] sm:$0xff]
  %v1910 = vld [vmem:[%s863 + $0x8] sm:$0xff]
  %v1911 = vld [vmem:[%s866] sm:$0x1]
  %v1913 = vperm.slane %v1911, 0
  %1915 = vmatpush.msra.mxu0 0.0
  %1916 = vmatpush.msra.mxu0 0.0
  %1917 = vmatpush.msra.mxu0 0.0
  %1918 = vmatpush.msra.mxu0 0.0
  %1919 = vmatpush.msra.mxu0 0.0
  %1920 = vmatpush.msra.mxu0 0.0
  %1921 = vmatpush.msra.mxu0 0.0
  %1922 = vmatpush.msra.mxu0 0.0
  %1923 = vmatpush.msra.mxu0 0.0
  %1924 = vmatpush.msra.mxu0 0.0
  %1925 = vmatpush.msra.mxu0 0.0
  %1926 = vmatpush.msra.mxu0 0.0
  %1927 = vmatpush.msra.mxu0 0.0
  %1928 = vmatpush.msra.mxu0 0.0
  %1929 = vmatpush.msra.mxu0 %v1910
  %1930 = vmatpush.msra.mxu0 %v1909
  %1931 = vmatmul.f32.gmra.mxu0 %v1887
  %v1932 = vpop.f32.mrf.mxu0
  %v1933 = vadd.f32 %v1913, %v1932
  %1934 = vdwg.mxu0
  %v1935 = vld [vmem:[%s891] sm:$0xff]
  %v1936 = vld [vmem:[%s891 + $0x8] sm:$0xff]
  %v1937 = vld [vmem:[%s894] sm:$0x1]
  %v1939 = vperm.slane %v1937, 0
  %1941 = vmatpush.msra.mxu0 0.0
  %1942 = vmatpush.msra.mxu0 0.0
  %1943 = vmatpush.msra.mxu0 0.0
  %1944 = vmatpush.msra.mxu0 0.0
  %1945 = vmatpush.msra.mxu0 0.0
  %1946 = vmatpush.msra.mxu0 0.0
  %1947 = vmatpush.msra.mxu0 0.0
  %1948 = vmatpush.msra.mxu0 0.0
  %1949 = vmatpush.msra.mxu0 0.0
  %1950 = vmatpush.msra.mxu0 0.0
  %1951 = vmatpush.msra.mxu0 0.0
  %1952 = vmatpush.msra.mxu0 0.0
  %1953 = vmatpush.msra.mxu0 0.0
  %1954 = vmatpush.msra.mxu0 0.0
  %1955 = vmatpush.msra.mxu0 %v1936
  %1956 = vmatpush.msra.mxu0 %v1935
  %1957 = vmatmul.f32.gmra.mxu0 %v1887
  %v1958 = vpop.f32.mrf.mxu0
  %v1959 = vadd.f32 %v1939, %v1958
  %1960 = vdwg.mxu0
  %v1961 = vadd.f32 %v1826, %v1907
  %v1962 = vsub.f32 0.0, %v1961
  %v1963 = vmul.f32 %v1962, 1.442695
  %v1964 = vpow.pop %v1963
  %v1965 = vadd.f32 %v1964, 1.0
  %v1966 = vrcp.pop %v1965
  %v1967 = vmul.f32 %v1965, %v1966
  %v1968 = vsub.f32 1.0, %v1967
  %v1969 = vmul.f32 %v1966, %v1968
  %v1970 = vadd.f32 %v1966, %v1969
  %vm1971 = vweird.f32 %v1965
  %vm1972 = vweird.f32 %v1966
  %vm1973 = vmor %vm1971, %vm1972
  %v1974 = vsel %vm1973, %v1966, %v1970
  %v1975 = vand.u32 2147483647, %v1965
  %vm1976 = vcmp.eq.f32.partialorder %v1975, 8.507059e+37
  %v1977 = vand.u32 %v1965, 2147483648
  %v1978 = vor.u32 1.1754944e-38, %v1977
  %v1979 = vsel %vm1976, %v1978, %v1974
  %v1980 = vmul.f32 1.0, %v1979
  %v1981 = vadd.f32 %v1852, %v1933
  %v1982 = vsub.f32 0.0, %v1981
  %v1983 = vmul.f32 %v1982, 1.442695
  %v1984 = vpow.pop %v1983
  %v1985 = vadd.f32 %v1984, 1.0
  %v1986 = vrcp.pop %v1985
  %v1987 = vmul.f32 %v1985, %v1986
  %v1988 = vsub.f32 1.0, %v1987
  %v1989 = vmul.f32 %v1986, %v1988
  %v1990 = vadd.f32 %v1986, %v1989
  %vm1991 = vweird.f32 %v1985
  %vm1992 = vweird.f32 %v1986
  %vm1993 = vmor %vm1991, %vm1992
  %v1994 = vsel %vm1993, %v1986, %v1990
  %v1995 = vand.u32 2147483647, %v1985
  %vm1996 = vcmp.eq.f32.partialorder %v1995, 8.507059e+37
  %v1997 = vand.u32 %v1985, 2147483648
  %v1998 = vor.u32 1.1754944e-38, %v1997
  %v1999 = vsel %vm1996, %v1998, %v1994
  %v2000 = vmul.f32 1.0, %v1999
  %v2001 = vmul.f32 %v1980, %v1959
  %v2002 = vadd.f32 %v1878, %v2001
  %v2003 = vtanh.pop %v2002
  %v2004 = vsub.f32 1.0, %v2000
  %v2005 = vmul.f32 %v2004, %v2003
  %v2006 = vmul.f32 %v2000, %v1660
  %v2007 = vadd.f32 %v2005, %v2006
  %2008 = vst.msk [vmem:[#allocation2 + $0x6] sm:$0x3] %vm966, %v2007
  %v2009 = vld [vmem:[%s7] sm:$0xff]
  %v2010 = vld [vmem:[%s7 + $0x8] sm:$0xff]
  %v2011 = vld [vmem:[%s8] sm:$0x1]
  %v2013 = vperm.slane %v2011, 0
  %2015 = vmatpush.msra.mxu0 0.0
  %2016 = vmatpush.msra.mxu0 0.0
  %2017 = vmatpush.msra.mxu0 0.0
  %2018 = vmatpush.msra.mxu0 0.0
  %2019 = vmatpush.msra.mxu0 0.0
  %2020 = vmatpush.msra.mxu0 0.0
  %2021 = vmatpush.msra.mxu0 0.0
  %2022 = vmatpush.msra.mxu0 0.0
  %2023 = vmatpush.msra.mxu0 0.0
  %2024 = vmatpush.msra.mxu0 0.0
  %2025 = vmatpush.msra.mxu0 0.0
  %2026 = vmatpush.msra.mxu0 0.0
  %2027 = vmatpush.msra.mxu0 0.0
  %2028 = vmatpush.msra.mxu0 0.0
  %2029 = vmatpush.msra.mxu0 %v2010
  %2030 = vmatpush.msra.mxu0 %v2009
  %2031 = vmatmul.f32.gmra.mxu0 %v1806
  %v2032 = vpop.f32.mrf.mxu0
  %v2033 = vadd.f32 %v2013, %v2032
  %2034 = vdwg.mxu0
  %v2035 = vld [vmem:[%s649] sm:$0xff]
  %v2036 = vld [vmem:[%s649 + $0x8] sm:$0xff]
  %v2037 = vld [vmem:[%s652] sm:$0x1]
  %v2039 = vperm.slane %v2037, 0
  %2041 = vmatpush.msra.mxu0 0.0
  %2042 = vmatpush.msra.mxu0 0.0
  %2043 = vmatpush.msra.mxu0 0.0
  %2044 = vmatpush.msra.mxu0 0.0
  %2045 = vmatpush.msra.mxu0 0.0
  %2046 = vmatpush.msra.mxu0 0.0
  %2047 = vmatpush.msra.mxu0 0.0
  %2048 = vmatpush.msra.mxu0 0.0
  %2049 = vmatpush.msra.mxu0 0.0
  %2050 = vmatpush.msra.mxu0 0.0
  %2051 = vmatpush.msra.mxu0 0.0
  %2052 = vmatpush.msra.mxu0 0.0
  %2053 = vmatpush.msra.mxu0 0.0
  %2054 = vmatpush.msra.mxu0 0.0
  %2055 = vmatpush.msra.mxu0 %v2036
  %2056 = vmatpush.msra.mxu0 %v2035
  %2057 = vmatmul.f32.gmra.mxu0 %v1806
  %v2058 = vpop.f32.mrf.mxu0
  %v2059 = vadd.f32 %v2039, %v2058
  %2060 = vdwg.mxu0
  %v2061 = vld [vmem:[%s677] sm:$0xff]
  %v2062 = vld [vmem:[%s677 + $0x8] sm:$0xff]
  %v2063 = vld [vmem:[%s680] sm:$0x1]
  %v2065 = vperm.slane %v2063, 0
  %2067 = vmatpush.msra.mxu0 0.0
  %2068 = vmatpush.msra.mxu0 0.0
  %2069 = vmatpush.msra.mxu0 0.0
  %2070 = vmatpush.msra.mxu0 0.0
  %2071 = vmatpush.msra.mxu0 0.0
  %2072 = vmatpush.msra.mxu0 0.0
  %2073 = vmatpush.msra.mxu0 0.0
  %2074 = vmatpush.msra.mxu0 0.0
  %2075 = vmatpush.msra.mxu0 0.0
  %2076 = vmatpush.msra.mxu0 0.0
  %2077 = vmatpush.msra.mxu0 0.0
  %2078 = vmatpush.msra.mxu0 0.0
  %2079 = vmatpush.msra.mxu0 0.0
  %2080 = vmatpush.msra.mxu0 0.0
  %2081 = vmatpush.msra.mxu0 %v2062
  %2082 = vmatpush.msra.mxu0 %v2061
  %2083 = vmatmul.f32.gmra.mxu0 %v1806
  %v2084 = vpop.f32.mrf.mxu0
  %v2085 = vadd.f32 %v2065, %v2084
  %2086 = vdwg.mxu0
  %v2087 = vadd.f32 %v501, %v2033
  %v2088 = vsub.f32 0.0, %v2087
  %v2089 = vmul.f32 %v2088, 1.442695
  %v2090 = vpow.pop %v2089
  %v2091 = vadd.f32 %v2090, 1.0
  %v2092 = vrcp.pop %v2091
  %v2093 = vmul.f32 %v2091, %v2092
  %v2094 = vsub.f32 1.0, %v2093
  %v2095 = vmul.f32 %v2092, %v2094
  %v2096 = vadd.f32 %v2092, %v2095
  %vm2097 = vweird.f32 %v2091
  %vm2098 = vweird.f32 %v2092
  %vm2099 = vmor %vm2097, %vm2098
  %v2100 = vsel %vm2099, %v2092, %v2096
  %v2101 = vand.u32 2147483647, %v2091
  %vm2102 = vcmp.eq.f32.partialorder %v2101, 8.507059e+37
  %v2103 = vand.u32 %v2091, 2147483648
  %v2104 = vor.u32 1.1754944e-38, %v2103
  %v2105 = vsel %vm2102, %v2104, %v2100
  %v2106 = vmul.f32 1.0, %v2105
  %v2107 = vadd.f32 %v560, %v2059
  %v2108 = vsub.f32 0.0, %v2107
  %v2109 = vmul.f32 %v2108, 1.442695
  %v2110 = vpow.pop %v2109
  %v2111 = vadd.f32 %v2110, 1.0
  %v2112 = vrcp.pop %v2111
  %v2113 = vmul.f32 %v2111, %v2112
  %v2114 = vsub.f32 1.0, %v2113
  %v2115 = vmul.f32 %v2112, %v2114
  %v2116 = vadd.f32 %v2112, %v2115
  %vm2117 = vweird.f32 %v2111
  %vm2118 = vweird.f32 %v2112
  %vm2119 = vmor %vm2117, %vm2118
  %v2120 = vsel %vm2119, %v2112, %v2116
  %v2121 = vand.u32 2147483647, %v2111
  %vm2122 = vcmp.eq.f32.partialorder %v2121, 8.507059e+37
  %v2123 = vand.u32 %v2111, 2147483648
  %v2124 = vor.u32 1.1754944e-38, %v2123
  %v2125 = vsel %vm2122, %v2124, %v2120
  %v2126 = vmul.f32 1.0, %v2125
  %v2127 = vmul.f32 %v2106, %v2085
  %v2128 = vadd.f32 %v619, %v2127
  %v2129 = vtanh.pop %v2128
  %v2130 = vsub.f32 1.0, %v2126
  %v2131 = vmul.f32 %v2130, %v2129
  %v2133 = vmul.f32 %v2126, %v1805
  %v2134 = vadd.f32 %v2131, %v2133
  %v2135 = vld [vmem:[%s9] sm:$0xff]
  %v2136 = vld [vmem:[%s9 + $0x8] sm:$0xff]
  %v2137 = vld [vmem:[%s10] sm:$0x1]
  %v2139 = vperm.slane %v2137, 0
  %v2142 = vsel %vm64, %v2134, 0
  %2144 = vmatpush.msra.mxu0 0.0
  %2145 = vmatpush.msra.mxu0 0.0
  %2146 = vmatpush.msra.mxu0 0.0
  %2147 = vmatpush.msra.mxu0 0.0
  %2148 = vmatpush.msra.mxu0 0.0
  %2149 = vmatpush.msra.mxu0 0.0
  %2150 = vmatpush.msra.mxu0 0.0
  %2151 = vmatpush.msra.mxu0 0.0
  %2152 = vmatpush.msra.mxu0 0.0
  %2153 = vmatpush.msra.mxu0 0.0
  %2154 = vmatpush.msra.mxu0 0.0
  %2155 = vmatpush.msra.mxu0 0.0
  %2156 = vmatpush.msra.mxu0 0.0
  %2157 = vmatpush.msra.mxu0 0.0
  %2158 = vmatpush.msra.mxu0 %v2136
  %2159 = vmatpush.msra.mxu0 %v2135
  %2160 = vmatmul.f32.gmra.mxu0 %v2142
  %v2161 = vpop.f32.mrf.mxu0
  %v2162 = vadd.f32 %v2139, %v2161
  %2163 = vdwg.mxu0
  %v2164 = vld [vmem:[%s781] sm:$0xff]
  %v2165 = vld [vmem:[%s781 + $0x8] sm:$0xff]
  %v2166 = vld [vmem:[%s784] sm:$0x1]
  %v2168 = vperm.slane %v2166, 0
  %2170 = vmatpush.msra.mxu0 0.0
  %2171 = vmatpush.msra.mxu0 0.0
  %2172 = vmatpush.msra.mxu0 0.0
  %2173 = vmatpush.msra.mxu0 0.0
  %2174 = vmatpush.msra.mxu0 0.0
  %2175 = vmatpush.msra.mxu0 0.0
  %2176 = vmatpush.msra.mxu0 0.0
  %2177 = vmatpush.msra.mxu0 0.0
  %2178 = vmatpush.msra.mxu0 0.0
  %2179 = vmatpush.msra.mxu0 0.0
  %2180 = vmatpush.msra.mxu0 0.0
  %2181 = vmatpush.msra.mxu0 0.0
  %2182 = vmatpush.msra.mxu0 0.0
  %2183 = vmatpush.msra.mxu0 0.0
  %2184 = vmatpush.msra.mxu0 %v2165
  %2185 = vmatpush.msra.mxu0 %v2164
  %2186 = vmatmul.f32.gmra.mxu0 %v2142
  %v2187 = vpop.f32.mrf.mxu0
  %v2188 = vadd.f32 %v2168, %v2187
  %2189 = vdwg.mxu0
  %v2190 = vld [vmem:[%s809] sm:$0xff]
  %v2191 = vld [vmem:[%s809 + $0x8] sm:$0xff]
  %v2192 = vld [vmem:[%s812] sm:$0x1]
  %v2194 = vperm.slane %v2192, 0
  %2196 = vmatpush.msra.mxu0 0.0
  %2197 = vmatpush.msra.mxu0 0.0
  %2198 = vmatpush.msra.mxu0 0.0
  %2199 = vmatpush.msra.mxu0 0.0
  %2200 = vmatpush.msra.mxu0 0.0
  %2201 = vmatpush.msra.mxu0 0.0
  %2202 = vmatpush.msra.mxu0 0.0
  %2203 = vmatpush.msra.mxu0 0.0
  %2204 = vmatpush.msra.mxu0 0.0
  %2205 = vmatpush.msra.mxu0 0.0
  %2206 = vmatpush.msra.mxu0 0.0
  %2207 = vmatpush.msra.mxu0 0.0
  %2208 = vmatpush.msra.mxu0 0.0
  %2209 = vmatpush.msra.mxu0 0.0
  %2210 = vmatpush.msra.mxu0 %v2191
  %2211 = vmatpush.msra.mxu0 %v2190
  %2212 = vmatmul.f32.gmra.mxu0 %v2142
  %v2213 = vpop.f32.mrf.mxu0
  %v2214 = vadd.f32 %v2194, %v2213
  %2215 = vdwg.mxu0
  %v2216 = vld [vmem:[%s11] sm:$0xff]
  %v2217 = vld [vmem:[%s11 + $0x8] sm:$0xff]
  %v2218 = vld [vmem:[%s12] sm:$0x1]
  %v2220 = vperm.slane %v2218, 0
  %v2223 = vsel %vm64, %v2007, 0
  %2225 = vmatpush.msra.mxu0 0.0
  %2226 = vmatpush.msra.mxu0 0.0
  %2227 = vmatpush.msra.mxu0 0.0
  %2228 = vmatpush.msra.mxu0 0.0
  %2229 = vmatpush.msra.mxu0 0.0
  %2230 = vmatpush.msra.mxu0 0.0
  %2231 = vmatpush.msra.mxu0 0.0
  %2232 = vmatpush.msra.mxu0 0.0
  %2233 = vmatpush.msra.mxu0 0.0
  %2234 = vmatpush.msra.mxu0 0.0
  %2235 = vmatpush.msra.mxu0 0.0
  %2236 = vmatpush.msra.mxu0 0.0
  %2237 = vmatpush.msra.mxu0 0.0
  %2238 = vmatpush.msra.mxu0 0.0
  %2239 = vmatpush.msra.mxu0 %v2217
  %2240 = vmatpush.msra.mxu0 %v2216
  %2241 = vmatmul.f32.gmra.mxu0 %v2223
  %v2242 = vpop.f32.mrf.mxu0
  %v2243 = vadd.f32 %v2220, %v2242
  %2244 = vdwg.mxu0
  %v2245 = vld [vmem:[%s863] sm:$0xff]
  %v2246 = vld [vmem:[%s863 + $0x8] sm:$0xff]
  %v2247 = vld [vmem:[%s866] sm:$0x1]
  %v2249 = vperm.slane %v2247, 0
  %2251 = vmatpush.msra.mxu0 0.0
  %2252 = vmatpush.msra.mxu0 0.0
  %2253 = vmatpush.msra.mxu0 0.0
  %2254 = vmatpush.msra.mxu0 0.0
  %2255 = vmatpush.msra.mxu0 0.0
  %2256 = vmatpush.msra.mxu0 0.0
  %2257 = vmatpush.msra.mxu0 0.0
  %2258 = vmatpush.msra.mxu0 0.0
  %2259 = vmatpush.msra.mxu0 0.0
  %2260 = vmatpush.msra.mxu0 0.0
  %2261 = vmatpush.msra.mxu0 0.0
  %2262 = vmatpush.msra.mxu0 0.0
  %2263 = vmatpush.msra.mxu0 0.0
  %2264 = vmatpush.msra.mxu0 0.0
  %2265 = vmatpush.msra.mxu0 %v2246
  %2266 = vmatpush.msra.mxu0 %v2245
  %2267 = vmatmul.f32.gmra.mxu0 %v2223
  %v2268 = vpop.f32.mrf.mxu0
  %v2269 = vadd.f32 %v2249, %v2268
  %2270 = vdwg.mxu0
  %v2271 = vld [vmem:[%s891] sm:$0xff]
  %v2272 = vld [vmem:[%s891 + $0x8] sm:$0xff]
  %v2273 = vld [vmem:[%s894] sm:$0x1]
  %v2275 = vperm.slane %v2273, 0
  %2277 = vmatpush.msra.mxu0 0.0
  %2278 = vmatpush.msra.mxu0 0.0
  %2279 = vmatpush.msra.mxu0 0.0
  %2280 = vmatpush.msra.mxu0 0.0
  %2281 = vmatpush.msra.mxu0 0.0
  %2282 = vmatpush.msra.mxu0 0.0
  %2283 = vmatpush.msra.mxu0 0.0
  %2284 = vmatpush.msra.mxu0 0.0
  %2285 = vmatpush.msra.mxu0 0.0
  %2286 = vmatpush.msra.mxu0 0.0
  %2287 = vmatpush.msra.mxu0 0.0
  %2288 = vmatpush.msra.mxu0 0.0
  %2289 = vmatpush.msra.mxu0 0.0
  %2290 = vmatpush.msra.mxu0 0.0
  %2291 = vmatpush.msra.mxu0 %v2272
  %2292 = vmatpush.msra.mxu0 %v2271
  %2293 = vmatmul.f32.gmra.mxu0 %v2223
  %v2294 = vpop.f32.mrf.mxu0
  %v2295 = vadd.f32 %v2275, %v2294
  %2296 = vdwg.mxu0
  %v2297 = vadd.f32 %v2162, %v2243
  %v2298 = vsub.f32 0.0, %v2297
  %v2299 = vmul.f32 %v2298, 1.442695
  %v2300 = vpow.pop %v2299
  %v2301 = vadd.f32 %v2300, 1.0
  %v2302 = vrcp.pop %v2301
  %v2303 = vmul.f32 %v2301, %v2302
  %v2304 = vsub.f32 1.0, %v2303
  %v2305 = vmul.f32 %v2302, %v2304
  %v2306 = vadd.f32 %v2302, %v2305
  %vm2307 = vweird.f32 %v2301
  %vm2308 = vweird.f32 %v2302
  %vm2309 = vmor %vm2307, %vm2308
  %v2310 = vsel %vm2309, %v2302, %v2306
  %v2311 = vand.u32 2147483647, %v2301
  %vm2312 = vcmp.eq.f32.partialorder %v2311, 8.507059e+37
  %v2313 = vand.u32 %v2301, 2147483648
  %v2314 = vor.u32 1.1754944e-38, %v2313
  %v2315 = vsel %vm2312, %v2314, %v2310
  %v2316 = vmul.f32 1.0, %v2315
  %v2317 = vadd.f32 %v2188, %v2269
  %v2318 = vsub.f32 0.0, %v2317
  %v2319 = vmul.f32 %v2318, 1.442695
  %v2320 = vpow.pop %v2319
  %v2321 = vadd.f32 %v2320, 1.0
  %v2322 = vrcp.pop %v2321
  %v2323 = vmul.f32 %v2321, %v2322
  %v2324 = vsub.f32 1.0, %v2323
  %v2325 = vmul.f32 %v2322, %v2324
  %v2326 = vadd.f32 %v2322, %v2325
  %vm2327 = vweird.f32 %v2321
  %vm2328 = vweird.f32 %v2322
  %vm2329 = vmor %vm2327, %vm2328
  %v2330 = vsel %vm2329, %v2322, %v2326
  %v2331 = vand.u32 2147483647, %v2321
  %vm2332 = vcmp.eq.f32.partialorder %v2331, 8.507059e+37
  %v2333 = vand.u32 %v2321, 2147483648
  %v2334 = vor.u32 1.1754944e-38, %v2333
  %v2335 = vsel %vm2332, %v2334, %v2330
  %v2336 = vmul.f32 1.0, %v2335
  %v2337 = vmul.f32 %v2316, %v2295
  %v2338 = vadd.f32 %v2214, %v2337
  %v2339 = vtanh.pop %v2338
  %v2340 = vsub.f32 1.0, %v2336
  %v2341 = vmul.f32 %v2340, %v2339
  %v2342 = vmul.f32 %v2336, %v2007
  %v2343 = vadd.f32 %v2341, %v2342
  %2344 = vst.msk [vmem:[#allocation2 + $0x8] sm:$0x3] %vm966, %v2343
  %v2345 = vld [vmem:[%s7] sm:$0xff]
  %v2346 = vld [vmem:[%s7 + $0x8] sm:$0xff]
  %v2347 = vld [vmem:[%s8] sm:$0x1]
  %v2349 = vperm.slane %v2347, 0
  %2351 = vmatpush.msra.mxu0 0.0
  %2352 = vmatpush.msra.mxu0 0.0
  %2353 = vmatpush.msra.mxu0 0.0
  %2354 = vmatpush.msra.mxu0 0.0
  %2355 = vmatpush.msra.mxu0 0.0
  %2356 = vmatpush.msra.mxu0 0.0
  %2357 = vmatpush.msra.mxu0 0.0
  %2358 = vmatpush.msra.mxu0 0.0
  %2359 = vmatpush.msra.mxu0 0.0
  %2360 = vmatpush.msra.mxu0 0.0
  %2361 = vmatpush.msra.mxu0 0.0
  %2362 = vmatpush.msra.mxu0 0.0
  %2363 = vmatpush.msra.mxu0 0.0
  %2364 = vmatpush.msra.mxu0 0.0
  %2365 = vmatpush.msra.mxu0 %v2346
  %2366 = vmatpush.msra.mxu0 %v2345
  %2367 = vmatmul.f32.gmra.mxu0 %v2142
  %v2368 = vpop.f32.mrf.mxu0
  %v2369 = vadd.f32 %v2349, %v2368
  %2370 = vdwg.mxu0
  %v2371 = vld [vmem:[%s649] sm:$0xff]
  %v2372 = vld [vmem:[%s649 + $0x8] sm:$0xff]
  %v2373 = vld [vmem:[%s652] sm:$0x1]
  %v2375 = vperm.slane %v2373, 0
  %2377 = vmatpush.msra.mxu0 0.0
  %2378 = vmatpush.msra.mxu0 0.0
  %2379 = vmatpush.msra.mxu0 0.0
  %2380 = vmatpush.msra.mxu0 0.0
  %2381 = vmatpush.msra.mxu0 0.0
  %2382 = vmatpush.msra.mxu0 0.0
  %2383 = vmatpush.msra.mxu0 0.0
  %2384 = vmatpush.msra.mxu0 0.0
  %2385 = vmatpush.msra.mxu0 0.0
  %2386 = vmatpush.msra.mxu0 0.0
  %2387 = vmatpush.msra.mxu0 0.0
  %2388 = vmatpush.msra.mxu0 0.0
  %2389 = vmatpush.msra.mxu0 0.0
  %2390 = vmatpush.msra.mxu0 0.0
  %2391 = vmatpush.msra.mxu0 %v2372
  %2392 = vmatpush.msra.mxu0 %v2371
  %2393 = vmatmul.f32.gmra.mxu0 %v2142
  %v2394 = vpop.f32.mrf.mxu0
  %v2395 = vadd.f32 %v2375, %v2394
  %2396 = vdwg.mxu0
  %v2397 = vld [vmem:[%s677] sm:$0xff]
  %v2398 = vld [vmem:[%s677 + $0x8] sm:$0xff]
  %v2399 = vld [vmem:[%s680] sm:$0x1]
  %v2401 = vperm.slane %v2399, 0
  %2403 = vmatpush.msra.mxu0 0.0
  %2404 = vmatpush.msra.mxu0 0.0
  %2405 = vmatpush.msra.mxu0 0.0
  %2406 = vmatpush.msra.mxu0 0.0
  %2407 = vmatpush.msra.mxu0 0.0
  %2408 = vmatpush.msra.mxu0 0.0
  %2409 = vmatpush.msra.mxu0 0.0
  %2410 = vmatpush.msra.mxu0 0.0
  %2411 = vmatpush.msra.mxu0 0.0
  %2412 = vmatpush.msra.mxu0 0.0
  %2413 = vmatpush.msra.mxu0 0.0
  %2414 = vmatpush.msra.mxu0 0.0
  %2415 = vmatpush.msra.mxu0 0.0
  %2416 = vmatpush.msra.mxu0 0.0
  %2417 = vmatpush.msra.mxu0 %v2398
  %2418 = vmatpush.msra.mxu0 %v2397
  %2419 = vmatmul.f32.gmra.mxu0 %v2142
  %v2420 = vpop.f32.mrf.mxu0
  %v2421 = vadd.f32 %v2401, %v2420
  %2422 = vdwg.mxu0
  %v2424 = vrot.slane %v2369, 6
  %v2426 = vadd.f32 %v501, %v2424
  %v2427 = vsub.f32 0.0, %v2426
  %v2428 = vmul.f32 %v2427, 1.442695
  %v2429 = vpow.pop %v2428
  %v2430 = vadd.f32 %v2429, 1.0
  %v2431 = vrcp.pop %v2430
  %v2432 = vmul.f32 %v2430, %v2431
  %v2433 = vsub.f32 1.0, %v2432
  %v2434 = vmul.f32 %v2431, %v2433
  %v2435 = vadd.f32 %v2431, %v2434
  %vm2436 = vweird.f32 %v2430
  %vm2437 = vweird.f32 %v2431
  %vm2438 = vmor %vm2436, %vm2437
  %v2439 = vsel %vm2438, %v2431, %v2435
  %v2440 = vand.u32 2147483647, %v2430
  %vm2441 = vcmp.eq.f32.partialorder %v2440, 8.507059e+37
  %v2442 = vand.u32 %v2430, 2147483648
  %v2443 = vor.u32 1.1754944e-38, %v2442
  %v2444 = vsel %vm2441, %v2443, %v2439
  %v2445 = vmul.f32 1.0, %v2444
  %v2447 = vrot.slane %v2395, 6
  %v2449 = vadd.f32 %v560, %v2447
  %v2450 = vsub.f32 0.0, %v2449
  %v2451 = vmul.f32 %v2450, 1.442695
  %v2452 = vpow.pop %v2451
  %v2453 = vadd.f32 %v2452, 1.0
  %v2454 = vrcp.pop %v2453
  %v2455 = vmul.f32 %v2453, %v2454
  %v2456 = vsub.f32 1.0, %v2455
  %v2457 = vmul.f32 %v2454, %v2456
  %v2458 = vadd.f32 %v2454, %v2457
  %vm2459 = vweird.f32 %v2453
  %vm2460 = vweird.f32 %v2454
  %vm2461 = vmor %vm2459, %vm2460
  %v2462 = vsel %vm2461, %v2454, %v2458
  %v2463 = vand.u32 2147483647, %v2453
  %vm2464 = vcmp.eq.f32.partialorder %v2463, 8.507059e+37
  %v2465 = vand.u32 %v2453, 2147483648
  %v2466 = vor.u32 1.1754944e-38, %v2465
  %v2467 = vsel %vm2464, %v2466, %v2462
  %v2468 = vmul.f32 1.0, %v2467
  %v2470 = vrot.slane %v2421, 6
  %v2472 = vmul.f32 %v2445, %v2470
  %v2473 = vadd.f32 %v619, %v2472
  %v2474 = vtanh.pop %v2473
  %v2475 = vsub.f32 1.0, %v2468
  %v2476 = vmul.f32 %v2475, %v2474
  %v2477 = vrot.slane %v2134, 6
  %v2479 = vmul.f32 %v2468, %v2477
  %v2480 = vadd.f32 %v2476, %v2479
  %v2481 = vld [vmem:[%s9] sm:$0xff]
  %v2482 = vld [vmem:[%s9 + $0x8] sm:$0xff]
  %v2483 = vld [vmem:[%s10] sm:$0x1]
  %v2485 = vperm.slane %v2483, 0
  %v2488 = vrot.slane %v2480, 2
  %v2489 = vsel %vm64, %v2488, 0
  %2491 = vmatpush.msra.mxu0 0.0
  %2492 = vmatpush.msra.mxu0 0.0
  %2493 = vmatpush.msra.mxu0 0.0
  %2494 = vmatpush.msra.mxu0 0.0
  %2495 = vmatpush.msra.mxu0 0.0
  %2496 = vmatpush.msra.mxu0 0.0
  %2497 = vmatpush.msra.mxu0 0.0
  %2498 = vmatpush.msra.mxu0 0.0
  %2499 = vmatpush.msra.mxu0 0.0
  %2500 = vmatpush.msra.mxu0 0.0
  %2501 = vmatpush.msra.mxu0 0.0
  %2502 = vmatpush.msra.mxu0 0.0
  %2503 = vmatpush.msra.mxu0 0.0
  %2504 = vmatpush.msra.mxu0 0.0
  %2505 = vmatpush.msra.mxu0 %v2482
  %2506 = vmatpush.msra.mxu0 %v2481
  %2507 = vmatmul.f32.gmra.mxu0 %v2489
  %v2508 = vpop.f32.mrf.mxu0
  %v2509 = vadd.f32 %v2485, %v2508
  %2510 = vdwg.mxu0
  %v2511 = vld [vmem:[%s781] sm:$0xff]
  %v2512 = vld [vmem:[%s781 + $0x8] sm:$0xff]
  %v2513 = vld [vmem:[%s784] sm:$0x1]
  %v2515 = vperm.slane %v2513, 0
  %2517 = vmatpush.msra.mxu0 0.0
  %2518 = vmatpush.msra.mxu0 0.0
  %2519 = vmatpush.msra.mxu0 0.0
  %2520 = vmatpush.msra.mxu0 0.0
  %2521 = vmatpush.msra.mxu0 0.0
  %2522 = vmatpush.msra.mxu0 0.0
  %2523 = vmatpush.msra.mxu0 0.0
  %2524 = vmatpush.msra.mxu0 0.0
  %2525 = vmatpush.msra.mxu0 0.0
  %2526 = vmatpush.msra.mxu0 0.0
  %2527 = vmatpush.msra.mxu0 0.0
  %2528 = vmatpush.msra.mxu0 0.0
  %2529 = vmatpush.msra.mxu0 0.0
  %2530 = vmatpush.msra.mxu0 0.0
  %2531 = vmatpush.msra.mxu0 %v2512
  %2532 = vmatpush.msra.mxu0 %v2511
  %2533 = vmatmul.f32.gmra.mxu0 %v2489
  %v2534 = vpop.f32.mrf.mxu0
  %v2535 = vadd.f32 %v2515, %v2534
  %2536 = vdwg.mxu0
  %v2537 = vld [vmem:[%s809] sm:$0xff]
  %v2538 = vld [vmem:[%s809 + $0x8] sm:$0xff]
  %v2539 = vld [vmem:[%s812] sm:$0x1]
  %v2541 = vperm.slane %v2539, 0
  %2543 = vmatpush.msra.mxu0 0.0
  %2544 = vmatpush.msra.mxu0 0.0
  %2545 = vmatpush.msra.mxu0 0.0
  %2546 = vmatpush.msra.mxu0 0.0
  %2547 = vmatpush.msra.mxu0 0.0
  %2548 = vmatpush.msra.mxu0 0.0
  %2549 = vmatpush.msra.mxu0 0.0
  %2550 = vmatpush.msra.mxu0 0.0
  %2551 = vmatpush.msra.mxu0 0.0
  %2552 = vmatpush.msra.mxu0 0.0
  %2553 = vmatpush.msra.mxu0 0.0
  %2554 = vmatpush.msra.mxu0 0.0
  %2555 = vmatpush.msra.mxu0 0.0
  %2556 = vmatpush.msra.mxu0 0.0
  %2557 = vmatpush.msra.mxu0 %v2538
  %2558 = vmatpush.msra.mxu0 %v2537
  %2559 = vmatmul.f32.gmra.mxu0 %v2489
  %v2560 = vpop.f32.mrf.mxu0
  %v2561 = vadd.f32 %v2541, %v2560
  %2562 = vdwg.mxu0
  %v2563 = vld [vmem:[%s11] sm:$0xff]
  %v2564 = vld [vmem:[%s11 + $0x8] sm:$0xff]
  %v2565 = vld [vmem:[%s12] sm:$0x1]
  %v2567 = vperm.slane %v2565, 0
  %v2570 = vsel %vm64, %v2343, 0
  %2572 = vmatpush.msra.mxu0 0.0
  %2573 = vmatpush.msra.mxu0 0.0
  %2574 = vmatpush.msra.mxu0 0.0
  %2575 = vmatpush.msra.mxu0 0.0
  %2576 = vmatpush.msra.mxu0 0.0
  %2577 = vmatpush.msra.mxu0 0.0
  %2578 = vmatpush.msra.mxu0 0.0
  %2579 = vmatpush.msra.mxu0 0.0
  %2580 = vmatpush.msra.mxu0 0.0
  %2581 = vmatpush.msra.mxu0 0.0
  %2582 = vmatpush.msra.mxu0 0.0
  %2583 = vmatpush.msra.mxu0 0.0
  %2584 = vmatpush.msra.mxu0 0.0
  %2585 = vmatpush.msra.mxu0 0.0
  %2586 = vmatpush.msra.mxu0 %v2564
  %2587 = vmatpush.msra.mxu0 %v2563
  %2588 = vmatmul.f32.gmra.mxu0 %v2570
  %v2589 = vpop.f32.mrf.mxu0
  %v2590 = vadd.f32 %v2567, %v2589
  %2591 = vdwg.mxu0
  %v2592 = vld [vmem:[%s863] sm:$0xff]
  %v2593 = vld [vmem:[%s863 + $0x8] sm:$0xff]
  %v2594 = vld [vmem:[%s866] sm:$0x1]
  %v2596 = vperm.slane %v2594, 0
  %2598 = vmatpush.msra.mxu0 0.0
  %2599 = vmatpush.msra.mxu0 0.0
  %2600 = vmatpush.msra.mxu0 0.0
  %2601 = vmatpush.msra.mxu0 0.0
  %2602 = vmatpush.msra.mxu0 0.0
  %2603 = vmatpush.msra.mxu0 0.0
  %2604 = vmatpush.msra.mxu0 0.0
  %2605 = vmatpush.msra.mxu0 0.0
  %2606 = vmatpush.msra.mxu0 0.0
  %2607 = vmatpush.msra.mxu0 0.0
  %2608 = vmatpush.msra.mxu0 0.0
  %2609 = vmatpush.msra.mxu0 0.0
  %2610 = vmatpush.msra.mxu0 0.0
  %2611 = vmatpush.msra.mxu0 0.0
  %2612 = vmatpush.msra.mxu0 %v2593
  %2613 = vmatpush.msra.mxu0 %v2592
  %2614 = vmatmul.f32.gmra.mxu0 %v2570
  %v2615 = vpop.f32.mrf.mxu0
  %v2616 = vadd.f32 %v2596, %v2615
  %2617 = vdwg.mxu0
  %v2618 = vld [vmem:[%s891] sm:$0xff]
  %v2619 = vld [vmem:[%s891 + $0x8] sm:$0xff]
  %v2620 = vld [vmem:[%s894] sm:$0x1]
  %v2622 = vperm.slane %v2620, 0
  %2624 = vmatpush.msra.mxu0 0.0
  %2625 = vmatpush.msra.mxu0 0.0
  %2626 = vmatpush.msra.mxu0 0.0
  %2627 = vmatpush.msra.mxu0 0.0
  %2628 = vmatpush.msra.mxu0 0.0
  %2629 = vmatpush.msra.mxu0 0.0
  %2630 = vmatpush.msra.mxu0 0.0
  %2631 = vmatpush.msra.mxu0 0.0
  %2632 = vmatpush.msra.mxu0 0.0
  %2633 = vmatpush.msra.mxu0 0.0
  %2634 = vmatpush.msra.mxu0 0.0
  %2635 = vmatpush.msra.mxu0 0.0
  %2636 = vmatpush.msra.mxu0 0.0
  %2637 = vmatpush.msra.mxu0 0.0
  %2638 = vmatpush.msra.mxu0 %v2619
  %2639 = vmatpush.msra.mxu0 %v2618
  %2640 = vmatmul.f32.gmra.mxu0 %v2570
  %v2641 = vpop.f32.mrf.mxu0
  %v2642 = vadd.f32 %v2622, %v2641
  %2643 = vdwg.mxu0
  %v2644 = vadd.f32 %v2509, %v2590
  %v2645 = vsub.f32 0.0, %v2644
  %v2646 = vmul.f32 %v2645, 1.442695
  %v2647 = vpow.pop %v2646
  %v2648 = vadd.f32 %v2647, 1.0
  %v2649 = vrcp.pop %v2648
  %v2650 = vmul.f32 %v2648, %v2649
  %v2651 = vsub.f32 1.0, %v2650
  %v2652 = vmul.f32 %v2649, %v2651
  %v2653 = vadd.f32 %v2649, %v2652
  %vm2654 = vweird.f32 %v2648
  %vm2655 = vweird.f32 %v2649
  %vm2656 = vmor %vm2654, %vm2655
  %v2657 = vsel %vm2656, %v2649, %v2653
  %v2658 = vand.u32 2147483647, %v2648
  %vm2659 = vcmp.eq.f32.partialorder %v2658, 8.507059e+37
  %v2660 = vand.u32 %v2648, 2147483648
  %v2661 = vor.u32 1.1754944e-38, %v2660
  %v2662 = vsel %vm2659, %v2661, %v2657
  %v2663 = vmul.f32 1.0, %v2662
  %v2664 = vadd.f32 %v2535, %v2616
  %v2665 = vsub.f32 0.0, %v2664
  %v2666 = vmul.f32 %v2665, 1.442695
  %v2667 = vpow.pop %v2666
  %v2668 = vadd.f32 %v2667, 1.0
  %v2669 = vrcp.pop %v2668
  %v2670 = vmul.f32 %v2668, %v2669
  %v2671 = vsub.f32 1.0, %v2670
  %v2672 = vmul.f32 %v2669, %v2671
  %v2673 = vadd.f32 %v2669, %v2672
  %vm2674 = vweird.f32 %v2668
  %vm2675 = vweird.f32 %v2669
  %vm2676 = vmor %vm2674, %vm2675
  %v2677 = vsel %vm2676, %v2669, %v2673
  %v2678 = vand.u32 2147483647, %v2668
  %vm2679 = vcmp.eq.f32.partialorder %v2678, 8.507059e+37
  %v2680 = vand.u32 %v2668, 2147483648
  %v2681 = vor.u32 1.1754944e-38, %v2680
  %v2682 = vsel %vm2679, %v2681, %v2677
  %v2683 = vmul.f32 1.0, %v2682
  %v2684 = vmul.f32 %v2663, %v2642
  %v2685 = vadd.f32 %v2561, %v2684
  %v2686 = vtanh.pop %v2685
  %v2687 = vsub.f32 1.0, %v2683
  %v2688 = vmul.f32 %v2687, %v2686
  %v2689 = vmul.f32 %v2683, %v2343
  %v2690 = vadd.f32 %v2688, %v2689
  %2691 = vst.msk [vmem:[#allocation2 + $0xa] sm:$0x3] %vm966, %v2690
  %v2692 = vld [vmem:[%s7] sm:$0xff]
  %v2693 = vld [vmem:[%s7 + $0x8] sm:$0xff]
  %v2694 = vld [vmem:[%s8] sm:$0x1]
  %v2696 = vperm.slane %v2694, 0
  %2698 = vmatpush.msra.mxu0 0.0
  %2699 = vmatpush.msra.mxu0 0.0
  %2700 = vmatpush.msra.mxu0 0.0
  %2701 = vmatpush.msra.mxu0 0.0
  %2702 = vmatpush.msra.mxu0 0.0
  %2703 = vmatpush.msra.mxu0 0.0
  %2704 = vmatpush.msra.mxu0 0.0
  %2705 = vmatpush.msra.mxu0 0.0
  %2706 = vmatpush.msra.mxu0 0.0
  %2707 = vmatpush.msra.mxu0 0.0
  %2708 = vmatpush.msra.mxu0 0.0
  %2709 = vmatpush.msra.mxu0 0.0
  %2710 = vmatpush.msra.mxu0 0.0
  %2711 = vmatpush.msra.mxu0 0.0
  %2712 = vmatpush.msra.mxu0 %v2693
  %2713 = vmatpush.msra.mxu0 %v2692
  %2714 = vmatmul.f32.gmra.mxu0 %v2489
  %v2715 = vpop.f32.mrf.mxu0
  %v2716 = vadd.f32 %v2696, %v2715
  %2717 = vdwg.mxu0
  %v2718 = vld [vmem:[%s649] sm:$0xff]
  %v2719 = vld [vmem:[%s649 + $0x8] sm:$0xff]
  %v2720 = vld [vmem:[%s652] sm:$0x1]
  %v2722 = vperm.slane %v2720, 0
  %2724 = vmatpush.msra.mxu0 0.0
  %2725 = vmatpush.msra.mxu0 0.0
  %2726 = vmatpush.msra.mxu0 0.0
  %2727 = vmatpush.msra.mxu0 0.0
  %2728 = vmatpush.msra.mxu0 0.0
  %2729 = vmatpush.msra.mxu0 0.0
  %2730 = vmatpush.msra.mxu0 0.0
  %2731 = vmatpush.msra.mxu0 0.0
  %2732 = vmatpush.msra.mxu0 0.0
  %2733 = vmatpush.msra.mxu0 0.0
  %2734 = vmatpush.msra.mxu0 0.0
  %2735 = vmatpush.msra.mxu0 0.0
  %2736 = vmatpush.msra.mxu0 0.0
  %2737 = vmatpush.msra.mxu0 0.0
  %2738 = vmatpush.msra.mxu0 %v2719
  %2739 = vmatpush.msra.mxu0 %v2718
  %2740 = vmatmul.f32.gmra.mxu0 %v2489
  %v2741 = vpop.f32.mrf.mxu0
  %v2742 = vadd.f32 %v2722, %v2741
  %2743 = vdwg.mxu0
  %v2744 = vld [vmem:[%s677] sm:$0xff]
  %v2745 = vld [vmem:[%s677 + $0x8] sm:$0xff]
  %v2746 = vld [vmem:[%s680] sm:$0x1]
  %v2748 = vperm.slane %v2746, 0
  %2750 = vmatpush.msra.mxu0 0.0
  %2751 = vmatpush.msra.mxu0 0.0
  %2752 = vmatpush.msra.mxu0 0.0
  %2753 = vmatpush.msra.mxu0 0.0
  %2754 = vmatpush.msra.mxu0 0.0
  %2755 = vmatpush.msra.mxu0 0.0
  %2756 = vmatpush.msra.mxu0 0.0
  %2757 = vmatpush.msra.mxu0 0.0
  %2758 = vmatpush.msra.mxu0 0.0
  %2759 = vmatpush.msra.mxu0 0.0
  %2760 = vmatpush.msra.mxu0 0.0
  %2761 = vmatpush.msra.mxu0 0.0
  %2762 = vmatpush.msra.mxu0 0.0
  %2763 = vmatpush.msra.mxu0 0.0
  %2764 = vmatpush.msra.mxu0 %v2745
  %2765 = vmatpush.msra.mxu0 %v2744
  %2766 = vmatmul.f32.gmra.mxu0 %v2489
  %v2767 = vpop.f32.mrf.mxu0
  %v2768 = vadd.f32 %v2748, %v2767
  %2769 = vdwg.mxu0
  %v2771 = vrot.slane %v2716, 4
  %v2773 = vadd.f32 %v501, %v2771
  %v2774 = vsub.f32 0.0, %v2773
  %v2775 = vmul.f32 %v2774, 1.442695
  %v2776 = vpow.pop %v2775
  %v2777 = vadd.f32 %v2776, 1.0
  %v2778 = vrcp.pop %v2777
  %v2779 = vmul.f32 %v2777, %v2778
  %v2780 = vsub.f32 1.0, %v2779
  %v2781 = vmul.f32 %v2778, %v2780
  %v2782 = vadd.f32 %v2778, %v2781
  %vm2783 = vweird.f32 %v2777
  %vm2784 = vweird.f32 %v2778
  %vm2785 = vmor %vm2783, %vm2784
  %v2786 = vsel %vm2785, %v2778, %v2782
  %v2787 = vand.u32 2147483647, %v2777
  %vm2788 = vcmp.eq.f32.partialorder %v2787, 8.507059e+37
  %v2789 = vand.u32 %v2777, 2147483648
  %v2790 = vor.u32 1.1754944e-38, %v2789
  %v2791 = vsel %vm2788, %v2790, %v2786
  %v2792 = vmul.f32 1.0, %v2791
  %v2794 = vrot.slane %v2742, 4
  %v2796 = vadd.f32 %v560, %v2794
  %v2797 = vsub.f32 0.0, %v2796
  %v2798 = vmul.f32 %v2797, 1.442695
  %v2799 = vpow.pop %v2798
  %v2800 = vadd.f32 %v2799, 1.0
  %v2801 = vrcp.pop %v2800
  %v2802 = vmul.f32 %v2800, %v2801
  %v2803 = vsub.f32 1.0, %v2802
  %v2804 = vmul.f32 %v2801, %v2803
  %v2805 = vadd.f32 %v2801, %v2804
  %vm2806 = vweird.f32 %v2800
  %vm2807 = vweird.f32 %v2801
  %vm2808 = vmor %vm2806, %vm2807
  %v2809 = vsel %vm2808, %v2801, %v2805
  %v2810 = vand.u32 2147483647, %v2800
  %vm2811 = vcmp.eq.f32.partialorder %v2810, 8.507059e+37
  %v2812 = vand.u32 %v2800, 2147483648
  %v2813 = vor.u32 1.1754944e-38, %v2812
  %v2814 = vsel %vm2811, %v2813, %v2809
  %v2815 = vmul.f32 1.0, %v2814
  %v2817 = vrot.slane %v2768, 4
  %v2819 = vmul.f32 %v2792, %v2817
  %v2820 = vadd.f32 %v619, %v2819
  %v2821 = vtanh.pop %v2820
  %v2822 = vsub.f32 1.0, %v2815
  %v2823 = vmul.f32 %v2822, %v2821
  %v2824 = vrot.slane %v2480, 6
  %v2826 = vmul.f32 %v2815, %v2824
  %v2827 = vadd.f32 %v2823, %v2826
  %v2828 = vld [vmem:[%s9] sm:$0xff]
  %v2829 = vld [vmem:[%s9 + $0x8] sm:$0xff]
  %v2830 = vld [vmem:[%s10] sm:$0x1]
  %v2832 = vperm.slane %v2830, 0
  %v2835 = vrot.slane %v2827, 4
  %v2836 = vsel %vm64, %v2835, 0
  %2838 = vmatpush.msra.mxu0 0.0
  %2839 = vmatpush.msra.mxu0 0.0
  %2840 = vmatpush.msra.mxu0 0.0
  %2841 = vmatpush.msra.mxu0 0.0
  %2842 = vmatpush.msra.mxu0 0.0
  %2843 = vmatpush.msra.mxu0 0.0
  %2844 = vmatpush.msra.mxu0 0.0
  %2845 = vmatpush.msra.mxu0 0.0
  %2846 = vmatpush.msra.mxu0 0.0
  %2847 = vmatpush.msra.mxu0 0.0
  %2848 = vmatpush.msra.mxu0 0.0
  %2849 = vmatpush.msra.mxu0 0.0
  %2850 = vmatpush.msra.mxu0 0.0
  %2851 = vmatpush.msra.mxu0 0.0
  %2852 = vmatpush.msra.mxu0 %v2829
  %2853 = vmatpush.msra.mxu0 %v2828
  %2854 = vmatmul.f32.gmra.mxu0 %v2836
  %v2855 = vpop.f32.mrf.mxu0
  %v2856 = vadd.f32 %v2832, %v2855
  %2857 = vdwg.mxu0
  %v2858 = vld [vmem:[%s781] sm:$0xff]
  %v2859 = vld [vmem:[%s781 + $0x8] sm:$0xff]
  %v2860 = vld [vmem:[%s784] sm:$0x1]
  %v2862 = vperm.slane %v2860, 0
  %2864 = vmatpush.msra.mxu0 0.0
  %2865 = vmatpush.msra.mxu0 0.0
  %2866 = vmatpush.msra.mxu0 0.0
  %2867 = vmatpush.msra.mxu0 0.0
  %2868 = vmatpush.msra.mxu0 0.0
  %2869 = vmatpush.msra.mxu0 0.0
  %2870 = vmatpush.msra.mxu0 0.0
  %2871 = vmatpush.msra.mxu0 0.0
  %2872 = vmatpush.msra.mxu0 0.0
  %2873 = vmatpush.msra.mxu0 0.0
  %2874 = vmatpush.msra.mxu0 0.0
  %2875 = vmatpush.msra.mxu0 0.0
  %2876 = vmatpush.msra.mxu0 0.0
  %2877 = vmatpush.msra.mxu0 0.0
  %2878 = vmatpush.msra.mxu0 %v2859
  %2879 = vmatpush.msra.mxu0 %v2858
  %2880 = vmatmul.f32.gmra.mxu0 %v2836
  %v2881 = vpop.f32.mrf.mxu0
  %v2882 = vadd.f32 %v2862, %v2881
  %2883 = vdwg.mxu0
  %v2884 = vld [vmem:[%s809] sm:$0xff]
  %v2885 = vld [vmem:[%s809 + $0x8] sm:$0xff]
  %v2886 = vld [vmem:[%s812] sm:$0x1]
  %v2888 = vperm.slane %v2886, 0
  %2890 = vmatpush.msra.mxu0 0.0
  %2891 = vmatpush.msra.mxu0 0.0
  %2892 = vmatpush.msra.mxu0 0.0
  %2893 = vmatpush.msra.mxu0 0.0
  %2894 = vmatpush.msra.mxu0 0.0
  %2895 = vmatpush.msra.mxu0 0.0
  %2896 = vmatpush.msra.mxu0 0.0
  %2897 = vmatpush.msra.mxu0 0.0
  %2898 = vmatpush.msra.mxu0 0.0
  %2899 = vmatpush.msra.mxu0 0.0
  %2900 = vmatpush.msra.mxu0 0.0
  %2901 = vmatpush.msra.mxu0 0.0
  %2902 = vmatpush.msra.mxu0 0.0
  %2903 = vmatpush.msra.mxu0 0.0
  %2904 = vmatpush.msra.mxu0 %v2885
  %2905 = vmatpush.msra.mxu0 %v2884
  %2906 = vmatmul.f32.gmra.mxu0 %v2836
  %v2907 = vpop.f32.mrf.mxu0
  %v2908 = vadd.f32 %v2888, %v2907
  %2909 = vdwg.mxu0
  %v2910 = vld [vmem:[%s11] sm:$0xff]
  %v2911 = vld [vmem:[%s11 + $0x8] sm:$0xff]
  %v2912 = vld [vmem:[%s12] sm:$0x1]
  %v2914 = vperm.slane %v2912, 0
  %v2917 = vsel %vm64, %v2690, 0
  %2919 = vmatpush.msra.mxu0 0.0
  %2920 = vmatpush.msra.mxu0 0.0
  %2921 = vmatpush.msra.mxu0 0.0
  %2922 = vmatpush.msra.mxu0 0.0
  %2923 = vmatpush.msra.mxu0 0.0
  %2924 = vmatpush.msra.mxu0 0.0
  %2925 = vmatpush.msra.mxu0 0.0
  %2926 = vmatpush.msra.mxu0 0.0
  %2927 = vmatpush.msra.mxu0 0.0
  %2928 = vmatpush.msra.mxu0 0.0
  %2929 = vmatpush.msra.mxu0 0.0
  %2930 = vmatpush.msra.mxu0 0.0
  %2931 = vmatpush.msra.mxu0 0.0
  %2932 = vmatpush.msra.mxu0 0.0
  %2933 = vmatpush.msra.mxu0 %v2911
  %2934 = vmatpush.msra.mxu0 %v2910
  %2935 = vmatmul.f32.gmra.mxu0 %v2917
  %v2936 = vpop.f32.mrf.mxu0
  %v2937 = vadd.f32 %v2914, %v2936
  %2938 = vdwg.mxu0
  %v2939 = vld [vmem:[%s863] sm:$0xff]
  %v2940 = vld [vmem:[%s863 + $0x8] sm:$0xff]
  %v2941 = vld [vmem:[%s866] sm:$0x1]
  %v2943 = vperm.slane %v2941, 0
  %2945 = vmatpush.msra.mxu0 0.0
  %2946 = vmatpush.msra.mxu0 0.0
  %2947 = vmatpush.msra.mxu0 0.0
  %2948 = vmatpush.msra.mxu0 0.0
  %2949 = vmatpush.msra.mxu0 0.0
  %2950 = vmatpush.msra.mxu0 0.0
  %2951 = vmatpush.msra.mxu0 0.0
  %2952 = vmatpush.msra.mxu0 0.0
  %2953 = vmatpush.msra.mxu0 0.0
  %2954 = vmatpush.msra.mxu0 0.0
  %2955 = vmatpush.msra.mxu0 0.0
  %2956 = vmatpush.msra.mxu0 0.0
  %2957 = vmatpush.msra.mxu0 0.0
  %2958 = vmatpush.msra.mxu0 0.0
  %2959 = vmatpush.msra.mxu0 %v2940
  %2960 = vmatpush.msra.mxu0 %v2939
  %2961 = vmatmul.f32.gmra.mxu0 %v2917
  %v2962 = vpop.f32.mrf.mxu0
  %v2963 = vadd.f32 %v2943, %v2962
  %2964 = vdwg.mxu0
  %v2965 = vld [vmem:[%s891] sm:$0xff]
  %v2966 = vld [vmem:[%s891 + $0x8] sm:$0xff]
  %v2967 = vld [vmem:[%s894] sm:$0x1]
  %v2969 = vperm.slane %v2967, 0
  %2971 = vmatpush.msra.mxu0 0.0
  %2972 = vmatpush.msra.mxu0 0.0
  %2973 = vmatpush.msra.mxu0 0.0
  %2974 = vmatpush.msra.mxu0 0.0
  %2975 = vmatpush.msra.mxu0 0.0
  %2976 = vmatpush.msra.mxu0 0.0
  %2977 = vmatpush.msra.mxu0 0.0
  %2978 = vmatpush.msra.mxu0 0.0
  %2979 = vmatpush.msra.mxu0 0.0
  %2980 = vmatpush.msra.mxu0 0.0
  %2981 = vmatpush.msra.mxu0 0.0
  %2982 = vmatpush.msra.mxu0 0.0
  %2983 = vmatpush.msra.mxu0 0.0
  %2984 = vmatpush.msra.mxu0 0.0
  %2985 = vmatpush.msra.mxu0 %v2966
  %2986 = vmatpush.msra.mxu0 %v2965
  %2987 = vmatmul.f32.gmra.mxu0 %v2917
  %v2988 = vpop.f32.mrf.mxu0
  %v2989 = vadd.f32 %v2969, %v2988
  %2990 = vdwg.mxu0
  %v2991 = vadd.f32 %v2856, %v2937
  %v2992 = vsub.f32 0.0, %v2991
  %v2993 = vmul.f32 %v2992, 1.442695
  %v2994 = vpow.pop %v2993
  %v2995 = vadd.f32 %v2994, 1.0
  %v2996 = vrcp.pop %v2995
  %v2997 = vmul.f32 %v2995, %v2996
  %v2998 = vsub.f32 1.0, %v2997
  %v2999 = vmul.f32 %v2996, %v2998
  %v3000 = vadd.f32 %v2996, %v2999
  %vm3001 = vweird.f32 %v2995
  %vm3002 = vweird.f32 %v2996
  %vm3003 = vmor %vm3001, %vm3002
  %v3004 = vsel %vm3003, %v2996, %v3000
  %v3005 = vand.u32 2147483647, %v2995
  %vm3006 = vcmp.eq.f32.partialorder %v3005, 8.507059e+37
  %v3007 = vand.u32 %v2995, 2147483648
  %v3008 = vor.u32 1.1754944e-38, %v3007
  %v3009 = vsel %vm3006, %v3008, %v3004
  %v3010 = vmul.f32 1.0, %v3009
  %v3011 = vadd.f32 %v2882, %v2963
  %v3012 = vsub.f32 0.0, %v3011
  %v3013 = vmul.f32 %v3012, 1.442695
  %v3014 = vpow.pop %v3013
  %v3015 = vadd.f32 %v3014, 1.0
  %v3016 = vrcp.pop %v3015
  %v3017 = vmul.f32 %v3015, %v3016
  %v3018 = vsub.f32 1.0, %v3017
  %v3019 = vmul.f32 %v3016, %v3018
  %v3020 = vadd.f32 %v3016, %v3019
  %vm3021 = vweird.f32 %v3015
  %vm3022 = vweird.f32 %v3016
  %vm3023 = vmor %vm3021, %vm3022
  %v3024 = vsel %vm3023, %v3016, %v3020
  %v3025 = vand.u32 2147483647, %v3015
  %vm3026 = vcmp.eq.f32.partialorder %v3025, 8.507059e+37
  %v3027 = vand.u32 %v3015, 2147483648
  %v3028 = vor.u32 1.1754944e-38, %v3027
  %v3029 = vsel %vm3026, %v3028, %v3024
  %v3030 = vmul.f32 1.0, %v3029
  %v3031 = vmul.f32 %v3010, %v2989
  %v3032 = vadd.f32 %v2908, %v3031
  %v3033 = vtanh.pop %v3032
  %v3034 = vsub.f32 1.0, %v3030
  %v3035 = vmul.f32 %v3034, %v3033
  %v3036 = vmul.f32 %v3030, %v2690
  %v3037 = vadd.f32 %v3035, %v3036
  %3038 = vst.msk [vmem:[#allocation2 + $0xc] sm:$0x3] %vm966, %v3037
  %v3039 = vld [vmem:[%s7] sm:$0xff]
  %v3040 = vld [vmem:[%s7 + $0x8] sm:$0xff]
  %v3041 = vld [vmem:[%s8] sm:$0x1]
  %v3043 = vperm.slane %v3041, 0
  %3045 = vmatpush.msra.mxu0 0.0
  %3046 = vmatpush.msra.mxu0 0.0
  %3047 = vmatpush.msra.mxu0 0.0
  %3048 = vmatpush.msra.mxu0 0.0
  %3049 = vmatpush.msra.mxu0 0.0
  %3050 = vmatpush.msra.mxu0 0.0
  %3051 = vmatpush.msra.mxu0 0.0
  %3052 = vmatpush.msra.mxu0 0.0
  %3053 = vmatpush.msra.mxu0 0.0
  %3054 = vmatpush.msra.mxu0 0.0
  %3055 = vmatpush.msra.mxu0 0.0
  %3056 = vmatpush.msra.mxu0 0.0
  %3057 = vmatpush.msra.mxu0 0.0
  %3058 = vmatpush.msra.mxu0 0.0
  %3059 = vmatpush.msra.mxu0 %v3040
  %3060 = vmatpush.msra.mxu0 %v3039
  %3061 = vmatmul.f32.gmra.mxu0 %v2836
  %v3062 = vpop.f32.mrf.mxu0
  %v3063 = vadd.f32 %v3043, %v3062
  %3064 = vdwg.mxu0
  %v3065 = vld [vmem:[%s649] sm:$0xff]
  %v3066 = vld [vmem:[%s649 + $0x8] sm:$0xff]
  %v3067 = vld [vmem:[%s652] sm:$0x1]
  %v3069 = vperm.slane %v3067, 0
  %3071 = vmatpush.msra.mxu0 0.0
  %3072 = vmatpush.msra.mxu0 0.0
  %3073 = vmatpush.msra.mxu0 0.0
  %3074 = vmatpush.msra.mxu0 0.0
  %3075 = vmatpush.msra.mxu0 0.0
  %3076 = vmatpush.msra.mxu0 0.0
  %3077 = vmatpush.msra.mxu0 0.0
  %3078 = vmatpush.msra.mxu0 0.0
  %3079 = vmatpush.msra.mxu0 0.0
  %3080 = vmatpush.msra.mxu0 0.0
  %3081 = vmatpush.msra.mxu0 0.0
  %3082 = vmatpush.msra.mxu0 0.0
  %3083 = vmatpush.msra.mxu0 0.0
  %3084 = vmatpush.msra.mxu0 0.0
  %3085 = vmatpush.msra.mxu0 %v3066
  %3086 = vmatpush.msra.mxu0 %v3065
  %3087 = vmatmul.f32.gmra.mxu0 %v2836
  %v3088 = vpop.f32.mrf.mxu0
  %v3089 = vadd.f32 %v3069, %v3088
  %3090 = vdwg.mxu0
  %v3091 = vld [vmem:[%s677] sm:$0xff]
  %v3092 = vld [vmem:[%s677 + $0x8] sm:$0xff]
  %v3093 = vld [vmem:[%s680] sm:$0x1]
  %v3095 = vperm.slane %v3093, 0
  %3097 = vmatpush.msra.mxu0 0.0
  %3098 = vmatpush.msra.mxu0 0.0
  %3099 = vmatpush.msra.mxu0 0.0
  %3100 = vmatpush.msra.mxu0 0.0
  %3101 = vmatpush.msra.mxu0 0.0
  %3102 = vmatpush.msra.mxu0 0.0
  %3103 = vmatpush.msra.mxu0 0.0
  %3104 = vmatpush.msra.mxu0 0.0
  %3105 = vmatpush.msra.mxu0 0.0
  %3106 = vmatpush.msra.mxu0 0.0
  %3107 = vmatpush.msra.mxu0 0.0
  %3108 = vmatpush.msra.mxu0 0.0
  %3109 = vmatpush.msra.mxu0 0.0
  %3110 = vmatpush.msra.mxu0 0.0
  %3111 = vmatpush.msra.mxu0 %v3092
  %3112 = vmatpush.msra.mxu0 %v3091
  %3113 = vmatmul.f32.gmra.mxu0 %v2836
  %v3114 = vpop.f32.mrf.mxu0
  %v3115 = vadd.f32 %v3095, %v3114
  %3116 = vdwg.mxu0
  %v3118 = vrot.slane %v3063, 2
  %v3120 = vadd.f32 %v501, %v3118
  %v3121 = vsub.f32 0.0, %v3120
  %v3122 = vmul.f32 %v3121, 1.442695
  %v3123 = vpow.pop %v3122
  %v3124 = vadd.f32 %v3123, 1.0
  %v3125 = vrcp.pop %v3124
  %v3126 = vmul.f32 %v3124, %v3125
  %v3127 = vsub.f32 1.0, %v3126
  %v3128 = vmul.f32 %v3125, %v3127
  %v3129 = vadd.f32 %v3125, %v3128
  %vm3130 = vweird.f32 %v3124
  %vm3131 = vweird.f32 %v3125
  %vm3132 = vmor %vm3130, %vm3131
  %v3133 = vsel %vm3132, %v3125, %v3129
  %v3134 = vand.u32 2147483647, %v3124
  %vm3135 = vcmp.eq.f32.partialorder %v3134, 8.507059e+37
  %v3136 = vand.u32 %v3124, 2147483648
  %v3137 = vor.u32 1.1754944e-38, %v3136
  %v3138 = vsel %vm3135, %v3137, %v3133
  %v3139 = vmul.f32 1.0, %v3138
  %v3141 = vrot.slane %v3089, 2
  %v3143 = vadd.f32 %v560, %v3141
  %v3144 = vsub.f32 0.0, %v3143
  %v3145 = vmul.f32 %v3144, 1.442695
  %v3146 = vpow.pop %v3145
  %v3147 = vadd.f32 %v3146, 1.0
  %v3148 = vrcp.pop %v3147
  %v3149 = vmul.f32 %v3147, %v3148
  %v3150 = vsub.f32 1.0, %v3149
  %v3151 = vmul.f32 %v3148, %v3150
  %v3152 = vadd.f32 %v3148, %v3151
  %vm3153 = vweird.f32 %v3147
  %vm3154 = vweird.f32 %v3148
  %vm3155 = vmor %vm3153, %vm3154
  %v3156 = vsel %vm3155, %v3148, %v3152
  %v3157 = vand.u32 2147483647, %v3147
  %vm3158 = vcmp.eq.f32.partialorder %v3157, 8.507059e+37
  %v3159 = vand.u32 %v3147, 2147483648
  %v3160 = vor.u32 1.1754944e-38, %v3159
  %v3161 = vsel %vm3158, %v3160, %v3156
  %v3162 = vmul.f32 1.0, %v3161
  %v3164 = vrot.slane %v3115, 2
  %v3166 = vmul.f32 %v3139, %v3164
  %v3167 = vadd.f32 %v619, %v3166
  %v3168 = vtanh.pop %v3167
  %v3169 = vsub.f32 1.0, %v3162
  %v3170 = vmul.f32 %v3169, %v3168
  %v3171 = vrot.slane %v2827, 6
  %v3173 = vmul.f32 %v3162, %v3171
  %v3174 = vadd.f32 %v3170, %v3173
  %v3175 = vld [vmem:[%s9] sm:$0xff]
  %v3176 = vld [vmem:[%s9 + $0x8] sm:$0xff]
  %v3177 = vld [vmem:[%s10] sm:$0x1]
  %v3179 = vperm.slane %v3177, 0
  %v3182 = vrot.slane %v3174, 6
  %v3183 = vsel %vm64, %v3182, 0
  %3185 = vmatpush.msra.mxu0 0.0
  %3186 = vmatpush.msra.mxu0 0.0
  %3187 = vmatpush.msra.mxu0 0.0
  %3188 = vmatpush.msra.mxu0 0.0
  %3189 = vmatpush.msra.mxu0 0.0
  %3190 = vmatpush.msra.mxu0 0.0
  %3191 = vmatpush.msra.mxu0 0.0
  %3192 = vmatpush.msra.mxu0 0.0
  %3193 = vmatpush.msra.mxu0 0.0
  %3194 = vmatpush.msra.mxu0 0.0
  %3195 = vmatpush.msra.mxu0 0.0
  %3196 = vmatpush.msra.mxu0 0.0
  %3197 = vmatpush.msra.mxu0 0.0
  %3198 = vmatpush.msra.mxu0 0.0
  %3199 = vmatpush.msra.mxu0 %v3176
  %3200 = vmatpush.msra.mxu0 %v3175
  %3201 = vmatmul.f32.gmra.mxu0 %v3183
  %v3202 = vpop.f32.mrf.mxu0
  %v3203 = vadd.f32 %v3179, %v3202
  %3204 = vdwg.mxu0
  %v3205 = vld [vmem:[%s781] sm:$0xff]
  %v3206 = vld [vmem:[%s781 + $0x8] sm:$0xff]
  %v3207 = vld [vmem:[%s784] sm:$0x1]
  %v3209 = vperm.slane %v3207, 0
  %3211 = vmatpush.msra.mxu0 0.0
  %3212 = vmatpush.msra.mxu0 0.0
  %3213 = vmatpush.msra.mxu0 0.0
  %3214 = vmatpush.msra.mxu0 0.0
  %3215 = vmatpush.msra.mxu0 0.0
  %3216 = vmatpush.msra.mxu0 0.0
  %3217 = vmatpush.msra.mxu0 0.0
  %3218 = vmatpush.msra.mxu0 0.0
  %3219 = vmatpush.msra.mxu0 0.0
  %3220 = vmatpush.msra.mxu0 0.0
  %3221 = vmatpush.msra.mxu0 0.0
  %3222 = vmatpush.msra.mxu0 0.0
  %3223 = vmatpush.msra.mxu0 0.0
  %3224 = vmatpush.msra.mxu0 0.0
  %3225 = vmatpush.msra.mxu0 %v3206
  %3226 = vmatpush.msra.mxu0 %v3205
  %3227 = vmatmul.f32.gmra.mxu0 %v3183
  %v3228 = vpop.f32.mrf.mxu0
  %v3229 = vadd.f32 %v3209, %v3228
  %3230 = vdwg.mxu0
  %v3231 = vld [vmem:[%s809] sm:$0xff]
  %v3232 = vld [vmem:[%s809 + $0x8] sm:$0xff]
  %v3233 = vld [vmem:[%s812] sm:$0x1]
  %v3235 = vperm.slane %v3233, 0
  %3237 = vmatpush.msra.mxu0 0.0
  %3238 = vmatpush.msra.mxu0 0.0
  %3239 = vmatpush.msra.mxu0 0.0
  %3240 = vmatpush.msra.mxu0 0.0
  %3241 = vmatpush.msra.mxu0 0.0
  %3242 = vmatpush.msra.mxu0 0.0
  %3243 = vmatpush.msra.mxu0 0.0
  %3244 = vmatpush.msra.mxu0 0.0
  %3245 = vmatpush.msra.mxu0 0.0
  %3246 = vmatpush.msra.mxu0 0.0
  %3247 = vmatpush.msra.mxu0 0.0
  %3248 = vmatpush.msra.mxu0 0.0
  %3249 = vmatpush.msra.mxu0 0.0
  %3250 = vmatpush.msra.mxu0 0.0
  %3251 = vmatpush.msra.mxu0 %v3232
  %3252 = vmatpush.msra.mxu0 %v3231
  %3253 = vmatmul.f32.gmra.mxu0 %v3183
  %v3254 = vpop.f32.mrf.mxu0
  %v3255 = vadd.f32 %v3235, %v3254
  %3256 = vdwg.mxu0
  %v3257 = vld [vmem:[%s11] sm:$0xff]
  %v3258 = vld [vmem:[%s11 + $0x8] sm:$0xff]
  %v3259 = vld [vmem:[%s12] sm:$0x1]
  %v3261 = vperm.slane %v3259, 0
  %v3264 = vsel %vm64, %v3037, 0
  %3266 = vmatpush.msra.mxu0 0.0
  %3267 = vmatpush.msra.mxu0 0.0
  %3268 = vmatpush.msra.mxu0 0.0
  %3269 = vmatpush.msra.mxu0 0.0
  %3270 = vmatpush.msra.mxu0 0.0
  %3271 = vmatpush.msra.mxu0 0.0
  %3272 = vmatpush.msra.mxu0 0.0
  %3273 = vmatpush.msra.mxu0 0.0
  %3274 = vmatpush.msra.mxu0 0.0
  %3275 = vmatpush.msra.mxu0 0.0
  %3276 = vmatpush.msra.mxu0 0.0
  %3277 = vmatpush.msra.mxu0 0.0
  %3278 = vmatpush.msra.mxu0 0.0
  %3279 = vmatpush.msra.mxu0 0.0
  %3280 = vmatpush.msra.mxu0 %v3258
  %3281 = vmatpush.msra.mxu0 %v3257
  %3282 = vmatmul.f32.gmra.mxu0 %v3264
  %v3283 = vpop.f32.mrf.mxu0
  %v3284 = vadd.f32 %v3261, %v3283
  %3285 = vdwg.mxu0
  %v3286 = vld [vmem:[%s863] sm:$0xff]
  %v3287 = vld [vmem:[%s863 + $0x8] sm:$0xff]
  %v3288 = vld [vmem:[%s866] sm:$0x1]
  %v3290 = vperm.slane %v3288, 0
  %3292 = vmatpush.msra.mxu0 0.0
  %3293 = vmatpush.msra.mxu0 0.0
  %3294 = vmatpush.msra.mxu0 0.0
  %3295 = vmatpush.msra.mxu0 0.0
  %3296 = vmatpush.msra.mxu0 0.0
  %3297 = vmatpush.msra.mxu0 0.0
  %3298 = vmatpush.msra.mxu0 0.0
  %3299 = vmatpush.msra.mxu0 0.0
  %3300 = vmatpush.msra.mxu0 0.0
  %3301 = vmatpush.msra.mxu0 0.0
  %3302 = vmatpush.msra.mxu0 0.0
  %3303 = vmatpush.msra.mxu0 0.0
  %3304 = vmatpush.msra.mxu0 0.0
  %3305 = vmatpush.msra.mxu0 0.0
  %3306 = vmatpush.msra.mxu0 %v3287
  %3307 = vmatpush.msra.mxu0 %v3286
  %3308 = vmatmul.f32.gmra.mxu0 %v3264
  %v3309 = vpop.f32.mrf.mxu0
  %v3310 = vadd.f32 %v3290, %v3309
  %3311 = vdwg.mxu0
  %v3312 = vld [vmem:[%s891] sm:$0xff]
  %v3313 = vld [vmem:[%s891 + $0x8] sm:$0xff]
  %v3314 = vld [vmem:[%s894] sm:$0x1]
  %v3316 = vperm.slane %v3314, 0
  %3318 = vmatpush.msra.mxu0 0.0
  %3319 = vmatpush.msra.mxu0 0.0
  %3320 = vmatpush.msra.mxu0 0.0
  %3321 = vmatpush.msra.mxu0 0.0
  %3322 = vmatpush.msra.mxu0 0.0
  %3323 = vmatpush.msra.mxu0 0.0
  %3324 = vmatpush.msra.mxu0 0.0
  %3325 = vmatpush.msra.mxu0 0.0
  %3326 = vmatpush.msra.mxu0 0.0
  %3327 = vmatpush.msra.mxu0 0.0
  %3328 = vmatpush.msra.mxu0 0.0
  %3329 = vmatpush.msra.mxu0 0.0
  %3330 = vmatpush.msra.mxu0 0.0
  %3331 = vmatpush.msra.mxu0 0.0
  %3332 = vmatpush.msra.mxu0 %v3313
  %3333 = vmatpush.msra.mxu0 %v3312
  %3334 = vmatmul.f32.gmra.mxu0 %v3264
  %v3335 = vpop.f32.mrf.mxu0
  %v3336 = vadd.f32 %v3316, %v3335
  %3337 = vdwg.mxu0
  %v3338 = vadd.f32 %v3203, %v3284
  %v3339 = vsub.f32 0.0, %v3338
  %v3340 = vmul.f32 %v3339, 1.442695
  %v3341 = vpow.pop %v3340
  %v3342 = vadd.f32 %v3341, 1.0
  %v3343 = vrcp.pop %v3342
  %v3344 = vmul.f32 %v3342, %v3343
  %v3345 = vsub.f32 1.0, %v3344
  %v3346 = vmul.f32 %v3343, %v3345
  %v3347 = vadd.f32 %v3343, %v3346
  %vm3348 = vweird.f32 %v3342
  %vm3349 = vweird.f32 %v3343
  %vm3350 = vmor %vm3348, %vm3349
  %v3351 = vsel %vm3350, %v3343, %v3347
  %v3352 = vand.u32 2147483647, %v3342
  %vm3353 = vcmp.eq.f32.partialorder %v3352, 8.507059e+37
  %v3354 = vand.u32 %v3342, 2147483648
  %v3355 = vor.u32 1.1754944e-38, %v3354
  %v3356 = vsel %vm3353, %v3355, %v3351
  %v3357 = vmul.f32 1.0, %v3356
  %v3358 = vadd.f32 %v3229, %v3310
  %v3359 = vsub.f32 0.0, %v3358
  %v3360 = vmul.f32 %v3359, 1.442695
  %v3361 = vpow.pop %v3360
  %v3362 = vadd.f32 %v3361, 1.0
  %v3363 = vrcp.pop %v3362
  %v3364 = vmul.f32 %v3362, %v3363
  %v3365 = vsub.f32 1.0, %v3364
  %v3366 = vmul.f32 %v3363, %v3365
  %v3367 = vadd.f32 %v3363, %v3366
  %vm3368 = vweird.f32 %v3362
  %vm3369 = vweird.f32 %v3363
  %vm3370 = vmor %vm3368, %vm3369
  %v3371 = vsel %vm3370, %v3363, %v3367
  %v3372 = vand.u32 2147483647, %v3362
  %vm3373 = vcmp.eq.f32.partialorder %v3372, 8.507059e+37
  %v3374 = vand.u32 %v3362, 2147483648
  %v3375 = vor.u32 1.1754944e-38, %v3374
  %v3376 = vsel %vm3373, %v3375, %v3371
  %v3377 = vmul.f32 1.0, %v3376
  %v3378 = vmul.f32 %v3357, %v3336
  %v3379 = vadd.f32 %v3255, %v3378
  %v3380 = vtanh.pop %v3379
  %v3381 = vsub.f32 1.0, %v3377
  %v3382 = vmul.f32 %v3381, %v3380
  %v3383 = vmul.f32 %v3377, %v3037
  %v3384 = vadd.f32 %v3382, %v3383
  %3385 = vst.msk [vmem:[#allocation2 + $0xe] sm:$0x3] %vm966, %v3384
  %v3386 = vld [vmem:[#allocation2] sm:$0xff]
  %v3387 = vld [vmem:[#allocation2 + $0x8] sm:$0xff]
  %vm3388 = vcmp.gt.f32.partialorder %v3386, 0.0
  %vm3389 = vcmp.gt.f32.partialorder %v3387, 0.0
  %v3390 = vmin.f32 %v3386, 0.0
  %v3391 = vmin.f32 %v3387, 0.0
  %v3392 = vmul.f32 %v3390, 1.442695
  %v3393 = vpow.pop %v3392
  %v3394 = vmul.f32 %v3391, 1.442695
  %v3395 = vpow.pop %v3394
  %v3396 = vsub.f32 %v3393, 1.0
  %v3397 = vsub.f32 %v3395, 1.0
  %v3398 = vsel %vm3388, %v3386, %v3396
  %v3399 = vsel %vm3389, %v3387, %v3397
  %v3400 = vld [vmem:[%s13] sm:$0xff]
  %v3401 = vld [vmem:[%s13 + $0x8] sm:$0xff]
  %v3402 = vld [vmem:[%s14] sm:$0x1]
  %v3404 = vperm.slane %v3402, 0
  %v3407 = vsel %vm64, %v3398, 0
  %v3410 = vsel %vm64, %v3399, 0
  %3412 = vmatpush.msra.mxu0 0.0
  %3413 = vmatpush.msra.mxu0 0.0
  %3414 = vmatpush.msra.mxu0 0.0
  %3415 = vmatpush.msra.mxu0 0.0
  %3416 = vmatpush.msra.mxu0 0.0
  %3417 = vmatpush.msra.mxu0 0.0
  %3418 = vmatpush.msra.mxu0 0.0
  %3419 = vmatpush.msra.mxu0 0.0
  %3420 = vmatpush.msra.mxu0 0.0
  %3421 = vmatpush.msra.mxu0 0.0
  %3422 = vmatpush.msra.mxu0 0.0
  %3423 = vmatpush.msra.mxu0 0.0
  %3424 = vmatpush.msra.mxu0 0.0
  %3425 = vmatpush.msra.mxu0 0.0
  %3426 = vmatpush.msra.mxu0 %v3401
  %3427 = vmatpush.msra.mxu0 %v3400
  %3428 = vmatmul.f32.gmra.mxu0 %v3407
  %v3429 = vpop.f32.mrf.mxu0
  %v3430 = vadd.f32 %v3404, %v3429
  %3431 = vmatmul.f32.gmra.mxu0 %v3410
  %v3432 = vpop.f32.mrf.mxu0
  %v3433 = vadd.f32 %v3404, %v3432
  %3434 = vdwg.mxu0
  %v3435 = vsel %vm64, %v3430, 0.0
  %3436 = vadd.xlane.f32.xlu0 %v3435
  %v3437 = vpop.xlane.xlu0 %3436
  %v3438 = vsel %vm64, %v3433, 0.0
  %3439 = vadd.xlane.f32.xlu0 %v3438
  %v3440 = vpop.xlane.xlu0 %3439
  %v3441 = vmul.f32 %v3437, %v95
  %v3442 = vmul.f32 %v3440, %v95
  %v3443 = vsub.f32 %v3430, %v3441
  %v3444 = vsub.f32 %v3433, %v3442
  %v3445 = vmul.f32 %v3443, %v3443
  %v3446 = vmul.f32 %v3444, %v3444
  %v3447 = vsel %vm64, %v3445, 0.0
  %3448 = vadd.xlane.f32.xlu0 %v3447
  %v3449 = vpop.xlane.xlu0 %3448
  %v3450 = vsel %vm64, %v3446, 0.0
  %3451 = vadd.xlane.f32.xlu0 %v3450
  %v3452 = vpop.xlane.xlu0 %3451
  %v3453 = vmul.f32 %v3449, %v95
  %v3454 = vmul.f32 %v3452, %v95
  %v3455 = vadd.f32 %v3453, 1e-05
  %v3456 = vadd.f32 %v3454, 1e-05
  %v3457 = vrsqrt.pop %v3455
  %v3458 = vmul.f32 %v3457, %v3455
  %v3459 = vmul.f32 %v3458, %v3457
  %v3460 = vmul.f32 0.5, %v3459
  %v3461 = vsub.f32 1.5, %v3460
  %v3462 = vmul.f32 %v3457, %v3461
  %vm3463 = vweird.f32 %v3455
  %vm3464 = vweird.f32 %v3457
  %vm3465 = vmor %vm3463, %vm3464
  %v3466 = vsel %vm3465, %v3457, %v3462
  %v3467 = vrsqrt.pop %v3456
  %v3468 = vmul.f32 %v3467, %v3456
  %v3469 = vmul.f32 %v3468, %v3467
  %v3470 = vmul.f32 0.5, %v3469
  %v3471 = vsub.f32 1.5, %v3470
  %v3472 = vmul.f32 %v3467, %v3471
  %vm3473 = vweird.f32 %v3456
  %vm3474 = vweird.f32 %v3467
  %vm3475 = vmor %vm3473, %vm3474
  %v3476 = vsel %vm3475, %v3467, %v3472
  %v3477 = vmul.f32 %v3443, %v3466
  %v3478 = vmul.f32 %v3444, %v3476
  %v3479 = vld [vmem:[%s15] sm:$0x1]
  %v3481 = vperm.slane %v3479, 0
  %v3483 = vmul.f32 %v3477, %v3481
  %v3484 = vmul.f32 %v3478, %v3481
  %v3485 = vld [vmem:[%s16] sm:$0x1]
  %v3487 = vperm.slane %v3485, 0
  %v3489 = vadd.f32 %v3483, %v3487
  %v3490 = vadd.f32 %v3484, %v3487
  %v3491 = vadd.f32 %v280, %v3489
  %v3492 = vadd.f32 %v281, %v3490
  %3493 = vst.msk [vmem:[%s17] sm:$0xff] %vm64, %v3491
  %3494 = vst.msk [vmem:[%s17 + $0x8] sm:$0xff] %vm64, %v3492
  %v3495 = vadd.f32 %v282, %v3489
  %v3496 = vadd.f32 %v283, %v3490
  %3497 = vst.msk [vmem:[%s17 + $0x10] sm:$0xff] %vm64, %v3495
  %3498 = vst.msk [vmem:[%s17 + $0x18] sm:$0xff] %vm64, %v3496
  %v3499 = vadd.f32 %v284, %v3489
  %v3500 = vadd.f32 %v285, %v3490
  %3501 = vst.msk [vmem:[%s17 + $0x20] sm:$0xff] %vm64, %v3499
  %3502 = vst.msk [vmem:[%s17 + $0x28] sm:$0xff] %vm64, %v3500
  %v3503 = vadd.f32 %v286, %v3489
  %v3504 = vadd.f32 %v287, %v3490
  %3505 = vst.msk [vmem:[%s17 + $0x30] sm:$0xff] %vm64, %v3503
  %3506 = vst.msk [vmem:[%s17 + $0x38] sm:$0xff] %vm64, %v3504
  // Predicated region
  $region70: #{dualpath_block_forward.3} parent=0 // pred_check
    _
  $region71: #{dualpath_block_forward.3} parent=0 // pred_check_branch
    %3508 = sbr.rel (0) target = $region73
  $region72: #{dualpath_block_forward.3} parent=0 // pred_region
    _
  $region73: #{dualpath_block_forward.3} parent=0 // pred_fallthru
    _
  // Predicated region
  $region74: #{dualpath_block_forward.3} parent=0 // pred_check
    _
  $region75: #{dualpath_block_forward.3} parent=0 // pred_check_branch
    %3510 = sbr.rel (0) target = $region77
  $region76: #{dualpath_block_forward.3} parent=0 // pred_region
    _
  $region77: #{dualpath_block_forward.3} parent=0 // pred_fallthru
    _

</llo_original>
